<compile_context>
chip_gen: v5e
topology: v5e:2x2
jax: 0.10.0
libtpu: 0.0.40
codegen_flags: <defaults>
</compile_context>

<pallas_src>
import jax
import jax.numpy as jnp
from jax import lax
from jax.experimental import pallas as pl
from jax.experimental.pallas import tpu as pltpu


_VMEM_SPEC = pl.BlockSpec(memory_space=pltpu.MemorySpace.VMEM)


# ----------------------------------------------------------------------------
# Fused forward kernel
# ----------------------------------------------------------------------------
def _make_fused_kernel(num_layers, num_heads):
    def kernel(*refs):
        lstm_out_ref = refs[-1]          # VMEM scratch (T, B, H)
        out_ref = refs[-2]               # (B, 1)
        it = iter(refs[:-2])

        x_news = next(it)[...]           # (B, S, E)  embedded news, batch-first
        neg = (next(it)[...] - 1.0) * 1e9  # (B, S)   0 = keep, -1e9 = masked key
        price = next(it)[...]            # (T, B, I)  price, time-major
        sel_qk = next(it)[...]           # (E, h)     per-head sum selector (pre-scaled)
        sel_ex = next(it)[...]           # (h, E)     per-head expansion selector
        lstm_w = [(next(it)[...], next(it)[...], next(it)[...])
                  for _ in range(num_layers)]
        rest = [r[...] for r in it]
        (ba_wqkv, ba_bqkv, ba_wo, ba_bo,
         ln1_g, ln1_b, ff_w1, ff_b1, ff_w2, ff_b2, ln2_g, ln2_b,
         sa_wqkv, sa_bqkv, sa_wo, sa_bo,
         ca_wq, ca_bq, ca_wkv, ca_bkv, ca_wo, ca_bo,
         fc_w, fc_b) = rest

        B, S, E = x_news.shape
        T = price.shape[0]
        H = E
        D = E // num_heads
        f32 = jnp.float32

        def dot(a, w):
            # weight matmul: MXU operands in the (possibly bf16) weight dtype,
            # f32 accumulation; activations stay f32 everywhere else (v5e-safe).
            return jnp.dot(a.astype(w.dtype), w, preferred_element_type=f32)

        def dotf(a, b):
            # tiny structural matmuls (head selectors) kept in f32
            return jnp.dot(a, b, preferred_element_type=f32)

        def layernorm(x, g, b):
            # single-pass: mean and E[x^2] computed directly from x
            mu = jnp.mean(x, axis=-1, keepdims=True)
            ex2 = jnp.mean(x * x, axis=-1, keepdims=True)
            var = ex2 - mu * mu
            return (x - mu) * lax.rsqrt(var + 1e-12) * g + b

        def attention(q, k, v, wo, bo, neg_mask):
            # q: (N, L, E)   k, v: (N, Sk, E)   neg_mask: (N, Sk) or None
            # returns (N, L, E)
            N, L, _ = q.shape
            Sk = k.shape[1]
            if D >= 64:
                # MXU path for production-scale head dims (not traced at toy sizes).
                qh = jnp.transpose(q.reshape(N, L, num_heads, D), (0, 2, 1, 3))
                kh = jnp.transpose(k.reshape(N, Sk, num_heads, D), (0, 2, 1, 3))
                vh = jnp.transpose(v.reshape(N, Sk, num_heads, D), (0, 2, 1, 3))
                s = jnp.einsum('nhld,nhsd->nhls', qh, kh,
                               preferred_element_type=f32) * (D ** -0.5)
                if neg_mask is not None:
                    s = s + neg_mask[:, None, None, :]
                s = s - jnp.max(s, axis=-1, keepdims=True)
                p = jnp.exp(s)
                p = p * pl.reciprocal(jnp.sum(p, axis=-1, keepdims=True),
                                      approx=True)
                ctx = jnp.einsum('nhls,nhsd->nhld', p, vh,
                                 preferred_element_type=f32)
                merged = jnp.transpose(ctx, (0, 2, 1, 3)).reshape(N * L, E)
            else:
                # Heads-in-lanes / VPU path: no head split, no per-head loops.
                # scores[n,l,t,h] = sum_{e in head h} q[n,l,e] * k[n,t,e]
                prod = q[:, :, None, :] * k[:, None, :, :]            # (N,L,Sk,E)
                s = dotf(prod.reshape(N * L * Sk, E), sel_qk)         # scaled scores
                s = s.reshape(N, L, Sk, num_heads)
                if neg_mask is not None:
                    s = s + neg_mask[:, None, :, None]                # broadcast mask
                s = s - jnp.max(s, axis=2, keepdims=True)             # softmax over keys
                p = jnp.exp(s)
                p = p * pl.reciprocal(jnp.sum(p, axis=2, keepdims=True),
                                      approx=True)
                pe = dotf(p.reshape(N * L * Sk, num_heads), sel_ex)   # expand to E lanes
                pe = pe.reshape(N, L, Sk, E)
                ctx = jnp.sum(pe * v[:, None, :, :], axis=2)          # (N, L, E)
                merged = ctx.reshape(N * L, E)
            out = dot(merged, wo) + bo
            return out.reshape(N, L, E)

        def self_mha(x, wqkv, bqkv, wo, bo, neg_mask=None):
            # x: (N, L, E); single fused QKV projection
            N, L, _ = x.shape
            qkv = dot(x.reshape(N * L, E), wqkv) + bqkv               # (N*L, 3E)
            q = qkv[:, :E].reshape(N, L, E)
            k = qkv[:, E:2 * E].reshape(N, L, E)
            v = qkv[:, 2 * E:].reshape(N, L, E)
            return attention(q, k, v, wo, bo, neg_mask)

        # ----------------- synthetic BERT encoder ----------------------------
        # TODO(synk): BertModel.from_pretrained('bert-base-uncased') cannot be
        # loaded in-script; stand-in is a deterministic 1-layer encoder with the
        # same output shape (B, S, hidden).
        attn = self_mha(x_news, ba_wqkv, ba_bqkv, ba_wo, ba_bo, neg_mask=neg)
        h1 = layernorm((attn + x_news).reshape(B * S, E), ln1_g, ln1_b)
        ff = dot(h1, ff_w1) + ff_b1
        ff = jax.nn.gelu(ff)    # TODO(synk): HF BERT uses erf GELU (stand-in only)
        ff = dot(ff, ff_w2) + ff_b2
        h2 = layernorm(ff + h1, ln2_g, ln2_b)
        # only leading-dim transpose in the kernel: (B,S,E) -> (S,B,E) so the
        # cross-attention key/value arrive already in (N=S, Sk=B, E) layout.
        bert_nm = jnp.transpose(h2.reshape(B, S, E), (1, 0, 2))        # (S, B, E)

        # ----------------- multi-layer LSTM (batch_first, zero init) ---------
        in_dim = price.shape[-1]
        w_ih0, w_hh0, b0 = lstm_w[0]
        # layer-0 input projection + bias hoisted out of the recurrence
        xp0 = (dot(price.reshape(T * B, in_dim), w_ih0) + b0).reshape(T, B, 4 * H)

        h_st = [jnp.zeros((B, H), f32) for _ in range(num_layers)]
        c_st = [jnp.zeros((B, H), f32) for _ in range(num_layers)]

        def cell(gates, c_prev):
            sig = jax.nn.sigmoid(gates)            # one full-width EUP slab
            i_g = sig[:, 0 * H:1 * H]
            f_g = sig[:, 1 * H:2 * H]
            o_g = sig[:, 3 * H:4 * H]
            g_g = jnp.tanh(gates[:, 2 * H:3 * H])
            c = f_g * c_prev + i_g * g_g
            h = o_g * jnp.tanh(c)
            return h, c

        # Wavefront pipeline: at wave w, layer l handles timestep t = w - l, so
        # the recurrent matmuls of different layers are independent and overlap
        # in the MXU pipeline.  Layers processed top-down so each reads the
        # previous layer's output produced on the prior wave.
        for wave in range(T + num_layers - 1):
            for l in reversed(range(num_layers)):
                t = wave - l
                if 0 <= t < T:
                    w_ih_l, w_hh_l, b_l = lstm_w[l]
                    if l == 0:
                        gates = xp0[t] + dot(h_st[0], w_hh_l)
                    else:
                        gates = (dot(h_st[l - 1], w_ih_l)
                                 + dot(h_st[l], w_hh_l) + b_l)
                    h_new, c_new = cell(gates, c_st[l])
                    h_st[l] = h_new
                    c_st[l] = c_new
                    if l == num_layers - 1:
                        lstm_out_ref[t] = h_new    # write into VMEM scratch

        lstm_seq = lstm_out_ref[...]               # (T, B, H) == (N=T, L=B, E)

        # ----------------- self attention (L=B, N=T) --------------------------
        lstm_att = self_mha(lstm_seq, sa_wqkv, sa_bqkv, sa_wo, sa_bo)   # (T, B, E)

        # ----------------- cross attention ------------------------------------
        # query = lstm_att (N=T, L=B), key/value = bert_nm (N=S, Sk=B); T == S.
        qp = (dot(lstm_att.reshape(T * B, E), ca_wq) + ca_bq).reshape(T, B, E)
        kvp = dot(bert_nm.reshape(S * B, E), ca_wkv) + ca_bkv           # (S*B, 2E)
        kq = kvp[:, :E].reshape(S, B, E)
        vq = kvp[:, E:].reshape(S, B, E)
        cross_att = attention(qp, kq, vq, ca_wo, ca_bo, None)           # (T, B, E)

        # ----------------- final head (VPU multiply + lane reduce) ------------
        # nn.Dropout is identity at inference.
        last_l = lstm_att[T - 1]                                        # (B, E)
        last_c = cross_att[T - 1]                                       # (B, E)
        out_ref[...] = (jnp.sum(last_l * fc_w[:, :E], axis=-1, keepdims=True)
                        + jnp.sum(last_c * fc_w[:, E:], axis=-1, keepdims=True)
                        + fc_b)                                         # (B, 1)

    return kernel


# ----------------------------------------------------------------------------
# Wrapper
# ----------------------------------------------------------------------------
def forward(params, price, news_input_ids, news_attention_mask, num_heads=8,
            mxu_dtype=jnp.bfloat16):
    B, T, _ = price.shape
    S = news_input_ids.shape[1]
    H = params['tok_emb'].shape[1]
    # Original module only works when T == S (batch-first tensors fed into
    # seq-first MHA); we honour the same constraint.
    assert T == S
    assert H % num_heads == 0
    D = H // num_heads

    # Token/positional embedding gather stays in XLA (outside the kernel).
    emb = (params['tok_emb'][news_input_ids]
           + params['pos_emb'][None]).astype(jnp.float32)              # (B, S, H)
    kp_mask = news_attention_mask.astype(jnp.float32)                  # (B, S)
    price_tm = jnp.transpose(price, (1, 0, 2)).astype(jnp.float32)     # (T, B, I)

    # Head selector constants for the heads-in-lanes attention path.
    head_ids = jnp.arange(H, dtype=jnp.int32) // D
    sel = (head_ids[:, None] == jnp.arange(num_heads)[None, :]).astype(jnp.float32)
    sel_qk = sel * (D ** -0.5)                                          # (H, h)
    sel_ex = sel.T                                                      # (h, H)

    wcast = lambda w: w.astype(mxu_dtype)   # weight matrices -> bf16 MXU operands

    num_layers = len(params['lstm'])
    inputs = [emb, kp_mask, price_tm, sel_qk, sel_ex]
    for lp in params['lstm']:
        inputs += [wcast(lp['w_ih']), wcast(lp['w_hh']), lp['b']]
    ba, ffn = params['bert_attn'], params['bert_ffn']
    inputs += [wcast(ba['wqkv']), ba['bqkv'], wcast(ba['wo']), ba['bo'],
               params['bert_ln1']['g'], params['bert_ln1']['b'],
               wcast(ffn['w1']), ffn['b1'], wcast(ffn['w2']), ffn['b2'],
               params['bert_ln2']['g'], params['bert_ln2']['b']]
    sa = params['self_attn']
    inputs += [wcast(sa['wqkv']), sa['bqkv'], wcast(sa['wo']), sa['bo']]
    ca = params['cross_attn']
    inputs += [wcast(ca['wq']), ca['bq'], wcast(ca['wkv']), ca['bkv'],
               wcast(ca['wo']), ca['bo']]
    inputs += [params['fc_w'].reshape(1, 2 * H), params['fc_b']]

    out = pl.pallas_call(
        _make_fused_kernel(num_layers, num_heads),
        out_shape=jax.ShapeDtypeStruct((B, 1), jnp.float32),
        in_specs=[_VMEM_SPEC] * len(inputs),
        out_specs=_VMEM_SPEC,
        scratch_shapes=[pltpu.VMEM((T, B, H), jnp.float32)],
        compiler_params=pltpu.CompilerParams(vmem_limit_bytes=32 * 1024 * 1024),
    )(*inputs)
    return jnp.squeeze(out, axis=-1)                                    # (B,)


# ----------------------------------------------------------------------------
# Deterministic parameter init (synthetic weights — no checkpoint loading)
# ----------------------------------------------------------------------------
def init_params(key, input_size, hidden_size, num_layers, vocab_size, seq_len):
    keys = iter(jax.random.split(key, 64))
    H = hidden_size

    def nrm(shape, scale=0.05):
        return (scale * jax.random.normal(next(keys), shape)).astype(jnp.float32)

    def zeros(shape):
        return jnp.zeros(shape, jnp.float32)

    def self_attn_params():
        return dict(wqkv=nrm((H, 3 * H)), bqkv=zeros((1, 3 * H)),
                    wo=nrm((H, H)), bo=zeros((1, H)))

    params = {
        'tok_emb': nrm((vocab_size, H)),
        'pos_emb': nrm((seq_len, H)),
        'bert_attn': self_attn_params(),
        'bert_ln1': dict(g=jnp.ones((1, H), jnp.float32), b=zeros((1, H))),
        'bert_ffn': dict(w1=nrm((H, 4 * H)), b1=zeros((1, 4 * H)),
                         w2=nrm((4 * H, H)), b2=zeros((1, H))),
        'bert_ln2': dict(g=jnp.ones((1, H), jnp.float32), b=zeros((1, H))),
        'self_attn': self_attn_params(),
        'cross_attn': dict(wq=nrm((H, H)), bq=zeros((1, H)),
                           wkv=nrm((H, 2 * H)), bkv=zeros((1, 2 * H)),
                           wo=nrm((H, H)), bo=zeros((1, H))),
        'fc_w': nrm((2 * H, 1), 0.1),
        'fc_b': zeros((1, 1)),
    }
    lstm = []
    for l in range(num_layers):
        in_l = input_size if l == 0 else H
        # TODO(synk): PyTorch nn.LSTM has separate b_ih / b_hh; sum them into `b`
        # when loading real checkpoints (zero-init here, so equivalent).
        lstm.append(dict(w_ih=nrm((in_l, 4 * H), 0.1),
                         w_hh=nrm((H, 4 * H), 0.1),
                         b=zeros((1, 4 * H))))
    params['lstm'] = lstm
    return params


# ----------------------------------------------------------------------------
if __name__ == "__main__":
    B, T, INPUT, HIDDEN, NUM_LAYERS = 4, 8, 16, 32, 2
    S = T                       # required by the module's attention wiring
    VOCAB = 50

    key = jax.random.PRNGKey(0)
    k_params, k_price, k_ids = jax.random.split(key, 3)

    params = init_params(k_params, INPUT, HIDDEN, NUM_LAYERS, VOCAB, S)
    price = jax.random.normal(k_price, (B, T, INPUT), jnp.float32)
    news_input_ids = jax.random.randint(k_ids, (B, S), 0, VOCAB)
    news_attention_mask = jnp.ones((B, S), jnp.int32).at[:, S - 2:].set(0)

    out = forward(params, price, news_input_ids, news_attention_mask)
    out = jax.block_until_ready(out)
    assert out.shape == (B,)
    assert bool(jnp.all(jnp.isfinite(out)))
    print("KERNEL_OK")
</pallas_src>

<mosaic_0001>
module attributes {stable_mosaic.version = 11 : i64} {
  func.func @kernel(%arg0: memref<4x8x32xf32, #tpu.memory_space<vmem>>, %arg1: memref<4x8xf32, #tpu.memory_space<vmem>>, %arg2: memref<8x4x16xf32, #tpu.memory_space<vmem>>, %arg3: memref<32x8xf32, #tpu.memory_space<vmem>>, %arg4: memref<8x32xf32, #tpu.memory_space<vmem>>, %arg5: memref<16x128xbf16, #tpu.memory_space<vmem>>, %arg6: memref<32x128xbf16, #tpu.memory_space<vmem>>, %arg7: memref<1x128xf32, #tpu.memory_space<vmem>>, %arg8: memref<32x128xbf16, #tpu.memory_space<vmem>>, %arg9: memref<32x128xbf16, #tpu.memory_space<vmem>>, %arg10: memref<1x128xf32, #tpu.memory_space<vmem>>, %arg11: memref<32x96xbf16, #tpu.memory_space<vmem>>, %arg12: memref<1x96xf32, #tpu.memory_space<vmem>>, %arg13: memref<32x32xbf16, #tpu.memory_space<vmem>>, %arg14: memref<1x32xf32, #tpu.memory_space<vmem>>, %arg15: memref<1x32xf32, #tpu.memory_space<vmem>>, %arg16: memref<1x32xf32, #tpu.memory_space<vmem>>, %arg17: memref<32x128xbf16, #tpu.memory_space<vmem>>, %arg18: memref<1x128xf32, #tpu.memory_space<vmem>>, %arg19: memref<128x32xbf16, #tpu.memory_space<vmem>>, %arg20: memref<1x32xf32, #tpu.memory_space<vmem>>, %arg21: memref<1x32xf32, #tpu.memory_space<vmem>>, %arg22: memref<1x32xf32, #tpu.memory_space<vmem>>, %arg23: memref<32x96xbf16, #tpu.memory_space<vmem>>, %arg24: memref<1x96xf32, #tpu.memory_space<vmem>>, %arg25: memref<32x32xbf16, #tpu.memory_space<vmem>>, %arg26: memref<1x32xf32, #tpu.memory_space<vmem>>, %arg27: memref<32x32xbf16, #tpu.memory_space<vmem>>, %arg28: memref<1x32xf32, #tpu.memory_space<vmem>>, %arg29: memref<32x64xbf16, #tpu.memory_space<vmem>>, %arg30: memref<1x64xf32, #tpu.memory_space<vmem>>, %arg31: memref<32x32xbf16, #tpu.memory_space<vmem>>, %arg32: memref<1x32xf32, #tpu.memory_space<vmem>>, %arg33: memref<1x64xf32, #tpu.memory_space<vmem>>, %arg34: memref<1x1xf32, #tpu.memory_space<vmem>>, %arg35: memref<4x1xf32, #tpu.memory_space<vmem>>, %arg36: memref<8x4x32xf32, #tpu.memory_space<vmem>>) attributes {dimension_semantics = [], scalar_prefetch = 0 : i64, scratch_operands = 1 : i64, tpu.core_type = #tpu.core_type<tc>} {
    %c0 = arith.constant 0 : index
    %c0_0 = arith.constant 0 : index
    %c0_1 = arith.constant 0 : index
    %0 = vector.load %arg0[%c0, %c0_0, %c0_1] : memref<4x8x32xf32, #tpu.memory_space<vmem>>, vector<4x8x32xf32>
    %c0_2 = arith.constant 0 : index
    %c0_3 = arith.constant 0 : index
    %1 = vector.load %arg1[%c0_2, %c0_3] : memref<4x8xf32, #tpu.memory_space<vmem>>, vector<4x8xf32>
    %cst = arith.constant 1.000000e+00 : f32
    %2 = vector.broadcast %cst : f32 to vector<4x8xf32>
    %3 = arith.subf %1, %2 : vector<4x8xf32>
    %cst_4 = arith.constant 1.000000e+09 : f32
    %4 = vector.broadcast %cst_4 : f32 to vector<4x8xf32>
    %5 = arith.mulf %3, %4 : vector<4x8xf32>
    %c0_5 = arith.constant 0 : index
    %c0_6 = arith.constant 0 : index
    %c0_7 = arith.constant 0 : index
    %6 = vector.load %arg2[%c0_5, %c0_6, %c0_7] : memref<8x4x16xf32, #tpu.memory_space<vmem>>, vector<8x4x16xf32>
    %c0_8 = arith.constant 0 : index
    %c0_9 = arith.constant 0 : index
    %7 = vector.load %arg3[%c0_8, %c0_9] : memref<32x8xf32, #tpu.memory_space<vmem>>, vector<32x8xf32>
    %c0_10 = arith.constant 0 : index
    %c0_11 = arith.constant 0 : index
    %8 = vector.load %arg4[%c0_10, %c0_11] : memref<8x32xf32, #tpu.memory_space<vmem>>, vector<8x32xf32>
    %c0_12 = arith.constant 0 : index
    %c0_13 = arith.constant 0 : index
    %9 = vector.load %arg5[%c0_12, %c0_13] : memref<16x128xbf16, #tpu.memory_space<vmem>>, vector<16x128xbf16>
    %c0_14 = arith.constant 0 : index
    %c0_15 = arith.constant 0 : index
    %10 = vector.load %arg6[%c0_14, %c0_15] : memref<32x128xbf16, #tpu.memory_space<vmem>>, vector<32x128xbf16>
    %c0_16 = arith.constant 0 : index
    %c0_17 = arith.constant 0 : index
    %11 = vector.load %arg7[%c0_16, %c0_17] : memref<1x128xf32, #tpu.memory_space<vmem>>, vector<1x128xf32>
    %c0_18 = arith.constant 0 : index
    %c0_19 = arith.constant 0 : index
    %12 = vector.load %arg8[%c0_18, %c0_19] : memref<32x128xbf16, #tpu.memory_space<vmem>>, vector<32x128xbf16>
    %c0_20 = arith.constant 0 : index
    %c0_21 = arith.constant 0 : index
    %13 = vector.load %arg9[%c0_20, %c0_21] : memref<32x128xbf16, #tpu.memory_space<vmem>>, vector<32x128xbf16>
    %c0_22 = arith.constant 0 : index
    %c0_23 = arith.constant 0 : index
    %14 = vector.load %arg10[%c0_22, %c0_23] : memref<1x128xf32, #tpu.memory_space<vmem>>, vector<1x128xf32>
    %c0_24 = arith.constant 0 : index
    %c0_25 = arith.constant 0 : index
    %15 = vector.load %arg11[%c0_24, %c0_25] : memref<32x96xbf16, #tpu.memory_space<vmem>>, vector<32x96xbf16>
    %c0_26 = arith.constant 0 : index
    %c0_27 = arith.constant 0 : index
    %16 = vector.load %arg12[%c0_26, %c0_27] : memref<1x96xf32, #tpu.memory_space<vmem>>, vector<1x96xf32>
    %c0_28 = arith.constant 0 : index
    %c0_29 = arith.constant 0 : index
    %17 = vector.load %arg13[%c0_28, %c0_29] : memref<32x32xbf16, #tpu.memory_space<vmem>>, vector<32x32xbf16>
    %c0_30 = arith.constant 0 : index
    %c0_31 = arith.constant 0 : index
    %18 = vector.load %arg14[%c0_30, %c0_31] : memref<1x32xf32, #tpu.memory_space<vmem>>, vector<1x32xf32>
    %c0_32 = arith.constant 0 : index
    %c0_33 = arith.constant 0 : index
    %19 = vector.load %arg15[%c0_32, %c0_33] : memref<1x32xf32, #tpu.memory_space<vmem>>, vector<1x32xf32>
    %c0_34 = arith.constant 0 : index
    %c0_35 = arith.constant 0 : index
    %20 = vector.load %arg16[%c0_34, %c0_35] : memref<1x32xf32, #tpu.memory_space<vmem>>, vector<1x32xf32>
    %c0_36 = arith.constant 0 : index
    %c0_37 = arith.constant 0 : index
    %21 = vector.load %arg17[%c0_36, %c0_37] : memref<32x128xbf16, #tpu.memory_space<vmem>>, vector<32x128xbf16>
    %c0_38 = arith.constant 0 : index
    %c0_39 = arith.constant 0 : index
    %22 = vector.load %arg18[%c0_38, %c0_39] : memref<1x128xf32, #tpu.memory_space<vmem>>, vector<1x128xf32>
    %c0_40 = arith.constant 0 : index
    %c0_41 = arith.constant 0 : index
    %23 = vector.load %arg19[%c0_40, %c0_41] : memref<128x32xbf16, #tpu.memory_space<vmem>>, vector<128x32xbf16>
    %c0_42 = arith.constant 0 : index
    %c0_43 = arith.constant 0 : index
    %24 = vector.load %arg20[%c0_42, %c0_43] : memref<1x32xf32, #tpu.memory_space<vmem>>, vector<1x32xf32>
    %c0_44 = arith.constant 0 : index
    %c0_45 = arith.constant 0 : index
    %25 = vector.load %arg21[%c0_44, %c0_45] : memref<1x32xf32, #tpu.memory_space<vmem>>, vector<1x32xf32>
    %c0_46 = arith.constant 0 : index
    %c0_47 = arith.constant 0 : index
    %26 = vector.load %arg22[%c0_46, %c0_47] : memref<1x32xf32, #tpu.memory_space<vmem>>, vector<1x32xf32>
    %c0_48 = arith.constant 0 : index
    %c0_49 = arith.constant 0 : index
    %27 = vector.load %arg23[%c0_48, %c0_49] : memref<32x96xbf16, #tpu.memory_space<vmem>>, vector<32x96xbf16>
    %c0_50 = arith.constant 0 : index
    %c0_51 = arith.constant 0 : index
    %28 = vector.load %arg24[%c0_50, %c0_51] : memref<1x96xf32, #tpu.memory_space<vmem>>, vector<1x96xf32>
    %c0_52 = arith.constant 0 : index
    %c0_53 = arith.constant 0 : index
    %29 = vector.load %arg25[%c0_52, %c0_53] : memref<32x32xbf16, #tpu.memory_space<vmem>>, vector<32x32xbf16>
    %c0_54 = arith.constant 0 : index
    %c0_55 = arith.constant 0 : index
    %30 = vector.load %arg26[%c0_54, %c0_55] : memref<1x32xf32, #tpu.memory_space<vmem>>, vector<1x32xf32>
    %c0_56 = arith.constant 0 : index
    %c0_57 = arith.constant 0 : index
    %31 = vector.load %arg27[%c0_56, %c0_57] : memref<32x32xbf16, #tpu.memory_space<vmem>>, vector<32x32xbf16>
    %c0_58 = arith.constant 0 : index
    %c0_59 = arith.constant 0 : index
    %32 = vector.load %arg28[%c0_58, %c0_59] : memref<1x32xf32, #tpu.memory_space<vmem>>, vector<1x32xf32>
    %c0_60 = arith.constant 0 : index
    %c0_61 = arith.constant 0 : index
    %33 = vector.load %arg29[%c0_60, %c0_61] : memref<32x64xbf16, #tpu.memory_space<vmem>>, vector<32x64xbf16>
    %c0_62 = arith.constant 0 : index
    %c0_63 = arith.constant 0 : index
    %34 = vector.load %arg30[%c0_62, %c0_63] : memref<1x64xf32, #tpu.memory_space<vmem>>, vector<1x64xf32>
    %c0_64 = arith.constant 0 : index
    %c0_65 = arith.constant 0 : index
    %35 = vector.load %arg31[%c0_64, %c0_65] : memref<32x32xbf16, #tpu.memory_space<vmem>>, vector<32x32xbf16>
    %c0_66 = arith.constant 0 : index
    %c0_67 = arith.constant 0 : index
    %36 = vector.load %arg32[%c0_66, %c0_67] : memref<1x32xf32, #tpu.memory_space<vmem>>, vector<1x32xf32>
    %c0_68 = arith.constant 0 : index
    %c0_69 = arith.constant 0 : index
    %37 = vector.load %arg33[%c0_68, %c0_69] : memref<1x64xf32, #tpu.memory_space<vmem>>, vector<1x64xf32>
    %c0_70 = arith.constant 0 : index
    %c0_71 = arith.constant 0 : index
    %38 = vector.load %arg34[%c0_70, %c0_71] : memref<1x1xf32, #tpu.memory_space<vmem>>, vector<1x1xf32>
    %39 = vector.shape_cast %0 : vector<4x8x32xf32> to vector<32x32xf32>
    %40 = arith.truncf %39 : vector<32x32xf32> to vector<32x32xbf16>
    %cst_72 = arith.constant dense<0.000000e+00> : vector<32x96xf32>
    %41 = tpu.matmul %40, %15, %cst_72 {dimension_numbers = #tpu.dot_dimension_numbers<[1], [0], [0], [1], [0, 0, 1, 1], [], []>} : vector<32x32xbf16>, vector<32x96xbf16>, vector<32x96xf32> -> vector<32x96xf32>
    %42 = vector.broadcast %16 : vector<1x96xf32> to vector<32x96xf32>
    %43 = arith.addf %41, %42 : vector<32x96xf32>
    %44 = vector.extract_strided_slice %43 {offsets = [0, 0], sizes = [32, 32], strides = [1, 1]} : vector<32x96xf32> to vector<32x32xf32>
    %45 = vector.shape_cast %44 : vector<32x32xf32> to vector<4x8x32xf32>
    %46 = vector.extract_strided_slice %43 {offsets = [0, 32], sizes = [32, 32], strides = [1, 1]} : vector<32x96xf32> to vector<32x32xf32>
    %47 = vector.shape_cast %46 : vector<32x32xf32> to vector<4x8x32xf32>
    %48 = vector.extract_strided_slice %43 {offsets = [0, 64], sizes = [32, 32], strides = [1, 1]} : vector<32x96xf32> to vector<32x32xf32>
    %49 = vector.shape_cast %48 : vector<32x32xf32> to vector<4x8x32xf32>
    %50 = vector.shape_cast %45 : vector<4x8x32xf32> to vector<4x8x1x32xf32>
    %51 = vector.shape_cast %47 : vector<4x8x32xf32> to vector<4x1x8x32xf32>
    %52 = vector.broadcast %50 : vector<4x8x1x32xf32> to vector<4x8x8x32xf32>
    %53 = vector.broadcast %51 : vector<4x1x8x32xf32> to vector<4x8x8x32xf32>
    %54 = arith.mulf %52, %53 : vector<4x8x8x32xf32>
    %55 = vector.shape_cast %54 : vector<4x8x8x32xf32> to vector<256x32xf32>
    %cst_73 = arith.constant dense<0.000000e+00> : vector<256x8xf32>
    %56 = tpu.matmul %55, %7, %cst_73 {dimension_numbers = #tpu.dot_dimension_numbers<[1], [0], [0], [1], [0, 0, 1, 1], [], []>} : vector<256x32xf32>, vector<32x8xf32>, vector<256x8xf32> -> vector<256x8xf32>
    %57 = vector.shape_cast %56 : vector<256x8xf32> to vector<4x8x8x8xf32>
    %58 = vector.shape_cast %5 : vector<4x8xf32> to vector<4x1x8x1xf32>
    %59 = vector.broadcast %58 : vector<4x1x8x1xf32> to vector<4x8x8x8xf32>
    %60 = arith.addf %57, %59 : vector<4x8x8x8xf32>
    %cst_74 = arith.constant dense<0xFF800000> : vector<4x8x8xf32>
    %61 = vector.multi_reduction <maximumf>, %60, %cst_74 [2] : vector<4x8x8x8xf32> to vector<4x8x8xf32>
    %62 = vector.shape_cast %61 : vector<4x8x8xf32> to vector<4x8x1x8xf32>
    %63 = vector.broadcast %62 : vector<4x8x1x8xf32> to vector<4x8x8x8xf32>
    %64 = arith.subf %60, %63 : vector<4x8x8x8xf32>
    %65 = math.exp %64 : vector<4x8x8x8xf32>
    %cst_75 = arith.constant dense<0.000000e+00> : vector<4x8x8xf32>
    %66 = vector.multi_reduction <add>, %65, %cst_75 [2] : vector<4x8x8x8xf32> to vector<4x8x8xf32>
    %67 = vector.shape_cast %66 : vector<4x8x8xf32> to vector<4x8x1x8xf32>
    %68 = tpu.reciprocal %67 {approx = true} : vector<4x8x1x8xf32> -> vector<4x8x1x8xf32>
    %69 = vector.broadcast %68 : vector<4x8x1x8xf32> to vector<4x8x8x8xf32>
    %70 = arith.mulf %65, %69 : vector<4x8x8x8xf32>
    %71 = vector.shape_cast %70 : vector<4x8x8x8xf32> to vector<256x8xf32>
    %cst_76 = arith.constant dense<0.000000e+00> : vector<256x32xf32>
    %72 = tpu.matmul %71, %8, %cst_76 {dimension_numbers = #tpu.dot_dimension_numbers<[1], [0], [0], [1], [0, 0, 1, 1], [], []>} : vector<256x8xf32>, vector<8x32xf32>, vector<256x32xf32> -> vector<256x32xf32>
    %73 = vector.shape_cast %72 : vector<256x32xf32> to vector<4x8x8x32xf32>
    %74 = vector.shape_cast %49 : vector<4x8x32xf32> to vector<4x1x8x32xf32>
    %75 = vector.broadcast %74 : vector<4x1x8x32xf32> to vector<4x8x8x32xf32>
    %76 = arith.mulf %73, %75 : vector<4x8x8x32xf32>
    %cst_77 = arith.constant dense<0.000000e+00> : vector<4x8x32xf32>
    %77 = vector.multi_reduction <add>, %76, %cst_77 [2] : vector<4x8x8x32xf32> to vector<4x8x32xf32>
    %78 = vector.shape_cast %77 : vector<4x8x32xf32> to vector<32x32xf32>
    %79 = arith.truncf %78 : vector<32x32xf32> to vector<32x32xbf16>
    %cst_78 = arith.constant dense<0.000000e+00> : vector<32x32xf32>
    %80 = tpu.matmul %79, %17, %cst_78 {dimension_numbers = #tpu.dot_dimension_numbers<[1], [0], [0], [1], [0, 0, 1, 1], [], []>} : vector<32x32xbf16>, vector<32x32xbf16>, vector<32x32xf32> -> vector<32x32xf32>
    %81 = vector.broadcast %18 : vector<1x32xf32> to vector<32x32xf32>
    %82 = arith.addf %80, %81 : vector<32x32xf32>
    %83 = vector.shape_cast %82 : vector<32x32xf32> to vector<4x8x32xf32>
    %84 = arith.addf %83, %0 : vector<4x8x32xf32>
    %85 = vector.shape_cast %84 : vector<4x8x32xf32> to vector<32x32xf32>
    %cst_79 = arith.constant dense<0.000000e+00> : vector<32xf32>
    %86 = vector.multi_reduction <add>, %85, %cst_79 [1] : vector<32x32xf32> to vector<32xf32>
    %87 = vector.shape_cast %86 : vector<32xf32> to vector<32x1xf32>
    %cst_80 = arith.constant 3.200000e+01 : f32
    %88 = vector.broadcast %cst_80 : f32 to vector<32x1xf32>
    %89 = arith.divf %87, %88 : vector<32x1xf32>
    %90 = arith.mulf %85, %85 : vector<32x32xf32>
    %cst_81 = arith.constant dense<0.000000e+00> : vector<32xf32>
    %91 = vector.multi_reduction <add>, %90, %cst_81 [1] : vector<32x32xf32> to vector<32xf32>
    %92 = vector.shape_cast %91 : vector<32xf32> to vector<32x1xf32>
    %cst_82 = arith.constant 3.200000e+01 : f32
    %93 = vector.broadcast %cst_82 : f32 to vector<32x1xf32>
    %94 = arith.divf %92, %93 : vector<32x1xf32>
    %95 = arith.mulf %89, %89 : vector<32x1xf32>
    %96 = arith.subf %94, %95 : vector<32x1xf32>
    %97 = vector.broadcast %89 : vector<32x1xf32> to vector<32x32xf32>
    %98 = arith.subf %85, %97 : vector<32x32xf32>
    %cst_83 = arith.constant 9.99999996E-13 : f32
    %99 = vector.broadcast %cst_83 : f32 to vector<32x1xf32>
    %100 = arith.addf %96, %99 : vector<32x1xf32>
    %101 = math.rsqrt %100 : vector<32x1xf32>
    %102 = vector.broadcast %101 : vector<32x1xf32> to vector<32x32xf32>
    %103 = arith.mulf %98, %102 : vector<32x32xf32>
    %104 = vector.broadcast %19 : vector<1x32xf32> to vector<32x32xf32>
    %105 = arith.mulf %103, %104 : vector<32x32xf32>
    %106 = vector.broadcast %20 : vector<1x32xf32> to vector<32x32xf32>
    %107 = arith.addf %105, %106 : vector<32x32xf32>
    %108 = arith.truncf %107 : vector<32x32xf32> to vector<32x32xbf16>
    %cst_84 = arith.constant dense<0.000000e+00> : vector<32x128xf32>
    %109 = tpu.matmul %108, %21, %cst_84 {dimension_numbers = #tpu.dot_dimension_numbers<[1], [0], [0], [1], [0, 0, 1, 1], [], []>} : vector<32x32xbf16>, vector<32x128xbf16>, vector<32x128xf32> -> vector<32x128xf32>
    %110 = vector.broadcast %22 : vector<1x128xf32> to vector<32x128xf32>
    %111 = arith.addf %109, %110 : vector<32x128xf32>
    %112 = arith.mulf %111, %111 : vector<32x128xf32>
    %113 = arith.mulf %111, %112 : vector<32x128xf32>
    %cst_85 = arith.constant 4.471500e-02 : f32
    %114 = vector.broadcast %cst_85 : f32 to vector<32x128xf32>
    %115 = arith.mulf %114, %113 : vector<32x128xf32>
    %116 = arith.addf %111, %115 : vector<32x128xf32>
    %cst_86 = arith.constant 0.797884583 : f32
    %117 = vector.broadcast %cst_86 : f32 to vector<32x128xf32>
    %118 = arith.mulf %117, %116 : vector<32x128xf32>
    %119 = math.tanh %118 : vector<32x128xf32>
    %cst_87 = arith.constant 1.000000e+00 : f32
    %120 = vector.broadcast %cst_87 : f32 to vector<32x128xf32>
    %121 = arith.addf %120, %119 : vector<32x128xf32>
    %cst_88 = arith.constant 5.000000e-01 : f32
    %122 = vector.broadcast %cst_88 : f32 to vector<32x128xf32>
    %123 = arith.mulf %122, %121 : vector<32x128xf32>
    %124 = arith.mulf %111, %123 : vector<32x128xf32>
    %125 = arith.truncf %124 : vector<32x128xf32> to vector<32x128xbf16>
    %cst_89 = arith.constant dense<0.000000e+00> : vector<32x32xf32>
    %126 = tpu.matmul %125, %23, %cst_89 {dimension_numbers = #tpu.dot_dimension_numbers<[1], [0], [0], [1], [0, 0, 1, 1], [], []>} : vector<32x128xbf16>, vector<128x32xbf16>, vector<32x32xf32> -> vector<32x32xf32>
    %127 = vector.broadcast %24 : vector<1x32xf32> to vector<32x32xf32>
    %128 = arith.addf %126, %127 : vector<32x32xf32>
    %129 = arith.addf %128, %107 : vector<32x32xf32>
    %cst_90 = arith.constant dense<0.000000e+00> : vector<32xf32>
    %130 = vector.multi_reduction <add>, %129, %cst_90 [1] : vector<32x32xf32> to vector<32xf32>
    %131 = vector.shape_cast %130 : vector<32xf32> to vector<32x1xf32>
    %cst_91 = arith.constant 3.200000e+01 : f32
    %132 = vector.broadcast %cst_91 : f32 to vector<32x1xf32>
    %133 = arith.divf %131, %132 : vector<32x1xf32>
    %134 = arith.mulf %129, %129 : vector<32x32xf32>
    %cst_92 = arith.constant dense<0.000000e+00> : vector<32xf32>
    %135 = vector.multi_reduction <add>, %134, %cst_92 [1] : vector<32x32xf32> to vector<32xf32>
    %136 = vector.shape_cast %135 : vector<32xf32> to vector<32x1xf32>
    %cst_93 = arith.constant 3.200000e+01 : f32
    %137 = vector.broadcast %cst_93 : f32 to vector<32x1xf32>
    %138 = arith.divf %136, %137 : vector<32x1xf32>
    %139 = arith.mulf %133, %133 : vector<32x1xf32>
    %140 = arith.subf %138, %139 : vector<32x1xf32>
    %141 = vector.broadcast %133 : vector<32x1xf32> to vector<32x32xf32>
    %142 = arith.subf %129, %141 : vector<32x32xf32>
    %cst_94 = arith.constant 9.99999996E-13 : f32
    %143 = vector.broadcast %cst_94 : f32 to vector<32x1xf32>
    %144 = arith.addf %140, %143 : vector<32x1xf32>
    %145 = math.rsqrt %144 : vector<32x1xf32>
    %146 = vector.broadcast %145 : vector<32x1xf32> to vector<32x32xf32>
    %147 = arith.mulf %142, %146 : vector<32x32xf32>
    %148 = vector.broadcast %25 : vector<1x32xf32> to vector<32x32xf32>
    %149 = arith.mulf %147, %148 : vector<32x32xf32>
    %150 = vector.broadcast %26 : vector<1x32xf32> to vector<32x32xf32>
    %151 = arith.addf %149, %150 : vector<32x32xf32>
    %152 = vector.shape_cast %151 : vector<32x32xf32> to vector<4x8x32xf32>
    %153 = tpu.transpose %152, [1, 0, 2] : vector<4x8x32xf32> -> vector<8x4x32xf32>
    %154 = vector.shape_cast %6 : vector<8x4x16xf32> to vector<32x16xf32>
    %155 = arith.truncf %154 : vector<32x16xf32> to vector<32x16xbf16>
    %cst_95 = arith.constant dense<0.000000e+00> : vector<32x128xf32>
    %156 = tpu.matmul %155, %9, %cst_95 {dimension_numbers = #tpu.dot_dimension_numbers<[1], [0], [0], [1], [0, 0, 1, 1], [], []>} : vector<32x16xbf16>, vector<16x128xbf16>, vector<32x128xf32> -> vector<32x128xf32>
    %157 = vector.broadcast %11 : vector<1x128xf32> to vector<32x128xf32>
    %158 = arith.addf %156, %157 : vector<32x128xf32>
    %159 = vector.shape_cast %158 : vector<32x128xf32> to vector<8x4x128xf32>
    %cst_96 = arith.constant 0.000000e+00 : f32
    %160 = vector.broadcast %cst_96 : f32 to vector<4x32xf32>
    %cst_97 = arith.constant 0.000000e+00 : f32
    %161 = vector.broadcast %cst_97 : f32 to vector<4x32xf32>
    %cst_98 = arith.constant 0.000000e+00 : f32
    %162 = vector.broadcast %cst_98 : f32 to vector<4x32xf32>
    %cst_99 = arith.constant 0.000000e+00 : f32
    %163 = vector.broadcast %cst_99 : f32 to vector<4x32xf32>
    %164 = vector.extract_strided_slice %159 {offsets = [0, 0, 0], sizes = [1, 4, 128], strides = [1, 1, 1]} : vector<8x4x128xf32> to vector<1x4x128xf32>
    %165 = vector.shape_cast %164 : vector<1x4x128xf32> to vector<4x128xf32>
    %166 = arith.truncf %160 : vector<4x32xf32> to vector<4x32xbf16>
    %cst_100 = arith.constant dense<0.000000e+00> : vector<4x128xf32>
    %167 = tpu.matmul %166, %10, %cst_100 {dimension_numbers = #tpu.dot_dimension_numbers<[1], [0], [0], [1], [0, 0, 1, 1], [], []>} : vector<4x32xbf16>, vector<32x128xbf16>, vector<4x128xf32> -> vector<4x128xf32>
    %168 = arith.addf %165, %167 : vector<4x128xf32>
    %169 = arith.negf %168 : vector<4x128xf32>
    %170 = math.exp %169 : vector<4x128xf32>
    %cst_101 = arith.constant 1.000000e+00 : f32
    %171 = vector.broadcast %cst_101 : f32 to vector<4x128xf32>
    %172 = arith.addf %171, %170 : vector<4x128xf32>
    %173 = arith.divf %171, %172 : vector<4x128xf32>
    %174 = vector.extract_strided_slice %173 {offsets = [0, 0], sizes = [4, 32], strides = [1, 1]} : vector<4x128xf32> to vector<4x32xf32>
    %175 = vector.extract_strided_slice %173 {offsets = [0, 32], sizes = [4, 32], strides = [1, 1]} : vector<4x128xf32> to vector<4x32xf32>
    %176 = vector.extract_strided_slice %173 {offsets = [0, 96], sizes = [4, 32], strides = [1, 1]} : vector<4x128xf32> to vector<4x32xf32>
    %177 = vector.extract_strided_slice %168 {offsets = [0, 64], sizes = [4, 32], strides = [1, 1]} : vector<4x128xf32> to vector<4x32xf32>
    %178 = math.tanh %177 : vector<4x32xf32>
    %179 = arith.mulf %175, %162 : vector<4x32xf32>
    %180 = arith.mulf %174, %178 : vector<4x32xf32>
    %181 = arith.addf %179, %180 : vector<4x32xf32>
    %182 = math.tanh %181 : vector<4x32xf32>
    %183 = arith.mulf %176, %182 : vector<4x32xf32>
    %184 = arith.truncf %183 : vector<4x32xf32> to vector<4x32xbf16>
    %cst_102 = arith.constant dense<0.000000e+00> : vector<4x128xf32>
    %185 = tpu.matmul %184, %12, %cst_102 {dimension_numbers = #tpu.dot_dimension_numbers<[1], [0], [0], [1], [0, 0, 1, 1], [], []>} : vector<4x32xbf16>, vector<32x128xbf16>, vector<4x128xf32> -> vector<4x128xf32>
    %186 = arith.truncf %161 : vector<4x32xf32> to vector<4x32xbf16>
    %cst_103 = arith.constant dense<0.000000e+00> : vector<4x128xf32>
    %187 = tpu.matmul %186, %13, %cst_103 {dimension_numbers = #tpu.dot_dimension_numbers<[1], [0], [0], [1], [0, 0, 1, 1], [], []>} : vector<4x32xbf16>, vector<32x128xbf16>, vector<4x128xf32> -> vector<4x128xf32>
    %188 = arith.addf %185, %187 : vector<4x128xf32>
    %189 = vector.broadcast %14 : vector<1x128xf32> to vector<4x128xf32>
    %190 = arith.addf %188, %189 : vector<4x128xf32>
    %191 = arith.negf %190 : vector<4x128xf32>
    %192 = math.exp %191 : vector<4x128xf32>
    %cst_104 = arith.constant 1.000000e+00 : f32
    %193 = vector.broadcast %cst_104 : f32 to vector<4x128xf32>
    %194 = arith.addf %193, %192 : vector<4x128xf32>
    %195 = arith.divf %193, %194 : vector<4x128xf32>
    %196 = vector.extract_strided_slice %195 {offsets = [0, 0], sizes = [4, 32], strides = [1, 1]} : vector<4x128xf32> to vector<4x32xf32>
    %197 = vector.extract_strided_slice %195 {offsets = [0, 32], sizes = [4, 32], strides = [1, 1]} : vector<4x128xf32> to vector<4x32xf32>
    %198 = vector.extract_strided_slice %195 {offsets = [0, 96], sizes = [4, 32], strides = [1, 1]} : vector<4x128xf32> to vector<4x32xf32>
    %199 = vector.extract_strided_slice %190 {offsets = [0, 64], sizes = [4, 32], strides = [1, 1]} : vector<4x128xf32> to vector<4x32xf32>
    %200 = math.tanh %199 : vector<4x32xf32>
    %201 = arith.mulf %197, %163 : vector<4x32xf32>
    %202 = arith.mulf %196, %200 : vector<4x32xf32>
    %203 = arith.addf %201, %202 : vector<4x32xf32>
    %204 = math.tanh %203 : vector<4x32xf32>
    %205 = arith.mulf %198, %204 : vector<4x32xf32>
    %c0_105 = arith.constant 0 : index
    %c0_106 = arith.constant 0 : index
    %c0_107 = arith.constant 0 : index
    %206 = vector.load %arg36[%c0_105, %c0_106, %c0_107] : memref<8x4x32xf32, #tpu.memory_space<vmem>>, vector<1x4x32xf32>
    %207 = vector.shape_cast %206 : vector<1x4x32xf32> to vector<4x32xf32>
    %208 = vector.shape_cast %205 : vector<4x32xf32> to vector<1x4x32xf32>
    tpu.vector_store %arg36[%c0_105, %c0_106, %c0_107], %208 {strides = array<i32>} : memref<8x4x32xf32, #tpu.memory_space<vmem>>, vector<1x4x32xf32>,
    %209 = vector.extract_strided_slice %159 {offsets = [1, 0, 0], sizes = [1, 4, 128], strides = [1, 1, 1]} : vector<8x4x128xf32> to vector<1x4x128xf32>
    %210 = vector.shape_cast %209 : vector<1x4x128xf32> to vector<4x128xf32>
    %211 = arith.truncf %183 : vector<4x32xf32> to vector<4x32xbf16>
    %cst_108 = arith.constant dense<0.000000e+00> : vector<4x128xf32>
    %212 = tpu.matmul %211, %10, %cst_108 {dimension_numbers = #tpu.dot_dimension_numbers<[1], [0], [0], [1], [0, 0, 1, 1], [], []>} : vector<4x32xbf16>, vector<32x128xbf16>, vector<4x128xf32> -> vector<4x128xf32>
    %213 = arith.addf %210, %212 : vector<4x128xf32>
    %214 = arith.negf %213 : vector<4x128xf32>
    %215 = math.exp %214 : vector<4x128xf32>
    %cst_109 = arith.constant 1.000000e+00 : f32
    %216 = vector.broadcast %cst_109 : f32 to vector<4x128xf32>
    %217 = arith.addf %216, %215 : vector<4x128xf32>
    %218 = arith.divf %216, %217 : vector<4x128xf32>
    %219 = vector.extract_strided_slice %218 {offsets = [0, 0], sizes = [4, 32], strides = [1, 1]} : vector<4x128xf32> to vector<4x32xf32>
    %220 = vector.extract_strided_slice %218 {offsets = [0, 32], sizes = [4, 32], strides = [1, 1]} : vector<4x128xf32> to vector<4x32xf32>
    %221 = vector.extract_strided_slice %218 {offsets = [0, 96], sizes = [4, 32], strides = [1, 1]} : vector<4x128xf32> to vector<4x32xf32>
    %222 = vector.extract_strided_slice %213 {offsets = [0, 64], sizes = [4, 32], strides = [1, 1]} : vector<4x128xf32> to vector<4x32xf32>
    %223 = math.tanh %222 : vector<4x32xf32>
    %224 = arith.mulf %220, %181 : vector<4x32xf32>
    %225 = arith.mulf %219, %223 : vector<4x32xf32>
    %226 = arith.addf %224, %225 : vector<4x32xf32>
    %227 = math.tanh %226 : vector<4x32xf32>
    %228 = arith.mulf %221, %227 : vector<4x32xf32>
    %229 = arith.truncf %228 : vector<4x32xf32> to vector<4x32xbf16>
    %cst_110 = arith.constant dense<0.000000e+00> : vector<4x128xf32>
    %230 = tpu.matmul %229, %12, %cst_110 {dimension_numbers = #tpu.dot_dimension_numbers<[1], [0], [0], [1], [0, 0, 1, 1], [], []>} : vector<4x32xbf16>, vector<32x128xbf16>, vector<4x128xf32> -> vector<4x128xf32>
    %231 = arith.truncf %205 : vector<4x32xf32> to vector<4x32xbf16>
    %cst_111 = arith.constant dense<0.000000e+00> : vector<4x128xf32>
    %232 = tpu.matmul %231, %13, %cst_111 {dimension_numbers = #tpu.dot_dimension_numbers<[1], [0], [0], [1], [0, 0, 1, 1], [], []>} : vector<4x32xbf16>, vector<32x128xbf16>, vector<4x128xf32> -> vector<4x128xf32>
    %233 = arith.addf %230, %232 : vector<4x128xf32>
    %234 = vector.broadcast %14 : vector<1x128xf32> to vector<4x128xf32>
    %235 = arith.addf %233, %234 : vector<4x128xf32>
    %236 = arith.negf %235 : vector<4x128xf32>
    %237 = math.exp %236 : vector<4x128xf32>
    %cst_112 = arith.constant 1.000000e+00 : f32
    %238 = vector.broadcast %cst_112 : f32 to vector<4x128xf32>
    %239 = arith.addf %238, %237 : vector<4x128xf32>
    %240 = arith.divf %238, %239 : vector<4x128xf32>
    %241 = vector.extract_strided_slice %240 {offsets = [0, 0], sizes = [4, 32], strides = [1, 1]} : vector<4x128xf32> to vector<4x32xf32>
    %242 = vector.extract_strided_slice %240 {offsets = [0, 32], sizes = [4, 32], strides = [1, 1]} : vector<4x128xf32> to vector<4x32xf32>
    %243 = vector.extract_strided_slice %240 {offsets = [0, 96], sizes = [4, 32], strides = [1, 1]} : vector<4x128xf32> to vector<4x32xf32>
    %244 = vector.extract_strided_slice %235 {offsets = [0, 64], sizes = [4, 32], strides = [1, 1]} : vector<4x128xf32> to vector<4x32xf32>
    %245 = math.tanh %244 : vector<4x32xf32>
    %246 = arith.mulf %242, %203 : vector<4x32xf32>
    %247 = arith.mulf %241, %245 : vector<4x32xf32>
    %248 = arith.addf %246, %247 : vector<4x32xf32>
    %249 = math.tanh %248 : vector<4x32xf32>
    %250 = arith.mulf %243, %249 : vector<4x32xf32>
    %c1 = arith.constant 1 : index
    %c0_113 = arith.constant 0 : index
    %c0_114 = arith.constant 0 : index
    %251 = vector.load %arg36[%c1, %c0_113, %c0_114] : memref<8x4x32xf32, #tpu.memory_space<vmem>>, vector<1x4x32xf32>
    %252 = vector.shape_cast %251 : vector<1x4x32xf32> to vector<4x32xf32>
    %253 = vector.shape_cast %250 : vector<4x32xf32> to vector<1x4x32xf32>
    tpu.vector_store %arg36[%c1, %c0_113, %c0_114], %253 {strides = array<i32>} : memref<8x4x32xf32, #tpu.memory_space<vmem>>, vector<1x4x32xf32>,
    %254 = vector.extract_strided_slice %159 {offsets = [2, 0, 0], sizes = [1, 4, 128], strides = [1, 1, 1]} : vector<8x4x128xf32> to vector<1x4x128xf32>
    %255 = vector.shape_cast %254 : vector<1x4x128xf32> to vector<4x128xf32>
    %256 = arith.truncf %228 : vector<4x32xf32> to vector<4x32xbf16>
    %cst_115 = arith.constant dense<0.000000e+00> : vector<4x128xf32>
    %257 = tpu.matmul %256, %10, %cst_115 {dimension_numbers = #tpu.dot_dimension_numbers<[1], [0], [0], [1], [0, 0, 1, 1], [], []>} : vector<4x32xbf16>, vector<32x128xbf16>, vector<4x128xf32> -> vector<4x128xf32>
    %258 = arith.addf %255, %257 : vector<4x128xf32>
    %259 = arith.negf %258 : vector<4x128xf32>
    %260 = math.exp %259 : vector<4x128xf32>
    %cst_116 = arith.constant 1.000000e+00 : f32
    %261 = vector.broadcast %cst_116 : f32 to vector<4x128xf32>
    %262 = arith.addf %261, %260 : vector<4x128xf32>
    %263 = arith.divf %261, %262 : vector<4x128xf32>
    %264 = vector.extract_strided_slice %263 {offsets = [0, 0], sizes = [4, 32], strides = [1, 1]} : vector<4x128xf32> to vector<4x32xf32>
    %265 = vector.extract_strided_slice %263 {offsets = [0, 32], sizes = [4, 32], strides = [1, 1]} : vector<4x128xf32> to vector<4x32xf32>
    %266 = vector.extract_strided_slice %263 {offsets = [0, 96], sizes = [4, 32], strides = [1, 1]} : vector<4x128xf32> to vector<4x32xf32>
    %267 = vector.extract_strided_slice %258 {offsets = [0, 64], sizes = [4, 32], strides = [1, 1]} : vector<4x128xf32> to vector<4x32xf32>
    %268 = math.tanh %267 : vector<4x32xf32>
    %269 = arith.mulf %265, %226 : vector<4x32xf32>
    %270 = arith.mulf %264, %268 : vector<4x32xf32>
    %271 = arith.addf %269, %270 : vector<4x32xf32>
    %272 = math.tanh %271 : vector<4x32xf32>
    %273 = arith.mulf %266, %272 : vector<4x32xf32>
    %274 = arith.truncf %273 : vector<4x32xf32> to vector<4x32xbf16>
    %cst_117 = arith.constant dense<0.000000e+00> : vector<4x128xf32>
    %275 = tpu.matmul %274, %12, %cst_117 {dimension_numbers = #tpu.dot_dimension_numbers<[1], [0], [0], [1], [0, 0, 1, 1], [], []>} : vector<4x32xbf16>, vector<32x128xbf16>, vector<4x128xf32> -> vector<4x128xf32>
    %276 = arith.truncf %250 : vector<4x32xf32> to vector<4x32xbf16>
    %cst_118 = arith.constant dense<0.000000e+00> : vector<4x128xf32>
    %277 = tpu.matmul %276, %13, %cst_118 {dimension_numbers = #tpu.dot_dimension_numbers<[1], [0], [0], [1], [0, 0, 1, 1], [], []>} : vector<4x32xbf16>, vector<32x128xbf16>, vector<4x128xf32> -> vector<4x128xf32>
    %278 = arith.addf %275, %277 : vector<4x128xf32>
    %279 = vector.broadcast %14 : vector<1x128xf32> to vector<4x128xf32>
    %280 = arith.addf %278, %279 : vector<4x128xf32>
    %281 = arith.negf %280 : vector<4x128xf32>
    %282 = math.exp %281 : vector<4x128xf32>
    %cst_119 = arith.constant 1.000000e+00 : f32
    %283 = vector.broadcast %cst_119 : f32 to vector<4x128xf32>
    %284 = arith.addf %283, %282 : vector<4x128xf32>
    %285 = arith.divf %283, %284 : vector<4x128xf32>
    %286 = vector.extract_strided_slice %285 {offsets = [0, 0], sizes = [4, 32], strides = [1, 1]} : vector<4x128xf32> to vector<4x32xf32>
    %287 = vector.extract_strided_slice %285 {offsets = [0, 32], sizes = [4, 32], strides = [1, 1]} : vector<4x128xf32> to vector<4x32xf32>
    %288 = vector.extract_strided_slice %285 {offsets = [0, 96], sizes = [4, 32], strides = [1, 1]} : vector<4x128xf32> to vector<4x32xf32>
    %289 = vector.extract_strided_slice %280 {offsets = [0, 64], sizes = [4, 32], strides = [1, 1]} : vector<4x128xf32> to vector<4x32xf32>
    %290 = math.tanh %289 : vector<4x32xf32>
    %291 = arith.mulf %287, %248 : vector<4x32xf32>
    %292 = arith.mulf %286, %290 : vector<4x32xf32>
    %293 = arith.addf %291, %292 : vector<4x32xf32>
    %294 = math.tanh %293 : vector<4x32xf32>
    %295 = arith.mulf %288, %294 : vector<4x32xf32>
    %c2 = arith.constant 2 : index
    %c0_120 = arith.constant 0 : index
    %c0_121 = arith.constant 0 : index
    %296 = vector.load %arg36[%c2, %c0_120, %c0_121] : memref<8x4x32xf32, #tpu.memory_space<vmem>>, vector<1x4x32xf32>
    %297 = vector.shape_cast %296 : vector<1x4x32xf32> to vector<4x32xf32>
    %298 = vector.shape_cast %295 : vector<4x32xf32> to vector<1x4x32xf32>
    tpu.vector_store %arg36[%c2, %c0_120, %c0_121], %298 {strides = array<i32>} : memref<8x4x32xf32, #tpu.memory_space<vmem>>, vector<1x4x32xf32>,
    %299 = vector.extract_strided_slice %159 {offsets = [3, 0, 0], sizes = [1, 4, 128], strides = [1, 1, 1]} : vector<8x4x128xf32> to vector<1x4x128xf32>
    %300 = vector.shape_cast %299 : vector<1x4x128xf32> to vector<4x128xf32>
    %301 = arith.truncf %273 : vector<4x32xf32> to vector<4x32xbf16>
    %cst_122 = arith.constant dense<0.000000e+00> : vector<4x128xf32>
    %302 = tpu.matmul %301, %10, %cst_122 {dimension_numbers = #tpu.dot_dimension_numbers<[1], [0], [0], [1], [0, 0, 1, 1], [], []>} : vector<4x32xbf16>, vector<32x128xbf16>, vector<4x128xf32> -> vector<4x128xf32>
    %303 = arith.addf %300, %302 : vector<4x128xf32>
    %304 = arith.negf %303 : vector<4x128xf32>
    %305 = math.exp %304 : vector<4x128xf32>
    %cst_123 = arith.constant 1.000000e+00 : f32
    %306 = vector.broadcast %cst_123 : f32 to vector<4x128xf32>
    %307 = arith.addf %306, %305 : vector<4x128xf32>
    %308 = arith.divf %306, %307 : vector<4x128xf32>
    %309 = vector.extract_strided_slice %308 {offsets = [0, 0], sizes = [4, 32], strides = [1, 1]} : vector<4x128xf32> to vector<4x32xf32>
    %310 = vector.extract_strided_slice %308 {offsets = [0, 32], sizes = [4, 32], strides = [1, 1]} : vector<4x128xf32> to vector<4x32xf32>
    %311 = vector.extract_strided_slice %308 {offsets = [0, 96], sizes = [4, 32], strides = [1, 1]} : vector<4x128xf32> to vector<4x32xf32>
    %312 = vector.extract_strided_slice %303 {offsets = [0, 64], sizes = [4, 32], strides = [1, 1]} : vector<4x128xf32> to vector<4x32xf32>
    %313 = math.tanh %312 : vector<4x32xf32>
    %314 = arith.mulf %310, %271 : vector<4x32xf32>
    %315 = arith.mulf %309, %313 : vector<4x32xf32>
    %316 = arith.addf %314, %315 : vector<4x32xf32>
    %317 = math.tanh %316 : vector<4x32xf32>
    %318 = arith.mulf %311, %317 : vector<4x32xf32>
    %319 = arith.truncf %318 : vector<4x32xf32> to vector<4x32xbf16>
    %cst_124 = arith.constant dense<0.000000e+00> : vector<4x128xf32>
    %320 = tpu.matmul %319, %12, %cst_124 {dimension_numbers = #tpu.dot_dimension_numbers<[1], [0], [0], [1], [0, 0, 1, 1], [], []>} : vector<4x32xbf16>, vector<32x128xbf16>, vector<4x128xf32> -> vector<4x128xf32>
    %321 = arith.truncf %295 : vector<4x32xf32> to vector<4x32xbf16>
    %cst_125 = arith.constant dense<0.000000e+00> : vector<4x128xf32>
    %322 = tpu.matmul %321, %13, %cst_125 {dimension_numbers = #tpu.dot_dimension_numbers<[1], [0], [0], [1], [0, 0, 1, 1], [], []>} : vector<4x32xbf16>, vector<32x128xbf16>, vector<4x128xf32> -> vector<4x128xf32>
    %323 = arith.addf %320, %322 : vector<4x128xf32>
    %324 = vector.broadcast %14 : vector<1x128xf32> to vector<4x128xf32>
    %325 = arith.addf %323, %324 : vector<4x128xf32>
    %326 = arith.negf %325 : vector<4x128xf32>
    %327 = math.exp %326 : vector<4x128xf32>
    %cst_126 = arith.constant 1.000000e+00 : f32
    %328 = vector.broadcast %cst_126 : f32 to vector<4x128xf32>
    %329 = arith.addf %328, %327 : vector<4x128xf32>
    %330 = arith.divf %328, %329 : vector<4x128xf32>
    %331 = vector.extract_strided_slice %330 {offsets = [0, 0], sizes = [4, 32], strides = [1, 1]} : vector<4x128xf32> to vector<4x32xf32>
    %332 = vector.extract_strided_slice %330 {offsets = [0, 32], sizes = [4, 32], strides = [1, 1]} : vector<4x128xf32> to vector<4x32xf32>
    %333 = vector.extract_strided_slice %330 {offsets = [0, 96], sizes = [4, 32], strides = [1, 1]} : vector<4x128xf32> to vector<4x32xf32>
    %334 = vector.extract_strided_slice %325 {offsets = [0, 64], sizes = [4, 32], strides = [1, 1]} : vector<4x128xf32> to vector<4x32xf32>
    %335 = math.tanh %334 : vector<4x32xf32>
    %336 = arith.mulf %332, %293 : vector<4x32xf32>
    %337 = arith.mulf %331, %335 : vector<4x32xf32>
    %338 = arith.addf %336, %337 : vector<4x32xf32>
    %339 = math.tanh %338 : vector<4x32xf32>
    %340 = arith.mulf %333, %339 : vector<4x32xf32>
    %c3 = arith.constant 3 : index
    %c0_127 = arith.constant 0 : index
    %c0_128 = arith.constant 0 : index
    %341 = vector.load %arg36[%c3, %c0_127, %c0_128] : memref<8x4x32xf32, #tpu.memory_space<vmem>>, vector<1x4x32xf32>
    %342 = vector.shape_cast %341 : vector<1x4x32xf32> to vector<4x32xf32>
    %343 = vector.shape_cast %340 : vector<4x32xf32> to vector<1x4x32xf32>
    tpu.vector_store %arg36[%c3, %c0_127, %c0_128], %343 {strides = array<i32>} : memref<8x4x32xf32, #tpu.memory_space<vmem>>, vector<1x4x32xf32>,
    %344 = vector.extract_strided_slice %159 {offsets = [4, 0, 0], sizes = [1, 4, 128], strides = [1, 1, 1]} : vector<8x4x128xf32> to vector<1x4x128xf32>
    %345 = vector.shape_cast %344 : vector<1x4x128xf32> to vector<4x128xf32>
    %346 = arith.truncf %318 : vector<4x32xf32> to vector<4x32xbf16>
    %cst_129 = arith.constant dense<0.000000e+00> : vector<4x128xf32>
    %347 = tpu.matmul %346, %10, %cst_129 {dimension_numbers = #tpu.dot_dimension_numbers<[1], [0], [0], [1], [0, 0, 1, 1], [], []>} : vector<4x32xbf16>, vector<32x128xbf16>, vector<4x128xf32> -> vector<4x128xf32>
    %348 = arith.addf %345, %347 : vector<4x128xf32>
    %349 = arith.negf %348 : vector<4x128xf32>
    %350 = math.exp %349 : vector<4x128xf32>
    %cst_130 = arith.constant 1.000000e+00 : f32
    %351 = vector.broadcast %cst_130 : f32 to vector<4x128xf32>
    %352 = arith.addf %351, %350 : vector<4x128xf32>
    %353 = arith.divf %351, %352 : vector<4x128xf32>
    %354 = vector.extract_strided_slice %353 {offsets = [0, 0], sizes = [4, 32], strides = [1, 1]} : vector<4x128xf32> to vector<4x32xf32>
    %355 = vector.extract_strided_slice %353 {offsets = [0, 32], sizes = [4, 32], strides = [1, 1]} : vector<4x128xf32> to vector<4x32xf32>
    %356 = vector.extract_strided_slice %353 {offsets = [0, 96], sizes = [4, 32], strides = [1, 1]} : vector<4x128xf32> to vector<4x32xf32>
    %357 = vector.extract_strided_slice %348 {offsets = [0, 64], sizes = [4, 32], strides = [1, 1]} : vector<4x128xf32> to vector<4x32xf32>
    %358 = math.tanh %357 : vector<4x32xf32>
    %359 = arith.mulf %355, %316 : vector<4x32xf32>
    %360 = arith.mulf %354, %358 : vector<4x32xf32>
    %361 = arith.addf %359, %360 : vector<4x32xf32>
    %362 = math.tanh %361 : vector<4x32xf32>
    %363 = arith.mulf %356, %362 : vector<4x32xf32>
    %364 = arith.truncf %363 : vector<4x32xf32> to vector<4x32xbf16>
    %cst_131 = arith.constant dense<0.000000e+00> : vector<4x128xf32>
    %365 = tpu.matmul %364, %12, %cst_131 {dimension_numbers = #tpu.dot_dimension_numbers<[1], [0], [0], [1], [0, 0, 1, 1], [], []>} : vector<4x32xbf16>, vector<32x128xbf16>, vector<4x128xf32> -> vector<4x128xf32>
    %366 = arith.truncf %340 : vector<4x32xf32> to vector<4x32xbf16>
    %cst_132 = arith.constant dense<0.000000e+00> : vector<4x128xf32>
    %367 = tpu.matmul %366, %13, %cst_132 {dimension_numbers = #tpu.dot_dimension_numbers<[1], [0], [0], [1], [0, 0, 1, 1], [], []>} : vector<4x32xbf16>, vector<32x128xbf16>, vector<4x128xf32> -> vector<4x128xf32>
    %368 = arith.addf %365, %367 : vector<4x128xf32>
    %369 = vector.broadcast %14 : vector<1x128xf32> to vector<4x128xf32>
    %370 = arith.addf %368, %369 : vector<4x128xf32>
    %371 = arith.negf %370 : vector<4x128xf32>
    %372 = math.exp %371 : vector<4x128xf32>
    %cst_133 = arith.constant 1.000000e+00 : f32
    %373 = vector.broadcast %cst_133 : f32 to vector<4x128xf32>
    %374 = arith.addf %373, %372 : vector<4x128xf32>
    %375 = arith.divf %373, %374 : vector<4x128xf32>
    %376 = vector.extract_strided_slice %375 {offsets = [0, 0], sizes = [4, 32], strides = [1, 1]} : vector<4x128xf32> to vector<4x32xf32>
    %377 = vector.extract_strided_slice %375 {offsets = [0, 32], sizes = [4, 32], strides = [1, 1]} : vector<4x128xf32> to vector<4x32xf32>
    %378 = vector.extract_strided_slice %375 {offsets = [0, 96], sizes = [4, 32], strides = [1, 1]} : vector<4x128xf32> to vector<4x32xf32>
    %379 = vector.extract_strided_slice %370 {offsets = [0, 64], sizes = [4, 32], strides = [1, 1]} : vector<4x128xf32> to vector<4x32xf32>
    %380 = math.tanh %379 : vector<4x32xf32>
    %381 = arith.mulf %377, %338 : vector<4x32xf32>
    %382 = arith.mulf %376, %380 : vector<4x32xf32>
    %383 = arith.addf %381, %382 : vector<4x32xf32>
    %384 = math.tanh %383 : vector<4x32xf32>
    %385 = arith.mulf %378, %384 : vector<4x32xf32>
    %c4 = arith.constant 4 : index
    %c0_134 = arith.constant 0 : index
    %c0_135 = arith.constant 0 : index
    %386 = vector.load %arg36[%c4, %c0_134, %c0_135] : memref<8x4x32xf32, #tpu.memory_space<vmem>>, vector<1x4x32xf32>
    %387 = vector.shape_cast %386 : vector<1x4x32xf32> to vector<4x32xf32>
    %388 = vector.shape_cast %385 : vector<4x32xf32> to vector<1x4x32xf32>
    tpu.vector_store %arg36[%c4, %c0_134, %c0_135], %388 {strides = array<i32>} : memref<8x4x32xf32, #tpu.memory_space<vmem>>, vector<1x4x32xf32>,
    %389 = vector.extract_strided_slice %159 {offsets = [5, 0, 0], sizes = [1, 4, 128], strides = [1, 1, 1]} : vector<8x4x128xf32> to vector<1x4x128xf32>
    %390 = vector.shape_cast %389 : vector<1x4x128xf32> to vector<4x128xf32>
    %391 = arith.truncf %363 : vector<4x32xf32> to vector<4x32xbf16>
    %cst_136 = arith.constant dense<0.000000e+00> : vector<4x128xf32>
    %392 = tpu.matmul %391, %10, %cst_136 {dimension_numbers = #tpu.dot_dimension_numbers<[1], [0], [0], [1], [0, 0, 1, 1], [], []>} : vector<4x32xbf16>, vector<32x128xbf16>, vector<4x128xf32> -> vector<4x128xf32>
    %393 = arith.addf %390, %392 : vector<4x128xf32>
    %394 = arith.negf %393 : vector<4x128xf32>
    %395 = math.exp %394 : vector<4x128xf32>
    %cst_137 = arith.constant 1.000000e+00 : f32
    %396 = vector.broadcast %cst_137 : f32 to vector<4x128xf32>
    %397 = arith.addf %396, %395 : vector<4x128xf32>
    %398 = arith.divf %396, %397 : vector<4x128xf32>
    %399 = vector.extract_strided_slice %398 {offsets = [0, 0], sizes = [4, 32], strides = [1, 1]} : vector<4x128xf32> to vector<4x32xf32>
    %400 = vector.extract_strided_slice %398 {offsets = [0, 32], sizes = [4, 32], strides = [1, 1]} : vector<4x128xf32> to vector<4x32xf32>
    %401 = vector.extract_strided_slice %398 {offsets = [0, 96], sizes = [4, 32], strides = [1, 1]} : vector<4x128xf32> to vector<4x32xf32>
    %402 = vector.extract_strided_slice %393 {offsets = [0, 64], sizes = [4, 32], strides = [1, 1]} : vector<4x128xf32> to vector<4x32xf32>
    %403 = math.tanh %402 : vector<4x32xf32>
    %404 = arith.mulf %400, %361 : vector<4x32xf32>
    %405 = arith.mulf %399, %403 : vector<4x32xf32>
    %406 = arith.addf %404, %405 : vector<4x32xf32>
    %407 = math.tanh %406 : vector<4x32xf32>
    %408 = arith.mulf %401, %407 : vector<4x32xf32>
    %409 = arith.truncf %408 : vector<4x32xf32> to vector<4x32xbf16>
    %cst_138 = arith.constant dense<0.000000e+00> : vector<4x128xf32>
    %410 = tpu.matmul %409, %12, %cst_138 {dimension_numbers = #tpu.dot_dimension_numbers<[1], [0], [0], [1], [0, 0, 1, 1], [], []>} : vector<4x32xbf16>, vector<32x128xbf16>, vector<4x128xf32> -> vector<4x128xf32>
    %411 = arith.truncf %385 : vector<4x32xf32> to vector<4x32xbf16>
    %cst_139 = arith.constant dense<0.000000e+00> : vector<4x128xf32>
    %412 = tpu.matmul %411, %13, %cst_139 {dimension_numbers = #tpu.dot_dimension_numbers<[1], [0], [0], [1], [0, 0, 1, 1], [], []>} : vector<4x32xbf16>, vector<32x128xbf16>, vector<4x128xf32> -> vector<4x128xf32>
    %413 = arith.addf %410, %412 : vector<4x128xf32>
    %414 = vector.broadcast %14 : vector<1x128xf32> to vector<4x128xf32>
    %415 = arith.addf %413, %414 : vector<4x128xf32>
    %416 = arith.negf %415 : vector<4x128xf32>
    %417 = math.exp %416 : vector<4x128xf32>
    %cst_140 = arith.constant 1.000000e+00 : f32
    %418 = vector.broadcast %cst_140 : f32 to vector<4x128xf32>
    %419 = arith.addf %418, %417 : vector<4x128xf32>
    %420 = arith.divf %418, %419 : vector<4x128xf32>
    %421 = vector.extract_strided_slice %420 {offsets = [0, 0], sizes = [4, 32], strides = [1, 1]} : vector<4x128xf32> to vector<4x32xf32>
    %422 = vector.extract_strided_slice %420 {offsets = [0, 32], sizes = [4, 32], strides = [1, 1]} : vector<4x128xf32> to vector<4x32xf32>
    %423 = vector.extract_strided_slice %420 {offsets = [0, 96], sizes = [4, 32], strides = [1, 1]} : vector<4x128xf32> to vector<4x32xf32>
    %424 = vector.extract_strided_slice %415 {offsets = [0, 64], sizes = [4, 32], strides = [1, 1]} : vector<4x128xf32> to vector<4x32xf32>
    %425 = math.tanh %424 : vector<4x32xf32>
    %426 = arith.mulf %422, %383 : vector<4x32xf32>
    %427 = arith.mulf %421, %425 : vector<4x32xf32>
    %428 = arith.addf %426, %427 : vector<4x32xf32>
    %429 = math.tanh %428 : vector<4x32xf32>
    %430 = arith.mulf %423, %429 : vector<4x32xf32>
    %c5 = arith.constant 5 : index
    %c0_141 = arith.constant 0 : index
    %c0_142 = arith.constant 0 : index
    %431 = vector.load %arg36[%c5, %c0_141, %c0_142] : memref<8x4x32xf32, #tpu.memory_space<vmem>>, vector<1x4x32xf32>
    %432 = vector.shape_cast %431 : vector<1x4x32xf32> to vector<4x32xf32>
    %433 = vector.shape_cast %430 : vector<4x32xf32> to vector<1x4x32xf32>
    tpu.vector_store %arg36[%c5, %c0_141, %c0_142], %433 {strides = array<i32>} : memref<8x4x32xf32, #tpu.memory_space<vmem>>, vector<1x4x32xf32>,
    %434 = vector.extract_strided_slice %159 {offsets = [6, 0, 0], sizes = [1, 4, 128], strides = [1, 1, 1]} : vector<8x4x128xf32> to vector<1x4x128xf32>
    %435 = vector.shape_cast %434 : vector<1x4x128xf32> to vector<4x128xf32>
    %436 = arith.truncf %408 : vector<4x32xf32> to vector<4x32xbf16>
    %cst_143 = arith.constant dense<0.000000e+00> : vector<4x128xf32>
    %437 = tpu.matmul %436, %10, %cst_143 {dimension_numbers = #tpu.dot_dimension_numbers<[1], [0], [0], [1], [0, 0, 1, 1], [], []>} : vector<4x32xbf16>, vector<32x128xbf16>, vector<4x128xf32> -> vector<4x128xf32>
    %438 = arith.addf %435, %437 : vector<4x128xf32>
    %439 = arith.negf %438 : vector<4x128xf32>
    %440 = math.exp %439 : vector<4x128xf32>
    %cst_144 = arith.constant 1.000000e+00 : f32
    %441 = vector.broadcast %cst_144 : f32 to vector<4x128xf32>
    %442 = arith.addf %441, %440 : vector<4x128xf32>
    %443 = arith.divf %441, %442 : vector<4x128xf32>
    %444 = vector.extract_strided_slice %443 {offsets = [0, 0], sizes = [4, 32], strides = [1, 1]} : vector<4x128xf32> to vector<4x32xf32>
    %445 = vector.extract_strided_slice %443 {offsets = [0, 32], sizes = [4, 32], strides = [1, 1]} : vector<4x128xf32> to vector<4x32xf32>
    %446 = vector.extract_strided_slice %443 {offsets = [0, 96], sizes = [4, 32], strides = [1, 1]} : vector<4x128xf32> to vector<4x32xf32>
    %447 = vector.extract_strided_slice %438 {offsets = [0, 64], sizes = [4, 32], strides = [1, 1]} : vector<4x128xf32> to vector<4x32xf32>
    %448 = math.tanh %447 : vector<4x32xf32>
    %449 = arith.mulf %445, %406 : vector<4x32xf32>
    %450 = arith.mulf %444, %448 : vector<4x32xf32>
    %451 = arith.addf %449, %450 : vector<4x32xf32>
    %452 = math.tanh %451 : vector<4x32xf32>
    %453 = arith.mulf %446, %452 : vector<4x32xf32>
    %454 = arith.truncf %453 : vector<4x32xf32> to vector<4x32xbf16>
    %cst_145 = arith.constant dense<0.000000e+00> : vector<4x128xf32>
    %455 = tpu.matmul %454, %12, %cst_145 {dimension_numbers = #tpu.dot_dimension_numbers<[1], [0], [0], [1], [0, 0, 1, 1], [], []>} : vector<4x32xbf16>, vector<32x128xbf16>, vector<4x128xf32> -> vector<4x128xf32>
    %456 = arith.truncf %430 : vector<4x32xf32> to vector<4x32xbf16>
    %cst_146 = arith.constant dense<0.000000e+00> : vector<4x128xf32>
    %457 = tpu.matmul %456, %13, %cst_146 {dimension_numbers = #tpu.dot_dimension_numbers<[1], [0], [0], [1], [0, 0, 1, 1], [], []>} : vector<4x32xbf16>, vector<32x128xbf16>, vector<4x128xf32> -> vector<4x128xf32>
    %458 = arith.addf %455, %457 : vector<4x128xf32>
    %459 = vector.broadcast %14 : vector<1x128xf32> to vector<4x128xf32>
    %460 = arith.addf %458, %459 : vector<4x128xf32>
    %461 = arith.negf %460 : vector<4x128xf32>
    %462 = math.exp %461 : vector<4x128xf32>
    %cst_147 = arith.constant 1.000000e+00 : f32
    %463 = vector.broadcast %cst_147 : f32 to vector<4x128xf32>
    %464 = arith.addf %463, %462 : vector<4x128xf32>
    %465 = arith.divf %463, %464 : vector<4x128xf32>
    %466 = vector.extract_strided_slice %465 {offsets = [0, 0], sizes = [4, 32], strides = [1, 1]} : vector<4x128xf32> to vector<4x32xf32>
    %467 = vector.extract_strided_slice %465 {offsets = [0, 32], sizes = [4, 32], strides = [1, 1]} : vector<4x128xf32> to vector<4x32xf32>
    %468 = vector.extract_strided_slice %465 {offsets = [0, 96], sizes = [4, 32], strides = [1, 1]} : vector<4x128xf32> to vector<4x32xf32>
    %469 = vector.extract_strided_slice %460 {offsets = [0, 64], sizes = [4, 32], strides = [1, 1]} : vector<4x128xf32> to vector<4x32xf32>
    %470 = math.tanh %469 : vector<4x32xf32>
    %471 = arith.mulf %467, %428 : vector<4x32xf32>
    %472 = arith.mulf %466, %470 : vector<4x32xf32>
    %473 = arith.addf %471, %472 : vector<4x32xf32>
    %474 = math.tanh %473 : vector<4x32xf32>
    %475 = arith.mulf %468, %474 : vector<4x32xf32>
    %c6 = arith.constant 6 : index
    %c0_148 = arith.constant 0 : index
    %c0_149 = arith.constant 0 : index
    %476 = vector.load %arg36[%c6, %c0_148, %c0_149] : memref<8x4x32xf32, #tpu.memory_space<vmem>>, vector<1x4x32xf32>
    %477 = vector.shape_cast %476 : vector<1x4x32xf32> to vector<4x32xf32>
    %478 = vector.shape_cast %475 : vector<4x32xf32> to vector<1x4x32xf32>
    tpu.vector_store %arg36[%c6, %c0_148, %c0_149], %478 {strides = array<i32>} : memref<8x4x32xf32, #tpu.memory_space<vmem>>, vector<1x4x32xf32>,
    %479 = vector.extract_strided_slice %159 {offsets = [7, 0, 0], sizes = [1, 4, 128], strides = [1, 1, 1]} : vector<8x4x128xf32> to vector<1x4x128xf32>
    %480 = vector.shape_cast %479 : vector<1x4x128xf32> to vector<4x128xf32>
    %481 = arith.truncf %453 : vector<4x32xf32> to vector<4x32xbf16>
    %cst_150 = arith.constant dense<0.000000e+00> : vector<4x128xf32>
    %482 = tpu.matmul %481, %10, %cst_150 {dimension_numbers = #tpu.dot_dimension_numbers<[1], [0], [0], [1], [0, 0, 1, 1], [], []>} : vector<4x32xbf16>, vector<32x128xbf16>, vector<4x128xf32> -> vector<4x128xf32>
    %483 = arith.addf %480, %482 : vector<4x128xf32>
    %484 = arith.negf %483 : vector<4x128xf32>
    %485 = math.exp %484 : vector<4x128xf32>
    %cst_151 = arith.constant 1.000000e+00 : f32
    %486 = vector.broadcast %cst_151 : f32 to vector<4x128xf32>
    %487 = arith.addf %486, %485 : vector<4x128xf32>
    %488 = arith.divf %486, %487 : vector<4x128xf32>
    %489 = vector.extract_strided_slice %488 {offsets = [0, 0], sizes = [4, 32], strides = [1, 1]} : vector<4x128xf32> to vector<4x32xf32>
    %490 = vector.extract_strided_slice %488 {offsets = [0, 32], sizes = [4, 32], strides = [1, 1]} : vector<4x128xf32> to vector<4x32xf32>
    %491 = vector.extract_strided_slice %488 {offsets = [0, 96], sizes = [4, 32], strides = [1, 1]} : vector<4x128xf32> to vector<4x32xf32>
    %492 = vector.extract_strided_slice %483 {offsets = [0, 64], sizes = [4, 32], strides = [1, 1]} : vector<4x128xf32> to vector<4x32xf32>
    %493 = math.tanh %492 : vector<4x32xf32>
    %494 = arith.mulf %490, %451 : vector<4x32xf32>
    %495 = arith.mulf %489, %493 : vector<4x32xf32>
    %496 = arith.addf %494, %495 : vector<4x32xf32>
    %497 = math.tanh %496 : vector<4x32xf32>
    %498 = arith.mulf %491, %497 : vector<4x32xf32>
    %499 = arith.truncf %498 : vector<4x32xf32> to vector<4x32xbf16>
    %cst_152 = arith.constant dense<0.000000e+00> : vector<4x128xf32>
    %500 = tpu.matmul %499, %12, %cst_152 {dimension_numbers = #tpu.dot_dimension_numbers<[1], [0], [0], [1], [0, 0, 1, 1], [], []>} : vector<4x32xbf16>, vector<32x128xbf16>, vector<4x128xf32> -> vector<4x128xf32>
    %501 = arith.truncf %475 : vector<4x32xf32> to vector<4x32xbf16>
    %cst_153 = arith.constant dense<0.000000e+00> : vector<4x128xf32>
    %502 = tpu.matmul %501, %13, %cst_153 {dimension_numbers = #tpu.dot_dimension_numbers<[1], [0], [0], [1], [0, 0, 1, 1], [], []>} : vector<4x32xbf16>, vector<32x128xbf16>, vector<4x128xf32> -> vector<4x128xf32>
    %503 = arith.addf %500, %502 : vector<4x128xf32>
    %504 = vector.broadcast %14 : vector<1x128xf32> to vector<4x128xf32>
    %505 = arith.addf %503, %504 : vector<4x128xf32>
    %506 = arith.negf %505 : vector<4x128xf32>
    %507 = math.exp %506 : vector<4x128xf32>
    %cst_154 = arith.constant 1.000000e+00 : f32
    %508 = vector.broadcast %cst_154 : f32 to vector<4x128xf32>
    %509 = arith.addf %508, %507 : vector<4x128xf32>
    %510 = arith.divf %508, %509 : vector<4x128xf32>
    %511 = vector.extract_strided_slice %510 {offsets = [0, 0], sizes = [4, 32], strides = [1, 1]} : vector<4x128xf32> to vector<4x32xf32>
    %512 = vector.extract_strided_slice %510 {offsets = [0, 32], sizes = [4, 32], strides = [1, 1]} : vector<4x128xf32> to vector<4x32xf32>
    %513 = vector.extract_strided_slice %510 {offsets = [0, 96], sizes = [4, 32], strides = [1, 1]} : vector<4x128xf32> to vector<4x32xf32>
    %514 = vector.extract_strided_slice %505 {offsets = [0, 64], sizes = [4, 32], strides = [1, 1]} : vector<4x128xf32> to vector<4x32xf32>
    %515 = math.tanh %514 : vector<4x32xf32>
    %516 = arith.mulf %512, %473 : vector<4x32xf32>
    %517 = arith.mulf %511, %515 : vector<4x32xf32>
    %518 = arith.addf %516, %517 : vector<4x32xf32>
    %519 = math.tanh %518 : vector<4x32xf32>
    %520 = arith.mulf %513, %519 : vector<4x32xf32>
    %c7 = arith.constant 7 : index
    %c0_155 = arith.constant 0 : index
    %c0_156 = arith.constant 0 : index
    %521 = vector.load %arg36[%c7, %c0_155, %c0_156] : memref<8x4x32xf32, #tpu.memory_space<vmem>>, vector<1x4x32xf32>
    %522 = vector.shape_cast %521 : vector<1x4x32xf32> to vector<4x32xf32>
    %523 = vector.shape_cast %520 : vector<4x32xf32> to vector<1x4x32xf32>
    tpu.vector_store %arg36[%c7, %c0_155, %c0_156], %523 {strides = array<i32>} : memref<8x4x32xf32, #tpu.memory_space<vmem>>, vector<1x4x32xf32>,
    %c0_157 = arith.constant 0 : index
    %c0_158 = arith.constant 0 : index
    %c0_159 = arith.constant 0 : index
    %524 = vector.load %arg36[%c0_157, %c0_158, %c0_159] : memref<8x4x32xf32, #tpu.memory_space<vmem>>, vector<8x4x32xf32>
    %525 = vector.shape_cast %524 : vector<8x4x32xf32> to vector<32x32xf32>
    %526 = arith.truncf %525 : vector<32x32xf32> to vector<32x32xbf16>
    %cst_160 = arith.constant dense<0.000000e+00> : vector<32x96xf32>
    %527 = tpu.matmul %526, %27, %cst_160 {dimension_numbers = #tpu.dot_dimension_numbers<[1], [0], [0], [1], [0, 0, 1, 1], [], []>} : vector<32x32xbf16>, vector<32x96xbf16>, vector<32x96xf32> -> vector<32x96xf32>
    %528 = vector.broadcast %28 : vector<1x96xf32> to vector<32x96xf32>
    %529 = arith.addf %527, %528 : vector<32x96xf32>
    %530 = vector.extract_strided_slice %529 {offsets = [0, 0], sizes = [32, 32], strides = [1, 1]} : vector<32x96xf32> to vector<32x32xf32>
    %531 = vector.shape_cast %530 : vector<32x32xf32> to vector<8x4x32xf32>
    %532 = vector.extract_strided_slice %529 {offsets = [0, 32], sizes = [32, 32], strides = [1, 1]} : vector<32x96xf32> to vector<32x32xf32>
    %533 = vector.shape_cast %532 : vector<32x32xf32> to vector<8x4x32xf32>
    %534 = vector.extract_strided_slice %529 {offsets = [0, 64], sizes = [32, 32], strides = [1, 1]} : vector<32x96xf32> to vector<32x32xf32>
    %535 = vector.shape_cast %534 : vector<32x32xf32> to vector<8x4x32xf32>
    %536 = vector.shape_cast %531 : vector<8x4x32xf32> to vector<8x4x1x32xf32>
    %537 = vector.shape_cast %533 : vector<8x4x32xf32> to vector<8x1x4x32xf32>
    %538 = vector.broadcast %536 : vector<8x4x1x32xf32> to vector<8x4x4x32xf32>
    %539 = vector.broadcast %537 : vector<8x1x4x32xf32> to vector<8x4x4x32xf32>
    %540 = arith.mulf %538, %539 : vector<8x4x4x32xf32>
    %541 = vector.shape_cast %540 : vector<8x4x4x32xf32> to vector<128x32xf32>
    %cst_161 = arith.constant dense<0.000000e+00> : vector<128x8xf32>
    %542 = tpu.matmul %541, %7, %cst_161 {dimension_numbers = #tpu.dot_dimension_numbers<[1], [0], [0], [1], [0, 0, 1, 1], [], []>} : vector<128x32xf32>, vector<32x8xf32>, vector<128x8xf32> -> vector<128x8xf32>
    %543 = vector.shape_cast %542 : vector<128x8xf32> to vector<8x4x4x8xf32>
    %cst_162 = arith.constant dense<0xFF800000> : vector<8x4x8xf32>
    %544 = vector.multi_reduction <maximumf>, %543, %cst_162 [2] : vector<8x4x4x8xf32> to vector<8x4x8xf32>
    %545 = vector.shape_cast %544 : vector<8x4x8xf32> to vector<8x4x1x8xf32>
    %546 = vector.broadcast %545 : vector<8x4x1x8xf32> to vector<8x4x4x8xf32>
    %547 = arith.subf %543, %546 : vector<8x4x4x8xf32>
    %548 = math.exp %547 : vector<8x4x4x8xf32>
    %cst_163 = arith.constant dense<0.000000e+00> : vector<8x4x8xf32>
    %549 = vector.multi_reduction <add>, %548, %cst_163 [2] : vector<8x4x4x8xf32> to vector<8x4x8xf32>
    %550 = vector.shape_cast %549 : vector<8x4x8xf32> to vector<8x4x1x8xf32>
    %551 = tpu.reciprocal %550 {approx = true} : vector<8x4x1x8xf32> -> vector<8x4x1x8xf32>
    %552 = vector.broadcast %551 : vector<8x4x1x8xf32> to vector<8x4x4x8xf32>
    %553 = arith.mulf %548, %552 : vector<8x4x4x8xf32>
    %554 = vector.shape_cast %553 : vector<8x4x4x8xf32> to vector<128x8xf32>
    %cst_164 = arith.constant dense<0.000000e+00> : vector<128x32xf32>
    %555 = tpu.matmul %554, %8, %cst_164 {dimension_numbers = #tpu.dot_dimension_numbers<[1], [0], [0], [1], [0, 0, 1, 1], [], []>} : vector<128x8xf32>, vector<8x32xf32>, vector<128x32xf32> -> vector<128x32xf32>
    %556 = vector.shape_cast %555 : vector<128x32xf32> to vector<8x4x4x32xf32>
    %557 = vector.shape_cast %535 : vector<8x4x32xf32> to vector<8x1x4x32xf32>
    %558 = vector.broadcast %557 : vector<8x1x4x32xf32> to vector<8x4x4x32xf32>
    %559 = arith.mulf %556, %558 : vector<8x4x4x32xf32>
    %cst_165 = arith.constant dense<0.000000e+00> : vector<8x4x32xf32>
    %560 = vector.multi_reduction <add>, %559, %cst_165 [2] : vector<8x4x4x32xf32> to vector<8x4x32xf32>
    %561 = vector.shape_cast %560 : vector<8x4x32xf32> to vector<32x32xf32>
    %562 = arith.truncf %561 : vector<32x32xf32> to vector<32x32xbf16>
    %cst_166 = arith.constant dense<0.000000e+00> : vector<32x32xf32>
    %563 = tpu.matmul %562, %29, %cst_166 {dimension_numbers = #tpu.dot_dimension_numbers<[1], [0], [0], [1], [0, 0, 1, 1], [], []>} : vector<32x32xbf16>, vector<32x32xbf16>, vector<32x32xf32> -> vector<32x32xf32>
    %564 = vector.broadcast %30 : vector<1x32xf32> to vector<32x32xf32>
    %565 = arith.addf %563, %564 : vector<32x32xf32>
    %566 = vector.shape_cast %565 : vector<32x32xf32> to vector<8x4x32xf32>
    %567 = vector.shape_cast %566 : vector<8x4x32xf32> to vector<32x32xf32>
    %568 = arith.truncf %567 : vector<32x32xf32> to vector<32x32xbf16>
    %cst_167 = arith.constant dense<0.000000e+00> : vector<32x32xf32>
    %569 = tpu.matmul %568, %31, %cst_167 {dimension_numbers = #tpu.dot_dimension_numbers<[1], [0], [0], [1], [0, 0, 1, 1], [], []>} : vector<32x32xbf16>, vector<32x32xbf16>, vector<32x32xf32> -> vector<32x32xf32>
    %570 = vector.broadcast %32 : vector<1x32xf32> to vector<32x32xf32>
    %571 = arith.addf %569, %570 : vector<32x32xf32>
    %572 = vector.shape_cast %571 : vector<32x32xf32> to vector<8x4x32xf32>
    %573 = vector.shape_cast %153 : vector<8x4x32xf32> to vector<32x32xf32>
    %574 = arith.truncf %573 : vector<32x32xf32> to vector<32x32xbf16>
    %cst_168 = arith.constant dense<0.000000e+00> : vector<32x64xf32>
    %575 = tpu.matmul %574, %33, %cst_168 {dimension_numbers = #tpu.dot_dimension_numbers<[1], [0], [0], [1], [0, 0, 1, 1], [], []>} : vector<32x32xbf16>, vector<32x64xbf16>, vector<32x64xf32> -> vector<32x64xf32>
    %576 = vector.broadcast %34 : vector<1x64xf32> to vector<32x64xf32>
    %577 = arith.addf %575, %576 : vector<32x64xf32>
    %578 = vector.extract_strided_slice %577 {offsets = [0, 0], sizes = [32, 32], strides = [1, 1]} : vector<32x64xf32> to vector<32x32xf32>
    %579 = vector.shape_cast %578 : vector<32x32xf32> to vector<8x4x32xf32>
    %580 = vector.extract_strided_slice %577 {offsets = [0, 32], sizes = [32, 32], strides = [1, 1]} : vector<32x64xf32> to vector<32x32xf32>
    %581 = vector.shape_cast %580 : vector<32x32xf32> to vector<8x4x32xf32>
    %582 = vector.shape_cast %572 : vector<8x4x32xf32> to vector<8x4x1x32xf32>
    %583 = vector.shape_cast %579 : vector<8x4x32xf32> to vector<8x1x4x32xf32>
    %584 = vector.broadcast %582 : vector<8x4x1x32xf32> to vector<8x4x4x32xf32>
    %585 = vector.broadcast %583 : vector<8x1x4x32xf32> to vector<8x4x4x32xf32>
    %586 = arith.mulf %584, %585 : vector<8x4x4x32xf32>
    %587 = vector.shape_cast %586 : vector<8x4x4x32xf32> to vector<128x32xf32>
    %cst_169 = arith.constant dense<0.000000e+00> : vector<128x8xf32>
    %588 = tpu.matmul %587, %7, %cst_169 {dimension_numbers = #tpu.dot_dimension_numbers<[1], [0], [0], [1], [0, 0, 1, 1], [], []>} : vector<128x32xf32>, vector<32x8xf32>, vector<128x8xf32> -> vector<128x8xf32>
    %589 = vector.shape_cast %588 : vector<128x8xf32> to vector<8x4x4x8xf32>
    %cst_170 = arith.constant dense<0xFF800000> : vector<8x4x8xf32>
    %590 = vector.multi_reduction <maximumf>, %589, %cst_170 [2] : vector<8x4x4x8xf32> to vector<8x4x8xf32>
    %591 = vector.shape_cast %590 : vector<8x4x8xf32> to vector<8x4x1x8xf32>
    %592 = vector.broadcast %591 : vector<8x4x1x8xf32> to vector<8x4x4x8xf32>
    %593 = arith.subf %589, %592 : vector<8x4x4x8xf32>
    %594 = math.exp %593 : vector<8x4x4x8xf32>
    %cst_171 = arith.constant dense<0.000000e+00> : vector<8x4x8xf32>
    %595 = vector.multi_reduction <add>, %594, %cst_171 [2] : vector<8x4x4x8xf32> to vector<8x4x8xf32>
    %596 = vector.shape_cast %595 : vector<8x4x8xf32> to vector<8x4x1x8xf32>
    %597 = tpu.reciprocal %596 {approx = true} : vector<8x4x1x8xf32> -> vector<8x4x1x8xf32>
    %598 = vector.broadcast %597 : vector<8x4x1x8xf32> to vector<8x4x4x8xf32>
    %599 = arith.mulf %594, %598 : vector<8x4x4x8xf32>
    %600 = vector.shape_cast %599 : vector<8x4x4x8xf32> to vector<128x8xf32>
    %cst_172 = arith.constant dense<0.000000e+00> : vector<128x32xf32>
    %601 = tpu.matmul %600, %8, %cst_172 {dimension_numbers = #tpu.dot_dimension_numbers<[1], [0], [0], [1], [0, 0, 1, 1], [], []>} : vector<128x8xf32>, vector<8x32xf32>, vector<128x32xf32> -> vector<128x32xf32>
    %602 = vector.shape_cast %601 : vector<128x32xf32> to vector<8x4x4x32xf32>
    %603 = vector.shape_cast %581 : vector<8x4x32xf32> to vector<8x1x4x32xf32>
    %604 = vector.broadcast %603 : vector<8x1x4x32xf32> to vector<8x4x4x32xf32>
    %605 = arith.mulf %602, %604 : vector<8x4x4x32xf32>
    %cst_173 = arith.constant dense<0.000000e+00> : vector<8x4x32xf32>
    %606 = vector.multi_reduction <add>, %605, %cst_173 [2] : vector<8x4x4x32xf32> to vector<8x4x32xf32>
    %607 = vector.shape_cast %606 : vector<8x4x32xf32> to vector<32x32xf32>
    %608 = arith.truncf %607 : vector<32x32xf32> to vector<32x32xbf16>
    %cst_174 = arith.constant dense<0.000000e+00> : vector<32x32xf32>
    %609 = tpu.matmul %608, %35, %cst_174 {dimension_numbers = #tpu.dot_dimension_numbers<[1], [0], [0], [1], [0, 0, 1, 1], [], []>} : vector<32x32xbf16>, vector<32x32xbf16>, vector<32x32xf32> -> vector<32x32xf32>
    %610 = vector.broadcast %36 : vector<1x32xf32> to vector<32x32xf32>
    %611 = arith.addf %609, %610 : vector<32x32xf32>
    %612 = vector.shape_cast %611 : vector<32x32xf32> to vector<8x4x32xf32>
    %613 = vector.extract_strided_slice %566 {offsets = [7, 0, 0], sizes = [1, 4, 32], strides = [1, 1, 1]} : vector<8x4x32xf32> to vector<1x4x32xf32>
    %614 = vector.shape_cast %613 : vector<1x4x32xf32> to vector<4x32xf32>
    %615 = vector.extract_strided_slice %612 {offsets = [7, 0, 0], sizes = [1, 4, 32], strides = [1, 1, 1]} : vector<8x4x32xf32> to vector<1x4x32xf32>
    %616 = vector.shape_cast %615 : vector<1x4x32xf32> to vector<4x32xf32>
    %617 = vector.extract_strided_slice %37 {offsets = [0, 0], sizes = [1, 32], strides = [1, 1]} : vector<1x64xf32> to vector<1x32xf32>
    %618 = vector.broadcast %617 : vector<1x32xf32> to vector<4x32xf32>
    %619 = arith.mulf %614, %618 : vector<4x32xf32>
    %cst_175 = arith.constant dense<0.000000e+00> : vector<4xf32>
    %620 = vector.multi_reduction <add>, %619, %cst_175 [1] : vector<4x32xf32> to vector<4xf32>
    %621 = vector.shape_cast %620 : vector<4xf32> to vector<4x1xf32>
    %622 = vector.extract_strided_slice %37 {offsets = [0, 32], sizes = [1, 32], strides = [1, 1]} : vector<1x64xf32> to vector<1x32xf32>
    %623 = vector.broadcast %622 : vector<1x32xf32> to vector<4x32xf32>
    %624 = arith.mulf %616, %623 : vector<4x32xf32>
    %cst_176 = arith.constant dense<0.000000e+00> : vector<4xf32>
    %625 = vector.multi_reduction <add>, %624, %cst_176 [1] : vector<4x32xf32> to vector<4xf32>
    %626 = vector.shape_cast %625 : vector<4xf32> to vector<4x1xf32>
    %627 = arith.addf %621, %626 : vector<4x1xf32>
    %628 = vector.broadcast %38 : vector<1x1xf32> to vector<4x1xf32>
    %629 = arith.addf %627, %628 : vector<4x1xf32>
    %c0_177 = arith.constant 0 : index
    %c0_178 = arith.constant 0 : index
    %630 = vector.load %arg35[%c0_177, %c0_178] : memref<4x1xf32, #tpu.memory_space<vmem>>, vector<4x1xf32>
    tpu.vector_store %arg35[%c0_177, %c0_178], %629 {strides = array<i32>} : memref<4x1xf32, #tpu.memory_space<vmem>>, vector<4x1xf32>,
    return
  }
}

</mosaic_0001>

<llo_original>
// kernel: tpu_custom_call.1
$region0: #{tpu_custom_call.1}
  #allocation0 [shape = 'u32[]', space=smem, size = 0x4, offset = 0x4, fixed_abs, tag = 'smem constant byte address 0x4 - core index']
  #allocation1 [shape = 'u32[72,128]{1,0:T(1,128)}', space=vmem, size = 0x9000, scoped, tag = 'internal scratch']
  #allocation2 [shape = 'f32[8,4,32]{2,1,0:T(4,128)}', space=vmem, size = 0x4000, scoped, tag = 'scratch operand']
  #allocation3 [shape = 'f32[1,1]{1,0:T(1,128)S(1)}', space=vmem, size = 0x200, scoped, tag = 'scoped memory for tpu_custom_call.1']
  %s0 = inlined_call_operand.smem [shape: u32[36], index: -1, kind: input, shape index: {}]
  %s1 = sld [smem:[%s0]]
  %s2 = scalar_lea.smem %s0, 1
  %s3 = sld [smem:[%s2]]
  %s4 = scalar_lea.smem %s0, 2
  %s5 = sld [smem:[%s4]]
  %s6 = scalar_lea.smem %s0, 3
  %s7 = sld [smem:[%s6]]
  %s8 = scalar_lea.smem %s0, 4
  %s9 = sld [smem:[%s8]]
  %s10 = scalar_lea.smem %s0, 5
  %s11 = sld [smem:[%s10]]
  %s12 = scalar_lea.smem %s0, 6
  %s13 = sld [smem:[%s12]]
  %s14 = scalar_lea.smem %s0, 7
  %s15 = sld [smem:[%s14]]
  %s16 = scalar_lea.smem %s0, 8
  %s17 = sld [smem:[%s16]]
  %s18 = scalar_lea.smem %s0, 9
  %s19 = sld [smem:[%s18]]
  %s20 = scalar_lea.smem %s0, 10
  %s21 = sld [smem:[%s20]]
  %s22 = scalar_lea.smem %s0, 11
  %s23 = sld [smem:[%s22]]
  %s24 = scalar_lea.smem %s0, 12
  %s25 = sld [smem:[%s24]]
  %s26 = scalar_lea.smem %s0, 13
  %s27 = sld [smem:[%s26]]
  %s28 = scalar_lea.smem %s0, 14
  %s29 = sld [smem:[%s28]]
  %s30 = scalar_lea.smem %s0, 15
  %s31 = sld [smem:[%s30]]
  %s32 = scalar_lea.smem %s0, 16
  %s33 = sld [smem:[%s32]]
  %s34 = scalar_lea.smem %s0, 17
  %s35 = sld [smem:[%s34]]
  %s36 = scalar_lea.smem %s0, 18
  %s37 = sld [smem:[%s36]]
  %s38 = scalar_lea.smem %s0, 19
  %s39 = sld [smem:[%s38]]
  %s40 = scalar_lea.smem %s0, 20
  %s41 = sld [smem:[%s40]]
  %s42 = scalar_lea.smem %s0, 21
  %s43 = sld [smem:[%s42]]
  %s44 = scalar_lea.smem %s0, 22
  %s45 = sld [smem:[%s44]]
  %s46 = scalar_lea.smem %s0, 23
  %s47 = sld [smem:[%s46]]
  %s48 = scalar_lea.smem %s0, 24
  %s49 = sld [smem:[%s48]]
  %s50 = scalar_lea.smem %s0, 25
  %s51 = sld [smem:[%s50]]
  %s52 = scalar_lea.smem %s0, 26
  %s53 = sld [smem:[%s52]]
  %s54 = scalar_lea.smem %s0, 27
  %s55 = sld [smem:[%s54]]
  %s56 = scalar_lea.smem %s0, 28
  %s57 = sld [smem:[%s56]]
  %s58 = scalar_lea.smem %s0, 29
  %s59 = sld [smem:[%s58]]
  %s60 = scalar_lea.smem %s0, 30
  %s61 = sld [smem:[%s60]]
  %s62 = scalar_lea.smem %s0, 31
  %s63 = sld [smem:[%s62]]
  %s64 = scalar_lea.smem %s0, 32
  %s65 = sld [smem:[%s64]]
  %s66 = scalar_lea.smem %s0, 33
  %s67 = sld [smem:[%s66]]
  %s68 = scalar_lea.smem %s0, 34
  %s69 = sld [smem:[%s68]]
  %s70 = scalar_lea.smem %s0, 35
  %s71 = sld [smem:[%s70]]
  %s72 = sld [smem:[#allocation0]]
  $region230: #{tpu_custom_call.1} parent=0
    _
  %s74 = ssub.s32 1, %s72
  %s75 = scalar_select 0, %s74, %s72
  %v76 = vstv %s69
  %77 = vst [vmem:[#allocation3] sm:$0x1] %v76
  $region1: #{tpu_custom_call.1} parent=0
    #allocation4 [shape = 'u8[2048]{0}', space=vmem, size = 0x800, scoped, tag = 'input window, operand 1, single buffered']
    #allocation5 [shape = 's32[1]{0}', space=sflag, size = 0x4, scoped, tag = 'scoped memory for tpu_custom_call.1']
    #allocation6 [shape = 'u8[4096]{0}', space=vmem, size = 0x1000, scoped, tag = 'input window, operand 4, single buffered']
    #allocation7 [shape = 's32[1]{0}', space=sflag, size = 0x4, scoped, tag = 'scoped memory for tpu_custom_call.1']
    #allocation8 [shape = 'u8[4096]{0}', space=vmem, size = 0x1000, scoped, tag = 'input window, operand 5, single buffered']
    #allocation9 [shape = 'u8[512]{0}', space=vmem, size = 0x400, scoped, tag = 'input window, operand 10, single buffered']
    #allocation10 [shape = 's32[1]{0}', space=sflag, size = 0x4, scoped, tag = 'scoped memory for tpu_custom_call.1']
    #allocation11 [shape = 'u8[8192]{0}', space=vmem, size = 0x2000, scoped, tag = 'input window, operand 11, single buffered']
    #allocation12 [shape = 'u8[512]{0}', space=vmem, size = 0x400, scoped, tag = 'input window, operand 12, single buffered']
    #allocation13 [shape = 's32[1]{0}', space=sflag, size = 0x4, scoped, tag = 'scoped memory for tpu_custom_call.1']
    #allocation14 [shape = 'u8[8192]{0}', space=vmem, size = 0x2000, scoped, tag = 'input window, operand 13, single buffered']
    #allocation15 [shape = 'u8[512]{0}', space=vmem, size = 0x400, scoped, tag = 'input window, operand 14, single buffered']
    #allocation16 [shape = 's32[1]{0}', space=sflag, size = 0x4, scoped, tag = 'scoped memory for tpu_custom_call.1']
    #allocation17 [shape = 'u8[512]{0}', space=vmem, size = 0x400, scoped, tag = 'input window, operand 15, single buffered']
    #allocation18 [shape = 'u8[512]{0}', space=vmem, size = 0x400, scoped, tag = 'input window, operand 16, single buffered']
    #allocation19 [shape = 's32[1]{0}', space=sflag, size = 0x4, scoped, tag = 'scoped memory for tpu_custom_call.1']
    #allocation20 [shape = 'u8[8192]{0}', space=vmem, size = 0x2000, scoped, tag = 'input window, operand 17, single buffered']
    #allocation21 [shape = 'u8[512]{0}', space=vmem, size = 0x400, scoped, tag = 'input window, operand 18, single buffered']
    #allocation22 [shape = 's32[1]{0}', space=sflag, size = 0x4, scoped, tag = 'scoped memory for tpu_custom_call.1']
    #allocation23 [shape = 'u8[512]{0}', space=vmem, size = 0x400, scoped, tag = 'input window, operand 20, single buffered']
    #allocation24 [shape = 'u8[512]{0}', space=vmem, size = 0x400, scoped, tag = 'input window, operand 21, single buffered']
    #allocation25 [shape = 's32[1]{0}', space=sflag, size = 0x4, scoped, tag = 'scoped memory for tpu_custom_call.1']
    #allocation26 [shape = 'u8[512]{0}', space=vmem, size = 0x400, scoped, tag = 'input window, operand 22, single buffered']
    #allocation27 [shape = 'u8[8192]{0}', space=vmem, size = 0x2000, scoped, tag = 'input window, operand 23, single buffered']
    #allocation28 [shape = 's32[1]{0}', space=sflag, size = 0x4, scoped, tag = 'scoped memory for tpu_custom_call.1']
    #allocation29 [shape = 'u8[512]{0}', space=vmem, size = 0x400, scoped, tag = 'input window, operand 24, single buffered']
    #allocation30 [shape = 'u8[8192]{0}', space=vmem, size = 0x2000, scoped, tag = 'input window, operand 27, single buffered']
    #allocation31 [shape = 's32[1]{0}', space=sflag, size = 0x4, scoped, tag = 'scoped memory for tpu_custom_call.1']
    #allocation32 [shape = 'u8[8192]{0}', space=vmem, size = 0x2000, scoped, tag = 'input window, operand 29, single buffered']
    #allocation33 [shape = 'u8[8192]{0}', space=vmem, size = 0x2000, scoped, tag = 'input window, operand 31, single buffered']
    #allocation34 [shape = 's32[1]{0}', space=sflag, size = 0x4, scoped, tag = 'scoped memory for tpu_custom_call.1']
    %78 = vsyncpa [#allocation5], 0
    %79 = vsyncpa [#allocation7], 0
    %80 = vsyncpa [#allocation10], 0
    %81 = vsyncpa [#allocation13], 0
    %82 = vsyncpa [#allocation16], 0
    %83 = vsyncpa [#allocation19], 0
    %84 = vsyncpa [#allocation22], 0
    %85 = vsyncpa [#allocation25], 0
    %86 = vsyncpa [#allocation28], 0
    %87 = vsyncpa [#allocation31], 0
    %88 = vsyncpa [#allocation34], 0
    // Predicated region
    $region2: #{tpu_custom_call.1} parent=1 // pred_check
      _
    $region3: #{tpu_custom_call.1} parent=1 // pred_check_branch
      %90 = sbr.rel (0) target = $region5
    $region4: #{tpu_custom_call.1} parent=1 // pred_region
      _
    $region5: #{tpu_custom_call.1} parent=1 // pred_fallthru
      _
    // Predicated region
    $region6: #{tpu_custom_call.1} parent=1 // pred_check
      _
    $region7: #{tpu_custom_call.1} parent=1 // pred_check_branch
      %92 = sbr.rel (0) target = $region9
    $region8: #{tpu_custom_call.1} parent=1 // pred_region
      %94 = vsyncadd [#allocation5], 0
      %s96 = sshll.u32 %s3, 4
      %s97 = int_to_ptr.hbm [resolvable:$true] %s96
      %s98 = sshll.u32 [#allocation4], 4
      %s99 = int_to_ptr.vmem [resolvable:$true] %s98
      %101 = dma.hbm_to_vmem [thread:$0]  %s97, 64, %s99, [#allocation5]
    $region9: #{tpu_custom_call.1} parent=1 // pred_fallthru
      _
    // Predicated region
    $region10: #{tpu_custom_call.1} parent=1 // pred_check
      _
    $region11: #{tpu_custom_call.1} parent=1 // pred_check_branch
      %103 = sbr.rel (0) target = $region13
    $region12: #{tpu_custom_call.1} parent=1 // pred_region
      _
    $region13: #{tpu_custom_call.1} parent=1 // pred_fallthru
      _
    // Predicated region
    $region14: #{tpu_custom_call.1} parent=1 // pred_check
      _
    $region15: #{tpu_custom_call.1} parent=1 // pred_check_branch
      %105 = sbr.rel (0) target = $region17
    $region16: #{tpu_custom_call.1} parent=1 // pred_region
      _
    $region17: #{tpu_custom_call.1} parent=1 // pred_fallthru
      _
    // Predicated region
    $region18: #{tpu_custom_call.1} parent=1 // pred_check
      _
    $region19: #{tpu_custom_call.1} parent=1 // pred_check_branch
      %107 = sbr.rel (0) target = $region21
    $region20: #{tpu_custom_call.1} parent=1 // pred_region
      %109 = vsyncadd [#allocation7], 0
      %s111 = sshll.u32 %s9, 4
      %s112 = int_to_ptr.hbm [resolvable:$true] %s111
      %s113 = sshll.u32 [#allocation6], 4
      %s114 = int_to_ptr.vmem [resolvable:$true] %s113
      %116 = dma.hbm_to_vmem [thread:$0]  %s112, 128, %s114, [#allocation7]
    $region21: #{tpu_custom_call.1} parent=1 // pred_fallthru
      _
    // Predicated region
    $region22: #{tpu_custom_call.1} parent=1 // pred_check
      _
    $region23: #{tpu_custom_call.1} parent=1 // pred_check_branch
      %118 = sbr.rel (0) target = $region25
    $region24: #{tpu_custom_call.1} parent=1 // pred_region
      %120 = vsyncadd [#allocation7], 0
      %s121 = sshll.u32 %s11, 4
      %s122 = int_to_ptr.hbm [resolvable:$true] %s121
      %s123 = sshll.u32 [#allocation8], 4
      %s124 = int_to_ptr.vmem [resolvable:$true] %s123
      %129 = dma.hbm_to_vmem [thread:$0]  %s122, 128, %s124, [#allocation7], 64, 64, 4
    $region25: #{tpu_custom_call.1} parent=1 // pred_fallthru
      _
    // Predicated region
    $region26: #{tpu_custom_call.1} parent=1 // pred_check
      _
    $region27: #{tpu_custom_call.1} parent=1 // pred_check_branch
      %131 = sbr.rel (0) target = $region29
    $region28: #{tpu_custom_call.1} parent=1 // pred_region
      _
    $region29: #{tpu_custom_call.1} parent=1 // pred_fallthru
      _
    // Predicated region
    $region30: #{tpu_custom_call.1} parent=1 // pred_check
      _
    $region31: #{tpu_custom_call.1} parent=1 // pred_check_branch
      %133 = sbr.rel (0) target = $region33
    $region32: #{tpu_custom_call.1} parent=1 // pred_region
      _
    $region33: #{tpu_custom_call.1} parent=1 // pred_fallthru
      _
    // Predicated region
    $region34: #{tpu_custom_call.1} parent=1 // pred_check
      _
    $region35: #{tpu_custom_call.1} parent=1 // pred_check_branch
      %135 = sbr.rel (0) target = $region37
    $region36: #{tpu_custom_call.1} parent=1 // pred_region
      _
    $region37: #{tpu_custom_call.1} parent=1 // pred_fallthru
      _
    // Predicated region
    $region38: #{tpu_custom_call.1} parent=1 // pred_check
      _
    $region39: #{tpu_custom_call.1} parent=1 // pred_check_branch
      %137 = sbr.rel (0) target = $region41
    $region40: #{tpu_custom_call.1} parent=1 // pred_region
      _
    $region41: #{tpu_custom_call.1} parent=1 // pred_fallthru
      _
    // Predicated region
    $region42: #{tpu_custom_call.1} parent=1 // pred_check
      _
    $region43: #{tpu_custom_call.1} parent=1 // pred_check_branch
      %139 = sbr.rel (0) target = $region45
    $region44: #{tpu_custom_call.1} parent=1 // pred_region
      %141 = vsyncadd [#allocation10], 0
      %s143 = sshll.u32 %s21, 4
      %s144 = int_to_ptr.hbm [resolvable:$true] %s143
      %s145 = sshll.u32 [#allocation9], 4
      %s146 = int_to_ptr.vmem [resolvable:$true] %s145
      %148 = dma.hbm_to_vmem [thread:$0]  %s144, 16, %s146, [#allocation10]
    $region45: #{tpu_custom_call.1} parent=1 // pred_fallthru
      _
    // Predicated region
    $region46: #{tpu_custom_call.1} parent=1 // pred_check
      _
    $region47: #{tpu_custom_call.1} parent=1 // pred_check_branch
      %150 = sbr.rel (0) target = $region49
    $region48: #{tpu_custom_call.1} parent=1 // pred_region
      %152 = vsyncadd [#allocation10], 0
      %s153 = sshll.u32 %s23, 4
      %s154 = int_to_ptr.hbm [resolvable:$true] %s153
      %s155 = sshll.u32 [#allocation11], 4
      %s156 = int_to_ptr.vmem [resolvable:$true] %s155
      %161 = dma.hbm_to_vmem [thread:$0]  %s154, 256, %s156, [#allocation10], 64, 64, 4
    $region49: #{tpu_custom_call.1} parent=1 // pred_fallthru
      _
    // Predicated region
    $region50: #{tpu_custom_call.1} parent=1 // pred_check
      _
    $region51: #{tpu_custom_call.1} parent=1 // pred_check_branch
      %163 = sbr.rel (0) target = $region53
    $region52: #{tpu_custom_call.1} parent=1 // pred_region
      %165 = vsyncadd [#allocation13], 0
      %s167 = sshll.u32 %s25, 4
      %s168 = int_to_ptr.hbm [resolvable:$true] %s167
      %s169 = sshll.u32 [#allocation12], 4
      %s170 = int_to_ptr.vmem [resolvable:$true] %s169
      %172 = dma.hbm_to_vmem [thread:$0]  %s168, 16, %s170, [#allocation13]
    $region53: #{tpu_custom_call.1} parent=1 // pred_fallthru
      _
    // Predicated region
    $region54: #{tpu_custom_call.1} parent=1 // pred_check
      _
    $region55: #{tpu_custom_call.1} parent=1 // pred_check_branch
      %174 = sbr.rel (0) target = $region57
    $region56: #{tpu_custom_call.1} parent=1 // pred_region
      %176 = vsyncadd [#allocation13], 0
      %s177 = sshll.u32 %s27, 4
      %s178 = int_to_ptr.hbm [resolvable:$true] %s177
      %s179 = sshll.u32 [#allocation14], 4
      %s180 = int_to_ptr.vmem [resolvable:$true] %s179
      %185 = dma.hbm_to_vmem [thread:$0]  %s178, 256, %s180, [#allocation13], 64, 64, 4
    $region57: #{tpu_custom_call.1} parent=1 // pred_fallthru
      _
    // Predicated region
    $region58: #{tpu_custom_call.1} parent=1 // pred_check
      _
    $region59: #{tpu_custom_call.1} parent=1 // pred_check_branch
      %187 = sbr.rel (0) target = $region61
    $region60: #{tpu_custom_call.1} parent=1 // pred_region
      %189 = vsyncadd [#allocation16], 0
      %s191 = sshll.u32 %s29, 4
      %s192 = int_to_ptr.hbm [resolvable:$true] %s191
      %s193 = sshll.u32 [#allocation15], 4
      %s194 = int_to_ptr.vmem [resolvable:$true] %s193
      %196 = dma.hbm_to_vmem [thread:$0]  %s192, 16, %s194, [#allocation16]
    $region61: #{tpu_custom_call.1} parent=1 // pred_fallthru
      _
    // Predicated region
    $region62: #{tpu_custom_call.1} parent=1 // pred_check
      _
    $region63: #{tpu_custom_call.1} parent=1 // pred_check_branch
      %198 = sbr.rel (0) target = $region65
    $region64: #{tpu_custom_call.1} parent=1 // pred_region
      %200 = vsyncadd [#allocation16], 0
      %s202 = sshll.u32 %s31, 4
      %s203 = int_to_ptr.hbm [resolvable:$true] %s202
      %s204 = sshll.u32 [#allocation17], 4
      %s205 = int_to_ptr.vmem [resolvable:$true] %s204
      %207 = dma.hbm_to_vmem [thread:$0]  %s203, 16, %s205, [#allocation16]
    $region65: #{tpu_custom_call.1} parent=1 // pred_fallthru
      _
    // Predicated region
    $region66: #{tpu_custom_call.1} parent=1 // pred_check
      _
    $region67: #{tpu_custom_call.1} parent=1 // pred_check_branch
      %209 = sbr.rel (0) target = $region69
    $region68: #{tpu_custom_call.1} parent=1 // pred_region
      %211 = vsyncadd [#allocation19], 0
      %s213 = sshll.u32 %s33, 4
      %s214 = int_to_ptr.hbm [resolvable:$true] %s213
      %s215 = sshll.u32 [#allocation18], 4
      %s216 = int_to_ptr.vmem [resolvable:$true] %s215
      %218 = dma.hbm_to_vmem [thread:$0]  %s214, 16, %s216, [#allocation19]
    $region69: #{tpu_custom_call.1} parent=1 // pred_fallthru
      _
    // Predicated region
    $region70: #{tpu_custom_call.1} parent=1 // pred_check
      _
    $region71: #{tpu_custom_call.1} parent=1 // pred_check_branch
      %220 = sbr.rel (0) target = $region73
    $region72: #{tpu_custom_call.1} parent=1 // pred_region
      %222 = vsyncadd [#allocation19], 0
      %s223 = sshll.u32 %s35, 4
      %s224 = int_to_ptr.hbm [resolvable:$true] %s223
      %s225 = sshll.u32 [#allocation20], 4
      %s226 = int_to_ptr.vmem [resolvable:$true] %s225
      %231 = dma.hbm_to_vmem [thread:$0]  %s224, 256, %s226, [#allocation19], 64, 64, 4
    $region73: #{tpu_custom_call.1} parent=1 // pred_fallthru
      _
    // Predicated region
    $region74: #{tpu_custom_call.1} parent=1 // pred_check
      _
    $region75: #{tpu_custom_call.1} parent=1 // pred_check_branch
      %233 = sbr.rel (0) target = $region77
    $region76: #{tpu_custom_call.1} parent=1 // pred_region
      %235 = vsyncadd [#allocation22], 0
      %s237 = sshll.u32 %s37, 4
      %s238 = int_to_ptr.hbm [resolvable:$true] %s237
      %s239 = sshll.u32 [#allocation21], 4
      %s240 = int_to_ptr.vmem [resolvable:$true] %s239
      %242 = dma.hbm_to_vmem [thread:$0]  %s238, 16, %s240, [#allocation22]
    $region77: #{tpu_custom_call.1} parent=1 // pred_fallthru
      _
    // Predicated region
    $region78: #{tpu_custom_call.1} parent=1 // pred_check
      _
    $region79: #{tpu_custom_call.1} parent=1 // pred_check_branch
      %244 = sbr.rel (0) target = $region81
    $region80: #{tpu_custom_call.1} parent=1 // pred_region
      _
    $region81: #{tpu_custom_call.1} parent=1 // pred_fallthru
      _
    // Predicated region
    $region82: #{tpu_custom_call.1} parent=1 // pred_check
      _
    $region83: #{tpu_custom_call.1} parent=1 // pred_check_branch
      %246 = sbr.rel (0) target = $region85
    $region84: #{tpu_custom_call.1} parent=1 // pred_region
      %248 = vsyncadd [#allocation22], 0
      %s250 = sshll.u32 %s41, 4
      %s251 = int_to_ptr.hbm [resolvable:$true] %s250
      %s252 = sshll.u32 [#allocation23], 4
      %s253 = int_to_ptr.vmem [resolvable:$true] %s252
      %255 = dma.hbm_to_vmem [thread:$0]  %s251, 16, %s253, [#allocation22]
    $region85: #{tpu_custom_call.1} parent=1 // pred_fallthru
      _
    // Predicated region
    $region86: #{tpu_custom_call.1} parent=1 // pred_check
      _
    $region87: #{tpu_custom_call.1} parent=1 // pred_check_branch
      %257 = sbr.rel (0) target = $region89
    $region88: #{tpu_custom_call.1} parent=1 // pred_region
      %259 = vsyncadd [#allocation25], 0
      %s261 = sshll.u32 %s43, 4
      %s262 = int_to_ptr.hbm [resolvable:$true] %s261
      %s263 = sshll.u32 [#allocation24], 4
      %s264 = int_to_ptr.vmem [resolvable:$true] %s263
      %266 = dma.hbm_to_vmem [thread:$0]  %s262, 16, %s264, [#allocation25]
    $region89: #{tpu_custom_call.1} parent=1 // pred_fallthru
      _
    // Predicated region
    $region90: #{tpu_custom_call.1} parent=1 // pred_check
      _
    $region91: #{tpu_custom_call.1} parent=1 // pred_check_branch
      %268 = sbr.rel (0) target = $region93
    $region92: #{tpu_custom_call.1} parent=1 // pred_region
      %270 = vsyncadd [#allocation25], 0
      %s272 = sshll.u32 %s45, 4
      %s273 = int_to_ptr.hbm [resolvable:$true] %s272
      %s274 = sshll.u32 [#allocation26], 4
      %s275 = int_to_ptr.vmem [resolvable:$true] %s274
      %277 = dma.hbm_to_vmem [thread:$0]  %s273, 16, %s275, [#allocation25]
    $region93: #{tpu_custom_call.1} parent=1 // pred_fallthru
      _
    // Predicated region
    $region94: #{tpu_custom_call.1} parent=1 // pred_check
      _
    $region95: #{tpu_custom_call.1} parent=1 // pred_check_branch
      %279 = sbr.rel (0) target = $region97
    $region96: #{tpu_custom_call.1} parent=1 // pred_region
      %281 = vsyncadd [#allocation28], 0
      %s282 = sshll.u32 %s47, 4
      %s283 = int_to_ptr.hbm [resolvable:$true] %s282
      %s284 = sshll.u32 [#allocation27], 4
      %s285 = int_to_ptr.vmem [resolvable:$true] %s284
      %290 = dma.hbm_to_vmem [thread:$0]  %s283, 256, %s285, [#allocation28], 64, 64, 4
    $region97: #{tpu_custom_call.1} parent=1 // pred_fallthru
      _
    // Predicated region
    $region98: #{tpu_custom_call.1} parent=1 // pred_check
      _
    $region99: #{tpu_custom_call.1} parent=1 // pred_check_branch
      %292 = sbr.rel (0) target = $region101
    $region100: #{tpu_custom_call.1} parent=1 // pred_region
      %294 = vsyncadd [#allocation28], 0
      %s296 = sshll.u32 %s49, 4
      %s297 = int_to_ptr.hbm [resolvable:$true] %s296
      %s298 = sshll.u32 [#allocation29], 4
      %s299 = int_to_ptr.vmem [resolvable:$true] %s298
      %301 = dma.hbm_to_vmem [thread:$0]  %s297, 16, %s299, [#allocation28]
    $region101: #{tpu_custom_call.1} parent=1 // pred_fallthru
      _
    // Predicated region
    $region102: #{tpu_custom_call.1} parent=1 // pred_check
      _
    $region103: #{tpu_custom_call.1} parent=1 // pred_check_branch
      %303 = sbr.rel (0) target = $region105
    $region104: #{tpu_custom_call.1} parent=1 // pred_region
      _
    $region105: #{tpu_custom_call.1} parent=1 // pred_fallthru
      _
    // Predicated region
    $region106: #{tpu_custom_call.1} parent=1 // pred_check
      _
    $region107: #{tpu_custom_call.1} parent=1 // pred_check_branch
      %305 = sbr.rel (0) target = $region109
    $region108: #{tpu_custom_call.1} parent=1 // pred_region
      _
    $region109: #{tpu_custom_call.1} parent=1 // pred_fallthru
      _
    // Predicated region
    $region110: #{tpu_custom_call.1} parent=1 // pred_check
      _
    $region111: #{tpu_custom_call.1} parent=1 // pred_check_branch
      %307 = sbr.rel (0) target = $region113
    $region112: #{tpu_custom_call.1} parent=1 // pred_region
      %309 = vsyncadd [#allocation31], 0
      %s310 = sshll.u32 %s55, 4
      %s311 = int_to_ptr.hbm [resolvable:$true] %s310
      %s312 = sshll.u32 [#allocation30], 4
      %s313 = int_to_ptr.vmem [resolvable:$true] %s312
      %318 = dma.hbm_to_vmem [thread:$0]  %s311, 256, %s313, [#allocation31], 64, 64, 4
    $region113: #{tpu_custom_call.1} parent=1 // pred_fallthru
      _
    // Predicated region
    $region114: #{tpu_custom_call.1} parent=1 // pred_check
      _
    $region115: #{tpu_custom_call.1} parent=1 // pred_check_branch
      %320 = sbr.rel (0) target = $region117
    $region116: #{tpu_custom_call.1} parent=1 // pred_region
      _
    $region117: #{tpu_custom_call.1} parent=1 // pred_fallthru
      _
    // Predicated region
    $region118: #{tpu_custom_call.1} parent=1 // pred_check
      _
    $region119: #{tpu_custom_call.1} parent=1 // pred_check_branch
      %322 = sbr.rel (0) target = $region121
    $region120: #{tpu_custom_call.1} parent=1 // pred_region
      %324 = vsyncadd [#allocation31], 0
      %s325 = sshll.u32 %s59, 4
      %s326 = int_to_ptr.hbm [resolvable:$true] %s325
      %s327 = sshll.u32 [#allocation32], 4
      %s328 = int_to_ptr.vmem [resolvable:$true] %s327
      %333 = dma.hbm_to_vmem [thread:$0]  %s326, 256, %s328, [#allocation31], 64, 64, 4
    $region121: #{tpu_custom_call.1} parent=1 // pred_fallthru
      _
    // Predicated region
    $region122: #{tpu_custom_call.1} parent=1 // pred_check
      _
    $region123: #{tpu_custom_call.1} parent=1 // pred_check_branch
      %335 = sbr.rel (0) target = $region125
    $region124: #{tpu_custom_call.1} parent=1 // pred_region
      _
    $region125: #{tpu_custom_call.1} parent=1 // pred_fallthru
      _
    // Predicated region
    $region126: #{tpu_custom_call.1} parent=1 // pred_check
      _
    $region127: #{tpu_custom_call.1} parent=1 // pred_check_branch
      %337 = sbr.rel (0) target = $region129
    $region128: #{tpu_custom_call.1} parent=1 // pred_region
      %339 = vsyncadd [#allocation34], 0
      %s340 = sshll.u32 %s63, 4
      %s341 = int_to_ptr.hbm [resolvable:$true] %s340
      %s342 = sshll.u32 [#allocation33], 4
      %s343 = int_to_ptr.vmem [resolvable:$true] %s342
      %348 = dma.hbm_to_vmem [thread:$0]  %s341, 256, %s343, [#allocation34], 64, 64, 4
    $region129: #{tpu_custom_call.1} parent=1 // pred_fallthru
      _
    // Predicated region
    $region130: #{tpu_custom_call.1} parent=1 // pred_check
      _
    $region131: #{tpu_custom_call.1} parent=1 // pred_check_branch
      %350 = sbr.rel (0) target = $region133
    $region132: #{tpu_custom_call.1} parent=1 // pred_region
      _
    $region133: #{tpu_custom_call.1} parent=1 // pred_fallthru
      _
    // Predicated region
    $region134: #{tpu_custom_call.1} parent=1 // pred_check
      _
    $region135: #{tpu_custom_call.1} parent=1 // pred_check_branch
      %352 = sbr.rel (0) target = $region137
    $region136: #{tpu_custom_call.1} parent=1 // pred_region
      _
    $region137: #{tpu_custom_call.1} parent=1 // pred_fallthru
      _
    // Predicated region
    $region138: #{tpu_custom_call.1} parent=1 // pred_check
      _
    $region139: #{tpu_custom_call.1} parent=1 // pred_check_branch
      %354 = sbr.rel (0) target = $region141
    $region140: #{tpu_custom_call.1} parent=1 // pred_region
      _
    $region141: #{tpu_custom_call.1} parent=1 // pred_fallthru
      _
    // Predicated region
    $region142: #{tpu_custom_call.1} parent=1 // pred_check
      _
    $region143: #{tpu_custom_call.1} parent=1 // pred_check_branch
      %356 = sbr.rel (0) target = $region145
    $region144: #{tpu_custom_call.1} parent=1 // pred_region
      %358 = dma.done [#allocation5], 64
    $region145: #{tpu_custom_call.1} parent=1 // pred_fallthru
      _
    // Predicated region
    $region146: #{tpu_custom_call.1} parent=1 // pred_check
      _
    $region147: #{tpu_custom_call.1} parent=1 // pred_check_branch
      %360 = sbr.rel (0) target = $region149
    $region148: #{tpu_custom_call.1} parent=1 // pred_region
      %362 = dma.done [#allocation7], 128
    $region149: #{tpu_custom_call.1} parent=1 // pred_fallthru
      _
    // Predicated region
    $region150: #{tpu_custom_call.1} parent=1 // pred_check
      _
    $region151: #{tpu_custom_call.1} parent=1 // pred_check_branch
      %364 = sbr.rel (0) target = $region153
    $region152: #{tpu_custom_call.1} parent=1 // pred_region
      %366 = dma.done [#allocation7], 128
    $region153: #{tpu_custom_call.1} parent=1 // pred_fallthru
      _
    // Predicated region
    $region154: #{tpu_custom_call.1} parent=1 // pred_check
      _
    $region155: #{tpu_custom_call.1} parent=1 // pred_check_branch
      %368 = sbr.rel (0) target = $region157
    $region156: #{tpu_custom_call.1} parent=1 // pred_region
      %370 = dma.done [#allocation10], 16
    $region157: #{tpu_custom_call.1} parent=1 // pred_fallthru
      _
    // Predicated region
    $region158: #{tpu_custom_call.1} parent=1 // pred_check
      _
    $region159: #{tpu_custom_call.1} parent=1 // pred_check_branch
      %372 = sbr.rel (0) target = $region161
    $region160: #{tpu_custom_call.1} parent=1 // pred_region
      %374 = dma.done [#allocation10], 256
    $region161: #{tpu_custom_call.1} parent=1 // pred_fallthru
      _
    // Predicated region
    $region162: #{tpu_custom_call.1} parent=1 // pred_check
      _
    $region163: #{tpu_custom_call.1} parent=1 // pred_check_branch
      %376 = sbr.rel (0) target = $region165
    $region164: #{tpu_custom_call.1} parent=1 // pred_region
      %378 = dma.done [#allocation13], 16
    $region165: #{tpu_custom_call.1} parent=1 // pred_fallthru
      _
    // Predicated region
    $region166: #{tpu_custom_call.1} parent=1 // pred_check
      _
    $region167: #{tpu_custom_call.1} parent=1 // pred_check_branch
      %380 = sbr.rel (0) target = $region169
    $region168: #{tpu_custom_call.1} parent=1 // pred_region
      %382 = dma.done [#allocation13], 256
    $region169: #{tpu_custom_call.1} parent=1 // pred_fallthru
      _
    // Predicated region
    $region170: #{tpu_custom_call.1} parent=1 // pred_check
      _
    $region171: #{tpu_custom_call.1} parent=1 // pred_check_branch
      %384 = sbr.rel (0) target = $region173
    $region172: #{tpu_custom_call.1} parent=1 // pred_region
      %386 = dma.done [#allocation16], 16
    $region173: #{tpu_custom_call.1} parent=1 // pred_fallthru
      _
    // Predicated region
    $region174: #{tpu_custom_call.1} parent=1 // pred_check
      _
    $region175: #{tpu_custom_call.1} parent=1 // pred_check_branch
      %388 = sbr.rel (0) target = $region177
    $region176: #{tpu_custom_call.1} parent=1 // pred_region
      %390 = dma.done [#allocation16], 16
    $region177: #{tpu_custom_call.1} parent=1 // pred_fallthru
      _
    // Predicated region
    $region178: #{tpu_custom_call.1} parent=1 // pred_check
      _
    $region179: #{tpu_custom_call.1} parent=1 // pred_check_branch
      %392 = sbr.rel (0) target = $region181
    $region180: #{tpu_custom_call.1} parent=1 // pred_region
      %394 = dma.done [#allocation19], 16
    $region181: #{tpu_custom_call.1} parent=1 // pred_fallthru
      _
    // Predicated region
    $region182: #{tpu_custom_call.1} parent=1 // pred_check
      _
    $region183: #{tpu_custom_call.1} parent=1 // pred_check_branch
      %396 = sbr.rel (0) target = $region185
    $region184: #{tpu_custom_call.1} parent=1 // pred_region
      %398 = dma.done [#allocation19], 256
    $region185: #{tpu_custom_call.1} parent=1 // pred_fallthru
      _
    // Predicated region
    $region186: #{tpu_custom_call.1} parent=1 // pred_check
      _
    $region187: #{tpu_custom_call.1} parent=1 // pred_check_branch
      %400 = sbr.rel (0) target = $region189
    $region188: #{tpu_custom_call.1} parent=1 // pred_region
      %402 = dma.done [#allocation22], 16
    $region189: #{tpu_custom_call.1} parent=1 // pred_fallthru
      _
    // Predicated region
    $region190: #{tpu_custom_call.1} parent=1 // pred_check
      _
    $region191: #{tpu_custom_call.1} parent=1 // pred_check_branch
      %404 = sbr.rel (0) target = $region193
    $region192: #{tpu_custom_call.1} parent=1 // pred_region
      %406 = dma.done [#allocation22], 16
    $region193: #{tpu_custom_call.1} parent=1 // pred_fallthru
      _
    // Predicated region
    $region194: #{tpu_custom_call.1} parent=1 // pred_check
      _
    $region195: #{tpu_custom_call.1} parent=1 // pred_check_branch
      %408 = sbr.rel (0) target = $region197
    $region196: #{tpu_custom_call.1} parent=1 // pred_region
      %410 = dma.done [#allocation25], 16
    $region197: #{tpu_custom_call.1} parent=1 // pred_fallthru
      _
    // Predicated region
    $region198: #{tpu_custom_call.1} parent=1 // pred_check
      _
    $region199: #{tpu_custom_call.1} parent=1 // pred_check_branch
      %412 = sbr.rel (0) target = $region201
    $region200: #{tpu_custom_call.1} parent=1 // pred_region
      %414 = dma.done [#allocation25], 16
    $region201: #{tpu_custom_call.1} parent=1 // pred_fallthru
      _
    // Predicated region
    $region202: #{tpu_custom_call.1} parent=1 // pred_check
      _
    $region203: #{tpu_custom_call.1} parent=1 // pred_check_branch
      %416 = sbr.rel (0) target = $region205
    $region204: #{tpu_custom_call.1} parent=1 // pred_region
      %418 = dma.done [#allocation28], 256
    $region205: #{tpu_custom_call.1} parent=1 // pred_fallthru
      _
    // Predicated region
    $region206: #{tpu_custom_call.1} parent=1 // pred_check
      _
    $region207: #{tpu_custom_call.1} parent=1 // pred_check_branch
      %420 = sbr.rel (0) target = $region209
    $region208: #{tpu_custom_call.1} parent=1 // pred_region
      %422 = dma.done [#allocation28], 16
    $region209: #{tpu_custom_call.1} parent=1 // pred_fallthru
      _
    // Predicated region
    $region210: #{tpu_custom_call.1} parent=1 // pred_check
      _
    $region211: #{tpu_custom_call.1} parent=1 // pred_check_branch
      %424 = sbr.rel (0) target = $region213
    $region212: #{tpu_custom_call.1} parent=1 // pred_region
      %426 = dma.done [#allocation31], 256
    $region213: #{tpu_custom_call.1} parent=1 // pred_fallthru
      _
    // Predicated region
    $region214: #{tpu_custom_call.1} parent=1 // pred_check
      _
    $region215: #{tpu_custom_call.1} parent=1 // pred_check_branch
      %428 = sbr.rel (0) target = $region217
    $region216: #{tpu_custom_call.1} parent=1 // pred_region
      %430 = dma.done [#allocation31], 256
    $region217: #{tpu_custom_call.1} parent=1 // pred_fallthru
      _
    // Predicated region
    $region218: #{tpu_custom_call.1} parent=1 // pred_check
      _
    $region219: #{tpu_custom_call.1} parent=1 // pred_check_branch
      %432 = sbr.rel (0) target = $region221
    $region220: #{tpu_custom_call.1} parent=1 // pred_region
      %434 = dma.done [#allocation34], 256
    $region221: #{tpu_custom_call.1} parent=1 // pred_fallthru
      _
    %v436 = vld [vmem:[%s1] sm:$0xff]
    %v437 = vld [vmem:[%s1 + $0x8] sm:$0xff]
    %v438 = vld [vmem:[%s1 + $0x10] sm:$0xff]
    %v439 = vld [vmem:[%s1 + $0x18] sm:$0xff]
    %v440 = vld [vmem:[#allocation4] sm:$0xf]
    %v441 = vsub.f32 %v440, 1.0
    %v442 = vmul.f32 %v441, 1e+09
    %v443 = vld [vmem:[%s5] sm:$0xf]
    %v444 = vld [vmem:[%s5 + $0x4] sm:$0xf]
    %v445 = vld [vmem:[%s5 + $0x8] sm:$0xf]
    %v446 = vld [vmem:[%s5 + $0xc] sm:$0xf]
    %v447 = vld [vmem:[%s5 + $0x10] sm:$0xf]
    %v448 = vld [vmem:[%s5 + $0x14] sm:$0xf]
    %v449 = vld [vmem:[%s5 + $0x18] sm:$0xf]
    %v450 = vld [vmem:[%s5 + $0x1c] sm:$0xf]
    %v451 = vld [vmem:[%s7] sm:$0xff]
    %v452 = vld [vmem:[%s7 + $0x8] sm:$0xff]
    %v453 = vld [vmem:[%s7 + $0x10] sm:$0xff]
    %v454 = vld [vmem:[%s7 + $0x18] sm:$0xff]
    %v455 = vld [vmem:[#allocation6] sm:$0xff]
    %v456 = vld [vmem:[#allocation8] sm:$0xf]
    %v457 = vld [vmem:[#allocation8 + $0x4] sm:$0xf]
    %v458 = vld [vmem:[%s13] sm:$0xf]
    %v459 = vld [vmem:[%s13 + $0x4] sm:$0xf]
    %v460 = vld [vmem:[%s13 + $0x8] sm:$0xf]
    %v461 = vld [vmem:[%s13 + $0xc] sm:$0xf]
    %v462 = vld [vmem:[%s15] sm:$0x1]
    %v463 = vld [vmem:[%s17] sm:$0xf]
    %v464 = vld [vmem:[%s17 + $0x4] sm:$0xf]
    %v465 = vld [vmem:[%s17 + $0x8] sm:$0xf]
    %v466 = vld [vmem:[%s17 + $0xc] sm:$0xf]
    %v467 = vld [vmem:[%s19] sm:$0xf]
    %v468 = vld [vmem:[%s19 + $0x4] sm:$0xf]
    %v469 = vld [vmem:[%s19 + $0x8] sm:$0xf]
    %v470 = vld [vmem:[%s19 + $0xc] sm:$0xf]
    %v471 = vld [vmem:[#allocation9] sm:$0x1]
    %v472 = vld [vmem:[#allocation11] sm:$0xf]
    %v473 = vld [vmem:[#allocation11 + $0x4] sm:$0xf]
    %v474 = vld [vmem:[#allocation11 + $0x8] sm:$0xf]
    %v475 = vld [vmem:[#allocation11 + $0xc] sm:$0xf]
    %v476 = vld [vmem:[#allocation12] sm:$0x1]
    %v477 = vld [vmem:[#allocation14] sm:$0xf]
    %v478 = vld [vmem:[#allocation14 + $0x4] sm:$0xf]
    %v479 = vld [vmem:[#allocation14 + $0x8] sm:$0xf]
    %v480 = vld [vmem:[#allocation14 + $0xc] sm:$0xf]
    %v481 = vld [vmem:[#allocation15] sm:$0x1]
    %v482 = vld [vmem:[#allocation17] sm:$0x1]
    %v483 = vld [vmem:[#allocation18] sm:$0x1]
    %v484 = vld [vmem:[#allocation20] sm:$0xf]
    %v485 = vld [vmem:[#allocation20 + $0x4] sm:$0xf]
    %v486 = vld [vmem:[#allocation20 + $0x8] sm:$0xf]
    %v487 = vld [vmem:[#allocation20 + $0xc] sm:$0xf]
    %v488 = vld [vmem:[#allocation21] sm:$0x1]
    %v489 = vld [vmem:[%s39] sm:$0xf]
    %v490 = vld [vmem:[%s39 + $0x4] sm:$0xf]
    %v491 = vld [vmem:[%s39 + $0x8] sm:$0xf]
    %v492 = vld [vmem:[%s39 + $0xc] sm:$0xf]
    %v493 = vld [vmem:[%s39 + $0x10] sm:$0xf]
    %v494 = vld [vmem:[%s39 + $0x14] sm:$0xf]
    %v495 = vld [vmem:[%s39 + $0x18] sm:$0xf]
    %v496 = vld [vmem:[%s39 + $0x1c] sm:$0xf]
    %v497 = vld [vmem:[%s39 + $0x20] sm:$0xf]
    %v498 = vld [vmem:[%s39 + $0x24] sm:$0xf]
    %v499 = vld [vmem:[%s39 + $0x28] sm:$0xf]
    %v500 = vld [vmem:[%s39 + $0x2c] sm:$0xf]
    %v501 = vld [vmem:[%s39 + $0x30] sm:$0xf]
    %v502 = vld [vmem:[%s39 + $0x34] sm:$0xf]
    %v503 = vld [vmem:[%s39 + $0x38] sm:$0xf]
    %v504 = vld [vmem:[%s39 + $0x3c] sm:$0xf]
    %v505 = vld [vmem:[#allocation23] sm:$0x1]
    %v506 = vld [vmem:[#allocation24] sm:$0x1]
    %v507 = vld [vmem:[#allocation26] sm:$0x1]
    %v508 = vld [vmem:[#allocation27] sm:$0xf]
    %v509 = vld [vmem:[#allocation27 + $0x4] sm:$0xf]
    %v510 = vld [vmem:[#allocation27 + $0x8] sm:$0xf]
    %v511 = vld [vmem:[#allocation27 + $0xc] sm:$0xf]
    %v512 = vld [vmem:[#allocation29] sm:$0x1]
    %v513 = vld [vmem:[%s51] sm:$0xf]
    %v514 = vld [vmem:[%s51 + $0x4] sm:$0xf]
    %v515 = vld [vmem:[%s51 + $0x8] sm:$0xf]
    %v516 = vld [vmem:[%s51 + $0xc] sm:$0xf]
    %v517 = vld [vmem:[%s53] sm:$0x1]
    %v518 = vld [vmem:[#allocation30] sm:$0xf]
    %v519 = vld [vmem:[#allocation30 + $0x4] sm:$0xf]
    %v520 = vld [vmem:[#allocation30 + $0x8] sm:$0xf]
    %v521 = vld [vmem:[#allocation30 + $0xc] sm:$0xf]
    %v522 = vld [vmem:[%s57] sm:$0x1]
    %v523 = vld [vmem:[#allocation32] sm:$0xf]
    %v524 = vld [vmem:[#allocation32 + $0x4] sm:$0xf]
    %v525 = vld [vmem:[#allocation32 + $0x8] sm:$0xf]
    %v526 = vld [vmem:[#allocation32 + $0xc] sm:$0xf]
    %v527 = vld [vmem:[%s61] sm:$0x1]
    %v528 = vld [vmem:[#allocation33] sm:$0xf]
    %v529 = vld [vmem:[#allocation33 + $0x4] sm:$0xf]
    %v530 = vld [vmem:[#allocation33 + $0x8] sm:$0xf]
    %v531 = vld [vmem:[#allocation33 + $0xc] sm:$0xf]
    %v532 = vld [vmem:[%s65] sm:$0x1]
    %v533 = vld [vmem:[%s67] sm:$0x1]
    %v534 = vld [vmem:[#allocation3] sm:$0x1]
    %v535 = vpack.c.bf16 %v437, %v436
    %v536 = vpack.c.bf16 %v439, %v438
    %v538 = vperm.slane %v476, 0
    %v544 = vunpack.c.l.b16 %v472
    %v545 = vunpack.c.l.b16 %v473
    %v546 = vunpack.c.l.b16 %v474
    %v547 = vunpack.c.l.b16 %v475
    %v548 = vpack.c.b16 %v545, %v544
    %v549 = vpack.c.b16 %v547, %v546
    %vm552 = vcmask 261120
    %v554 = vsel %vm552, %v535, 0
    %v557 = vsel %vm552, %v536, 0
    %559 = vmatpush.bf16.msra.mxu0 0
    %560 = vmatpush.bf16.msra.mxu0 0
    %561 = vmatpush.bf16.msra.mxu0 0
    %562 = vmatpush.bf16.msra.mxu0 0
    %563 = vmatpush.bf16.msra.mxu0 0
    %564 = vmatpush.bf16.msra.mxu0 0
    %565 = vmatpush.bf16.msra.mxu0 %v549
    %566 = vmatpush.bf16.msra.mxu0 %v548
    %567 = vmatmul.bf16.gmra.mxu0 %v554
    %v568 = vpop.f32.mrf.mxu0
    %v569 = vadd.f32 %v538, %v568
    %v570 = vpop.f32.mrf.mxu0
    %v571 = vadd.f32 %v538, %v570
    %572 = vmatmul.bf16.gmra.mxu0 %v557
    %v573 = vpop.f32.mrf.mxu0
    %v574 = vadd.f32 %v538, %v573
    %v575 = vpop.f32.mrf.mxu0
    %v576 = vadd.f32 %v538, %v575
    %577 = vdwg.mxu0
    %v582 = vrot.slane %v569, 1
    %v583 = vrot.slane %v569, 2
    %v584 = vrot.slane %v569, 3
    %v585 = vrot.slane %v569, 4
    %v586 = vrot.slane %v569, 5
    %v587 = vrot.slane %v569, 6
    %v588 = vrot.slane %v569, 7
    %v589 = vrot.slane %v571, 1
    %v590 = vrot.slane %v571, 2
    %v591 = vrot.slane %v571, 3
    %v592 = vrot.slane %v571, 4
    %v593 = vrot.slane %v571, 5
    %v594 = vrot.slane %v571, 6
    %v595 = vrot.slane %v571, 7
    %v596 = vrot.slane %v574, 1
    %v597 = vrot.slane %v574, 2
    %v598 = vrot.slane %v574, 3
    %v599 = vrot.slane %v574, 4
    %v600 = vrot.slane %v574, 5
    %v601 = vrot.slane %v574, 6
    %v602 = vrot.slane %v574, 7
    %v603 = vrot.slane %v576, 1
    %v604 = vrot.slane %v576, 2
    %v605 = vrot.slane %v576, 3
    %v606 = vrot.slane %v576, 4
    %v607 = vrot.slane %v576, 5
    %v608 = vrot.slane %v576, 6
    %v609 = vrot.slane %v576, 7
    %v610 = vperm.slane %v569, 0
    %v611 = vperm.slane %v582, 0
    %v612 = vperm.slane %v583, 0
    %v613 = vperm.slane %v584, 0
    %v614 = vperm.slane %v585, 0
    %v615 = vperm.slane %v586, 0
    %v616 = vperm.slane %v587, 0
    %v617 = vperm.slane %v588, 0
    %v618 = vperm.slane %v571, 0
    %v619 = vperm.slane %v589, 0
    %v620 = vperm.slane %v590, 0
    %v621 = vperm.slane %v591, 0
    %v622 = vperm.slane %v592, 0
    %v623 = vperm.slane %v593, 0
    %v624 = vperm.slane %v594, 0
    %v625 = vperm.slane %v595, 0
    %v626 = vperm.slane %v574, 0
    %v627 = vperm.slane %v596, 0
    %v628 = vperm.slane %v597, 0
    %v629 = vperm.slane %v598, 0
    %v630 = vperm.slane %v599, 0
    %v631 = vperm.slane %v600, 0
    %v632 = vperm.slane %v601, 0
    %v633 = vperm.slane %v602, 0
    %v634 = vperm.slane %v576, 0
    %v635 = vperm.slane %v603, 0
    %v636 = vperm.slane %v604, 0
    %v637 = vperm.slane %v605, 0
    %v638 = vperm.slane %v606, 0
    %v639 = vperm.slane %v607, 0
    %v640 = vperm.slane %v608, 0
    %v641 = vperm.slane %v609, 0
    %674 = vrot.lane.b32.xlu0 %v569, 96
    %v675 = vpop.permute.xlu0 %674
    %676 = vrot.lane.b32.xlu0 %v571, 96
    %v677 = vpop.permute.xlu0 %676
    %678 = vrot.lane.b32.xlu0 %v574, 96
    %v679 = vpop.permute.xlu0 %678
    %680 = vrot.lane.b32.xlu0 %v576, 96
    %v681 = vpop.permute.xlu0 %680
    %v686 = vmul.f32 %v610, %v675
    %v687 = vmul.f32 %v611, %v675
    %v688 = vmul.f32 %v612, %v675
    %v689 = vmul.f32 %v613, %v675
    %v690 = vmul.f32 %v614, %v675
    %v691 = vmul.f32 %v615, %v675
    %v692 = vmul.f32 %v616, %v675
    %v693 = vmul.f32 %v617, %v675
    %v694 = vmul.f32 %v618, %v677
    %v695 = vmul.f32 %v619, %v677
    %v696 = vmul.f32 %v620, %v677
    %v697 = vmul.f32 %v621, %v677
    %v698 = vmul.f32 %v622, %v677
    %v699 = vmul.f32 %v623, %v677
    %v700 = vmul.f32 %v624, %v677
    %v701 = vmul.f32 %v625, %v677
    %v702 = vmul.f32 %v626, %v679
    %v703 = vmul.f32 %v627, %v679
    %v704 = vmul.f32 %v628, %v679
    %v705 = vmul.f32 %v629, %v679
    %v706 = vmul.f32 %v630, %v679
    %v707 = vmul.f32 %v631, %v679
    %v708 = vmul.f32 %v632, %v679
    %v709 = vmul.f32 %v633, %v679
    %v710 = vmul.f32 %v634, %v681
    %v711 = vmul.f32 %v635, %v681
    %v712 = vmul.f32 %v636, %v681
    %v713 = vmul.f32 %v637, %v681
    %v714 = vmul.f32 %v638, %v681
    %v715 = vmul.f32 %v639, %v681
    %v716 = vmul.f32 %v640, %v681
    %v717 = vmul.f32 %v641, %v681
    %v719 = vsel %vm552, %v686, 0
    %v722 = vsel %vm552, %v687, 0
    %v725 = vsel %vm552, %v688, 0
    %v728 = vsel %vm552, %v689, 0
    %v731 = vsel %vm552, %v690, 0
    %v734 = vsel %vm552, %v691, 0
    %v737 = vsel %vm552, %v692, 0
    %v740 = vsel %vm552, %v693, 0
    %v743 = vsel %vm552, %v694, 0
    %v746 = vsel %vm552, %v695, 0
    %v749 = vsel %vm552, %v696, 0
    %v752 = vsel %vm552, %v697, 0
    %v755 = vsel %vm552, %v698, 0
    %v758 = vsel %vm552, %v699, 0
    %v761 = vsel %vm552, %v700, 0
    %v764 = vsel %vm552, %v701, 0
    %v767 = vsel %vm552, %v702, 0
    %v770 = vsel %vm552, %v703, 0
    %v773 = vsel %vm552, %v704, 0
    %v776 = vsel %vm552, %v705, 0
    %v779 = vsel %vm552, %v706, 0
    %v782 = vsel %vm552, %v707, 0
    %v785 = vsel %vm552, %v708, 0
    %v788 = vsel %vm552, %v709, 0
    %v791 = vsel %vm552, %v710, 0
    %v794 = vsel %vm552, %v711, 0
    %v797 = vsel %vm552, %v712, 0
    %v800 = vsel %vm552, %v713, 0
    %v803 = vsel %vm552, %v714, 0
    %v806 = vsel %vm552, %v715, 0
    %v809 = vsel %vm552, %v716, 0
    %v812 = vsel %vm552, %v717, 0
    %814 = vmatpush.msra.mxu0 0.0
    %815 = vmatpush.msra.mxu0 0.0
    %816 = vmatpush.msra.mxu0 0.0
    %817 = vmatpush.msra.mxu0 0.0
    %818 = vmatpush.msra.mxu0 0.0
    %819 = vmatpush.msra.mxu0 0.0
    %820 = vmatpush.msra.mxu0 0.0
    %821 = vmatpush.msra.mxu0 0.0
    %822 = vmatpush.msra.mxu0 0.0
    %823 = vmatpush.msra.mxu0 0.0
    %824 = vmatpush.msra.mxu0 0.0
    %825 = vmatpush.msra.mxu0 0.0
    %826 = vmatpush.msra.mxu0 %v454
    %827 = vmatpush.msra.mxu0 %v453
    %828 = vmatpush.msra.mxu0 %v452
    %829 = vmatpush.msra.mxu0 %v451
    %830 = vmatmul.f32.gmra.mxu0 %v719
    %v831 = vpop.f32.mrf.mxu0
    %v832 = vadd.f32 0.0, %v831
    %833 = vmatmul.f32.gmra.mxu0 %v722
    %v834 = vpop.f32.mrf.mxu0
    %v835 = vadd.f32 0.0, %v834
    %836 = vmatmul.f32.gmra.mxu0 %v725
    %v837 = vpop.f32.mrf.mxu0
    %v838 = vadd.f32 0.0, %v837
    %839 = vmatmul.f32.gmra.mxu0 %v728
    %v840 = vpop.f32.mrf.mxu0
    %v841 = vadd.f32 0.0, %v840
    %842 = vmatmul.f32.gmra.mxu0 %v731
    %v843 = vpop.f32.mrf.mxu0
    %v844 = vadd.f32 0.0, %v843
    %845 = vmatmul.f32.gmra.mxu0 %v734
    %v846 = vpop.f32.mrf.mxu0
    %v847 = vadd.f32 0.0, %v846
    %848 = vmatmul.f32.gmra.mxu0 %v737
    %v849 = vpop.f32.mrf.mxu0
    %v850 = vadd.f32 0.0, %v849
    %851 = vmatmul.f32.gmra.mxu0 %v740
    %v852 = vpop.f32.mrf.mxu0
    %v853 = vadd.f32 0.0, %v852
    %854 = vmatmul.f32.gmra.mxu0 %v743
    %v855 = vpop.f32.mrf.mxu0
    %v856 = vadd.f32 0.0, %v855
    %857 = vmatmul.f32.gmra.mxu0 %v746
    %v858 = vpop.f32.mrf.mxu0
    %v859 = vadd.f32 0.0, %v858
    %860 = vmatmul.f32.gmra.mxu0 %v749
    %v861 = vpop.f32.mrf.mxu0
    %v862 = vadd.f32 0.0, %v861
    %863 = vmatmul.f32.gmra.mxu0 %v752
    %v864 = vpop.f32.mrf.mxu0
    %v865 = vadd.f32 0.0, %v864
    %866 = vmatmul.f32.gmra.mxu0 %v755
    %v867 = vpop.f32.mrf.mxu0
    %v868 = vadd.f32 0.0, %v867
    %869 = vmatmul.f32.gmra.mxu0 %v758
    %v870 = vpop.f32.mrf.mxu0
    %v871 = vadd.f32 0.0, %v870
    %872 = vmatmul.f32.gmra.mxu0 %v761
    %v873 = vpop.f32.mrf.mxu0
    %v874 = vadd.f32 0.0, %v873
    %875 = vmatmul.f32.gmra.mxu0 %v764
    %v876 = vpop.f32.mrf.mxu0
    %v877 = vadd.f32 0.0, %v876
    %878 = vmatmul.f32.gmra.mxu0 %v767
    %v879 = vpop.f32.mrf.mxu0
    %v880 = vadd.f32 0.0, %v879
    %881 = vmatmul.f32.gmra.mxu0 %v770
    %v882 = vpop.f32.mrf.mxu0
    %v883 = vadd.f32 0.0, %v882
    %884 = vmatmul.f32.gmra.mxu0 %v773
    %v885 = vpop.f32.mrf.mxu0
    %v886 = vadd.f32 0.0, %v885
    %887 = vmatmul.f32.gmra.mxu0 %v776
    %v888 = vpop.f32.mrf.mxu0
    %v889 = vadd.f32 0.0, %v888
    %890 = vmatmul.f32.gmra.mxu0 %v779
    %v891 = vpop.f32.mrf.mxu0
    %v892 = vadd.f32 0.0, %v891
    %893 = vmatmul.f32.gmra.mxu0 %v782
    %v894 = vpop.f32.mrf.mxu0
    %v895 = vadd.f32 0.0, %v894
    %896 = vmatmul.f32.gmra.mxu0 %v785
    %v897 = vpop.f32.mrf.mxu0
    %v898 = vadd.f32 0.0, %v897
    %899 = vmatmul.f32.gmra.mxu0 %v788
    %v900 = vpop.f32.mrf.mxu0
    %v901 = vadd.f32 0.0, %v900
    %902 = vmatmul.f32.gmra.mxu0 %v791
    %v903 = vpop.f32.mrf.mxu0
    %v904 = vadd.f32 0.0, %v903
    %905 = vmatmul.f32.gmra.mxu0 %v794
    %v906 = vpop.f32.mrf.mxu0
    %v907 = vadd.f32 0.0, %v906
    %908 = vmatmul.f32.gmra.mxu0 %v797
    %v909 = vpop.f32.mrf.mxu0
    %v910 = vadd.f32 0.0, %v909
    %911 = vmatmul.f32.gmra.mxu0 %v800
    %v912 = vpop.f32.mrf.mxu0
    %v913 = vadd.f32 0.0, %v912
    %914 = vmatmul.f32.gmra.mxu0 %v803
    %v915 = vpop.f32.mrf.mxu0
    %v916 = vadd.f32 0.0, %v915
    %917 = vmatmul.f32.gmra.mxu0 %v806
    %v918 = vpop.f32.mrf.mxu0
    %v919 = vadd.f32 0.0, %v918
    %920 = vmatmul.f32.gmra.mxu0 %v809
    %v921 = vpop.f32.mrf.mxu0
    %v922 = vadd.f32 0.0, %v921
    %923 = vmatmul.f32.gmra.mxu0 %v812
    %v924 = vpop.f32.mrf.mxu0
    %v925 = vadd.f32 0.0, %v924
    %926 = vdwg.mxu0
    %v927 = vperm.slane %v442, 0
    %v928 = vlaneseq
    %v929 = vshrl.u32 %v928, 7
    %931 = vset.pattern.permute.xlu0 %v929
    %932 = vperm.xlu0 %931, %v927
    %v933 = vpop.permute.xlu0 %932
    %v934 = vperm.slane %v442, 1
    %v935 = vlaneseq
    %v936 = vshrl.u32 %v935, 7
    %938 = vset.pattern.permute.xlu0 %v936
    %939 = vperm.xlu0 %938, %v934
    %v940 = vpop.permute.xlu0 %939
    %v941 = vperm.slane %v442, 2
    %v942 = vlaneseq
    %v943 = vshrl.u32 %v942, 7
    %945 = vset.pattern.permute.xlu0 %v943
    %946 = vperm.xlu0 %945, %v941
    %v947 = vpop.permute.xlu0 %946
    %v948 = vperm.slane %v442, 3
    %v949 = vlaneseq
    %v950 = vshrl.u32 %v949, 7
    %952 = vset.pattern.permute.xlu0 %v950
    %953 = vperm.xlu0 %952, %v948
    %v954 = vpop.permute.xlu0 %953
    %v955 = vadd.f32 %v832, %v933
    %v956 = vadd.f32 %v835, %v933
    %v957 = vadd.f32 %v838, %v933
    %v958 = vadd.f32 %v841, %v933
    %v959 = vadd.f32 %v844, %v933
    %v960 = vadd.f32 %v847, %v933
    %v961 = vadd.f32 %v850, %v933
    %v962 = vadd.f32 %v853, %v933
    %v963 = vadd.f32 %v856, %v940
    %v964 = vadd.f32 %v859, %v940
    %v965 = vadd.f32 %v862, %v940
    %v966 = vadd.f32 %v865, %v940
    %v967 = vadd.f32 %v868, %v940
    %v968 = vadd.f32 %v871, %v940
    %v969 = vadd.f32 %v874, %v940
    %v970 = vadd.f32 %v877, %v940
    %v971 = vadd.f32 %v880, %v947
    %v972 = vadd.f32 %v883, %v947
    %v973 = vadd.f32 %v886, %v947
    %v974 = vadd.f32 %v889, %v947
    %v975 = vadd.f32 %v892, %v947
    %v976 = vadd.f32 %v895, %v947
    %v977 = vadd.f32 %v898, %v947
    %v978 = vadd.f32 %v901, %v947
    %v979 = vadd.f32 %v904, %v954
    %v980 = vadd.f32 %v907, %v954
    %v981 = vadd.f32 %v910, %v954
    %v982 = vadd.f32 %v913, %v954
    %v983 = vadd.f32 %v916, %v954
    %v984 = vadd.f32 %v919, %v954
    %v985 = vadd.f32 %v922, %v954
    %v986 = vadd.f32 %v925, %v954
    %vm987 = vcmask 64512
    %v988 = vsel %vm987, %v955, -inf
    %v989 = vrot.slane %v988, 4
    %v990 = vmax.f32 %v988, %v989
    %v991 = vrot.slane %v990, 2
    %v992 = vmax.f32 %v990, %v991
    %v993 = vrot.slane %v992, 1
    %v994 = vmax.f32 %v992, %v993
    %v995 = vsel %vm987, %v956, -inf
    %v996 = vrot.slane %v995, 4
    %v997 = vmax.f32 %v995, %v996
    %v998 = vrot.slane %v997, 2
    %v999 = vmax.f32 %v997, %v998
    %v1000 = vrot.slane %v999, 1
    %v1001 = vmax.f32 %v999, %v1000
    %v1002 = vsel %vm987, %v957, -inf
    %v1003 = vrot.slane %v1002, 4
    %v1004 = vmax.f32 %v1002, %v1003
    %v1005 = vrot.slane %v1004, 2
    %v1006 = vmax.f32 %v1004, %v1005
    %v1007 = vrot.slane %v1006, 1
    %v1008 = vmax.f32 %v1006, %v1007
    %v1009 = vsel %vm987, %v958, -inf
    %v1010 = vrot.slane %v1009, 4
    %v1011 = vmax.f32 %v1009, %v1010
    %v1012 = vrot.slane %v1011, 2
    %v1013 = vmax.f32 %v1011, %v1012
    %v1014 = vrot.slane %v1013, 1
    %v1015 = vmax.f32 %v1013, %v1014
    %v1016 = vsel %vm987, %v959, -inf
    %v1017 = vrot.slane %v1016, 4
    %v1018 = vmax.f32 %v1016, %v1017
    %v1019 = vrot.slane %v1018, 2
    %v1020 = vmax.f32 %v1018, %v1019
    %v1021 = vrot.slane %v1020, 1
    %v1022 = vmax.f32 %v1020, %v1021
    %v1023 = vsel %vm987, %v960, -inf
    %v1024 = vrot.slane %v1023, 4
    %v1025 = vmax.f32 %v1023, %v1024
    %v1026 = vrot.slane %v1025, 2
    %v1027 = vmax.f32 %v1025, %v1026
    %v1028 = vrot.slane %v1027, 1
    %v1029 = vmax.f32 %v1027, %v1028
    %v1030 = vsel %vm987, %v961, -inf
    %v1031 = vrot.slane %v1030, 4
    %v1032 = vmax.f32 %v1030, %v1031
    %v1033 = vrot.slane %v1032, 2
    %v1034 = vmax.f32 %v1032, %v1033
    %v1035 = vrot.slane %v1034, 1
    %v1036 = vmax.f32 %v1034, %v1035
    %v1037 = vsel %vm987, %v962, -inf
    %v1038 = vrot.slane %v1037, 4
    %v1039 = vmax.f32 %v1037, %v1038
    %v1040 = vrot.slane %v1039, 2
    %v1041 = vmax.f32 %v1039, %v1040
    %v1042 = vrot.slane %v1041, 1
    %v1043 = vmax.f32 %v1041, %v1042
    %v1044 = vsel %vm987, %v963, -inf
    %v1045 = vrot.slane %v1044, 4
    %v1046 = vmax.f32 %v1044, %v1045
    %v1047 = vrot.slane %v1046, 2
    %v1048 = vmax.f32 %v1046, %v1047
    %v1049 = vrot.slane %v1048, 1
    %v1050 = vmax.f32 %v1048, %v1049
    %v1051 = vsel %vm987, %v964, -inf
    %v1052 = vrot.slane %v1051, 4
    %v1053 = vmax.f32 %v1051, %v1052
    %v1054 = vrot.slane %v1053, 2
    %v1055 = vmax.f32 %v1053, %v1054
    %v1056 = vrot.slane %v1055, 1
    %v1057 = vmax.f32 %v1055, %v1056
    %v1058 = vsel %vm987, %v965, -inf
    %v1059 = vrot.slane %v1058, 4
    %v1060 = vmax.f32 %v1058, %v1059
    %v1061 = vrot.slane %v1060, 2
    %v1062 = vmax.f32 %v1060, %v1061
    %v1063 = vrot.slane %v1062, 1
    %v1064 = vmax.f32 %v1062, %v1063
    %v1065 = vsel %vm987, %v966, -inf
    %v1066 = vrot.slane %v1065, 4
    %v1067 = vmax.f32 %v1065, %v1066
    %v1068 = vrot.slane %v1067, 2
    %v1069 = vmax.f32 %v1067, %v1068
    %v1070 = vrot.slane %v1069, 1
    %v1071 = vmax.f32 %v1069, %v1070
    %v1072 = vsel %vm987, %v967, -inf
    %v1073 = vrot.slane %v1072, 4
    %v1074 = vmax.f32 %v1072, %v1073
    %v1075 = vrot.slane %v1074, 2
    %v1076 = vmax.f32 %v1074, %v1075
    %v1077 = vrot.slane %v1076, 1
    %v1078 = vmax.f32 %v1076, %v1077
    %v1079 = vsel %vm987, %v968, -inf
    %v1080 = vrot.slane %v1079, 4
    %v1081 = vmax.f32 %v1079, %v1080
    %v1082 = vrot.slane %v1081, 2
    %v1083 = vmax.f32 %v1081, %v1082
    %v1084 = vrot.slane %v1083, 1
    %v1085 = vmax.f32 %v1083, %v1084
    %v1086 = vsel %vm987, %v969, -inf
    %v1087 = vrot.slane %v1086, 4
    %v1088 = vmax.f32 %v1086, %v1087
    %v1089 = vrot.slane %v1088, 2
    %v1090 = vmax.f32 %v1088, %v1089
    %v1091 = vrot.slane %v1090, 1
    %v1092 = vmax.f32 %v1090, %v1091
    %v1093 = vsel %vm987, %v970, -inf
    %v1094 = vrot.slane %v1093, 4
    %v1095 = vmax.f32 %v1093, %v1094
    %v1096 = vrot.slane %v1095, 2
    %v1097 = vmax.f32 %v1095, %v1096
    %v1098 = vrot.slane %v1097, 1
    %v1099 = vmax.f32 %v1097, %v1098
    %v1100 = vsel %vm987, %v971, -inf
    %v1101 = vrot.slane %v1100, 4
    %v1102 = vmax.f32 %v1100, %v1101
    %v1103 = vrot.slane %v1102, 2
    %v1104 = vmax.f32 %v1102, %v1103
    %v1105 = vrot.slane %v1104, 1
    %v1106 = vmax.f32 %v1104, %v1105
    %v1107 = vsel %vm987, %v972, -inf
    %v1108 = vrot.slane %v1107, 4
    %v1109 = vmax.f32 %v1107, %v1108
    %v1110 = vrot.slane %v1109, 2
    %v1111 = vmax.f32 %v1109, %v1110
    %v1112 = vrot.slane %v1111, 1
    %v1113 = vmax.f32 %v1111, %v1112
    %v1114 = vsel %vm987, %v973, -inf
    %v1115 = vrot.slane %v1114, 4
    %v1116 = vmax.f32 %v1114, %v1115
    %v1117 = vrot.slane %v1116, 2
    %v1118 = vmax.f32 %v1116, %v1117
    %v1119 = vrot.slane %v1118, 1
    %v1120 = vmax.f32 %v1118, %v1119
    %v1121 = vsel %vm987, %v974, -inf
    %v1122 = vrot.slane %v1121, 4
    %v1123 = vmax.f32 %v1121, %v1122
    %v1124 = vrot.slane %v1123, 2
    %v1125 = vmax.f32 %v1123, %v1124
    %v1126 = vrot.slane %v1125, 1
    %v1127 = vmax.f32 %v1125, %v1126
    %v1128 = vsel %vm987, %v975, -inf
    %v1129 = vrot.slane %v1128, 4
    %v1130 = vmax.f32 %v1128, %v1129
    %v1131 = vrot.slane %v1130, 2
    %v1132 = vmax.f32 %v1130, %v1131
    %v1133 = vrot.slane %v1132, 1
    %v1134 = vmax.f32 %v1132, %v1133
    %v1135 = vsel %vm987, %v976, -inf
    %v1136 = vrot.slane %v1135, 4
    %v1137 = vmax.f32 %v1135, %v1136
    %v1138 = vrot.slane %v1137, 2
    %v1139 = vmax.f32 %v1137, %v1138
    %v1140 = vrot.slane %v1139, 1
    %v1141 = vmax.f32 %v1139, %v1140
    %v1142 = vsel %vm987, %v977, -inf
    %v1143 = vrot.slane %v1142, 4
    %v1144 = vmax.f32 %v1142, %v1143
    %v1145 = vrot.slane %v1144, 2
    %v1146 = vmax.f32 %v1144, %v1145
    %v1147 = vrot.slane %v1146, 1
    %v1148 = vmax.f32 %v1146, %v1147
    %v1149 = vsel %vm987, %v978, -inf
    %v1150 = vrot.slane %v1149, 4
    %v1151 = vmax.f32 %v1149, %v1150
    %v1152 = vrot.slane %v1151, 2
    %v1153 = vmax.f32 %v1151, %v1152
    %v1154 = vrot.slane %v1153, 1
    %v1155 = vmax.f32 %v1153, %v1154
    %v1156 = vsel %vm987, %v979, -inf
    %v1157 = vrot.slane %v1156, 4
    %v1158 = vmax.f32 %v1156, %v1157
    %v1159 = vrot.slane %v1158, 2
    %v1160 = vmax.f32 %v1158, %v1159
    %v1161 = vrot.slane %v1160, 1
    %v1162 = vmax.f32 %v1160, %v1161
    %v1163 = vsel %vm987, %v980, -inf
    %v1164 = vrot.slane %v1163, 4
    %v1165 = vmax.f32 %v1163, %v1164
    %v1166 = vrot.slane %v1165, 2
    %v1167 = vmax.f32 %v1165, %v1166
    %v1168 = vrot.slane %v1167, 1
    %v1169 = vmax.f32 %v1167, %v1168
    %v1170 = vsel %vm987, %v981, -inf
    %v1171 = vrot.slane %v1170, 4
    %v1172 = vmax.f32 %v1170, %v1171
    %v1173 = vrot.slane %v1172, 2
    %v1174 = vmax.f32 %v1172, %v1173
    %v1175 = vrot.slane %v1174, 1
    %v1176 = vmax.f32 %v1174, %v1175
    %v1177 = vsel %vm987, %v982, -inf
    %v1178 = vrot.slane %v1177, 4
    %v1179 = vmax.f32 %v1177, %v1178
    %v1180 = vrot.slane %v1179, 2
    %v1181 = vmax.f32 %v1179, %v1180
    %v1182 = vrot.slane %v1181, 1
    %v1183 = vmax.f32 %v1181, %v1182
    %v1184 = vsel %vm987, %v983, -inf
    %v1185 = vrot.slane %v1184, 4
    %v1186 = vmax.f32 %v1184, %v1185
    %v1187 = vrot.slane %v1186, 2
    %v1188 = vmax.f32 %v1186, %v1187
    %v1189 = vrot.slane %v1188, 1
    %v1190 = vmax.f32 %v1188, %v1189
    %v1191 = vsel %vm987, %v984, -inf
    %v1192 = vrot.slane %v1191, 4
    %v1193 = vmax.f32 %v1191, %v1192
    %v1194 = vrot.slane %v1193, 2
    %v1195 = vmax.f32 %v1193, %v1194
    %v1196 = vrot.slane %v1195, 1
    %v1197 = vmax.f32 %v1195, %v1196
    %v1198 = vsel %vm987, %v985, -inf
    %v1199 = vrot.slane %v1198, 4
    %v1200 = vmax.f32 %v1198, %v1199
    %v1201 = vrot.slane %v1200, 2
    %v1202 = vmax.f32 %v1200, %v1201
    %v1203 = vrot.slane %v1202, 1
    %v1204 = vmax.f32 %v1202, %v1203
    %v1205 = vsel %vm987, %v986, -inf
    %v1206 = vrot.slane %v1205, 4
    %v1207 = vmax.f32 %v1205, %v1206
    %v1208 = vrot.slane %v1207, 2
    %v1209 = vmax.f32 %v1207, %v1208
    %v1210 = vrot.slane %v1209, 1
    %v1211 = vmax.f32 %v1209, %v1210
    %v1212 = vsub.f32 %v955, %v994
    %v1213 = vsub.f32 %v956, %v1001
    %v1214 = vsub.f32 %v957, %v1008
    %v1215 = vsub.f32 %v958, %v1015
    %v1216 = vsub.f32 %v959, %v1022
    %v1217 = vsub.f32 %v960, %v1029
    %v1218 = vsub.f32 %v961, %v1036
    %v1219 = vsub.f32 %v962, %v1043
    %v1220 = vsub.f32 %v963, %v1050
    %v1221 = vsub.f32 %v964, %v1057
    %v1222 = vsub.f32 %v965, %v1064
    %v1223 = vsub.f32 %v966, %v1071
    %v1224 = vsub.f32 %v967, %v1078
    %v1225 = vsub.f32 %v968, %v1085
    %v1226 = vsub.f32 %v969, %v1092
    %v1227 = vsub.f32 %v970, %v1099
    %v1228 = vsub.f32 %v971, %v1106
    %v1229 = vsub.f32 %v972, %v1113
    %v1230 = vsub.f32 %v973, %v1120
    %v1231 = vsub.f32 %v974, %v1127
    %v1232 = vsub.f32 %v975, %v1134
    %v1233 = vsub.f32 %v976, %v1141
    %v1234 = vsub.f32 %v977, %v1148
    %v1235 = vsub.f32 %v978, %v1155
    %v1236 = vsub.f32 %v979, %v1162
    %v1237 = vsub.f32 %v980, %v1169
    %v1238 = vsub.f32 %v981, %v1176
    %v1239 = vsub.f32 %v982, %v1183
    %v1240 = vsub.f32 %v983, %v1190
    %v1241 = vsub.f32 %v984, %v1197
    %v1242 = vsub.f32 %v985, %v1204
    %v1243 = vsub.f32 %v986, %v1211
    %v1244 = vmul.f32 %v1212, 1.442695
    %v1245 = vpow.pop %v1244
    %v1246 = vmul.f32 %v1213, 1.442695
    %v1247 = vpow.pop %v1246
    %v1248 = vmul.f32 %v1214, 1.442695
    %v1249 = vpow.pop %v1248
    %v1250 = vmul.f32 %v1215, 1.442695
    %v1251 = vpow.pop %v1250
    %v1252 = vmul.f32 %v1216, 1.442695
    %v1253 = vpow.pop %v1252
    %v1254 = vmul.f32 %v1217, 1.442695
    %v1255 = vpow.pop %v1254
    %v1256 = vmul.f32 %v1218, 1.442695
    %v1257 = vpow.pop %v1256
    %v1258 = vmul.f32 %v1219, 1.442695
    %v1259 = vpow.pop %v1258
    %v1260 = vmul.f32 %v1220, 1.442695
    %v1261 = vpow.pop %v1260
    %v1262 = vmul.f32 %v1221, 1.442695
    %v1263 = vpow.pop %v1262
    %v1264 = vmul.f32 %v1222, 1.442695
    %v1265 = vpow.pop %v1264
    %v1266 = vmul.f32 %v1223, 1.442695
    %v1267 = vpow.pop %v1266
    %v1268 = vmul.f32 %v1224, 1.442695
    %v1269 = vpow.pop %v1268
    %v1270 = vmul.f32 %v1225, 1.442695
    %v1271 = vpow.pop %v1270
    %v1272 = vmul.f32 %v1226, 1.442695
    %v1273 = vpow.pop %v1272
    %v1274 = vmul.f32 %v1227, 1.442695
    %v1275 = vpow.pop %v1274
    %v1276 = vmul.f32 %v1228, 1.442695
    %v1277 = vpow.pop %v1276
    %v1278 = vmul.f32 %v1229, 1.442695
    %v1279 = vpow.pop %v1278
    %v1280 = vmul.f32 %v1230, 1.442695
    %v1281 = vpow.pop %v1280
    %v1282 = vmul.f32 %v1231, 1.442695
    %v1283 = vpow.pop %v1282
    %v1284 = vmul.f32 %v1232, 1.442695
    %v1285 = vpow.pop %v1284
    %v1286 = vmul.f32 %v1233, 1.442695
    %v1287 = vpow.pop %v1286
    %v1288 = vmul.f32 %v1234, 1.442695
    %v1289 = vpow.pop %v1288
    %v1290 = vmul.f32 %v1235, 1.442695
    %v1291 = vpow.pop %v1290
    %v1292 = vmul.f32 %v1236, 1.442695
    %v1293 = vpow.pop %v1292
    %v1294 = vmul.f32 %v1237, 1.442695
    %v1295 = vpow.pop %v1294
    %v1296 = vmul.f32 %v1238, 1.442695
    %v1297 = vpow.pop %v1296
    %v1298 = vmul.f32 %v1239, 1.442695
    %v1299 = vpow.pop %v1298
    %v1300 = vmul.f32 %v1240, 1.442695
    %v1301 = vpow.pop %v1300
    %v1302 = vmul.f32 %v1241, 1.442695
    %v1303 = vpow.pop %v1302
    %v1304 = vmul.f32 %v1242, 1.442695
    %v1305 = vpow.pop %v1304
    %v1306 = vmul.f32 %v1243, 1.442695
    %v1307 = vpow.pop %v1306
    %v1308 = vsel %vm987, %v1245, 0.0
    %v1309 = vrot.slane %v1308, 4
    %v1310 = vadd.f32 %v1308, %v1309
    %v1311 = vrot.slane %v1310, 2
    %v1312 = vadd.f32 %v1310, %v1311
    %v1313 = vrot.slane %v1312, 1
    %v1314 = vadd.f32 %v1312, %v1313
    %v1315 = vsel %vm987, %v1247, 0.0
    %v1316 = vrot.slane %v1315, 4
    %v1317 = vadd.f32 %v1315, %v1316
    %v1318 = vrot.slane %v1317, 2
    %v1319 = vadd.f32 %v1317, %v1318
    %v1320 = vrot.slane %v1319, 1
    %v1321 = vadd.f32 %v1319, %v1320
    %v1322 = vsel %vm987, %v1249, 0.0
    %v1323 = vrot.slane %v1322, 4
    %v1324 = vadd.f32 %v1322, %v1323
    %v1325 = vrot.slane %v1324, 2
    %v1326 = vadd.f32 %v1324, %v1325
    %v1327 = vrot.slane %v1326, 1
    %v1328 = vadd.f32 %v1326, %v1327
    %v1329 = vsel %vm987, %v1251, 0.0
    %v1330 = vrot.slane %v1329, 4
    %v1331 = vadd.f32 %v1329, %v1330
    %v1332 = vrot.slane %v1331, 2
    %v1333 = vadd.f32 %v1331, %v1332
    %v1334 = vrot.slane %v1333, 1
    %v1335 = vadd.f32 %v1333, %v1334
    %v1336 = vsel %vm987, %v1253, 0.0
    %v1337 = vrot.slane %v1336, 4
    %v1338 = vadd.f32 %v1336, %v1337
    %v1339 = vrot.slane %v1338, 2
    %v1340 = vadd.f32 %v1338, %v1339
    %v1341 = vrot.slane %v1340, 1
    %v1342 = vadd.f32 %v1340, %v1341
    %v1343 = vsel %vm987, %v1255, 0.0
    %v1344 = vrot.slane %v1343, 4
    %v1345 = vadd.f32 %v1343, %v1344
    %v1346 = vrot.slane %v1345, 2
    %v1347 = vadd.f32 %v1345, %v1346
    %v1348 = vrot.slane %v1347, 1
    %v1349 = vadd.f32 %v1347, %v1348
    %v1350 = vsel %vm987, %v1257, 0.0
    %v1351 = vrot.slane %v1350, 4
    %v1352 = vadd.f32 %v1350, %v1351
    %v1353 = vrot.slane %v1352, 2
    %v1354 = vadd.f32 %v1352, %v1353
    %v1355 = vrot.slane %v1354, 1
    %v1356 = vadd.f32 %v1354, %v1355
    %v1357 = vsel %vm987, %v1259, 0.0
    %v1358 = vrot.slane %v1357, 4
    %v1359 = vadd.f32 %v1357, %v1358
    %v1360 = vrot.slane %v1359, 2
    %v1361 = vadd.f32 %v1359, %v1360
    %v1362 = vrot.slane %v1361, 1
    %v1363 = vadd.f32 %v1361, %v1362
    %v1364 = vsel %vm987, %v1261, 0.0
    %v1365 = vrot.slane %v1364, 4
    %v1366 = vadd.f32 %v1364, %v1365
    %v1367 = vrot.slane %v1366, 2
    %v1368 = vadd.f32 %v1366, %v1367
    %v1369 = vrot.slane %v1368, 1
    %v1370 = vadd.f32 %v1368, %v1369
    %v1371 = vsel %vm987, %v1263, 0.0
    %v1372 = vrot.slane %v1371, 4
    %v1373 = vadd.f32 %v1371, %v1372
    %v1374 = vrot.slane %v1373, 2
    %v1375 = vadd.f32 %v1373, %v1374
    %v1376 = vrot.slane %v1375, 1
    %v1377 = vadd.f32 %v1375, %v1376
    %v1378 = vsel %vm987, %v1265, 0.0
    %v1379 = vrot.slane %v1378, 4
    %v1380 = vadd.f32 %v1378, %v1379
    %v1381 = vrot.slane %v1380, 2
    %v1382 = vadd.f32 %v1380, %v1381
    %v1383 = vrot.slane %v1382, 1
    %v1384 = vadd.f32 %v1382, %v1383
    %v1385 = vsel %vm987, %v1267, 0.0
    %v1386 = vrot.slane %v1385, 4
    %v1387 = vadd.f32 %v1385, %v1386
    %v1388 = vrot.slane %v1387, 2
    %v1389 = vadd.f32 %v1387, %v1388
    %v1390 = vrot.slane %v1389, 1
    %v1391 = vadd.f32 %v1389, %v1390
    %v1392 = vsel %vm987, %v1269, 0.0
    %v1393 = vrot.slane %v1392, 4
    %v1394 = vadd.f32 %v1392, %v1393
    %v1395 = vrot.slane %v1394, 2
    %v1396 = vadd.f32 %v1394, %v1395
    %v1397 = vrot.slane %v1396, 1
    %v1398 = vadd.f32 %v1396, %v1397
    %v1399 = vsel %vm987, %v1271, 0.0
    %v1400 = vrot.slane %v1399, 4
    %v1401 = vadd.f32 %v1399, %v1400
    %v1402 = vrot.slane %v1401, 2
    %v1403 = vadd.f32 %v1401, %v1402
    %v1404 = vrot.slane %v1403, 1
    %v1405 = vadd.f32 %v1403, %v1404
    %v1406 = vsel %vm987, %v1273, 0.0
    %v1407 = vrot.slane %v1406, 4
    %v1408 = vadd.f32 %v1406, %v1407
    %v1409 = vrot.slane %v1408, 2
    %v1410 = vadd.f32 %v1408, %v1409
    %v1411 = vrot.slane %v1410, 1
    %v1412 = vadd.f32 %v1410, %v1411
    %v1413 = vsel %vm987, %v1275, 0.0
    %v1414 = vrot.slane %v1413, 4
    %v1415 = vadd.f32 %v1413, %v1414
    %v1416 = vrot.slane %v1415, 2
    %v1417 = vadd.f32 %v1415, %v1416
    %v1418 = vrot.slane %v1417, 1
    %v1419 = vadd.f32 %v1417, %v1418
    %v1420 = vsel %vm987, %v1277, 0.0
    %v1421 = vrot.slane %v1420, 4
    %v1422 = vadd.f32 %v1420, %v1421
    %v1423 = vrot.slane %v1422, 2
    %v1424 = vadd.f32 %v1422, %v1423
    %v1425 = vrot.slane %v1424, 1
    %v1426 = vadd.f32 %v1424, %v1425
    %v1427 = vsel %vm987, %v1279, 0.0
    %v1428 = vrot.slane %v1427, 4
    %v1429 = vadd.f32 %v1427, %v1428
    %v1430 = vrot.slane %v1429, 2
    %v1431 = vadd.f32 %v1429, %v1430
    %v1432 = vrot.slane %v1431, 1
    %v1433 = vadd.f32 %v1431, %v1432
    %v1434 = vsel %vm987, %v1281, 0.0
    %v1435 = vrot.slane %v1434, 4
    %v1436 = vadd.f32 %v1434, %v1435
    %v1437 = vrot.slane %v1436, 2
    %v1438 = vadd.f32 %v1436, %v1437
    %v1439 = vrot.slane %v1438, 1
    %v1440 = vadd.f32 %v1438, %v1439
    %v1441 = vsel %vm987, %v1283, 0.0
    %v1442 = vrot.slane %v1441, 4
    %v1443 = vadd.f32 %v1441, %v1442
    %v1444 = vrot.slane %v1443, 2
    %v1445 = vadd.f32 %v1443, %v1444
    %v1446 = vrot.slane %v1445, 1
    %v1447 = vadd.f32 %v1445, %v1446
    %v1448 = vsel %vm987, %v1285, 0.0
    %v1449 = vrot.slane %v1448, 4
    %v1450 = vadd.f32 %v1448, %v1449
    %v1451 = vrot.slane %v1450, 2
    %v1452 = vadd.f32 %v1450, %v1451
    %v1453 = vrot.slane %v1452, 1
    %v1454 = vadd.f32 %v1452, %v1453
    %v1455 = vsel %vm987, %v1287, 0.0
    %v1456 = vrot.slane %v1455, 4
    %v1457 = vadd.f32 %v1455, %v1456
    %v1458 = vrot.slane %v1457, 2
    %v1459 = vadd.f32 %v1457, %v1458
    %v1460 = vrot.slane %v1459, 1
    %v1461 = vadd.f32 %v1459, %v1460
    %v1462 = vsel %vm987, %v1289, 0.0
    %v1463 = vrot.slane %v1462, 4
    %v1464 = vadd.f32 %v1462, %v1463
    %v1465 = vrot.slane %v1464, 2
    %v1466 = vadd.f32 %v1464, %v1465
    %v1467 = vrot.slane %v1466, 1
    %v1468 = vadd.f32 %v1466, %v1467
    %v1469 = vsel %vm987, %v1291, 0.0
    %v1470 = vrot.slane %v1469, 4
    %v1471 = vadd.f32 %v1469, %v1470
    %v1472 = vrot.slane %v1471, 2
    %v1473 = vadd.f32 %v1471, %v1472
    %v1474 = vrot.slane %v1473, 1
    %v1475 = vadd.f32 %v1473, %v1474
    %v1476 = vsel %vm987, %v1293, 0.0
    %v1477 = vrot.slane %v1476, 4
    %v1478 = vadd.f32 %v1476, %v1477
    %v1479 = vrot.slane %v1478, 2
    %v1480 = vadd.f32 %v1478, %v1479
    %v1481 = vrot.slane %v1480, 1
    %v1482 = vadd.f32 %v1480, %v1481
    %v1483 = vsel %vm987, %v1295, 0.0
    %v1484 = vrot.slane %v1483, 4
    %v1485 = vadd.f32 %v1483, %v1484
    %v1486 = vrot.slane %v1485, 2
    %v1487 = vadd.f32 %v1485, %v1486
    %v1488 = vrot.slane %v1487, 1
    %v1489 = vadd.f32 %v1487, %v1488
    %v1490 = vsel %vm987, %v1297, 0.0
    %v1491 = vrot.slane %v1490, 4
    %v1492 = vadd.f32 %v1490, %v1491
    %v1493 = vrot.slane %v1492, 2
    %v1494 = vadd.f32 %v1492, %v1493
    %v1495 = vrot.slane %v1494, 1
    %v1496 = vadd.f32 %v1494, %v1495
    %v1497 = vsel %vm987, %v1299, 0.0
    %v1498 = vrot.slane %v1497, 4
    %v1499 = vadd.f32 %v1497, %v1498
    %v1500 = vrot.slane %v1499, 2
    %v1501 = vadd.f32 %v1499, %v1500
    %v1502 = vrot.slane %v1501, 1
    %v1503 = vadd.f32 %v1501, %v1502
    %v1504 = vsel %vm987, %v1301, 0.0
    %v1505 = vrot.slane %v1504, 4
    %v1506 = vadd.f32 %v1504, %v1505
    %v1507 = vrot.slane %v1506, 2
    %v1508 = vadd.f32 %v1506, %v1507
    %v1509 = vrot.slane %v1508, 1
    %v1510 = vadd.f32 %v1508, %v1509
    %v1511 = vsel %vm987, %v1303, 0.0
    %v1512 = vrot.slane %v1511, 4
    %v1513 = vadd.f32 %v1511, %v1512
    %v1514 = vrot.slane %v1513, 2
    %v1515 = vadd.f32 %v1513, %v1514
    %v1516 = vrot.slane %v1515, 1
    %v1517 = vadd.f32 %v1515, %v1516
    %v1518 = vsel %vm987, %v1305, 0.0
    %v1519 = vrot.slane %v1518, 4
    %v1520 = vadd.f32 %v1518, %v1519
    %v1521 = vrot.slane %v1520, 2
    %v1522 = vadd.f32 %v1520, %v1521
    %v1523 = vrot.slane %v1522, 1
    %v1524 = vadd.f32 %v1522, %v1523
    %v1525 = vsel %vm987, %v1307, 0.0
    %v1526 = vrot.slane %v1525, 4
    %v1527 = vadd.f32 %v1525, %v1526
    %v1528 = vrot.slane %v1527, 2
    %v1529 = vadd.f32 %v1527, %v1528
    %v1530 = vrot.slane %v1529, 1
    %v1531 = vadd.f32 %v1529, %v1530
    %v1532 = vrcp.pop %v1314
    %v1533 = vrcp.pop %v1321
    %v1534 = vrcp.pop %v1328
    %v1535 = vrcp.pop %v1335
    %v1536 = vrcp.pop %v1342
    %v1537 = vrcp.pop %v1349
    %v1538 = vrcp.pop %v1356
    %v1539 = vrcp.pop %v1363
    %v1540 = vrcp.pop %v1370
    %v1541 = vrcp.pop %v1377
    %v1542 = vrcp.pop %v1384
    %v1543 = vrcp.pop %v1391
    %v1544 = vrcp.pop %v1398
    %v1545 = vrcp.pop %v1405
    %v1546 = vrcp.pop %v1412
    %v1547 = vrcp.pop %v1419
    %v1548 = vrcp.pop %v1426
    %v1549 = vrcp.pop %v1433
    %v1550 = vrcp.pop %v1440
    %v1551 = vrcp.pop %v1447
    %v1552 = vrcp.pop %v1454
    %v1553 = vrcp.pop %v1461
    %v1554 = vrcp.pop %v1468
    %v1555 = vrcp.pop %v1475
    %v1556 = vrcp.pop %v1482
    %v1557 = vrcp.pop %v1489
    %v1558 = vrcp.pop %v1496
    %v1559 = vrcp.pop %v1503
    %v1560 = vrcp.pop %v1510
    %v1561 = vrcp.pop %v1517
    %v1562 = vrcp.pop %v1524
    %v1563 = vrcp.pop %v1531
    %v1564 = vmul.f32 %v1245, %v1532
    %v1565 = vmul.f32 %v1247, %v1533
    %v1566 = vmul.f32 %v1249, %v1534
    %v1567 = vmul.f32 %v1251, %v1535
    %v1568 = vmul.f32 %v1253, %v1536
    %v1569 = vmul.f32 %v1255, %v1537
    %v1570 = vmul.f32 %v1257, %v1538
    %v1571 = vmul.f32 %v1259, %v1539
    %v1572 = vmul.f32 %v1261, %v1540
    %v1573 = vmul.f32 %v1263, %v1541
    %v1574 = vmul.f32 %v1265, %v1542
    %v1575 = vmul.f32 %v1267, %v1543
    %v1576 = vmul.f32 %v1269, %v1544
    %v1577 = vmul.f32 %v1271, %v1545
    %v1578 = vmul.f32 %v1273, %v1546
    %v1579 = vmul.f32 %v1275, %v1547
    %v1580 = vmul.f32 %v1277, %v1548
    %v1581 = vmul.f32 %v1279, %v1549
    %v1582 = vmul.f32 %v1281, %v1550
    %v1583 = vmul.f32 %v1283, %v1551
    %v1584 = vmul.f32 %v1285, %v1552
    %v1585 = vmul.f32 %v1287, %v1553
    %v1586 = vmul.f32 %v1289, %v1554
    %v1587 = vmul.f32 %v1291, %v1555
    %v1588 = vmul.f32 %v1293, %v1556
    %v1589 = vmul.f32 %v1295, %v1557
    %v1590 = vmul.f32 %v1297, %v1558
    %v1591 = vmul.f32 %v1299, %v1559
    %v1592 = vmul.f32 %v1301, %v1560
    %v1593 = vmul.f32 %v1303, %v1561
    %v1594 = vmul.f32 %v1305, %v1562
    %v1595 = vmul.f32 %v1307, %v1563
    %v1597 = vsel %vm987, %v1564, 0
    %v1600 = vsel %vm987, %v1565, 0
    %v1603 = vsel %vm987, %v1566, 0
    %v1606 = vsel %vm987, %v1567, 0
    %v1609 = vsel %vm987, %v1568, 0
    %v1612 = vsel %vm987, %v1569, 0
    %v1615 = vsel %vm987, %v1570, 0
    %v1618 = vsel %vm987, %v1571, 0
    %v1621 = vsel %vm987, %v1572, 0
    %v1624 = vsel %vm987, %v1573, 0
    %v1627 = vsel %vm987, %v1574, 0
    %v1630 = vsel %vm987, %v1575, 0
    %v1633 = vsel %vm987, %v1576, 0
    %v1636 = vsel %vm987, %v1577, 0
    %v1639 = vsel %vm987, %v1578, 0
    %v1642 = vsel %vm987, %v1579, 0
    %v1645 = vsel %vm987, %v1580, 0
    %v1648 = vsel %vm987, %v1581, 0
    %v1651 = vsel %vm987, %v1582, 0
    %v1654 = vsel %vm987, %v1583, 0
    %v1657 = vsel %vm987, %v1584, 0
    %v1660 = vsel %vm987, %v1585, 0
    %v1663 = vsel %vm987, %v1586, 0
    %v1666 = vsel %vm987, %v1587, 0
    %v1669 = vsel %vm987, %v1588, 0
    %v1672 = vsel %vm987, %v1589, 0
    %v1675 = vsel %vm987, %v1590, 0
    %v1678 = vsel %vm987, %v1591, 0
    %v1681 = vsel %vm987, %v1592, 0
    %v1684 = vsel %vm987, %v1593, 0
    %v1687 = vsel %vm987, %v1594, 0
    %v1690 = vsel %vm987, %v1595, 0
    %1692 = vmatpush.msra.mxu0 0.0
    %1693 = vmatpush.msra.mxu0 0.0
    %1694 = vmatpush.msra.mxu0 0.0
    %1695 = vmatpush.msra.mxu0 0.0
    %1696 = vmatpush.msra.mxu0 0.0
    %1697 = vmatpush.msra.mxu0 0.0
    %1698 = vmatpush.msra.mxu0 0.0
    %1699 = vmatpush.msra.mxu0 0.0
    %1700 = vmatpush.msra.mxu0 0.0
    %1701 = vmatpush.msra.mxu0 0.0
    %1702 = vmatpush.msra.mxu0 0.0
    %1703 = vmatpush.msra.mxu0 0.0
    %1704 = vmatpush.msra.mxu0 0.0
    %1705 = vmatpush.msra.mxu0 0.0
    %1706 = vmatpush.msra.mxu0 0.0
    %1707 = vmatpush.msra.mxu0 %v455
    %1708 = vmatmul.f32.gmra.mxu0 %v1597
    %v1709 = vpop.f32.mrf.mxu0
    %v1710 = vadd.f32 0.0, %v1709
    %1711 = vmatmul.f32.gmra.mxu0 %v1600
    %v1712 = vpop.f32.mrf.mxu0
    %v1713 = vadd.f32 0.0, %v1712
    %1714 = vmatmul.f32.gmra.mxu0 %v1603
    %v1715 = vpop.f32.mrf.mxu0
    %v1716 = vadd.f32 0.0, %v1715
    %1717 = vmatmul.f32.gmra.mxu0 %v1606
    %v1718 = vpop.f32.mrf.mxu0
    %v1719 = vadd.f32 0.0, %v1718
    %1720 = vmatmul.f32.gmra.mxu0 %v1609
    %v1721 = vpop.f32.mrf.mxu0
    %v1722 = vadd.f32 0.0, %v1721
    %1723 = vmatmul.f32.gmra.mxu0 %v1612
    %v1724 = vpop.f32.mrf.mxu0
    %v1725 = vadd.f32 0.0, %v1724
    %1726 = vmatmul.f32.gmra.mxu0 %v1615
    %v1727 = vpop.f32.mrf.mxu0
    %v1728 = vadd.f32 0.0, %v1727
    %1729 = vmatmul.f32.gmra.mxu0 %v1618
    %v1730 = vpop.f32.mrf.mxu0
    %v1731 = vadd.f32 0.0, %v1730
    %1732 = vmatmul.f32.gmra.mxu0 %v1621
    %v1733 = vpop.f32.mrf.mxu0
    %v1734 = vadd.f32 0.0, %v1733
    %1735 = vmatmul.f32.gmra.mxu0 %v1624
    %v1736 = vpop.f32.mrf.mxu0
    %v1737 = vadd.f32 0.0, %v1736
    %1738 = vmatmul.f32.gmra.mxu0 %v1627
    %v1739 = vpop.f32.mrf.mxu0
    %v1740 = vadd.f32 0.0, %v1739
    %1741 = vmatmul.f32.gmra.mxu0 %v1630
    %v1742 = vpop.f32.mrf.mxu0
    %v1743 = vadd.f32 0.0, %v1742
    %1744 = vmatmul.f32.gmra.mxu0 %v1633
    %v1745 = vpop.f32.mrf.mxu0
    %v1746 = vadd.f32 0.0, %v1745
    %1747 = vmatmul.f32.gmra.mxu0 %v1636
    %v1748 = vpop.f32.mrf.mxu0
    %v1749 = vadd.f32 0.0, %v1748
    %1750 = vmatmul.f32.gmra.mxu0 %v1639
    %v1751 = vpop.f32.mrf.mxu0
    %v1752 = vadd.f32 0.0, %v1751
    %1753 = vmatmul.f32.gmra.mxu0 %v1642
    %v1754 = vpop.f32.mrf.mxu0
    %v1755 = vadd.f32 0.0, %v1754
    %1756 = vmatmul.f32.gmra.mxu0 %v1645
    %v1757 = vpop.f32.mrf.mxu0
    %v1758 = vadd.f32 0.0, %v1757
    %1759 = vmatmul.f32.gmra.mxu0 %v1648
    %v1760 = vpop.f32.mrf.mxu0
    %v1761 = vadd.f32 0.0, %v1760
    %1762 = vmatmul.f32.gmra.mxu0 %v1651
    %v1763 = vpop.f32.mrf.mxu0
    %v1764 = vadd.f32 0.0, %v1763
    %1765 = vmatmul.f32.gmra.mxu0 %v1654
    %v1766 = vpop.f32.mrf.mxu0
    %v1767 = vadd.f32 0.0, %v1766
    %1768 = vmatmul.f32.gmra.mxu0 %v1657
    %v1769 = vpop.f32.mrf.mxu0
    %v1770 = vadd.f32 0.0, %v1769
    %1771 = vmatmul.f32.gmra.mxu0 %v1660
    %v1772 = vpop.f32.mrf.mxu0
    %v1773 = vadd.f32 0.0, %v1772
    %1774 = vmatmul.f32.gmra.mxu0 %v1663
    %v1775 = vpop.f32.mrf.mxu0
    %v1776 = vadd.f32 0.0, %v1775
    %1777 = vmatmul.f32.gmra.mxu0 %v1666
    %v1778 = vpop.f32.mrf.mxu0
    %v1779 = vadd.f32 0.0, %v1778
    %1780 = vmatmul.f32.gmra.mxu0 %v1669
    %v1781 = vpop.f32.mrf.mxu0
    %v1782 = vadd.f32 0.0, %v1781
    %1783 = vmatmul.f32.gmra.mxu0 %v1672
    %v1784 = vpop.f32.mrf.mxu0
    %v1785 = vadd.f32 0.0, %v1784
    %1786 = vmatmul.f32.gmra.mxu0 %v1675
    %v1787 = vpop.f32.mrf.mxu0
    %v1788 = vadd.f32 0.0, %v1787
    %1789 = vmatmul.f32.gmra.mxu0 %v1678
    %v1790 = vpop.f32.mrf.mxu0
    %v1791 = vadd.f32 0.0, %v1790
    %1792 = vmatmul.f32.gmra.mxu0 %v1681
    %v1793 = vpop.f32.mrf.mxu0
    %v1794 = vadd.f32 0.0, %v1793
    %1795 = vmatmul.f32.gmra.mxu0 %v1684
    %v1796 = vpop.f32.mrf.mxu0
    %v1797 = vadd.f32 0.0, %v1796
    %1798 = vmatmul.f32.gmra.mxu0 %v1687
    %v1799 = vpop.f32.mrf.mxu0
    %v1800 = vadd.f32 0.0, %v1799
    %1801 = vmatmul.f32.gmra.mxu0 %v1690
    %v1802 = vpop.f32.mrf.mxu0
    %v1803 = vadd.f32 0.0, %v1802
    %1804 = vdwg.mxu0
    %1805 = vrot.lane.b32.xlu0 %v569, 64
    %v1806 = vpop.permute.xlu0 %1805
    %1807 = vrot.lane.b32.xlu0 %v571, 64
    %v1808 = vpop.permute.xlu0 %1807
    %1809 = vrot.lane.b32.xlu0 %v574, 64
    %v1810 = vpop.permute.xlu0 %1809
    %1811 = vrot.lane.b32.xlu0 %v576, 64
    %v1812 = vpop.permute.xlu0 %1811
    %v1817 = vmul.f32 %v1710, %v1806
    %v1818 = vmul.f32 %v1713, %v1806
    %v1819 = vmul.f32 %v1716, %v1806
    %v1820 = vmul.f32 %v1719, %v1806
    %v1821 = vmul.f32 %v1722, %v1806
    %v1822 = vmul.f32 %v1725, %v1806
    %v1823 = vmul.f32 %v1728, %v1806
    %v1824 = vmul.f32 %v1731, %v1806
    %v1825 = vmul.f32 %v1734, %v1808
    %v1826 = vmul.f32 %v1737, %v1808
    %v1827 = vmul.f32 %v1740, %v1808
    %v1828 = vmul.f32 %v1743, %v1808
    %v1829 = vmul.f32 %v1746, %v1808
    %v1830 = vmul.f32 %v1749, %v1808
    %v1831 = vmul.f32 %v1752, %v1808
    %v1832 = vmul.f32 %v1755, %v1808
    %v1833 = vmul.f32 %v1758, %v1810
    %v1834 = vmul.f32 %v1761, %v1810
    %v1835 = vmul.f32 %v1764, %v1810
    %v1836 = vmul.f32 %v1767, %v1810
    %v1837 = vmul.f32 %v1770, %v1810
    %v1838 = vmul.f32 %v1773, %v1810
    %v1839 = vmul.f32 %v1776, %v1810
    %v1840 = vmul.f32 %v1779, %v1810
    %v1841 = vmul.f32 %v1782, %v1812
    %v1842 = vmul.f32 %v1785, %v1812
    %v1843 = vmul.f32 %v1788, %v1812
    %v1844 = vmul.f32 %v1791, %v1812
    %v1845 = vmul.f32 %v1794, %v1812
    %v1846 = vmul.f32 %v1797, %v1812
    %v1847 = vmul.f32 %v1800, %v1812
    %v1848 = vmul.f32 %v1803, %v1812
    %v1849 = vsel %vm552, %v1817, 0.0
    %v1850 = vrot.slane %v1849, 4
    %v1851 = vadd.f32 %v1849, %v1850
    %v1852 = vrot.slane %v1851, 2
    %v1853 = vadd.f32 %v1851, %v1852
    %v1854 = vrot.slane %v1853, 1
    %v1855 = vadd.f32 %v1853, %v1854
    %v1856 = vsel %vm552, %v1818, 0.0
    %v1857 = vrot.slane %v1856, 4
    %v1858 = vadd.f32 %v1856, %v1857
    %v1859 = vrot.slane %v1858, 2
    %v1860 = vadd.f32 %v1858, %v1859
    %v1861 = vrot.slane %v1860, 1
    %v1862 = vadd.f32 %v1860, %v1861
    %v1863 = vsel %vm552, %v1819, 0.0
    %v1864 = vrot.slane %v1863, 4
    %v1865 = vadd.f32 %v1863, %v1864
    %v1866 = vrot.slane %v1865, 2
    %v1867 = vadd.f32 %v1865, %v1866
    %v1868 = vrot.slane %v1867, 1
    %v1869 = vadd.f32 %v1867, %v1868
    %v1870 = vsel %vm552, %v1820, 0.0
    %v1871 = vrot.slane %v1870, 4
    %v1872 = vadd.f32 %v1870, %v1871
    %v1873 = vrot.slane %v1872, 2
    %v1874 = vadd.f32 %v1872, %v1873
    %v1875 = vrot.slane %v1874, 1
    %v1876 = vadd.f32 %v1874, %v1875
    %v1877 = vsel %vm552, %v1821, 0.0
    %v1878 = vrot.slane %v1877, 4
    %v1879 = vadd.f32 %v1877, %v1878
    %v1880 = vrot.slane %v1879, 2
    %v1881 = vadd.f32 %v1879, %v1880
    %v1882 = vrot.slane %v1881, 1
    %v1883 = vadd.f32 %v1881, %v1882
    %v1884 = vsel %vm552, %v1822, 0.0
    %v1885 = vrot.slane %v1884, 4
    %v1886 = vadd.f32 %v1884, %v1885
    %v1887 = vrot.slane %v1886, 2
    %v1888 = vadd.f32 %v1886, %v1887
    %v1889 = vrot.slane %v1888, 1
    %v1890 = vadd.f32 %v1888, %v1889
    %v1891 = vsel %vm552, %v1823, 0.0
    %v1892 = vrot.slane %v1891, 4
    %v1893 = vadd.f32 %v1891, %v1892
    %v1894 = vrot.slane %v1893, 2
    %v1895 = vadd.f32 %v1893, %v1894
    %v1896 = vrot.slane %v1895, 1
    %v1897 = vadd.f32 %v1895, %v1896
    %v1898 = vsel %vm552, %v1824, 0.0
    %v1899 = vrot.slane %v1898, 4
    %v1900 = vadd.f32 %v1898, %v1899
    %v1901 = vrot.slane %v1900, 2
    %v1902 = vadd.f32 %v1900, %v1901
    %v1903 = vrot.slane %v1902, 1
    %v1904 = vadd.f32 %v1902, %v1903
    %v1905 = vsel %vm552, %v1825, 0.0
    %v1906 = vrot.slane %v1905, 4
    %v1907 = vadd.f32 %v1905, %v1906
    %v1908 = vrot.slane %v1907, 2
    %v1909 = vadd.f32 %v1907, %v1908
    %v1910 = vrot.slane %v1909, 1
    %v1911 = vadd.f32 %v1909, %v1910
    %v1912 = vsel %vm552, %v1826, 0.0
    %v1913 = vrot.slane %v1912, 4
    %v1914 = vadd.f32 %v1912, %v1913
    %v1915 = vrot.slane %v1914, 2
    %v1916 = vadd.f32 %v1914, %v1915
    %v1917 = vrot.slane %v1916, 1
    %v1918 = vadd.f32 %v1916, %v1917
    %v1919 = vsel %vm552, %v1827, 0.0
    %v1920 = vrot.slane %v1919, 4
    %v1921 = vadd.f32 %v1919, %v1920
    %v1922 = vrot.slane %v1921, 2
    %v1923 = vadd.f32 %v1921, %v1922
    %v1924 = vrot.slane %v1923, 1
    %v1925 = vadd.f32 %v1923, %v1924
    %v1926 = vsel %vm552, %v1828, 0.0
    %v1927 = vrot.slane %v1926, 4
    %v1928 = vadd.f32 %v1926, %v1927
    %v1929 = vrot.slane %v1928, 2
    %v1930 = vadd.f32 %v1928, %v1929
    %v1931 = vrot.slane %v1930, 1
    %v1932 = vadd.f32 %v1930, %v1931
    %v1933 = vsel %vm552, %v1829, 0.0
    %v1934 = vrot.slane %v1933, 4
    %v1935 = vadd.f32 %v1933, %v1934
    %v1936 = vrot.slane %v1935, 2
    %v1937 = vadd.f32 %v1935, %v1936
    %v1938 = vrot.slane %v1937, 1
    %v1939 = vadd.f32 %v1937, %v1938
    %v1940 = vsel %vm552, %v1830, 0.0
    %v1941 = vrot.slane %v1940, 4
    %v1942 = vadd.f32 %v1940, %v1941
    %v1943 = vrot.slane %v1942, 2
    %v1944 = vadd.f32 %v1942, %v1943
    %v1945 = vrot.slane %v1944, 1
    %v1946 = vadd.f32 %v1944, %v1945
    %v1947 = vsel %vm552, %v1831, 0.0
    %v1948 = vrot.slane %v1947, 4
    %v1949 = vadd.f32 %v1947, %v1948
    %v1950 = vrot.slane %v1949, 2
    %v1951 = vadd.f32 %v1949, %v1950
    %v1952 = vrot.slane %v1951, 1
    %v1953 = vadd.f32 %v1951, %v1952
    %v1954 = vsel %vm552, %v1832, 0.0
    %v1955 = vrot.slane %v1954, 4
    %v1956 = vadd.f32 %v1954, %v1955
    %v1957 = vrot.slane %v1956, 2
    %v1958 = vadd.f32 %v1956, %v1957
    %v1959 = vrot.slane %v1958, 1
    %v1960 = vadd.f32 %v1958, %v1959
    %v1961 = vsel %vm552, %v1833, 0.0
    %v1962 = vrot.slane %v1961, 4
    %v1963 = vadd.f32 %v1961, %v1962
    %v1964 = vrot.slane %v1963, 2
    %v1965 = vadd.f32 %v1963, %v1964
    %v1966 = vrot.slane %v1965, 1
    %v1967 = vadd.f32 %v1965, %v1966
    %v1968 = vsel %vm552, %v1834, 0.0
    %v1969 = vrot.slane %v1968, 4
    %v1970 = vadd.f32 %v1968, %v1969
    %v1971 = vrot.slane %v1970, 2
    %v1972 = vadd.f32 %v1970, %v1971
    %v1973 = vrot.slane %v1972, 1
    %v1974 = vadd.f32 %v1972, %v1973
    %v1975 = vsel %vm552, %v1835, 0.0
    %v1976 = vrot.slane %v1975, 4
    %v1977 = vadd.f32 %v1975, %v1976
    %v1978 = vrot.slane %v1977, 2
    %v1979 = vadd.f32 %v1977, %v1978
    %v1980 = vrot.slane %v1979, 1
    %v1981 = vadd.f32 %v1979, %v1980
    %v1982 = vsel %vm552, %v1836, 0.0
    %v1983 = vrot.slane %v1982, 4
    %v1984 = vadd.f32 %v1982, %v1983
    %v1985 = vrot.slane %v1984, 2
    %v1986 = vadd.f32 %v1984, %v1985
    %v1987 = vrot.slane %v1986, 1
    %v1988 = vadd.f32 %v1986, %v1987
    %v1989 = vsel %vm552, %v1837, 0.0
    %v1990 = vrot.slane %v1989, 4
    %v1991 = vadd.f32 %v1989, %v1990
    %v1992 = vrot.slane %v1991, 2
    %v1993 = vadd.f32 %v1991, %v1992
    %v1994 = vrot.slane %v1993, 1
    %v1995 = vadd.f32 %v1993, %v1994
    %v1996 = vsel %vm552, %v1838, 0.0
    %v1997 = vrot.slane %v1996, 4
    %v1998 = vadd.f32 %v1996, %v1997
    %v1999 = vrot.slane %v1998, 2
    %v2000 = vadd.f32 %v1998, %v1999
    %v2001 = vrot.slane %v2000, 1
    %v2002 = vadd.f32 %v2000, %v2001
    %v2003 = vsel %vm552, %v1839, 0.0
    %v2004 = vrot.slane %v2003, 4
    %v2005 = vadd.f32 %v2003, %v2004
    %v2006 = vrot.slane %v2005, 2
    %v2007 = vadd.f32 %v2005, %v2006
    %v2008 = vrot.slane %v2007, 1
    %v2009 = vadd.f32 %v2007, %v2008
    %v2010 = vsel %vm552, %v1840, 0.0
    %v2011 = vrot.slane %v2010, 4
    %v2012 = vadd.f32 %v2010, %v2011
    %v2013 = vrot.slane %v2012, 2
    %v2014 = vadd.f32 %v2012, %v2013
    %v2015 = vrot.slane %v2014, 1
    %v2016 = vadd.f32 %v2014, %v2015
    %v2017 = vsel %vm552, %v1841, 0.0
    %v2018 = vrot.slane %v2017, 4
    %v2019 = vadd.f32 %v2017, %v2018
    %v2020 = vrot.slane %v2019, 2
    %v2021 = vadd.f32 %v2019, %v2020
    %v2022 = vrot.slane %v2021, 1
    %v2023 = vadd.f32 %v2021, %v2022
    %v2024 = vsel %vm552, %v1842, 0.0
    %v2025 = vrot.slane %v2024, 4
    %v2026 = vadd.f32 %v2024, %v2025
    %v2027 = vrot.slane %v2026, 2
    %v2028 = vadd.f32 %v2026, %v2027
    %v2029 = vrot.slane %v2028, 1
    %v2030 = vadd.f32 %v2028, %v2029
    %v2031 = vsel %vm552, %v1843, 0.0
    %v2032 = vrot.slane %v2031, 4
    %v2033 = vadd.f32 %v2031, %v2032
    %v2034 = vrot.slane %v2033, 2
    %v2035 = vadd.f32 %v2033, %v2034
    %v2036 = vrot.slane %v2035, 1
    %v2037 = vadd.f32 %v2035, %v2036
    %v2038 = vsel %vm552, %v1844, 0.0
    %v2039 = vrot.slane %v2038, 4
    %v2040 = vadd.f32 %v2038, %v2039
    %v2041 = vrot.slane %v2040, 2
    %v2042 = vadd.f32 %v2040, %v2041
    %v2043 = vrot.slane %v2042, 1
    %v2044 = vadd.f32 %v2042, %v2043
    %v2045 = vsel %vm552, %v1845, 0.0
    %v2046 = vrot.slane %v2045, 4
    %v2047 = vadd.f32 %v2045, %v2046
    %v2048 = vrot.slane %v2047, 2
    %v2049 = vadd.f32 %v2047, %v2048
    %v2050 = vrot.slane %v2049, 1
    %v2051 = vadd.f32 %v2049, %v2050
    %v2052 = vsel %vm552, %v1846, 0.0
    %v2053 = vrot.slane %v2052, 4
    %v2054 = vadd.f32 %v2052, %v2053
    %v2055 = vrot.slane %v2054, 2
    %v2056 = vadd.f32 %v2054, %v2055
    %v2057 = vrot.slane %v2056, 1
    %v2058 = vadd.f32 %v2056, %v2057
    %v2059 = vsel %vm552, %v1847, 0.0
    %v2060 = vrot.slane %v2059, 4
    %v2061 = vadd.f32 %v2059, %v2060
    %v2062 = vrot.slane %v2061, 2
    %v2063 = vadd.f32 %v2061, %v2062
    %v2064 = vrot.slane %v2063, 1
    %v2065 = vadd.f32 %v2063, %v2064
    %v2066 = vsel %vm552, %v1848, 0.0
    %v2067 = vrot.slane %v2066, 4
    %v2068 = vadd.f32 %v2066, %v2067
    %v2069 = vrot.slane %v2068, 2
    %v2070 = vadd.f32 %v2068, %v2069
    %v2071 = vrot.slane %v2070, 1
    %v2072 = vadd.f32 %v2070, %v2071
    %v2073 = vpack.c.bf16 %v1855, %v1855
    %v2074 = vpack.c.bf16 %v1862, %v1862
    %v2075 = vpack.c.bf16 %v1869, %v1869
    %v2076 = vpack.c.bf16 %v1876, %v1876
    %v2077 = vpack.c.bf16 %v1883, %v1883
    %v2078 = vpack.c.bf16 %v1890, %v1890
    %v2079 = vpack.c.bf16 %v1897, %v1897
    %v2080 = vpack.c.bf16 %v1904, %v1904
    %v2081 = vpack.c.bf16 %v1911, %v1911
    %v2082 = vpack.c.bf16 %v1918, %v1918
    %v2083 = vpack.c.bf16 %v1925, %v1925
    %v2084 = vpack.c.bf16 %v1932, %v1932
    %v2085 = vpack.c.bf16 %v1939, %v1939
    %v2086 = vpack.c.bf16 %v1946, %v1946
    %v2087 = vpack.c.bf16 %v1953, %v1953
    %v2088 = vpack.c.bf16 %v1960, %v1960
    %v2089 = vpack.c.bf16 %v1967, %v1967
    %v2090 = vpack.c.bf16 %v1974, %v1974
    %v2091 = vpack.c.bf16 %v1981, %v1981
    %v2092 = vpack.c.bf16 %v1988, %v1988
    %v2093 = vpack.c.bf16 %v1995, %v1995
    %v2094 = vpack.c.bf16 %v2002, %v2002
    %v2095 = vpack.c.bf16 %v2009, %v2009
    %v2096 = vpack.c.bf16 %v2016, %v2016
    %v2097 = vpack.c.bf16 %v2023, %v2023
    %v2098 = vpack.c.bf16 %v2030, %v2030
    %v2099 = vpack.c.bf16 %v2037, %v2037
    %v2100 = vpack.c.bf16 %v2044, %v2044
    %v2101 = vpack.c.bf16 %v2051, %v2051
    %v2102 = vpack.c.bf16 %v2058, %v2058
    %v2103 = vpack.c.bf16 %v2065, %v2065
    %v2104 = vpack.c.bf16 %v2072, %v2072
    %v2106 = vperm.slane %v481, 0
    %v2140 = vunpack.c.l.b16 %v2073
    %v2141 = vunpack.c.l.b16 %v2074
    %v2142 = vunpack.c.l.b16 %v2075
    %v2143 = vunpack.c.l.b16 %v2076
    %v2144 = vunpack.c.l.b16 %v2077
    %v2145 = vunpack.c.l.b16 %v2078
    %v2146 = vunpack.c.l.b16 %v2079
    %v2147 = vunpack.c.l.b16 %v2080
    %v2148 = vunpack.c.l.b16 %v2081
    %v2149 = vunpack.c.l.b16 %v2082
    %v2150 = vunpack.c.l.b16 %v2083
    %v2151 = vunpack.c.l.b16 %v2084
    %v2152 = vunpack.c.l.b16 %v2085
    %v2153 = vunpack.c.l.b16 %v2086
    %v2154 = vunpack.c.l.b16 %v2087
    %v2155 = vunpack.c.l.b16 %v2088
    %v2156 = vunpack.c.l.b16 %v2089
    %v2157 = vunpack.c.l.b16 %v2090
    %v2158 = vunpack.c.l.b16 %v2091
    %v2159 = vunpack.c.l.b16 %v2092
    %v2160 = vunpack.c.l.b16 %v2093
    %v2161 = vunpack.c.l.b16 %v2094
    %v2162 = vunpack.c.l.b16 %v2095
    %v2163 = vunpack.c.l.b16 %v2096
    %v2164 = vunpack.c.l.b16 %v2097
    %v2165 = vunpack.c.l.b16 %v2098
    %v2166 = vunpack.c.l.b16 %v2099
    %v2167 = vunpack.c.l.b16 %v2100
    %v2168 = vunpack.c.l.b16 %v2101
    %v2169 = vunpack.c.l.b16 %v2102
    %v2170 = vunpack.c.l.b16 %v2103
    %v2171 = vunpack.c.l.b16 %v2104
    %vm2172 = vcmask 1041409
    %v2173 = vsel %vm2172, %v2141, %v2140
    %vm2174 = vcmask 1042434
    %v2175 = vsel %vm2174, %v2142, %v2173
    %vm2176 = vcmask 1043459
    %v2177 = vsel %vm2176, %v2143, %v2175
    %vm2178 = vcmask 1044484
    %v2179 = vsel %vm2178, %v2144, %v2177
    %vm2180 = vcmask 1045509
    %v2181 = vsel %vm2180, %v2145, %v2179
    %vm2182 = vcmask 1046534
    %v2183 = vsel %vm2182, %v2146, %v2181
    %vm2184 = vcmask 1047559
    %v2185 = vsel %vm2184, %v2147, %v2183
    %v2186 = vsel %vm2172, %v2149, %v2148
    %v2187 = vsel %vm2174, %v2150, %v2186
    %v2188 = vsel %vm2176, %v2151, %v2187
    %v2189 = vsel %vm2178, %v2152, %v2188
    %v2190 = vsel %vm2180, %v2153, %v2189
    %v2191 = vsel %vm2182, %v2154, %v2190
    %v2192 = vsel %vm2184, %v2155, %v2191
    %v2193 = vsel %vm2172, %v2157, %v2156
    %v2194 = vsel %vm2174, %v2158, %v2193
    %v2195 = vsel %vm2176, %v2159, %v2194
    %v2196 = vsel %vm2178, %v2160, %v2195
    %v2197 = vsel %vm2180, %v2161, %v2196
    %v2198 = vsel %vm2182, %v2162, %v2197
    %v2199 = vsel %vm2184, %v2163, %v2198
    %v2200 = vsel %vm2172, %v2165, %v2164
    %v2201 = vsel %vm2174, %v2166, %v2200
    %v2202 = vsel %vm2176, %v2167, %v2201
    %v2203 = vsel %vm2178, %v2168, %v2202
    %v2204 = vsel %vm2180, %v2169, %v2203
    %v2205 = vsel %vm2182, %v2170, %v2204
    %v2206 = vsel %vm2184, %v2171, %v2205
    %v2207 = vpack.c.b16 %v2192, %v2185
    %v2208 = vpack.c.b16 %v2206, %v2199
    %v2213 = vunpack.c.l.b16 %v477
    %v2214 = vunpack.c.l.b16 %v478
    %v2215 = vunpack.c.l.b16 %v479
    %v2216 = vunpack.c.l.b16 %v480
    %v2217 = vpack.c.b16 %v2214, %v2213
    %v2218 = vpack.c.b16 %v2216, %v2215
    %v2222 = vsel %vm552, %v2207, 0
    %v2225 = vsel %vm552, %v2208, 0
    %2227 = vmatpush.bf16.msra.mxu0 0
    %2228 = vmatpush.bf16.msra.mxu0 0
    %2229 = vmatpush.bf16.msra.mxu0 0
    %2230 = vmatpush.bf16.msra.mxu0 0
    %2231 = vmatpush.bf16.msra.mxu0 0
    %2232 = vmatpush.bf16.msra.mxu0 0
    %2233 = vmatpush.bf16.msra.mxu0 %v2218
    %2234 = vmatpush.bf16.msra.mxu0 %v2217
    %2235 = vmatmul.bf16.gmra.mxu0 %v2222
    %v2236 = vpop.f32.mrf.mxu0
    %v2237 = vadd.f32 %v2106, %v2236
    %v2238 = vpop.f32.mrf.mxu0
    %v2239 = vadd.f32 %v2106, %v2238
    %2240 = vmatmul.bf16.gmra.mxu0 %v2225
    %v2241 = vpop.f32.mrf.mxu0
    %v2242 = vadd.f32 %v2106, %v2241
    %v2243 = vpop.f32.mrf.mxu0
    %v2244 = vadd.f32 %v2106, %v2243
    %2245 = vdwg.mxu0
    %v2246 = vadd.f32 %v2237, %v436
    %v2247 = vadd.f32 %v2239, %v437
    %v2248 = vadd.f32 %v2242, %v438
    %v2249 = vadd.f32 %v2244, %v439
    %v2250 = vsel %vm552, %v2246, 0.0
    %2251 = vadd.xlane.f32.xlu0 %v2250
    %v2252 = vpop.xlane.xlu0 %2251
    %v2253 = vsel %vm552, %v2247, 0.0
    %2254 = vadd.xlane.f32.xlu0 %v2253
    %v2255 = vpop.xlane.xlu0 %2254
    %v2256 = vsel %vm552, %v2248, 0.0
    %2257 = vadd.xlane.f32.xlu0 %v2256
    %v2258 = vpop.xlane.xlu0 %2257
    %v2259 = vsel %vm552, %v2249, 0.0
    %2260 = vadd.xlane.f32.xlu0 %v2259
    %v2261 = vpop.xlane.xlu0 %2260
    %v2262 = vrcp.pop 32.0
    %v2263 = vmul.f32 32.0, %v2262
    %v2264 = vsub.f32 1.0, %v2263
    %v2265 = vmul.f32 %v2262, %v2264
    %v2266 = vadd.f32 %v2262, %v2265
    %vm2267 = vweird.f32 %v2262
    %v2268 = vsel %vm2267, %v2262, %v2266
    %v2269 = vmul.f32 %v2252, %v2268
    %v2270 = vmul.f32 %v2255, %v2268
    %v2271 = vmul.f32 %v2258, %v2268
    %v2272 = vmul.f32 %v2261, %v2268
    %v2273 = vmul.f32 %v2246, %v2246
    %v2274 = vmul.f32 %v2247, %v2247
    %v2275 = vmul.f32 %v2248, %v2248
    %v2276 = vmul.f32 %v2249, %v2249
    %v2277 = vsel %vm552, %v2273, 0.0
    %2278 = vadd.xlane.f32.xlu0 %v2277
    %v2279 = vpop.xlane.xlu0 %2278
    %v2280 = vsel %vm552, %v2274, 0.0
    %2281 = vadd.xlane.f32.xlu0 %v2280
    %v2282 = vpop.xlane.xlu0 %2281
    %v2283 = vsel %vm552, %v2275, 0.0
    %2284 = vadd.xlane.f32.xlu0 %v2283
    %v2285 = vpop.xlane.xlu0 %2284
    %v2286 = vsel %vm552, %v2276, 0.0
    %2287 = vadd.xlane.f32.xlu0 %v2286
    %v2288 = vpop.xlane.xlu0 %2287
    %v2289 = vmul.f32 %v2279, %v2268
    %v2290 = vmul.f32 %v2282, %v2268
    %v2291 = vmul.f32 %v2285, %v2268
    %v2292 = vmul.f32 %v2288, %v2268
    %v2293 = vmul.f32 %v2269, %v2269
    %v2294 = vmul.f32 %v2270, %v2270
    %v2295 = vmul.f32 %v2271, %v2271
    %v2296 = vmul.f32 %v2272, %v2272
    %v2297 = vsub.f32 %v2289, %v2293
    %v2298 = vsub.f32 %v2290, %v2294
    %v2299 = vsub.f32 %v2291, %v2295
    %v2300 = vsub.f32 %v2292, %v2296
    %v2301 = vsub.f32 %v2246, %v2269
    %v2302 = vsub.f32 %v2247, %v2270
    %v2303 = vsub.f32 %v2248, %v2271
    %v2304 = vsub.f32 %v2249, %v2272
    %v2305 = vadd.f32 %v2297, 1e-12
    %v2306 = vadd.f32 %v2298, 1e-12
    %v2307 = vadd.f32 %v2299, 1e-12
    %v2308 = vadd.f32 %v2300, 1e-12
    %v2309 = vrsqrt.pop %v2305
    %v2310 = vmul.f32 %v2309, %v2305
    %v2311 = vmul.f32 %v2310, %v2309
    %v2312 = vmul.f32 0.5, %v2311
    %v2313 = vsub.f32 1.5, %v2312
    %v2314 = vmul.f32 %v2309, %v2313
    %vm2315 = vweird.f32 %v2305
    %vm2316 = vweird.f32 %v2309
    %vm2317 = vmor %vm2315, %vm2316
    %v2318 = vsel %vm2317, %v2309, %v2314
    %v2319 = vrsqrt.pop %v2306
    %v2320 = vmul.f32 %v2319, %v2306
    %v2321 = vmul.f32 %v2320, %v2319
    %v2322 = vmul.f32 0.5, %v2321
    %v2323 = vsub.f32 1.5, %v2322
    %v2324 = vmul.f32 %v2319, %v2323
    %vm2325 = vweird.f32 %v2306
    %vm2326 = vweird.f32 %v2319
    %vm2327 = vmor %vm2325, %vm2326
    %v2328 = vsel %vm2327, %v2319, %v2324
    %v2329 = vrsqrt.pop %v2307
    %v2330 = vmul.f32 %v2329, %v2307
    %v2331 = vmul.f32 %v2330, %v2329
    %v2332 = vmul.f32 0.5, %v2331
    %v2333 = vsub.f32 1.5, %v2332
    %v2334 = vmul.f32 %v2329, %v2333
    %vm2335 = vweird.f32 %v2307
    %vm2336 = vweird.f32 %v2329
    %vm2337 = vmor %vm2335, %vm2336
    %v2338 = vsel %vm2337, %v2329, %v2334
    %v2339 = vrsqrt.pop %v2308
    %v2340 = vmul.f32 %v2339, %v2308
    %v2341 = vmul.f32 %v2340, %v2339
    %v2342 = vmul.f32 0.5, %v2341
    %v2343 = vsub.f32 1.5, %v2342
    %v2344 = vmul.f32 %v2339, %v2343
    %vm2345 = vweird.f32 %v2308
    %vm2346 = vweird.f32 %v2339
    %vm2347 = vmor %vm2345, %vm2346
    %v2348 = vsel %vm2347, %v2339, %v2344
    %v2349 = vmul.f32 %v2301, %v2318
    %v2350 = vmul.f32 %v2302, %v2328
    %v2351 = vmul.f32 %v2303, %v2338
    %v2352 = vmul.f32 %v2304, %v2348
    %v2354 = vperm.slane %v482, 0
    %v2356 = vmul.f32 %v2349, %v2354
    %v2357 = vmul.f32 %v2350, %v2354
    %v2358 = vmul.f32 %v2351, %v2354
    %v2359 = vmul.f32 %v2352, %v2354
    %v2361 = vperm.slane %v483, 0
    %v2363 = vadd.f32 %v2356, %v2361
    %v2364 = vadd.f32 %v2357, %v2361
    %v2365 = vadd.f32 %v2358, %v2361
    %v2366 = vadd.f32 %v2359, %v2361
    %v2367 = vpack.c.bf16 %v2364, %v2363
    %v2368 = vpack.c.bf16 %v2366, %v2365
    %v2370 = vperm.slane %v488, 0
    %v2376 = vunpack.c.l.b16 %v484
    %v2377 = vunpack.c.l.b16 %v485
    %v2378 = vunpack.c.l.b16 %v486
    %v2379 = vunpack.c.l.b16 %v487
    %v2380 = vpack.c.b16 %v2377, %v2376
    %v2381 = vpack.c.b16 %v2379, %v2378
    %v2385 = vsel %vm552, %v2367, 0
    %v2388 = vsel %vm552, %v2368, 0
    %2390 = vmatpush.bf16.msra.mxu0 0
    %2391 = vmatpush.bf16.msra.mxu0 0
    %2392 = vmatpush.bf16.msra.mxu0 0
    %2393 = vmatpush.bf16.msra.mxu0 0
    %2394 = vmatpush.bf16.msra.mxu0 0
    %2395 = vmatpush.bf16.msra.mxu0 0
    %2396 = vmatpush.bf16.msra.mxu0 %v2381
    %2397 = vmatpush.bf16.msra.mxu0 %v2380
    %2398 = vmatmul.bf16.gmra.mxu0 %v2385
    %v2399 = vpop.f32.mrf.mxu0
    %v2400 = vadd.f32 %v2370, %v2399
    %v2401 = vpop.f32.mrf.mxu0
    %v2402 = vadd.f32 %v2370, %v2401
    %2403 = vmatmul.bf16.gmra.mxu0 %v2388
    %v2404 = vpop.f32.mrf.mxu0
    %v2405 = vadd.f32 %v2370, %v2404
    %v2406 = vpop.f32.mrf.mxu0
    %v2407 = vadd.f32 %v2370, %v2406
    %2408 = vdwg.mxu0
    %v2409 = vmul.f32 %v2400, %v2400
    %v2410 = vmul.f32 %v2402, %v2402
    %v2411 = vmul.f32 %v2405, %v2405
    %v2412 = vmul.f32 %v2407, %v2407
    %v2413 = vmul.f32 %v2400, %v2409
    %v2414 = vmul.f32 %v2402, %v2410
    %v2415 = vmul.f32 %v2405, %v2411
    %v2416 = vmul.f32 %v2407, %v2412
    %v2417 = vmul.f32 %v2413, 0.044715
    %v2418 = vmul.f32 %v2414, 0.044715
    %v2419 = vmul.f32 %v2415, 0.044715
    %v2420 = vmul.f32 %v2416, 0.044715
    %v2421 = vadd.f32 %v2400, %v2417
    %v2422 = vadd.f32 %v2402, %v2418
    %v2423 = vadd.f32 %v2405, %v2419
    %v2424 = vadd.f32 %v2407, %v2420
    %v2425 = vmul.f32 %v2421, 0.7978846
    %v2426 = vmul.f32 %v2422, 0.7978846
    %v2427 = vmul.f32 %v2423, 0.7978846
    %v2428 = vmul.f32 %v2424, 0.7978846
    %v2429 = vtanh.pop %v2425
    %v2430 = vtanh.pop %v2426
    %v2431 = vtanh.pop %v2427
    %v2432 = vtanh.pop %v2428
    %v2433 = vadd.f32 %v2429, 1.0
    %v2434 = vadd.f32 %v2430, 1.0
    %v2435 = vadd.f32 %v2431, 1.0
    %v2436 = vadd.f32 %v2432, 1.0
    %v2437 = vmul.f32 %v2433, 0.5
    %v2438 = vmul.f32 %v2434, 0.5
    %v2439 = vmul.f32 %v2435, 0.5
    %v2440 = vmul.f32 %v2436, 0.5
    %v2441 = vmul.f32 %v2400, %v2437
    %v2442 = vmul.f32 %v2402, %v2438
    %v2443 = vmul.f32 %v2405, %v2439
    %v2444 = vmul.f32 %v2407, %v2440
    %v2445 = vpack.c.bf16 %v2442, %v2441
    %v2446 = vpack.c.bf16 %v2444, %v2443
    %v2448 = vperm.slane %v505, 0
    %v2466 = vunpack.c.l.b16 %v489
    %v2467 = vunpack.c.l.b16 %v490
    %v2468 = vunpack.c.l.b16 %v491
    %v2469 = vunpack.c.l.b16 %v492
    %v2470 = vunpack.c.l.b16 %v493
    %v2471 = vunpack.c.l.b16 %v494
    %v2472 = vunpack.c.l.b16 %v495
    %v2473 = vunpack.c.l.b16 %v496
    %v2474 = vunpack.c.l.b16 %v497
    %v2475 = vunpack.c.l.b16 %v498
    %v2476 = vunpack.c.l.b16 %v499
    %v2477 = vunpack.c.l.b16 %v500
    %v2478 = vunpack.c.l.b16 %v501
    %v2479 = vunpack.c.l.b16 %v502
    %v2480 = vunpack.c.l.b16 %v503
    %v2481 = vunpack.c.l.b16 %v504
    %v2482 = vpack.c.b16 %v2467, %v2466
    %v2483 = vpack.c.b16 %v2469, %v2468
    %v2484 = vpack.c.b16 %v2471, %v2470
    %v2485 = vpack.c.b16 %v2473, %v2472
    %v2486 = vpack.c.b16 %v2475, %v2474
    %v2487 = vpack.c.b16 %v2477, %v2476
    %v2488 = vpack.c.b16 %v2479, %v2478
    %v2489 = vpack.c.b16 %v2481, %v2480
    %2498 = vmatpush.bf16.msra.mxu0 %v2489
    %2499 = vmatpush.bf16.msra.mxu0 %v2488
    %2500 = vmatpush.bf16.msra.mxu0 %v2487
    %2501 = vmatpush.bf16.msra.mxu0 %v2486
    %2502 = vmatpush.bf16.msra.mxu0 %v2485
    %2503 = vmatpush.bf16.msra.mxu0 %v2484
    %2504 = vmatpush.bf16.msra.mxu0 %v2483
    %2505 = vmatpush.bf16.msra.mxu0 %v2482
    %2506 = vmatmul.bf16.gmra.mxu0 %v2445
    %v2507 = vpop.f32.mrf.mxu0
    %v2508 = vadd.f32 %v2448, %v2507
    %v2509 = vpop.f32.mrf.mxu0
    %v2510 = vadd.f32 %v2448, %v2509
    %2511 = vmatmul.bf16.gmra.mxu0 %v2446
    %v2512 = vpop.f32.mrf.mxu0
    %v2513 = vadd.f32 %v2448, %v2512
    %v2514 = vpop.f32.mrf.mxu0
    %v2515 = vadd.f32 %v2448, %v2514
    %2516 = vdwg.mxu0
    %v2517 = vadd.f32 %v2508, %v2363
    %v2518 = vadd.f32 %v2510, %v2364
    %v2519 = vadd.f32 %v2513, %v2365
    %v2520 = vadd.f32 %v2515, %v2366
    %v2521 = vsel %vm552, %v2517, 0.0
    %2522 = vadd.xlane.f32.xlu0 %v2521
    %v2523 = vpop.xlane.xlu0 %2522
    %v2524 = vsel %vm552, %v2518, 0.0
    %2525 = vadd.xlane.f32.xlu0 %v2524
    %v2526 = vpop.xlane.xlu0 %2525
    %v2527 = vsel %vm552, %v2519, 0.0
    %2528 = vadd.xlane.f32.xlu0 %v2527
    %v2529 = vpop.xlane.xlu0 %2528
    %v2530 = vsel %vm552, %v2520, 0.0
    %2531 = vadd.xlane.f32.xlu0 %v2530
    %v2532 = vpop.xlane.xlu0 %2531
    %v2533 = vmul.f32 %v2523, %v2268
    %v2534 = vmul.f32 %v2526, %v2268
    %v2535 = vmul.f32 %v2529, %v2268
    %v2536 = vmul.f32 %v2532, %v2268
    %v2537 = vmul.f32 %v2517, %v2517
    %v2538 = vmul.f32 %v2518, %v2518
    %v2539 = vmul.f32 %v2519, %v2519
    %v2540 = vmul.f32 %v2520, %v2520
    %v2541 = vsel %vm552, %v2537, 0.0
    %2542 = vadd.xlane.f32.xlu0 %v2541
    %v2543 = vpop.xlane.xlu0 %2542
    %v2544 = vsel %vm552, %v2538, 0.0
    %2545 = vadd.xlane.f32.xlu0 %v2544
    %v2546 = vpop.xlane.xlu0 %2545
    %v2547 = vsel %vm552, %v2539, 0.0
    %2548 = vadd.xlane.f32.xlu0 %v2547
    %v2549 = vpop.xlane.xlu0 %2548
    %v2550 = vsel %vm552, %v2540, 0.0
    %2551 = vadd.xlane.f32.xlu0 %v2550
    %v2552 = vpop.xlane.xlu0 %2551
    %v2553 = vmul.f32 %v2543, %v2268
    %v2554 = vmul.f32 %v2546, %v2268
    %v2555 = vmul.f32 %v2549, %v2268
    %v2556 = vmul.f32 %v2552, %v2268
    %v2557 = vmul.f32 %v2533, %v2533
    %v2558 = vmul.f32 %v2534, %v2534
    %v2559 = vmul.f32 %v2535, %v2535
    %v2560 = vmul.f32 %v2536, %v2536
    %v2561 = vsub.f32 %v2553, %v2557
    %v2562 = vsub.f32 %v2554, %v2558
    %v2563 = vsub.f32 %v2555, %v2559
    %v2564 = vsub.f32 %v2556, %v2560
    %v2565 = vsub.f32 %v2517, %v2533
    %v2566 = vsub.f32 %v2518, %v2534
    %v2567 = vsub.f32 %v2519, %v2535
    %v2568 = vsub.f32 %v2520, %v2536
    %v2569 = vadd.f32 %v2561, 1e-12
    %v2570 = vadd.f32 %v2562, 1e-12
    %v2571 = vadd.f32 %v2563, 1e-12
    %v2572 = vadd.f32 %v2564, 1e-12
    %v2573 = vrsqrt.pop %v2569
    %v2574 = vmul.f32 %v2573, %v2569
    %v2575 = vmul.f32 %v2574, %v2573
    %v2576 = vmul.f32 0.5, %v2575
    %v2577 = vsub.f32 1.5, %v2576
    %v2578 = vmul.f32 %v2573, %v2577
    %vm2579 = vweird.f32 %v2569
    %vm2580 = vweird.f32 %v2573
    %vm2581 = vmor %vm2579, %vm2580
    %v2582 = vsel %vm2581, %v2573, %v2578
    %v2583 = vrsqrt.pop %v2570
    %v2584 = vmul.f32 %v2583, %v2570
    %v2585 = vmul.f32 %v2584, %v2583
    %v2586 = vmul.f32 0.5, %v2585
    %v2587 = vsub.f32 1.5, %v2586
    %v2588 = vmul.f32 %v2583, %v2587
    %vm2589 = vweird.f32 %v2570
    %vm2590 = vweird.f32 %v2583
    %vm2591 = vmor %vm2589, %vm2590
    %v2592 = vsel %vm2591, %v2583, %v2588
    %v2593 = vrsqrt.pop %v2571
    %v2594 = vmul.f32 %v2593, %v2571
    %v2595 = vmul.f32 %v2594, %v2593
    %v2596 = vmul.f32 0.5, %v2595
    %v2597 = vsub.f32 1.5, %v2596
    %v2598 = vmul.f32 %v2593, %v2597
    %vm2599 = vweird.f32 %v2571
    %vm2600 = vweird.f32 %v2593
    %vm2601 = vmor %vm2599, %vm2600
    %v2602 = vsel %vm2601, %v2593, %v2598
    %v2603 = vrsqrt.pop %v2572
    %v2604 = vmul.f32 %v2603, %v2572
    %v2605 = vmul.f32 %v2604, %v2603
    %v2606 = vmul.f32 0.5, %v2605
    %v2607 = vsub.f32 1.5, %v2606
    %v2608 = vmul.f32 %v2603, %v2607
    %vm2609 = vweird.f32 %v2572
    %vm2610 = vweird.f32 %v2603
    %vm2611 = vmor %vm2609, %vm2610
    %v2612 = vsel %vm2611, %v2603, %v2608
    %v2613 = vmul.f32 %v2565, %v2582
    %v2614 = vmul.f32 %v2566, %v2592
    %v2615 = vmul.f32 %v2567, %v2602
    %v2616 = vmul.f32 %v2568, %v2612
    %v2618 = vperm.slane %v506, 0
    %v2620 = vmul.f32 %v2613, %v2618
    %v2621 = vmul.f32 %v2614, %v2618
    %v2622 = vmul.f32 %v2615, %v2618
    %v2623 = vmul.f32 %v2616, %v2618
    %v2625 = vperm.slane %v507, 0
    %v2627 = vadd.f32 %v2620, %v2625
    %v2628 = vadd.f32 %v2621, %v2625
    %v2629 = vadd.f32 %v2622, %v2625
    %v2630 = vadd.f32 %v2623, %v2625
    %v2631 = vrot.slane %v2629, 4
    %vm2632 = vcmask 1047556
    %v2633 = vsel %vm2632, %v2631, %v2627
    %v2634 = vrot.slane %v2627, 4
    %v2635 = vsel %vm2632, %v2629, %v2634
    %v2637 = vunpack.c.l.s4 1983009808
    %v2638 = vunpack.c.0.s8 %v2637
    %v2639 = vperm.slane %v2633, %v2638
    %v2641 = vunpack.c.l.s4 1983009808
    %v2642 = vunpack.c.0.s8 %v2641
    %v2643 = vperm.slane %v2635, %v2642
    %v2644 = vrot.slane %v2630, 4
    %v2645 = vsel %vm2632, %v2644, %v2628
    %v2646 = vrot.slane %v2628, 4
    %v2647 = vsel %vm2632, %v2630, %v2646
    %v2649 = vunpack.c.l.s4 1983009808
    %v2650 = vunpack.c.0.s8 %v2649
    %v2651 = vperm.slane %v2645, %v2650
    %v2653 = vunpack.c.l.s4 1983009808
    %v2654 = vunpack.c.0.s8 %v2653
    %v2655 = vperm.slane %v2647, %v2654
    %v2656 = vrot.slane %v2651, 4
    %v2657 = vsel %vm2632, %v2656, %v2639
    %v2658 = vrot.slane %v2639, 4
    %v2659 = vsel %vm2632, %v2651, %v2658
    %v2661 = vunpack.c.l.s4 1934713408
    %v2662 = vunpack.c.0.s8 %v2661
    %v2663 = vperm.slane %v2657, %v2662
    %v2665 = vunpack.c.l.s4 1934713408
    %v2666 = vunpack.c.0.s8 %v2665
    %v2667 = vperm.slane %v2659, %v2666
    %v2668 = vrot.slane %v2655, 4
    %v2669 = vsel %vm2632, %v2668, %v2643
    %v2670 = vrot.slane %v2643, 4
    %v2671 = vsel %vm2632, %v2655, %v2670
    %v2673 = vunpack.c.l.s4 1934713408
    %v2674 = vunpack.c.0.s8 %v2673
    %v2675 = vperm.slane %v2669, %v2674
    %v2677 = vunpack.c.l.s4 1934713408
    %v2678 = vunpack.c.0.s8 %v2677
    %v2679 = vperm.slane %v2671, %v2678
    %v2680 = vrot.slane %v2663, 4
    %v2681 = vsel %vm2632, 0.0, %v2680
    %v2682 = vrot.slane %v2667, 4
    %v2683 = vsel %vm2632, 0.0, %v2682
    %v2684 = vrot.slane %v2675, 4
    %v2685 = vsel %vm2632, 0.0, %v2684
    %v2686 = vrot.slane %v2679, 4
    %v2687 = vsel %vm2632, 0.0, %v2686
    %2696 = vst [vmem:[#allocation1] ss:$2 sm:$0xff] %v443
    %s2697 = scalar_lea.vmem [#allocation1], 1
    %2698 = vst [vmem:[%s2697] ss:$2 sm:$0xff] %v444
    %s2699 = scalar_lea.vmem [#allocation1], 16
    %2700 = vst [vmem:[%s2699] ss:$2 sm:$0xff] %v445
    %s2701 = scalar_lea.vmem [#allocation1], 17
    %2702 = vst [vmem:[%s2701] ss:$2 sm:$0xff] %v446
    %s2703 = scalar_lea.vmem [#allocation1], 32
    %2704 = vst [vmem:[%s2703] ss:$2 sm:$0xff] %v447
    %s2705 = scalar_lea.vmem [#allocation1], 33
    %2706 = vst [vmem:[%s2705] ss:$2 sm:$0xff] %v448
    %s2707 = scalar_lea.vmem [#allocation1], 48
    %2708 = vst [vmem:[%s2707] ss:$2 sm:$0xff] %v449
    %s2709 = scalar_lea.vmem [#allocation1], 49
    %2710 = vst [vmem:[%s2709] ss:$2 sm:$0xff] %v450
    %v2711 = vld.sshfl [vmem:[#allocation1] sm:$0xff pattern:$0x75316420]
    %v2712 = vld.sshfl [vmem:[#allocation1 + $0x10] sm:$0xff pattern:$0x75316420]
    %v2713 = vld.sshfl [vmem:[#allocation1 + $0x20] sm:$0xff pattern:$0x75316420]
    %v2714 = vld.sshfl [vmem:[#allocation1 + $0x30] sm:$0xff pattern:$0x75316420]
    %v2719 = vpack.c.bf16 %v2712, %v2711
    %v2720 = vpack.c.bf16 %v2714, %v2713
    %v2722 = vperm.slane %v462, 0
    %v2726 = vunpack.c.l.b16 %v456
    %v2727 = vunpack.c.l.b16 %v457
    %v2728 = vpack.c.b16 %v2727, %v2726
    %vm2730 = vcmask 130048
    %v2732 = vsel %vm2730, %v2719, 0
    %v2735 = vsel %vm2730, %v2720, 0
    %2737 = vmatpush.bf16.msra.mxu0 0
    %2738 = vmatpush.bf16.msra.mxu0 0
    %2739 = vmatpush.bf16.msra.mxu0 0
    %2740 = vmatpush.bf16.msra.mxu0 0
    %2741 = vmatpush.bf16.msra.mxu0 0
    %2742 = vmatpush.bf16.msra.mxu0 0
    %2743 = vmatpush.bf16.msra.mxu0 0
    %2744 = vmatpush.bf16.msra.mxu0 %v2728
    %2745 = vmatmul.bf16.gmra.mxu0 %v2732
    %v2746 = vpop.f32.mrf.mxu0
    %v2747 = vadd.f32 %v2722, %v2746
    %v2748 = vpop.f32.mrf.mxu0
    %v2749 = vadd.f32 %v2722, %v2748
    %2750 = vmatmul.bf16.gmra.mxu0 %v2735
    %v2751 = vpop.f32.mrf.mxu0
    %v2752 = vadd.f32 %v2722, %v2751
    %v2753 = vpop.f32.mrf.mxu0
    %v2754 = vadd.f32 %v2722, %v2753
    %2755 = vdwg.mxu0
    %v2760 = vrot.slane %v2747, 4
    %v2761 = vrot.slane %v2749, 4
    %v2762 = vrot.slane %v2752, 4
    %v2763 = vrot.slane %v2754, 4
    %v2772 = vunpack.c.l.b16 %v458
    %v2773 = vunpack.c.l.b16 %v459
    %v2774 = vunpack.c.l.b16 %v460
    %v2775 = vunpack.c.l.b16 %v461
    %v2776 = vpack.c.b16 %v2773, %v2772
    %v2777 = vpack.c.b16 %v2775, %v2774
    %v2781 = vsel %vm552, 0, 0
    %2783 = vmatpush.bf16.msra.mxu0 0
    %2784 = vmatpush.bf16.msra.mxu0 0
    %2785 = vmatpush.bf16.msra.mxu0 0
    %2786 = vmatpush.bf16.msra.mxu0 0
    %2787 = vmatpush.bf16.msra.mxu0 0
    %2788 = vmatpush.bf16.msra.mxu0 0
    %2789 = vmatpush.bf16.msra.mxu0 %v2777
    %2790 = vmatpush.bf16.msra.mxu0 %v2776
    %2791 = vmatmul.bf16.gmra.mxu0 %v2781
    %v2792 = vpop.f32.mrf.mxu0
    %v2793 = vadd.f32 0.0, %v2792
    %v2794 = vpop.f32.mrf.mxu0
    %2795 = vdwg.mxu0
    %v2796 = vadd.f32 %v2747, %v2793
    %v2797 = vxor.u32 %v2796, 2147483648
    %v2798 = vmul.f32 %v2797, 1.442695
    %v2799 = vpow.pop %v2798
    %v2800 = vadd.f32 %v2799, 1.0
    %v2801 = vrcp.pop %v2800
    %v2802 = vmul.f32 %v2800, %v2801
    %v2803 = vsub.f32 1.0, %v2802
    %v2804 = vmul.f32 %v2801, %v2803
    %v2805 = vadd.f32 %v2801, %v2804
    %vm2806 = vweird.f32 %v2800
    %vm2807 = vweird.f32 %v2801
    %vm2808 = vmor %vm2806, %vm2807
    %v2809 = vsel %vm2808, %v2801, %v2805
    %v2810 = vand.u32 2147483647, %v2800
    %vm2811 = vcmp.eq.f32.partialorder %v2810, 8.507059e+37
    %v2812 = vand.u32 %v2800, 2147483648
    %v2813 = vor.u32 1.1754944e-38, %v2812
    %v2814 = vsel %vm2811, %v2813, %v2809
    %v2815 = vmul.f32 1.0, %v2814
    %v2816 = vtanh.pop %v2796
    %v2817 = vmul.f32 %v2815, 0.0
    %2819 = vrot.lane.b32.xlu0 %v2816, 64
    %v2820 = vpop.permute.xlu0 %2819
    %v2822 = vmul.f32 %v2815, %v2820
    %2824 = vrot.lane.b32.xlu0 %v2822, 32
    %v2825 = vpop.permute.xlu0 %2824
    %v2827 = vadd.f32 %v2817, %v2825
    %v2828 = vtanh.pop %v2827
    %2830 = vrot.lane.b32.xlu0 %v2828, 64
    %v2831 = vpop.permute.xlu0 %2830
    %v2833 = vmul.f32 %v2815, %v2831
    %v2834 = vpack.c.bf16 %v2833, %v2833
    %v2839 = vunpack.c.l.b16 %v467
    %v2840 = vunpack.c.l.b16 %v468
    %v2841 = vunpack.c.l.b16 %v469
    %v2842 = vunpack.c.l.b16 %v470
    %v2843 = vpack.c.b16 %v2840, %v2839
    %v2844 = vpack.c.b16 %v2842, %v2841
    %2847 = vmatpush.bf16.msra.mxu0 0
    %2848 = vmatpush.bf16.msra.mxu0 0
    %2849 = vmatpush.bf16.msra.mxu0 0
    %2850 = vmatpush.bf16.msra.mxu0 0
    %2851 = vmatpush.bf16.msra.mxu0 0
    %2852 = vmatpush.bf16.msra.mxu0 0
    %2853 = vmatpush.bf16.msra.mxu0 %v2844
    %2854 = vmatpush.bf16.msra.mxu0 %v2843
    %2855 = vmatmul.bf16.gmra.mxu0 %v2781
    %v2856 = vpop.f32.mrf.mxu0
    %v2857 = vadd.f32 0.0, %v2856
    %v2858 = vpop.f32.mrf.mxu0
    %2859 = vdwg.mxu0
    %2861 = vrot.lane.b32.xlu0 %v2834, 32
    %v2862 = vpop.permute.xlu0 %2861
    %v2867 = vunpack.c.l.b16 %v463
    %v2868 = vunpack.c.l.b16 %v464
    %v2869 = vunpack.c.l.b16 %v465
    %v2870 = vunpack.c.l.b16 %v466
    %v2871 = vpack.c.b16 %v2868, %v2867
    %v2872 = vpack.c.b16 %v2870, %v2869
    %v2876 = vsel %vm552, %v2862, 0
    %2878 = vmatpush.bf16.msra.mxu0 0
    %2879 = vmatpush.bf16.msra.mxu0 0
    %2880 = vmatpush.bf16.msra.mxu0 0
    %2881 = vmatpush.bf16.msra.mxu0 0
    %2882 = vmatpush.bf16.msra.mxu0 0
    %2883 = vmatpush.bf16.msra.mxu0 0
    %2884 = vmatpush.bf16.msra.mxu0 %v2872
    %2885 = vmatpush.bf16.msra.mxu0 %v2871
    %2886 = vmatmul.bf16.gmra.mxu0 %v2876
    %v2887 = vpop.f32.mrf.mxu0
    %v2888 = vadd.f32 %v2857, %v2887
    %v2889 = vpop.f32.mrf.mxu0
    %2890 = vdwg.mxu0
    %v2892 = vperm.slane %v471, 0
    %v2894 = vadd.f32 %v2888, %v2892
    %v2895 = vxor.u32 %v2894, 2147483648
    %v2896 = vmul.f32 %v2895, 1.442695
    %v2897 = vpow.pop %v2896
    %v2898 = vadd.f32 %v2897, 1.0
    %v2899 = vrcp.pop %v2898
    %v2900 = vmul.f32 %v2898, %v2899
    %v2901 = vsub.f32 1.0, %v2900
    %v2902 = vmul.f32 %v2899, %v2901
    %v2903 = vadd.f32 %v2899, %v2902
    %vm2904 = vweird.f32 %v2898
    %vm2905 = vweird.f32 %v2899
    %vm2906 = vmor %vm2904, %vm2905
    %v2907 = vsel %vm2906, %v2899, %v2903
    %v2908 = vand.u32 2147483647, %v2898
    %vm2909 = vcmp.eq.f32.partialorder %v2908, 8.507059e+37
    %v2910 = vand.u32 %v2898, 2147483648
    %v2911 = vor.u32 1.1754944e-38, %v2910
    %v2912 = vsel %vm2909, %v2911, %v2907
    %v2913 = vmul.f32 1.0, %v2912
    %v2914 = vtanh.pop %v2894
    %v2915 = vmul.f32 %v2913, 0.0
    %2917 = vrot.lane.b32.xlu0 %v2914, 64
    %v2918 = vpop.permute.xlu0 %2917
    %v2920 = vmul.f32 %v2913, %v2918
    %2922 = vrot.lane.b32.xlu0 %v2920, 32
    %v2923 = vpop.permute.xlu0 %2922
    %v2925 = vadd.f32 %v2915, %v2923
    %v2926 = vtanh.pop %v2925
    %2928 = vrot.lane.b32.xlu0 %v2926, 64
    %v2929 = vpop.permute.xlu0 %2928
    %v2931 = vmul.f32 %v2913, %v2929
    %2933 = vrot.lane.b32.xlu0 %v2931, 32
    %v2934 = vpop.permute.xlu0 %2933
    %vm2936 = vcmask 257024
    %2937 = vst.msk [vmem:[#allocation2] sm:$0xf] %vm2936, %v2934
    %2938 = vmatpush.bf16.msra.mxu0 0
    %2939 = vmatpush.bf16.msra.mxu0 0
    %2940 = vmatpush.bf16.msra.mxu0 0
    %2941 = vmatpush.bf16.msra.mxu0 0
    %2942 = vmatpush.bf16.msra.mxu0 0
    %2943 = vmatpush.bf16.msra.mxu0 0
    %2944 = vmatpush.bf16.msra.mxu0 %v2777
    %2945 = vmatpush.bf16.msra.mxu0 %v2776
    %2946 = vmatmul.bf16.gmra.mxu0 %v2876
    %v2947 = vpop.f32.mrf.mxu0
    %v2948 = vadd.f32 0.0, %v2947
    %v2949 = vpop.f32.mrf.mxu0
    %2950 = vdwg.mxu0
    %v2951 = vadd.f32 %v2760, %v2948
    %v2952 = vxor.u32 %v2951, 2147483648
    %v2953 = vmul.f32 %v2952, 1.442695
    %v2954 = vpow.pop %v2953
    %v2955 = vadd.f32 %v2954, 1.0
    %v2956 = vrcp.pop %v2955
    %v2957 = vmul.f32 %v2955, %v2956
    %v2958 = vsub.f32 1.0, %v2957
    %v2959 = vmul.f32 %v2956, %v2958
    %v2960 = vadd.f32 %v2956, %v2959
    %vm2961 = vweird.f32 %v2955
    %vm2962 = vweird.f32 %v2956
    %vm2963 = vmor %vm2961, %vm2962
    %v2964 = vsel %vm2963, %v2956, %v2960
    %v2965 = vand.u32 2147483647, %v2955
    %vm2966 = vcmp.eq.f32.partialorder %v2965, 8.507059e+37
    %v2967 = vand.u32 %v2955, 2147483648
    %v2968 = vor.u32 1.1754944e-38, %v2967
    %v2969 = vsel %vm2966, %v2968, %v2964
    %v2970 = vmul.f32 1.0, %v2969
    %v2971 = vtanh.pop %v2951
    %v2972 = vmul.f32 %v2970, %v2827
    %2974 = vrot.lane.b32.xlu0 %v2971, 64
    %v2975 = vpop.permute.xlu0 %2974
    %v2977 = vmul.f32 %v2970, %v2975
    %2979 = vrot.lane.b32.xlu0 %v2977, 32
    %v2980 = vpop.permute.xlu0 %2979
    %v2982 = vadd.f32 %v2972, %v2980
    %v2983 = vtanh.pop %v2982
    %2985 = vrot.lane.b32.xlu0 %v2983, 64
    %v2986 = vpop.permute.xlu0 %2985
    %v2988 = vmul.f32 %v2970, %v2986
    %v2989 = vpack.c.bf16 %v2988, %v2988
    %v2990 = vpack.c.bf16 %v2931, %v2931
    %2992 = vrot.lane.b32.xlu0 %v2990, 32
    %v2993 = vpop.permute.xlu0 %2992
    %v2995 = vsel %vm552, %v2993, 0
    %2997 = vmatpush.bf16.msra.mxu0 0
    %2998 = vmatpush.bf16.msra.mxu0 0
    %2999 = vmatpush.bf16.msra.mxu0 0
    %3000 = vmatpush.bf16.msra.mxu0 0
    %3001 = vmatpush.bf16.msra.mxu0 0
    %3002 = vmatpush.bf16.msra.mxu0 0
    %3003 = vmatpush.bf16.msra.mxu0 %v2844
    %3004 = vmatpush.bf16.msra.mxu0 %v2843
    %3005 = vmatmul.bf16.gmra.mxu0 %v2995
    %v3006 = vpop.f32.mrf.mxu0
    %v3007 = vadd.f32 0.0, %v3006
    %v3008 = vpop.f32.mrf.mxu0
    %3009 = vdwg.mxu0
    %3011 = vrot.lane.b32.xlu0 %v2989, 32
    %v3012 = vpop.permute.xlu0 %3011
    %v3014 = vsel %vm552, %v3012, 0
    %3016 = vmatpush.bf16.msra.mxu0 0
    %3017 = vmatpush.bf16.msra.mxu0 0
    %3018 = vmatpush.bf16.msra.mxu0 0
    %3019 = vmatpush.bf16.msra.mxu0 0
    %3020 = vmatpush.bf16.msra.mxu0 0
    %3021 = vmatpush.bf16.msra.mxu0 0
    %3022 = vmatpush.bf16.msra.mxu0 %v2872
    %3023 = vmatpush.bf16.msra.mxu0 %v2871
    %3024 = vmatmul.bf16.gmra.mxu0 %v3014
    %v3025 = vpop.f32.mrf.mxu0
    %v3026 = vadd.f32 %v3007, %v3025
    %v3027 = vpop.f32.mrf.mxu0
    %3028 = vdwg.mxu0
    %v3029 = vadd.f32 %v3026, %v2892
    %v3030 = vxor.u32 %v3029, 2147483648
    %v3031 = vmul.f32 %v3030, 1.442695
    %v3032 = vpow.pop %v3031
    %v3033 = vadd.f32 %v3032, 1.0
    %v3034 = vrcp.pop %v3033
    %v3035 = vmul.f32 %v3033, %v3034
    %v3036 = vsub.f32 1.0, %v3035
    %v3037 = vmul.f32 %v3034, %v3036
    %v3038 = vadd.f32 %v3034, %v3037
    %vm3039 = vweird.f32 %v3033
    %vm3040 = vweird.f32 %v3034
    %vm3041 = vmor %vm3039, %vm3040
    %v3042 = vsel %vm3041, %v3034, %v3038
    %v3043 = vand.u32 2147483647, %v3033
    %vm3044 = vcmp.eq.f32.partialorder %v3043, 8.507059e+37
    %v3045 = vand.u32 %v3033, 2147483648
    %v3046 = vor.u32 1.1754944e-38, %v3045
    %v3047 = vsel %vm3044, %v3046, %v3042
    %v3048 = vmul.f32 1.0, %v3047
    %v3049 = vtanh.pop %v3029
    %v3050 = vmul.f32 %v3048, %v2925
    %3052 = vrot.lane.b32.xlu0 %v3049, 64
    %v3053 = vpop.permute.xlu0 %3052
    %v3055 = vmul.f32 %v3048, %v3053
    %3057 = vrot.lane.b32.xlu0 %v3055, 32
    %v3058 = vpop.permute.xlu0 %3057
    %v3060 = vadd.f32 %v3050, %v3058
    %v3061 = vtanh.pop %v3060
    %3063 = vrot.lane.b32.xlu0 %v3061, 64
    %v3064 = vpop.permute.xlu0 %3063
    %v3066 = vmul.f32 %v3048, %v3064
    %3068 = vrot.lane.b32.xlu0 %v3066, 32
    %v3069 = vpop.permute.xlu0 %3068
    %s3071 = scalar_lea.vmem [#allocation2], 4
    %3072 = vst.msk [vmem:[%s3071] sm:$0xf] %vm2936, %v3069
    %3073 = vmatpush.bf16.msra.mxu0 0
    %3074 = vmatpush.bf16.msra.mxu0 0
    %3075 = vmatpush.bf16.msra.mxu0 0
    %3076 = vmatpush.bf16.msra.mxu0 0
    %3077 = vmatpush.bf16.msra.mxu0 0
    %3078 = vmatpush.bf16.msra.mxu0 0
    %3079 = vmatpush.bf16.msra.mxu0 %v2777
    %3080 = vmatpush.bf16.msra.mxu0 %v2776
    %3081 = vmatmul.bf16.gmra.mxu0 %v3014
    %v3082 = vpop.f32.mrf.mxu0
    %v3083 = vadd.f32 0.0, %v3082
    %v3084 = vpop.f32.mrf.mxu0
    %3085 = vdwg.mxu0
    %v3086 = vadd.f32 %v2749, %v3083
    %v3087 = vxor.u32 %v3086, 2147483648
    %v3088 = vmul.f32 %v3087, 1.442695
    %v3089 = vpow.pop %v3088
    %v3090 = vadd.f32 %v3089, 1.0
    %v3091 = vrcp.pop %v3090
    %v3092 = vmul.f32 %v3090, %v3091
    %v3093 = vsub.f32 1.0, %v3092
    %v3094 = vmul.f32 %v3091, %v3093
    %v3095 = vadd.f32 %v3091, %v3094
    %vm3096 = vweird.f32 %v3090
    %vm3097 = vweird.f32 %v3091
    %vm3098 = vmor %vm3096, %vm3097
    %v3099 = vsel %vm3098, %v3091, %v3095
    %v3100 = vand.u32 2147483647, %v3090
    %vm3101 = vcmp.eq.f32.partialorder %v3100, 8.507059e+37
    %v3102 = vand.u32 %v3090, 2147483648
    %v3103 = vor.u32 1.1754944e-38, %v3102
    %v3104 = vsel %vm3101, %v3103, %v3099
    %v3105 = vmul.f32 1.0, %v3104
    %v3106 = vtanh.pop %v3086
    %v3107 = vmul.f32 %v3105, %v2982
    %3109 = vrot.lane.b32.xlu0 %v3106, 64
    %v3110 = vpop.permute.xlu0 %3109
    %v3112 = vmul.f32 %v3105, %v3110
    %3114 = vrot.lane.b32.xlu0 %v3112, 32
    %v3115 = vpop.permute.xlu0 %3114
    %v3117 = vadd.f32 %v3107, %v3115
    %v3118 = vtanh.pop %v3117
    %3120 = vrot.lane.b32.xlu0 %v3118, 64
    %v3121 = vpop.permute.xlu0 %3120
    %v3123 = vmul.f32 %v3105, %v3121
    %v3124 = vpack.c.bf16 %v3123, %v3123
    %v3125 = vpack.c.bf16 %v3066, %v3066
    %3127 = vrot.lane.b32.xlu0 %v3125, 32
    %v3128 = vpop.permute.xlu0 %3127
    %v3130 = vsel %vm552, %v3128, 0
    %3132 = vmatpush.bf16.msra.mxu0 0
    %3133 = vmatpush.bf16.msra.mxu0 0
    %3134 = vmatpush.bf16.msra.mxu0 0
    %3135 = vmatpush.bf16.msra.mxu0 0
    %3136 = vmatpush.bf16.msra.mxu0 0
    %3137 = vmatpush.bf16.msra.mxu0 0
    %3138 = vmatpush.bf16.msra.mxu0 %v2844
    %3139 = vmatpush.bf16.msra.mxu0 %v2843
    %3140 = vmatmul.bf16.gmra.mxu0 %v3130
    %v3141 = vpop.f32.mrf.mxu0
    %v3142 = vadd.f32 0.0, %v3141
    %v3143 = vpop.f32.mrf.mxu0
    %3144 = vdwg.mxu0
    %3146 = vrot.lane.b32.xlu0 %v3124, 32
    %v3147 = vpop.permute.xlu0 %3146
    %v3149 = vsel %vm552, %v3147, 0
    %3151 = vmatpush.bf16.msra.mxu0 0
    %3152 = vmatpush.bf16.msra.mxu0 0
    %3153 = vmatpush.bf16.msra.mxu0 0
    %3154 = vmatpush.bf16.msra.mxu0 0
    %3155 = vmatpush.bf16.msra.mxu0 0
    %3156 = vmatpush.bf16.msra.mxu0 0
    %3157 = vmatpush.bf16.msra.mxu0 %v2872
    %3158 = vmatpush.bf16.msra.mxu0 %v2871
    %3159 = vmatmul.bf16.gmra.mxu0 %v3149
    %v3160 = vpop.f32.mrf.mxu0
    %v3161 = vadd.f32 %v3142, %v3160
    %v3162 = vpop.f32.mrf.mxu0
    %3163 = vdwg.mxu0
    %v3164 = vadd.f32 %v3161, %v2892
    %v3165 = vxor.u32 %v3164, 2147483648
    %v3166 = vmul.f32 %v3165, 1.442695
    %v3167 = vpow.pop %v3166
    %v3168 = vadd.f32 %v3167, 1.0
    %v3169 = vrcp.pop %v3168
    %v3170 = vmul.f32 %v3168, %v3169
    %v3171 = vsub.f32 1.0, %v3170
    %v3172 = vmul.f32 %v3169, %v3171
    %v3173 = vadd.f32 %v3169, %v3172
    %vm3174 = vweird.f32 %v3168
    %vm3175 = vweird.f32 %v3169
    %vm3176 = vmor %vm3174, %vm3175
    %v3177 = vsel %vm3176, %v3169, %v3173
    %v3178 = vand.u32 2147483647, %v3168
    %vm3179 = vcmp.eq.f32.partialorder %v3178, 8.507059e+37
    %v3180 = vand.u32 %v3168, 2147483648
    %v3181 = vor.u32 1.1754944e-38, %v3180
    %v3182 = vsel %vm3179, %v3181, %v3177
    %v3183 = vmul.f32 1.0, %v3182
    %v3184 = vtanh.pop %v3164
    %v3185 = vmul.f32 %v3183, %v3060
    %3187 = vrot.lane.b32.xlu0 %v3184, 64
    %v3188 = vpop.permute.xlu0 %3187
    %v3190 = vmul.f32 %v3183, %v3188
    %3192 = vrot.lane.b32.xlu0 %v3190, 32
    %v3193 = vpop.permute.xlu0 %3192
    %v3195 = vadd.f32 %v3185, %v3193
    %v3196 = vtanh.pop %v3195
    %3198 = vrot.lane.b32.xlu0 %v3196, 64
    %v3199 = vpop.permute.xlu0 %3198
    %v3201 = vmul.f32 %v3183, %v3199
    %3203 = vrot.lane.b32.xlu0 %v3201, 32
    %v3204 = vpop.permute.xlu0 %3203
    %s3206 = scalar_lea.vmem [#allocation2], 8
    %3207 = vst.msk [vmem:[%s3206] sm:$0xf] %vm2936, %v3204
    %3208 = vmatpush.bf16.msra.mxu0 0
    %3209 = vmatpush.bf16.msra.mxu0 0
    %3210 = vmatpush.bf16.msra.mxu0 0
    %3211 = vmatpush.bf16.msra.mxu0 0
    %3212 = vmatpush.bf16.msra.mxu0 0
    %3213 = vmatpush.bf16.msra.mxu0 0
    %3214 = vmatpush.bf16.msra.mxu0 %v2777
    %3215 = vmatpush.bf16.msra.mxu0 %v2776
    %3216 = vmatmul.bf16.gmra.mxu0 %v3149
    %v3217 = vpop.f32.mrf.mxu0
    %v3218 = vadd.f32 0.0, %v3217
    %v3219 = vpop.f32.mrf.mxu0
    %3220 = vdwg.mxu0
    %v3221 = vadd.f32 %v2761, %v3218
    %v3222 = vxor.u32 %v3221, 2147483648
    %v3223 = vmul.f32 %v3222, 1.442695
    %v3224 = vpow.pop %v3223
    %v3225 = vadd.f32 %v3224, 1.0
    %v3226 = vrcp.pop %v3225
    %v3227 = vmul.f32 %v3225, %v3226
    %v3228 = vsub.f32 1.0, %v3227
    %v3229 = vmul.f32 %v3226, %v3228
    %v3230 = vadd.f32 %v3226, %v3229
    %vm3231 = vweird.f32 %v3225
    %vm3232 = vweird.f32 %v3226
    %vm3233 = vmor %vm3231, %vm3232
    %v3234 = vsel %vm3233, %v3226, %v3230
    %v3235 = vand.u32 2147483647, %v3225
    %vm3236 = vcmp.eq.f32.partialorder %v3235, 8.507059e+37
    %v3237 = vand.u32 %v3225, 2147483648
    %v3238 = vor.u32 1.1754944e-38, %v3237
    %v3239 = vsel %vm3236, %v3238, %v3234
    %v3240 = vmul.f32 1.0, %v3239
    %v3241 = vtanh.pop %v3221
    %v3242 = vmul.f32 %v3240, %v3117
    %3244 = vrot.lane.b32.xlu0 %v3241, 64
    %v3245 = vpop.permute.xlu0 %3244
    %v3247 = vmul.f32 %v3240, %v3245
    %3249 = vrot.lane.b32.xlu0 %v3247, 32
    %v3250 = vpop.permute.xlu0 %3249
    %v3252 = vadd.f32 %v3242, %v3250
    %v3253 = vtanh.pop %v3252
    %3255 = vrot.lane.b32.xlu0 %v3253, 64
    %v3256 = vpop.permute.xlu0 %3255
    %v3258 = vmul.f32 %v3240, %v3256
    %v3259 = vpack.c.bf16 %v3258, %v3258
    %v3260 = vpack.c.bf16 %v3201, %v3201
    %3262 = vrot.lane.b32.xlu0 %v3260, 32
    %v3263 = vpop.permute.xlu0 %3262
    %v3265 = vsel %vm552, %v3263, 0
    %3267 = vmatpush.bf16.msra.mxu0 0
    %3268 = vmatpush.bf16.msra.mxu0 0
    %3269 = vmatpush.bf16.msra.mxu0 0
    %3270 = vmatpush.bf16.msra.mxu0 0
    %3271 = vmatpush.bf16.msra.mxu0 0
    %3272 = vmatpush.bf16.msra.mxu0 0
    %3273 = vmatpush.bf16.msra.mxu0 %v2844
    %3274 = vmatpush.bf16.msra.mxu0 %v2843
    %3275 = vmatmul.bf16.gmra.mxu0 %v3265
    %v3276 = vpop.f32.mrf.mxu0
    %v3277 = vadd.f32 0.0, %v3276
    %v3278 = vpop.f32.mrf.mxu0
    %3279 = vdwg.mxu0
    %3281 = vrot.lane.b32.xlu0 %v3259, 32
    %v3282 = vpop.permute.xlu0 %3281
    %v3284 = vsel %vm552, %v3282, 0
    %3286 = vmatpush.bf16.msra.mxu0 0
    %3287 = vmatpush.bf16.msra.mxu0 0
    %3288 = vmatpush.bf16.msra.mxu0 0
    %3289 = vmatpush.bf16.msra.mxu0 0
    %3290 = vmatpush.bf16.msra.mxu0 0
    %3291 = vmatpush.bf16.msra.mxu0 0
    %3292 = vmatpush.bf16.msra.mxu0 %v2872
    %3293 = vmatpush.bf16.msra.mxu0 %v2871
    %3294 = vmatmul.bf16.gmra.mxu0 %v3284
    %v3295 = vpop.f32.mrf.mxu0
    %v3296 = vadd.f32 %v3277, %v3295
    %v3297 = vpop.f32.mrf.mxu0
    %3298 = vdwg.mxu0
    %v3299 = vadd.f32 %v3296, %v2892
    %v3300 = vxor.u32 %v3299, 2147483648
    %v3301 = vmul.f32 %v3300, 1.442695
    %v3302 = vpow.pop %v3301
    %v3303 = vadd.f32 %v3302, 1.0
    %v3304 = vrcp.pop %v3303
    %v3305 = vmul.f32 %v3303, %v3304
    %v3306 = vsub.f32 1.0, %v3305
    %v3307 = vmul.f32 %v3304, %v3306
    %v3308 = vadd.f32 %v3304, %v3307
    %vm3309 = vweird.f32 %v3303
    %vm3310 = vweird.f32 %v3304
    %vm3311 = vmor %vm3309, %vm3310
    %v3312 = vsel %vm3311, %v3304, %v3308
    %v3313 = vand.u32 2147483647, %v3303
    %vm3314 = vcmp.eq.f32.partialorder %v3313, 8.507059e+37
    %v3315 = vand.u32 %v3303, 2147483648
    %v3316 = vor.u32 1.1754944e-38, %v3315
    %v3317 = vsel %vm3314, %v3316, %v3312
    %v3318 = vmul.f32 1.0, %v3317
    %v3319 = vtanh.pop %v3299
    %v3320 = vmul.f32 %v3318, %v3195
    %3322 = vrot.lane.b32.xlu0 %v3319, 64
    %v3323 = vpop.permute.xlu0 %3322
    %v3325 = vmul.f32 %v3318, %v3323
    %3327 = vrot.lane.b32.xlu0 %v3325, 32
    %v3328 = vpop.permute.xlu0 %3327
    %v3330 = vadd.f32 %v3320, %v3328
    %v3331 = vtanh.pop %v3330
    %3333 = vrot.lane.b32.xlu0 %v3331, 64
    %v3334 = vpop.permute.xlu0 %3333
    %v3336 = vmul.f32 %v3318, %v3334
    %3338 = vrot.lane.b32.xlu0 %v3336, 32
    %v3339 = vpop.permute.xlu0 %3338
    %s3341 = scalar_lea.vmem [#allocation2], 12
    %3342 = vst.msk [vmem:[%s3341] sm:$0xf] %vm2936, %v3339
    %3343 = vmatpush.bf16.msra.mxu0 0
    %3344 = vmatpush.bf16.msra.mxu0 0
    %3345 = vmatpush.bf16.msra.mxu0 0
    %3346 = vmatpush.bf16.msra.mxu0 0
    %3347 = vmatpush.bf16.msra.mxu0 0
    %3348 = vmatpush.bf16.msra.mxu0 0
    %3349 = vmatpush.bf16.msra.mxu0 %v2777
    %3350 = vmatpush.bf16.msra.mxu0 %v2776
    %3351 = vmatmul.bf16.gmra.mxu0 %v3284
    %v3352 = vpop.f32.mrf.mxu0
    %v3353 = vadd.f32 0.0, %v3352
    %v3354 = vpop.f32.mrf.mxu0
    %3355 = vdwg.mxu0
    %v3356 = vadd.f32 %v2752, %v3353
    %v3357 = vxor.u32 %v3356, 2147483648
    %v3358 = vmul.f32 %v3357, 1.442695
    %v3359 = vpow.pop %v3358
    %v3360 = vadd.f32 %v3359, 1.0
    %v3361 = vrcp.pop %v3360
    %v3362 = vmul.f32 %v3360, %v3361
    %v3363 = vsub.f32 1.0, %v3362
    %v3364 = vmul.f32 %v3361, %v3363
    %v3365 = vadd.f32 %v3361, %v3364
    %vm3366 = vweird.f32 %v3360
    %vm3367 = vweird.f32 %v3361
    %vm3368 = vmor %vm3366, %vm3367
    %v3369 = vsel %vm3368, %v3361, %v3365
    %v3370 = vand.u32 2147483647, %v3360
    %vm3371 = vcmp.eq.f32.partialorder %v3370, 8.507059e+37
    %v3372 = vand.u32 %v3360, 2147483648
    %v3373 = vor.u32 1.1754944e-38, %v3372
    %v3374 = vsel %vm3371, %v3373, %v3369
    %v3375 = vmul.f32 1.0, %v3374
    %v3376 = vtanh.pop %v3356
    %v3377 = vmul.f32 %v3375, %v3252
    %3379 = vrot.lane.b32.xlu0 %v3376, 64
    %v3380 = vpop.permute.xlu0 %3379
    %v3382 = vmul.f32 %v3375, %v3380
    %3384 = vrot.lane.b32.xlu0 %v3382, 32
    %v3385 = vpop.permute.xlu0 %3384
    %v3387 = vadd.f32 %v3377, %v3385
    %v3388 = vtanh.pop %v3387
    %3390 = vrot.lane.b32.xlu0 %v3388, 64
    %v3391 = vpop.permute.xlu0 %3390
    %v3393 = vmul.f32 %v3375, %v3391
    %v3394 = vpack.c.bf16 %v3393, %v3393
    %v3395 = vpack.c.bf16 %v3336, %v3336
    %3397 = vrot.lane.b32.xlu0 %v3395, 32
    %v3398 = vpop.permute.xlu0 %3397
    %v3400 = vsel %vm552, %v3398, 0
    %3402 = vmatpush.bf16.msra.mxu0 0
    %3403 = vmatpush.bf16.msra.mxu0 0
    %3404 = vmatpush.bf16.msra.mxu0 0
    %3405 = vmatpush.bf16.msra.mxu0 0
    %3406 = vmatpush.bf16.msra.mxu0 0
    %3407 = vmatpush.bf16.msra.mxu0 0
    %3408 = vmatpush.bf16.msra.mxu0 %v2844
    %3409 = vmatpush.bf16.msra.mxu0 %v2843
    %3410 = vmatmul.bf16.gmra.mxu0 %v3400
    %v3411 = vpop.f32.mrf.mxu0
    %v3412 = vadd.f32 0.0, %v3411
    %v3413 = vpop.f32.mrf.mxu0
    %3414 = vdwg.mxu0
    %3416 = vrot.lane.b32.xlu0 %v3394, 32
    %v3417 = vpop.permute.xlu0 %3416
    %v3419 = vsel %vm552, %v3417, 0
    %3421 = vmatpush.bf16.msra.mxu0 0
    %3422 = vmatpush.bf16.msra.mxu0 0
    %3423 = vmatpush.bf16.msra.mxu0 0
    %3424 = vmatpush.bf16.msra.mxu0 0
    %3425 = vmatpush.bf16.msra.mxu0 0
    %3426 = vmatpush.bf16.msra.mxu0 0
    %3427 = vmatpush.bf16.msra.mxu0 %v2872
    %3428 = vmatpush.bf16.msra.mxu0 %v2871
    %3429 = vmatmul.bf16.gmra.mxu0 %v3419
    %v3430 = vpop.f32.mrf.mxu0
    %v3431 = vadd.f32 %v3412, %v3430
    %v3432 = vpop.f32.mrf.mxu0
    %3433 = vdwg.mxu0
    %v3434 = vadd.f32 %v3431, %v2892
    %v3435 = vxor.u32 %v3434, 2147483648
    %v3436 = vmul.f32 %v3435, 1.442695
    %v3437 = vpow.pop %v3436
    %v3438 = vadd.f32 %v3437, 1.0
    %v3439 = vrcp.pop %v3438
    %v3440 = vmul.f32 %v3438, %v3439
    %v3441 = vsub.f32 1.0, %v3440
    %v3442 = vmul.f32 %v3439, %v3441
    %v3443 = vadd.f32 %v3439, %v3442
    %vm3444 = vweird.f32 %v3438
    %vm3445 = vweird.f32 %v3439
    %vm3446 = vmor %vm3444, %vm3445
    %v3447 = vsel %vm3446, %v3439, %v3443
    %v3448 = vand.u32 2147483647, %v3438
    %vm3449 = vcmp.eq.f32.partialorder %v3448, 8.507059e+37
    %v3450 = vand.u32 %v3438, 2147483648
    %v3451 = vor.u32 1.1754944e-38, %v3450
    %v3452 = vsel %vm3449, %v3451, %v3447
    %v3453 = vmul.f32 1.0, %v3452
    %v3454 = vtanh.pop %v3434
    %v3455 = vmul.f32 %v3453, %v3330
    %3457 = vrot.lane.b32.xlu0 %v3454, 64
    %v3458 = vpop.permute.xlu0 %3457
    %v3460 = vmul.f32 %v3453, %v3458
    %3462 = vrot.lane.b32.xlu0 %v3460, 32
    %v3463 = vpop.permute.xlu0 %3462
    %v3465 = vadd.f32 %v3455, %v3463
    %v3466 = vtanh.pop %v3465
    %3468 = vrot.lane.b32.xlu0 %v3466, 64
    %v3469 = vpop.permute.xlu0 %3468
    %v3471 = vmul.f32 %v3453, %v3469
    %3473 = vrot.lane.b32.xlu0 %v3471, 32
    %v3474 = vpop.permute.xlu0 %3473
    %s3476 = scalar_lea.vmem [#allocation2], 16
    %3477 = vst.msk [vmem:[%s3476] sm:$0xf] %vm2936, %v3474
    %3478 = vmatpush.bf16.msra.mxu0 0
    %3479 = vmatpush.bf16.msra.mxu0 0
    %3480 = vmatpush.bf16.msra.mxu0 0
    %3481 = vmatpush.bf16.msra.mxu0 0
    %3482 = vmatpush.bf16.msra.mxu0 0
    %3483 = vmatpush.bf16.msra.mxu0 0
    %3484 = vmatpush.bf16.msra.mxu0 %v2777
    %3485 = vmatpush.bf16.msra.mxu0 %v2776
    %3486 = vmatmul.bf16.gmra.mxu0 %v3419
    %v3487 = vpop.f32.mrf.mxu0
    %v3488 = vadd.f32 0.0, %v3487
    %v3489 = vpop.f32.mrf.mxu0
    %3490 = vdwg.mxu0
    %v3491 = vadd.f32 %v2762, %v3488
    %v3492 = vxor.u32 %v3491, 2147483648
    %v3493 = vmul.f32 %v3492, 1.442695
    %v3494 = vpow.pop %v3493
    %v3495 = vadd.f32 %v3494, 1.0
    %v3496 = vrcp.pop %v3495
    %v3497 = vmul.f32 %v3495, %v3496
    %v3498 = vsub.f32 1.0, %v3497
    %v3499 = vmul.f32 %v3496, %v3498
    %v3500 = vadd.f32 %v3496, %v3499
    %vm3501 = vweird.f32 %v3495
    %vm3502 = vweird.f32 %v3496
    %vm3503 = vmor %vm3501, %vm3502
    %v3504 = vsel %vm3503, %v3496, %v3500
    %v3505 = vand.u32 2147483647, %v3495
    %vm3506 = vcmp.eq.f32.partialorder %v3505, 8.507059e+37
    %v3507 = vand.u32 %v3495, 2147483648
    %v3508 = vor.u32 1.1754944e-38, %v3507
    %v3509 = vsel %vm3506, %v3508, %v3504
    %v3510 = vmul.f32 1.0, %v3509
    %v3511 = vtanh.pop %v3491
    %v3512 = vmul.f32 %v3510, %v3387
    %3514 = vrot.lane.b32.xlu0 %v3511, 64
    %v3515 = vpop.permute.xlu0 %3514
    %v3517 = vmul.f32 %v3510, %v3515
    %3519 = vrot.lane.b32.xlu0 %v3517, 32
    %v3520 = vpop.permute.xlu0 %3519
    %v3522 = vadd.f32 %v3512, %v3520
    %v3523 = vtanh.pop %v3522
    %3525 = vrot.lane.b32.xlu0 %v3523, 64
    %v3526 = vpop.permute.xlu0 %3525
    %v3528 = vmul.f32 %v3510, %v3526
    %v3529 = vpack.c.bf16 %v3528, %v3528
    %v3530 = vpack.c.bf16 %v3471, %v3471
    %3532 = vrot.lane.b32.xlu0 %v3530, 32
    %v3533 = vpop.permute.xlu0 %3532
    %v3535 = vsel %vm552, %v3533, 0
    %3537 = vmatpush.bf16.msra.mxu0 0
    %3538 = vmatpush.bf16.msra.mxu0 0
    %3539 = vmatpush.bf16.msra.mxu0 0
    %3540 = vmatpush.bf16.msra.mxu0 0
    %3541 = vmatpush.bf16.msra.mxu0 0
    %3542 = vmatpush.bf16.msra.mxu0 0
    %3543 = vmatpush.bf16.msra.mxu0 %v2844
    %3544 = vmatpush.bf16.msra.mxu0 %v2843
    %3545 = vmatmul.bf16.gmra.mxu0 %v3535
    %v3546 = vpop.f32.mrf.mxu0
    %v3547 = vadd.f32 0.0, %v3546
    %v3548 = vpop.f32.mrf.mxu0
    %3549 = vdwg.mxu0
    %3551 = vrot.lane.b32.xlu0 %v3529, 32
    %v3552 = vpop.permute.xlu0 %3551
    %v3554 = vsel %vm552, %v3552, 0
    %3556 = vmatpush.bf16.msra.mxu0 0
    %3557 = vmatpush.bf16.msra.mxu0 0
    %3558 = vmatpush.bf16.msra.mxu0 0
    %3559 = vmatpush.bf16.msra.mxu0 0
    %3560 = vmatpush.bf16.msra.mxu0 0
    %3561 = vmatpush.bf16.msra.mxu0 0
    %3562 = vmatpush.bf16.msra.mxu0 %v2872
    %3563 = vmatpush.bf16.msra.mxu0 %v2871
    %3564 = vmatmul.bf16.gmra.mxu0 %v3554
    %v3565 = vpop.f32.mrf.mxu0
    %v3566 = vadd.f32 %v3547, %v3565
    %v3567 = vpop.f32.mrf.mxu0
    %3568 = vdwg.mxu0
    %v3569 = vadd.f32 %v3566, %v2892
    %v3570 = vxor.u32 %v3569, 2147483648
    %v3571 = vmul.f32 %v3570, 1.442695
    %v3572 = vpow.pop %v3571
    %v3573 = vadd.f32 %v3572, 1.0
    %v3574 = vrcp.pop %v3573
    %v3575 = vmul.f32 %v3573, %v3574
    %v3576 = vsub.f32 1.0, %v3575
    %v3577 = vmul.f32 %v3574, %v3576
    %v3578 = vadd.f32 %v3574, %v3577
    %vm3579 = vweird.f32 %v3573
    %vm3580 = vweird.f32 %v3574
    %vm3581 = vmor %vm3579, %vm3580
    %v3582 = vsel %vm3581, %v3574, %v3578
    %v3583 = vand.u32 2147483647, %v3573
    %vm3584 = vcmp.eq.f32.partialorder %v3583, 8.507059e+37
    %v3585 = vand.u32 %v3573, 2147483648
    %v3586 = vor.u32 1.1754944e-38, %v3585
    %v3587 = vsel %vm3584, %v3586, %v3582
    %v3588 = vmul.f32 1.0, %v3587
    %v3589 = vtanh.pop %v3569
    %v3590 = vmul.f32 %v3588, %v3465
    %3592 = vrot.lane.b32.xlu0 %v3589, 64
    %v3593 = vpop.permute.xlu0 %3592
    %v3595 = vmul.f32 %v3588, %v3593
    %3597 = vrot.lane.b32.xlu0 %v3595, 32
    %v3598 = vpop.permute.xlu0 %3597
    %v3600 = vadd.f32 %v3590, %v3598
    %v3601 = vtanh.pop %v3600
    %3603 = vrot.lane.b32.xlu0 %v3601, 64
    %v3604 = vpop.permute.xlu0 %3603
    %v3606 = vmul.f32 %v3588, %v3604
    %3608 = vrot.lane.b32.xlu0 %v3606, 32
    %v3609 = vpop.permute.xlu0 %3608
    %s3611 = scalar_lea.vmem [#allocation2], 20
    %3612 = vst.msk [vmem:[%s3611] sm:$0xf] %vm2936, %v3609
    %3613 = vmatpush.bf16.msra.mxu0 0
    %3614 = vmatpush.bf16.msra.mxu0 0
    %3615 = vmatpush.bf16.msra.mxu0 0
    %3616 = vmatpush.bf16.msra.mxu0 0
    %3617 = vmatpush.bf16.msra.mxu0 0
    %3618 = vmatpush.bf16.msra.mxu0 0
    %3619 = vmatpush.bf16.msra.mxu0 %v2777
    %3620 = vmatpush.bf16.msra.mxu0 %v2776
    %3621 = vmatmul.bf16.gmra.mxu0 %v3554
    %v3622 = vpop.f32.mrf.mxu0
    %v3623 = vadd.f32 0.0, %v3622
    %v3624 = vpop.f32.mrf.mxu0
    %3625 = vdwg.mxu0
    %v3626 = vadd.f32 %v2754, %v3623
    %v3627 = vxor.u32 %v3626, 2147483648
    %v3628 = vmul.f32 %v3627, 1.442695
    %v3629 = vpow.pop %v3628
    %v3630 = vadd.f32 %v3629, 1.0
    %v3631 = vrcp.pop %v3630
    %v3632 = vmul.f32 %v3630, %v3631
    %v3633 = vsub.f32 1.0, %v3632
    %v3634 = vmul.f32 %v3631, %v3633
    %v3635 = vadd.f32 %v3631, %v3634
    %vm3636 = vweird.f32 %v3630
    %vm3637 = vweird.f32 %v3631
    %vm3638 = vmor %vm3636, %vm3637
    %v3639 = vsel %vm3638, %v3631, %v3635
    %v3640 = vand.u32 2147483647, %v3630
    %vm3641 = vcmp.eq.f32.partialorder %v3640, 8.507059e+37
    %v3642 = vand.u32 %v3630, 2147483648
    %v3643 = vor.u32 1.1754944e-38, %v3642
    %v3644 = vsel %vm3641, %v3643, %v3639
    %v3645 = vmul.f32 1.0, %v3644
    %v3646 = vtanh.pop %v3626
    %v3647 = vmul.f32 %v3645, %v3522
    %3649 = vrot.lane.b32.xlu0 %v3646, 64
    %v3650 = vpop.permute.xlu0 %3649
    %v3652 = vmul.f32 %v3645, %v3650
    %3654 = vrot.lane.b32.xlu0 %v3652, 32
    %v3655 = vpop.permute.xlu0 %3654
    %v3657 = vadd.f32 %v3647, %v3655
    %v3658 = vtanh.pop %v3657
    %3660 = vrot.lane.b32.xlu0 %v3658, 64
    %v3661 = vpop.permute.xlu0 %3660
    %v3663 = vmul.f32 %v3645, %v3661
    %v3664 = vpack.c.bf16 %v3663, %v3663
    %v3665 = vpack.c.bf16 %v3606, %v3606
    %3667 = vrot.lane.b32.xlu0 %v3665, 32
    %v3668 = vpop.permute.xlu0 %3667
    %v3670 = vsel %vm552, %v3668, 0
    %3672 = vmatpush.bf16.msra.mxu0 0
    %3673 = vmatpush.bf16.msra.mxu0 0
    %3674 = vmatpush.bf16.msra.mxu0 0
    %3675 = vmatpush.bf16.msra.mxu0 0
    %3676 = vmatpush.bf16.msra.mxu0 0
    %3677 = vmatpush.bf16.msra.mxu0 0
    %3678 = vmatpush.bf16.msra.mxu0 %v2844
    %3679 = vmatpush.bf16.msra.mxu0 %v2843
    %3680 = vmatmul.bf16.gmra.mxu0 %v3670
    %v3681 = vpop.f32.mrf.mxu0
    %v3682 = vadd.f32 0.0, %v3681
    %v3683 = vpop.f32.mrf.mxu0
    %3684 = vdwg.mxu0
    %3686 = vrot.lane.b32.xlu0 %v3664, 32
    %v3687 = vpop.permute.xlu0 %3686
    %v3689 = vsel %vm552, %v3687, 0
    %3691 = vmatpush.bf16.msra.mxu0 0
    %3692 = vmatpush.bf16.msra.mxu0 0
    %3693 = vmatpush.bf16.msra.mxu0 0
    %3694 = vmatpush.bf16.msra.mxu0 0
    %3695 = vmatpush.bf16.msra.mxu0 0
    %3696 = vmatpush.bf16.msra.mxu0 0
    %3697 = vmatpush.bf16.msra.mxu0 %v2872
    %3698 = vmatpush.bf16.msra.mxu0 %v2871
    %3699 = vmatmul.bf16.gmra.mxu0 %v3689
    %v3700 = vpop.f32.mrf.mxu0
    %v3701 = vadd.f32 %v3682, %v3700
    %v3702 = vpop.f32.mrf.mxu0
    %3703 = vdwg.mxu0
    %v3704 = vadd.f32 %v3701, %v2892
    %v3705 = vxor.u32 %v3704, 2147483648
    %v3706 = vmul.f32 %v3705, 1.442695
    %v3707 = vpow.pop %v3706
    %v3708 = vadd.f32 %v3707, 1.0
    %v3709 = vrcp.pop %v3708
    %v3710 = vmul.f32 %v3708, %v3709
    %v3711 = vsub.f32 1.0, %v3710
    %v3712 = vmul.f32 %v3709, %v3711
    %v3713 = vadd.f32 %v3709, %v3712
    %vm3714 = vweird.f32 %v3708
    %vm3715 = vweird.f32 %v3709
    %vm3716 = vmor %vm3714, %vm3715
    %v3717 = vsel %vm3716, %v3709, %v3713
    %v3718 = vand.u32 2147483647, %v3708
    %vm3719 = vcmp.eq.f32.partialorder %v3718, 8.507059e+37
    %v3720 = vand.u32 %v3708, 2147483648
    %v3721 = vor.u32 1.1754944e-38, %v3720
    %v3722 = vsel %vm3719, %v3721, %v3717
    %v3723 = vmul.f32 1.0, %v3722
    %v3724 = vtanh.pop %v3704
    %v3725 = vmul.f32 %v3723, %v3600
    %3727 = vrot.lane.b32.xlu0 %v3724, 64
    %v3728 = vpop.permute.xlu0 %3727
    %v3730 = vmul.f32 %v3723, %v3728
    %3732 = vrot.lane.b32.xlu0 %v3730, 32
    %v3733 = vpop.permute.xlu0 %3732
    %v3735 = vadd.f32 %v3725, %v3733
    %v3736 = vtanh.pop %v3735
    %3738 = vrot.lane.b32.xlu0 %v3736, 64
    %v3739 = vpop.permute.xlu0 %3738
    %v3741 = vmul.f32 %v3723, %v3739
    %3743 = vrot.lane.b32.xlu0 %v3741, 32
    %v3744 = vpop.permute.xlu0 %3743
    %s3746 = scalar_lea.vmem [#allocation2], 24
    %3747 = vst.msk [vmem:[%s3746] sm:$0xf] %vm2936, %v3744
    %3748 = vmatpush.bf16.msra.mxu0 0
    %3749 = vmatpush.bf16.msra.mxu0 0
    %3750 = vmatpush.bf16.msra.mxu0 0
    %3751 = vmatpush.bf16.msra.mxu0 0
    %3752 = vmatpush.bf16.msra.mxu0 0
    %3753 = vmatpush.bf16.msra.mxu0 0
    %3754 = vmatpush.bf16.msra.mxu0 %v2777
    %3755 = vmatpush.bf16.msra.mxu0 %v2776
    %3756 = vmatmul.bf16.gmra.mxu0 %v3689
    %v3757 = vpop.f32.mrf.mxu0
    %v3758 = vadd.f32 0.0, %v3757
    %v3759 = vpop.f32.mrf.mxu0
    %3760 = vdwg.mxu0
    %v3761 = vadd.f32 %v2763, %v3758
    %v3762 = vxor.u32 %v3761, 2147483648
    %v3763 = vmul.f32 %v3762, 1.442695
    %v3764 = vpow.pop %v3763
    %v3765 = vadd.f32 %v3764, 1.0
    %v3766 = vrcp.pop %v3765
    %v3767 = vmul.f32 %v3765, %v3766
    %v3768 = vsub.f32 1.0, %v3767
    %v3769 = vmul.f32 %v3766, %v3768
    %v3770 = vadd.f32 %v3766, %v3769
    %vm3771 = vweird.f32 %v3765
    %vm3772 = vweird.f32 %v3766
    %vm3773 = vmor %vm3771, %vm3772
    %v3774 = vsel %vm3773, %v3766, %v3770
    %v3775 = vand.u32 2147483647, %v3765
    %vm3776 = vcmp.eq.f32.partialorder %v3775, 8.507059e+37
    %v3777 = vand.u32 %v3765, 2147483648
    %v3778 = vor.u32 1.1754944e-38, %v3777
    %v3779 = vsel %vm3776, %v3778, %v3774
    %v3780 = vmul.f32 1.0, %v3779
    %v3781 = vtanh.pop %v3761
    %v3782 = vmul.f32 %v3780, %v3657
    %3784 = vrot.lane.b32.xlu0 %v3781, 64
    %v3785 = vpop.permute.xlu0 %3784
    %v3787 = vmul.f32 %v3780, %v3785
    %3789 = vrot.lane.b32.xlu0 %v3787, 32
    %v3790 = vpop.permute.xlu0 %3789
    %v3792 = vadd.f32 %v3782, %v3790
    %v3793 = vtanh.pop %v3792
    %3795 = vrot.lane.b32.xlu0 %v3793, 64
    %v3796 = vpop.permute.xlu0 %3795
    %v3798 = vmul.f32 %v3780, %v3796
    %v3799 = vpack.c.bf16 %v3798, %v3798
    %v3800 = vpack.c.bf16 %v3741, %v3741
    %3802 = vrot.lane.b32.xlu0 %v3800, 32
    %v3803 = vpop.permute.xlu0 %3802
    %v3805 = vsel %vm552, %v3803, 0
    %3807 = vmatpush.bf16.msra.mxu0 0
    %3808 = vmatpush.bf16.msra.mxu0 0
    %3809 = vmatpush.bf16.msra.mxu0 0
    %3810 = vmatpush.bf16.msra.mxu0 0
    %3811 = vmatpush.bf16.msra.mxu0 0
    %3812 = vmatpush.bf16.msra.mxu0 0
    %3813 = vmatpush.bf16.msra.mxu0 %v2844
    %3814 = vmatpush.bf16.msra.mxu0 %v2843
    %3815 = vmatmul.bf16.gmra.mxu0 %v3805
    %v3816 = vpop.f32.mrf.mxu0
    %v3817 = vadd.f32 0.0, %v3816
    %v3818 = vpop.f32.mrf.mxu0
    %3819 = vdwg.mxu0
    %3821 = vrot.lane.b32.xlu0 %v3799, 32
    %v3822 = vpop.permute.xlu0 %3821
    %v3824 = vsel %vm552, %v3822, 0
    %3826 = vmatpush.bf16.msra.mxu0 0
    %3827 = vmatpush.bf16.msra.mxu0 0
    %3828 = vmatpush.bf16.msra.mxu0 0
    %3829 = vmatpush.bf16.msra.mxu0 0
    %3830 = vmatpush.bf16.msra.mxu0 0
    %3831 = vmatpush.bf16.msra.mxu0 0
    %3832 = vmatpush.bf16.msra.mxu0 %v2872
    %3833 = vmatpush.bf16.msra.mxu0 %v2871
    %3834 = vmatmul.bf16.gmra.mxu0 %v3824
    %v3835 = vpop.f32.mrf.mxu0
    %v3836 = vadd.f32 %v3817, %v3835
    %v3837 = vpop.f32.mrf.mxu0
    %3838 = vdwg.mxu0
    %v3839 = vadd.f32 %v3836, %v2892
    %v3840 = vxor.u32 %v3839, 2147483648
    %v3841 = vmul.f32 %v3840, 1.442695
    %v3842 = vpow.pop %v3841
    %v3843 = vadd.f32 %v3842, 1.0
    %v3844 = vrcp.pop %v3843
    %v3845 = vmul.f32 %v3843, %v3844
    %v3846 = vsub.f32 1.0, %v3845
    %v3847 = vmul.f32 %v3844, %v3846
    %v3848 = vadd.f32 %v3844, %v3847
    %vm3849 = vweird.f32 %v3843
    %vm3850 = vweird.f32 %v3844
    %vm3851 = vmor %vm3849, %vm3850
    %v3852 = vsel %vm3851, %v3844, %v3848
    %v3853 = vand.u32 2147483647, %v3843
    %vm3854 = vcmp.eq.f32.partialorder %v3853, 8.507059e+37
    %v3855 = vand.u32 %v3843, 2147483648
    %v3856 = vor.u32 1.1754944e-38, %v3855
    %v3857 = vsel %vm3854, %v3856, %v3852
    %v3858 = vmul.f32 1.0, %v3857
    %v3859 = vtanh.pop %v3839
    %v3860 = vmul.f32 %v3858, %v3735
    %3862 = vrot.lane.b32.xlu0 %v3859, 64
    %v3863 = vpop.permute.xlu0 %3862
    %v3865 = vmul.f32 %v3858, %v3863
    %3867 = vrot.lane.b32.xlu0 %v3865, 32
    %v3868 = vpop.permute.xlu0 %3867
    %v3870 = vadd.f32 %v3860, %v3868
    %v3871 = vtanh.pop %v3870
    %3873 = vrot.lane.b32.xlu0 %v3871, 64
    %v3874 = vpop.permute.xlu0 %3873
    %v3876 = vmul.f32 %v3858, %v3874
    %3878 = vrot.lane.b32.xlu0 %v3876, 32
    %v3879 = vpop.permute.xlu0 %3878
    %s3881 = scalar_lea.vmem [#allocation2], 28
    %3882 = vst.msk [vmem:[%s3881] sm:$0xf] %vm2936, %v3879
    %v3883 = vld [vmem:[#allocation2] sm:$0xf]
    %v3884 = vld [vmem:[#allocation2 + $0x4] sm:$0xf]
    %v3885 = vld [vmem:[#allocation2 + $0x8] sm:$0xf]
    %v3886 = vld [vmem:[#allocation2 + $0xc] sm:$0xf]
    %v3887 = vld [vmem:[#allocation2 + $0x10] sm:$0xf]
    %v3888 = vld [vmem:[#allocation2 + $0x14] sm:$0xf]
    %v3889 = vld [vmem:[#allocation2 + $0x18] sm:$0xf]
    %v3890 = vld [vmem:[#allocation2 + $0x1c] sm:$0xf]
    %3899 = vst [vmem:[#allocation1] ss:$2 sm:$0xff] %v3883
    %s3900 = scalar_lea.vmem [#allocation1], 1
    %3901 = vst [vmem:[%s3900] ss:$2 sm:$0xff] %v3884
    %s3902 = scalar_lea.vmem [#allocation1], 16
    %3903 = vst [vmem:[%s3902] ss:$2 sm:$0xff] %v3885
    %s3904 = scalar_lea.vmem [#allocation1], 17
    %3905 = vst [vmem:[%s3904] ss:$2 sm:$0xff] %v3886
    %s3906 = scalar_lea.vmem [#allocation1], 32
    %3907 = vst [vmem:[%s3906] ss:$2 sm:$0xff] %v3887
    %s3908 = scalar_lea.vmem [#allocation1], 33
    %3909 = vst [vmem:[%s3908] ss:$2 sm:$0xff] %v3888
    %s3910 = scalar_lea.vmem [#allocation1], 48
    %3911 = vst [vmem:[%s3910] ss:$2 sm:$0xff] %v3889
    %s3912 = scalar_lea.vmem [#allocation1], 49
    %3913 = vst [vmem:[%s3912] ss:$2 sm:$0xff] %v3890
    %v3914 = vld.sshfl [vmem:[#allocation1] sm:$0xff pattern:$0x75316420]
    %v3915 = vld.sshfl [vmem:[#allocation1 + $0x10] sm:$0xff pattern:$0x75316420]
    %v3916 = vld.sshfl [vmem:[#allocation1 + $0x20] sm:$0xff pattern:$0x75316420]
    %v3917 = vld.sshfl [vmem:[#allocation1 + $0x30] sm:$0xff pattern:$0x75316420]
    %v3922 = vpack.c.bf16 %v3915, %v3914
    %v3923 = vpack.c.bf16 %v3917, %v3916
    %v3925 = vperm.slane %v512, 0
    %v3931 = vunpack.c.l.b16 %v508
    %v3932 = vunpack.c.l.b16 %v509
    %v3933 = vunpack.c.l.b16 %v510
    %v3934 = vunpack.c.l.b16 %v511
    %v3935 = vpack.c.b16 %v3932, %v3931
    %v3936 = vpack.c.b16 %v3934, %v3933
    %v3940 = vsel %vm552, %v3922, 0
    %v3943 = vsel %vm552, %v3923, 0
    %3945 = vmatpush.bf16.msra.mxu0 0
    %3946 = vmatpush.bf16.msra.mxu0 0
    %3947 = vmatpush.bf16.msra.mxu0 0
    %3948 = vmatpush.bf16.msra.mxu0 0
    %3949 = vmatpush.bf16.msra.mxu0 0
    %3950 = vmatpush.bf16.msra.mxu0 0
    %3951 = vmatpush.bf16.msra.mxu0 %v3936
    %3952 = vmatpush.bf16.msra.mxu0 %v3935
    %3953 = vmatmul.bf16.gmra.mxu0 %v3940
    %v3954 = vpop.f32.mrf.mxu0
    %v3955 = vadd.f32 %v3925, %v3954
    %v3956 = vpop.f32.mrf.mxu0
    %v3957 = vadd.f32 %v3925, %v3956
    %3958 = vmatmul.bf16.gmra.mxu0 %v3943
    %v3959 = vpop.f32.mrf.mxu0
    %v3960 = vadd.f32 %v3925, %v3959
    %v3961 = vpop.f32.mrf.mxu0
    %v3962 = vadd.f32 %v3925, %v3961
    %3963 = vdwg.mxu0
    %v3968 = vrot.slane %v3955, 1
    %v3969 = vrot.slane %v3955, 2
    %v3970 = vrot.slane %v3955, 3
    %v3971 = vrot.slane %v3955, 4
    %v3972 = vrot.slane %v3955, 5
    %v3973 = vrot.slane %v3955, 6
    %v3974 = vrot.slane %v3955, 7
    %v3975 = vrot.slane %v3957, 1
    %v3976 = vrot.slane %v3957, 2
    %v3977 = vrot.slane %v3957, 3
    %v3978 = vrot.slane %v3957, 4
    %v3979 = vrot.slane %v3957, 5
    %v3980 = vrot.slane %v3957, 6
    %v3981 = vrot.slane %v3957, 7
    %v3982 = vrot.slane %v3960, 1
    %v3983 = vrot.slane %v3960, 2
    %v3984 = vrot.slane %v3960, 3
    %v3985 = vrot.slane %v3960, 4
    %v3986 = vrot.slane %v3960, 5
    %v3987 = vrot.slane %v3960, 6
    %v3988 = vrot.slane %v3960, 7
    %v3989 = vrot.slane %v3962, 1
    %v3990 = vrot.slane %v3962, 2
    %v3991 = vrot.slane %v3962, 3
    %v3992 = vrot.slane %v3962, 4
    %v3993 = vrot.slane %v3962, 5
    %v3994 = vrot.slane %v3962, 6
    %v3995 = vrot.slane %v3962, 7
    %v3996 = vperm.slane %v3955, 0
    %v3997 = vperm.slane %v3968, 0
    %v3998 = vperm.slane %v3969, 0
    %v3999 = vperm.slane %v3970, 0
    %v4000 = vperm.slane %v3971, 0
    %v4001 = vperm.slane %v3972, 0
    %v4002 = vperm.slane %v3973, 0
    %v4003 = vperm.slane %v3974, 0
    %v4004 = vperm.slane %v3957, 0
    %v4005 = vperm.slane %v3975, 0
    %v4006 = vperm.slane %v3976, 0
    %v4007 = vperm.slane %v3977, 0
    %v4008 = vperm.slane %v3978, 0
    %v4009 = vperm.slane %v3979, 0
    %v4010 = vperm.slane %v3980, 0
    %v4011 = vperm.slane %v3981, 0
    %v4012 = vperm.slane %v3960, 0
    %v4013 = vperm.slane %v3982, 0
    %v4014 = vperm.slane %v3983, 0
    %v4015 = vperm.slane %v3984, 0
    %v4016 = vperm.slane %v3985, 0
    %v4017 = vperm.slane %v3986, 0
    %v4018 = vperm.slane %v3987, 0
    %v4019 = vperm.slane %v3988, 0
    %v4020 = vperm.slane %v3962, 0
    %v4021 = vperm.slane %v3989, 0
    %v4022 = vperm.slane %v3990, 0
    %v4023 = vperm.slane %v3991, 0
    %v4024 = vperm.slane %v3992, 0
    %v4025 = vperm.slane %v3993, 0
    %v4026 = vperm.slane %v3994, 0
    %v4027 = vperm.slane %v3995, 0
    %4060 = vst [vmem:[#allocation1] ss:$2 sm:$0xff] %v3955
    %v4061 = vld.sshfl [vmem:[#allocation1] sm:$0xff pattern:$0x75316420]
    %s4062 = scalar_lea.vmem [#allocation1], 16
    %4063 = vst [vmem:[%s4062] ss:$2 sm:$0xff] %v3955
    %v4064 = vld.sshfl [vmem:[#allocation1 + $0x10] sm:$0xff pattern:$0x75316420]
    %s4065 = scalar_lea.vmem [#allocation1], 32
    %4066 = vst [vmem:[%s4065] ss:$2 sm:$0xff] %v3955
    %v4067 = vld.sshfl [vmem:[#allocation1 + $0x20] sm:$0xff pattern:$0x75316420]
    %s4068 = scalar_lea.vmem [#allocation1], 48
    %4069 = vst [vmem:[%s4068] ss:$2 sm:$0xff] %v3955
    %v4070 = vld.sshfl [vmem:[#allocation1 + $0x30] sm:$0xff pattern:$0x75316420]
    %4071 = vst [vmem:[#allocation1] ss:$2 sm:$0xff] %v3971
    %v4072 = vld.sshfl [vmem:[#allocation1] sm:$0xff pattern:$0x75316420]
    %4073 = vst [vmem:[%s4062] ss:$2 sm:$0xff] %v3971
    %v4074 = vld.sshfl [vmem:[#allocation1 + $0x10] sm:$0xff pattern:$0x75316420]
    %4075 = vst [vmem:[%s4065] ss:$2 sm:$0xff] %v3971
    %v4076 = vld.sshfl [vmem:[#allocation1 + $0x20] sm:$0xff pattern:$0x75316420]
    %4077 = vst [vmem:[%s4068] ss:$2 sm:$0xff] %v3971
    %v4078 = vld.sshfl [vmem:[#allocation1 + $0x30] sm:$0xff pattern:$0x75316420]
    %4079 = vst [vmem:[#allocation1] ss:$2 sm:$0xff] %v3957
    %v4080 = vld.sshfl [vmem:[#allocation1] sm:$0xff pattern:$0x75316420]
    %4081 = vst [vmem:[%s4062] ss:$2 sm:$0xff] %v3957
    %v4082 = vld.sshfl [vmem:[#allocation1 + $0x10] sm:$0xff pattern:$0x75316420]
    %4083 = vst [vmem:[%s4065] ss:$2 sm:$0xff] %v3957
    %v4084 = vld.sshfl [vmem:[#allocation1 + $0x20] sm:$0xff pattern:$0x75316420]
    %4085 = vst [vmem:[%s4068] ss:$2 sm:$0xff] %v3957
    %v4086 = vld.sshfl [vmem:[#allocation1 + $0x30] sm:$0xff pattern:$0x75316420]
    %4087 = vst [vmem:[#allocation1] ss:$2 sm:$0xff] %v3978
    %v4088 = vld.sshfl [vmem:[#allocation1] sm:$0xff pattern:$0x75316420]
    %4089 = vst [vmem:[%s4062] ss:$2 sm:$0xff] %v3978
    %v4090 = vld.sshfl [vmem:[#allocation1 + $0x10] sm:$0xff pattern:$0x75316420]
    %4091 = vst [vmem:[%s4065] ss:$2 sm:$0xff] %v3978
    %v4092 = vld.sshfl [vmem:[#allocation1 + $0x20] sm:$0xff pattern:$0x75316420]
    %4093 = vst [vmem:[%s4068] ss:$2 sm:$0xff] %v3978
    %v4094 = vld.sshfl [vmem:[#allocation1 + $0x30] sm:$0xff pattern:$0x75316420]
    %4095 = vst [vmem:[#allocation1] ss:$2 sm:$0xff] %v3960
    %v4096 = vld.sshfl [vmem:[#allocation1] sm:$0xff pattern:$0x75316420]
    %4097 = vst [vmem:[%s4062] ss:$2 sm:$0xff] %v3960
    %v4098 = vld.sshfl [vmem:[#allocation1 + $0x10] sm:$0xff pattern:$0x75316420]
    %4099 = vst [vmem:[%s4065] ss:$2 sm:$0xff] %v3960
    %v4100 = vld.sshfl [vmem:[#allocation1 + $0x20] sm:$0xff pattern:$0x75316420]
    %4101 = vst [vmem:[%s4068] ss:$2 sm:$0xff] %v3960
    %v4102 = vld.sshfl [vmem:[#allocation1 + $0x30] sm:$0xff pattern:$0x75316420]
    %4103 = vst [vmem:[#allocation1] ss:$2 sm:$0xff] %v3985
    %v4104 = vld.sshfl [vmem:[#allocation1] sm:$0xff pattern:$0x75316420]
    %4105 = vst [vmem:[%s4062] ss:$2 sm:$0xff] %v3985
    %v4106 = vld.sshfl [vmem:[#allocation1 + $0x10] sm:$0xff pattern:$0x75316420]
    %4107 = vst [vmem:[%s4065] ss:$2 sm:$0xff] %v3985
    %v4108 = vld.sshfl [vmem:[#allocation1 + $0x20] sm:$0xff pattern:$0x75316420]
    %4109 = vst [vmem:[%s4068] ss:$2 sm:$0xff] %v3985
    %v4110 = vld.sshfl [vmem:[#allocation1 + $0x30] sm:$0xff pattern:$0x75316420]
    %4111 = vst [vmem:[#allocation1] ss:$2 sm:$0xff] %v3962
    %v4112 = vld.sshfl [vmem:[#allocation1] sm:$0xff pattern:$0x75316420]
    %4113 = vst [vmem:[%s4062] ss:$2 sm:$0xff] %v3962
    %v4114 = vld.sshfl [vmem:[#allocation1 + $0x10] sm:$0xff pattern:$0x75316420]
    %4115 = vst [vmem:[%s4065] ss:$2 sm:$0xff] %v3962
    %v4116 = vld.sshfl [vmem:[#allocation1 + $0x20] sm:$0xff pattern:$0x75316420]
    %4117 = vst [vmem:[%s4068] ss:$2 sm:$0xff] %v3962
    %v4118 = vld.sshfl [vmem:[#allocation1 + $0x30] sm:$0xff pattern:$0x75316420]
    %4119 = vst [vmem:[#allocation1] ss:$2 sm:$0xff] %v3992
    %v4120 = vld.sshfl [vmem:[#allocation1] sm:$0xff pattern:$0x75316420]
    %4121 = vst [vmem:[%s4062] ss:$2 sm:$0xff] %v3992
    %v4122 = vld.sshfl [vmem:[#allocation1 + $0x10] sm:$0xff pattern:$0x75316420]
    %4123 = vst [vmem:[%s4065] ss:$2 sm:$0xff] %v3992
    %v4124 = vld.sshfl [vmem:[#allocation1 + $0x20] sm:$0xff pattern:$0x75316420]
    %4125 = vst [vmem:[%s4068] ss:$2 sm:$0xff] %v3992
    %v4126 = vld.sshfl [vmem:[#allocation1 + $0x30] sm:$0xff pattern:$0x75316420]
    %4127 = vrot.lane.b32.xlu0 %v4061, 96
    %v4128 = vpop.permute.xlu0 %4127
    %4129 = vrot.lane.b32.xlu0 %v4064, 96
    %v4130 = vpop.permute.xlu0 %4129
    %4131 = vrot.lane.b32.xlu0 %v4067, 96
    %v4132 = vpop.permute.xlu0 %4131
    %4133 = vrot.lane.b32.xlu0 %v4070, 96
    %v4134 = vpop.permute.xlu0 %4133
    %4135 = vrot.lane.b32.xlu0 %v4072, 96
    %v4136 = vpop.permute.xlu0 %4135
    %4137 = vrot.lane.b32.xlu0 %v4074, 96
    %v4138 = vpop.permute.xlu0 %4137
    %4139 = vrot.lane.b32.xlu0 %v4076, 96
    %v4140 = vpop.permute.xlu0 %4139
    %4141 = vrot.lane.b32.xlu0 %v4078, 96
    %v4142 = vpop.permute.xlu0 %4141
    %4143 = vrot.lane.b32.xlu0 %v4080, 96
    %v4144 = vpop.permute.xlu0 %4143
    %4145 = vrot.lane.b32.xlu0 %v4082, 96
    %v4146 = vpop.permute.xlu0 %4145
    %4147 = vrot.lane.b32.xlu0 %v4084, 96
    %v4148 = vpop.permute.xlu0 %4147
    %4149 = vrot.lane.b32.xlu0 %v4086, 96
    %v4150 = vpop.permute.xlu0 %4149
    %4151 = vrot.lane.b32.xlu0 %v4088, 96
    %v4152 = vpop.permute.xlu0 %4151
    %4153 = vrot.lane.b32.xlu0 %v4090, 96
    %v4154 = vpop.permute.xlu0 %4153
    %4155 = vrot.lane.b32.xlu0 %v4092, 96
    %v4156 = vpop.permute.xlu0 %4155
    %4157 = vrot.lane.b32.xlu0 %v4094, 96
    %v4158 = vpop.permute.xlu0 %4157
    %4159 = vrot.lane.b32.xlu0 %v4096, 96
    %v4160 = vpop.permute.xlu0 %4159
    %4161 = vrot.lane.b32.xlu0 %v4098, 96
    %v4162 = vpop.permute.xlu0 %4161
    %4163 = vrot.lane.b32.xlu0 %v4100, 96
    %v4164 = vpop.permute.xlu0 %4163
    %4165 = vrot.lane.b32.xlu0 %v4102, 96
    %v4166 = vpop.permute.xlu0 %4165
    %4167 = vrot.lane.b32.xlu0 %v4104, 96
    %v4168 = vpop.permute.xlu0 %4167
    %4169 = vrot.lane.b32.xlu0 %v4106, 96
    %v4170 = vpop.permute.xlu0 %4169
    %4171 = vrot.lane.b32.xlu0 %v4108, 96
    %v4172 = vpop.permute.xlu0 %4171
    %4173 = vrot.lane.b32.xlu0 %v4110, 96
    %v4174 = vpop.permute.xlu0 %4173
    %4175 = vrot.lane.b32.xlu0 %v4112, 96
    %v4176 = vpop.permute.xlu0 %4175
    %4177 = vrot.lane.b32.xlu0 %v4114, 96
    %v4178 = vpop.permute.xlu0 %4177
    %4179 = vrot.lane.b32.xlu0 %v4116, 96
    %v4180 = vpop.permute.xlu0 %4179
    %4181 = vrot.lane.b32.xlu0 %v4118, 96
    %v4182 = vpop.permute.xlu0 %4181
    %4183 = vrot.lane.b32.xlu0 %v4120, 96
    %v4184 = vpop.permute.xlu0 %4183
    %4185 = vrot.lane.b32.xlu0 %v4122, 96
    %v4186 = vpop.permute.xlu0 %4185
    %4187 = vrot.lane.b32.xlu0 %v4124, 96
    %v4188 = vpop.permute.xlu0 %4187
    %4189 = vrot.lane.b32.xlu0 %v4126, 96
    %v4190 = vpop.permute.xlu0 %4189
    %v4223 = vmul.f32 %v3996, %v4128
    %v4224 = vmul.f32 %v3997, %v4130
    %v4225 = vmul.f32 %v3998, %v4132
    %v4226 = vmul.f32 %v3999, %v4134
    %v4227 = vmul.f32 %v4000, %v4136
    %v4228 = vmul.f32 %v4001, %v4138
    %v4229 = vmul.f32 %v4002, %v4140
    %v4230 = vmul.f32 %v4003, %v4142
    %v4231 = vmul.f32 %v4004, %v4144
    %v4232 = vmul.f32 %v4005, %v4146
    %v4233 = vmul.f32 %v4006, %v4148
    %v4234 = vmul.f32 %v4007, %v4150
    %v4235 = vmul.f32 %v4008, %v4152
    %v4236 = vmul.f32 %v4009, %v4154
    %v4237 = vmul.f32 %v4010, %v4156
    %v4238 = vmul.f32 %v4011, %v4158
    %v4239 = vmul.f32 %v4012, %v4160
    %v4240 = vmul.f32 %v4013, %v4162
    %v4241 = vmul.f32 %v4014, %v4164
    %v4242 = vmul.f32 %v4015, %v4166
    %v4243 = vmul.f32 %v4016, %v4168
    %v4244 = vmul.f32 %v4017, %v4170
    %v4245 = vmul.f32 %v4018, %v4172
    %v4246 = vmul.f32 %v4019, %v4174
    %v4247 = vmul.f32 %v4020, %v4176
    %v4248 = vmul.f32 %v4021, %v4178
    %v4249 = vmul.f32 %v4022, %v4180
    %v4250 = vmul.f32 %v4023, %v4182
    %v4251 = vmul.f32 %v4024, %v4184
    %v4252 = vmul.f32 %v4025, %v4186
    %v4253 = vmul.f32 %v4026, %v4188
    %v4254 = vmul.f32 %v4027, %v4190
    %4287 = vst [vmem:[#allocation1] ss:$2 sm:$0xff] %v4223
    %s4288 = scalar_lea.vmem [#allocation1], 1
    %4289 = vst [vmem:[%s4288] ss:$2 sm:$0xff] %v4224
    %s4290 = scalar_lea.vmem [#allocation1], 16
    %4291 = vst [vmem:[%s4290] ss:$2 sm:$0xff] %v4225
    %s4292 = scalar_lea.vmem [#allocation1], 17
    %4293 = vst [vmem:[%s4292] ss:$2 sm:$0xff] %v4226
    %s4294 = scalar_lea.vmem [#allocation1], 32
    %4295 = vst [vmem:[%s4294] ss:$2 sm:$0xff] %v4227
    %s4296 = scalar_lea.vmem [#allocation1], 33
    %4297 = vst [vmem:[%s4296] ss:$2 sm:$0xff] %v4228
    %s4298 = scalar_lea.vmem [#allocation1], 48
    %4299 = vst [vmem:[%s4298] ss:$2 sm:$0xff] %v4229
    %s4300 = scalar_lea.vmem [#allocation1], 49
    %4301 = vst [vmem:[%s4300] ss:$2 sm:$0xff] %v4230
    %v4302 = vld.sshfl [vmem:[#allocation1] sm:$0xff pattern:$0x75316420]
    %v4303 = vld.sshfl [vmem:[#allocation1 + $0x10] sm:$0xff pattern:$0x75316420]
    %v4304 = vld.sshfl [vmem:[#allocation1 + $0x20] sm:$0xff pattern:$0x75316420]
    %v4305 = vld.sshfl [vmem:[#allocation1 + $0x30] sm:$0xff pattern:$0x75316420]
    %4306 = vst [vmem:[#allocation1] ss:$2 sm:$0xff] %v4231
    %4307 = vst [vmem:[%s4288] ss:$2 sm:$0xff] %v4232
    %4308 = vst [vmem:[%s4290] ss:$2 sm:$0xff] %v4233
    %4309 = vst [vmem:[%s4292] ss:$2 sm:$0xff] %v4234
    %4310 = vst [vmem:[%s4294] ss:$2 sm:$0xff] %v4235
    %4311 = vst [vmem:[%s4296] ss:$2 sm:$0xff] %v4236
    %4312 = vst [vmem:[%s4298] ss:$2 sm:$0xff] %v4237
    %4313 = vst [vmem:[%s4300] ss:$2 sm:$0xff] %v4238
    %v4314 = vld.sshfl [vmem:[#allocation1] sm:$0xff pattern:$0x75316420]
    %v4315 = vld.sshfl [vmem:[#allocation1 + $0x10] sm:$0xff pattern:$0x75316420]
    %v4316 = vld.sshfl [vmem:[#allocation1 + $0x20] sm:$0xff pattern:$0x75316420]
    %v4317 = vld.sshfl [vmem:[#allocation1 + $0x30] sm:$0xff pattern:$0x75316420]
    %4318 = vst [vmem:[#allocation1] ss:$2 sm:$0xff] %v4239
    %4319 = vst [vmem:[%s4288] ss:$2 sm:$0xff] %v4240
    %4320 = vst [vmem:[%s4290] ss:$2 sm:$0xff] %v4241
    %4321 = vst [vmem:[%s4292] ss:$2 sm:$0xff] %v4242
    %4322 = vst [vmem:[%s4294] ss:$2 sm:$0xff] %v4243
    %4323 = vst [vmem:[%s4296] ss:$2 sm:$0xff] %v4244
    %4324 = vst [vmem:[%s4298] ss:$2 sm:$0xff] %v4245
    %4325 = vst [vmem:[%s4300] ss:$2 sm:$0xff] %v4246
    %v4326 = vld.sshfl [vmem:[#allocation1] sm:$0xff pattern:$0x75316420]
    %v4327 = vld.sshfl [vmem:[#allocation1 + $0x10] sm:$0xff pattern:$0x75316420]
    %v4328 = vld.sshfl [vmem:[#allocation1 + $0x20] sm:$0xff pattern:$0x75316420]
    %v4329 = vld.sshfl [vmem:[#allocation1 + $0x30] sm:$0xff pattern:$0x75316420]
    %4330 = vst [vmem:[#allocation1] ss:$2 sm:$0xff] %v4247
    %4331 = vst [vmem:[%s4288] ss:$2 sm:$0xff] %v4248
    %4332 = vst [vmem:[%s4290] ss:$2 sm:$0xff] %v4249
    %4333 = vst [vmem:[%s4292] ss:$2 sm:$0xff] %v4250
    %4334 = vst [vmem:[%s4294] ss:$2 sm:$0xff] %v4251
    %4335 = vst [vmem:[%s4296] ss:$2 sm:$0xff] %v4252
    %4336 = vst [vmem:[%s4298] ss:$2 sm:$0xff] %v4253
    %4337 = vst [vmem:[%s4300] ss:$2 sm:$0xff] %v4254
    %v4338 = vld.sshfl [vmem:[#allocation1] sm:$0xff pattern:$0x75316420]
    %v4339 = vld.sshfl [vmem:[#allocation1 + $0x10] sm:$0xff pattern:$0x75316420]
    %v4340 = vld.sshfl [vmem:[#allocation1 + $0x20] sm:$0xff pattern:$0x75316420]
    %v4341 = vld.sshfl [vmem:[#allocation1 + $0x30] sm:$0xff pattern:$0x75316420]
    %v4342 = vsel %vm552, %v4302, 0
    %v4344 = vsel %vm552, %v4303, 0
    %v4346 = vsel %vm552, %v4304, 0
    %v4348 = vsel %vm552, %v4305, 0
    %v4350 = vsel %vm552, %v4314, 0
    %v4352 = vsel %vm552, %v4315, 0
    %v4354 = vsel %vm552, %v4316, 0
    %v4356 = vsel %vm552, %v4317, 0
    %v4358 = vsel %vm552, %v4326, 0
    %v4360 = vsel %vm552, %v4327, 0
    %v4362 = vsel %vm552, %v4328, 0
    %v4364 = vsel %vm552, %v4329, 0
    %v4366 = vsel %vm552, %v4338, 0
    %v4368 = vsel %vm552, %v4339, 0
    %v4370 = vsel %vm552, %v4340, 0
    %v4372 = vsel %vm552, %v4341, 0
    %4374 = vmatpush.msra.mxu0 0.0
    %4375 = vmatpush.msra.mxu0 0.0
    %4376 = vmatpush.msra.mxu0 0.0
    %4377 = vmatpush.msra.mxu0 0.0
    %4378 = vmatpush.msra.mxu0 0.0
    %4379 = vmatpush.msra.mxu0 0.0
    %4380 = vmatpush.msra.mxu0 0.0
    %4381 = vmatpush.msra.mxu0 0.0
    %4382 = vmatpush.msra.mxu0 0.0
    %4383 = vmatpush.msra.mxu0 0.0
    %4384 = vmatpush.msra.mxu0 0.0
    %4385 = vmatpush.msra.mxu0 0.0
    %4386 = vmatpush.msra.mxu0 %v454
    %4387 = vmatpush.msra.mxu0 %v453
    %4388 = vmatpush.msra.mxu0 %v452
    %4389 = vmatpush.msra.mxu0 %v451
    %4390 = vmatmul.f32.gmra.mxu0 %v4342
    %v4391 = vpop.f32.mrf.mxu0
    %v4392 = vadd.f32 0.0, %v4391
    %4393 = vmatmul.f32.gmra.mxu0 %v4344
    %v4394 = vpop.f32.mrf.mxu0
    %v4395 = vadd.f32 0.0, %v4394
    %4396 = vmatmul.f32.gmra.mxu0 %v4346
    %v4397 = vpop.f32.mrf.mxu0
    %v4398 = vadd.f32 0.0, %v4397
    %4399 = vmatmul.f32.gmra.mxu0 %v4348
    %v4400 = vpop.f32.mrf.mxu0
    %v4401 = vadd.f32 0.0, %v4400
    %4402 = vmatmul.f32.gmra.mxu0 %v4350
    %v4403 = vpop.f32.mrf.mxu0
    %v4404 = vadd.f32 0.0, %v4403
    %4405 = vmatmul.f32.gmra.mxu0 %v4352
    %v4406 = vpop.f32.mrf.mxu0
    %v4407 = vadd.f32 0.0, %v4406
    %4408 = vmatmul.f32.gmra.mxu0 %v4354
    %v4409 = vpop.f32.mrf.mxu0
    %v4410 = vadd.f32 0.0, %v4409
    %4411 = vmatmul.f32.gmra.mxu0 %v4356
    %v4412 = vpop.f32.mrf.mxu0
    %v4413 = vadd.f32 0.0, %v4412
    %4414 = vmatmul.f32.gmra.mxu0 %v4358
    %v4415 = vpop.f32.mrf.mxu0
    %v4416 = vadd.f32 0.0, %v4415
    %4417 = vmatmul.f32.gmra.mxu0 %v4360
    %v4418 = vpop.f32.mrf.mxu0
    %v4419 = vadd.f32 0.0, %v4418
    %4420 = vmatmul.f32.gmra.mxu0 %v4362
    %v4421 = vpop.f32.mrf.mxu0
    %v4422 = vadd.f32 0.0, %v4421
    %4423 = vmatmul.f32.gmra.mxu0 %v4364
    %v4424 = vpop.f32.mrf.mxu0
    %v4425 = vadd.f32 0.0, %v4424
    %4426 = vmatmul.f32.gmra.mxu0 %v4366
    %v4427 = vpop.f32.mrf.mxu0
    %v4428 = vadd.f32 0.0, %v4427
    %4429 = vmatmul.f32.gmra.mxu0 %v4368
    %v4430 = vpop.f32.mrf.mxu0
    %v4431 = vadd.f32 0.0, %v4430
    %4432 = vmatmul.f32.gmra.mxu0 %v4370
    %v4433 = vpop.f32.mrf.mxu0
    %v4434 = vadd.f32 0.0, %v4433
    %4435 = vmatmul.f32.gmra.mxu0 %v4372
    %v4436 = vpop.f32.mrf.mxu0
    %v4437 = vadd.f32 0.0, %v4436
    %4438 = vdwg.mxu0
    %v4455 = vrot.slane %v4392, 4
    %v4456 = vrot.slane %v4395, 4
    %v4457 = vrot.slane %v4398, 4
    %v4458 = vrot.slane %v4401, 4
    %v4459 = vrot.slane %v4404, 4
    %v4460 = vrot.slane %v4407, 4
    %v4461 = vrot.slane %v4410, 4
    %v4462 = vrot.slane %v4413, 4
    %v4463 = vrot.slane %v4416, 4
    %v4464 = vrot.slane %v4419, 4
    %v4465 = vrot.slane %v4422, 4
    %v4466 = vrot.slane %v4425, 4
    %v4467 = vrot.slane %v4428, 4
    %v4468 = vrot.slane %v4431, 4
    %v4469 = vrot.slane %v4434, 4
    %v4470 = vrot.slane %v4437, 4
    %vm4487 = vcmask 60416
    %v4488 = vsel %vm4487, %v4392, -inf
    %v4489 = vrot.slane %v4488, 4
    %v4490 = vmax.f32 %v4488, %v4489
    %v4491 = vrot.slane %v4490, 2
    %v4492 = vmax.f32 %v4490, %v4491
    %v4493 = vrot.slane %v4492, 1
    %v4494 = vmax.f32 %v4492, %v4493
    %v4495 = vsel %vm4487, %v4455, -inf
    %v4496 = vrot.slane %v4495, 4
    %v4497 = vmax.f32 %v4495, %v4496
    %v4498 = vrot.slane %v4497, 2
    %v4499 = vmax.f32 %v4497, %v4498
    %v4500 = vrot.slane %v4499, 1
    %v4501 = vmax.f32 %v4499, %v4500
    %v4502 = vsel %vm4487, %v4395, -inf
    %v4503 = vrot.slane %v4502, 4
    %v4504 = vmax.f32 %v4502, %v4503
    %v4505 = vrot.slane %v4504, 2
    %v4506 = vmax.f32 %v4504, %v4505
    %v4507 = vrot.slane %v4506, 1
    %v4508 = vmax.f32 %v4506, %v4507
    %v4509 = vsel %vm4487, %v4456, -inf
    %v4510 = vrot.slane %v4509, 4
    %v4511 = vmax.f32 %v4509, %v4510
    %v4512 = vrot.slane %v4511, 2
    %v4513 = vmax.f32 %v4511, %v4512
    %v4514 = vrot.slane %v4513, 1
    %v4515 = vmax.f32 %v4513, %v4514
    %v4516 = vsel %vm4487, %v4398, -inf
    %v4517 = vrot.slane %v4516, 4
    %v4518 = vmax.f32 %v4516, %v4517
    %v4519 = vrot.slane %v4518, 2
    %v4520 = vmax.f32 %v4518, %v4519
    %v4521 = vrot.slane %v4520, 1
    %v4522 = vmax.f32 %v4520, %v4521
    %v4523 = vsel %vm4487, %v4457, -inf
    %v4524 = vrot.slane %v4523, 4
    %v4525 = vmax.f32 %v4523, %v4524
    %v4526 = vrot.slane %v4525, 2
    %v4527 = vmax.f32 %v4525, %v4526
    %v4528 = vrot.slane %v4527, 1
    %v4529 = vmax.f32 %v4527, %v4528
    %v4530 = vsel %vm4487, %v4401, -inf
    %v4531 = vrot.slane %v4530, 4
    %v4532 = vmax.f32 %v4530, %v4531
    %v4533 = vrot.slane %v4532, 2
    %v4534 = vmax.f32 %v4532, %v4533
    %v4535 = vrot.slane %v4534, 1
    %v4536 = vmax.f32 %v4534, %v4535
    %v4537 = vsel %vm4487, %v4458, -inf
    %v4538 = vrot.slane %v4537, 4
    %v4539 = vmax.f32 %v4537, %v4538
    %v4540 = vrot.slane %v4539, 2
    %v4541 = vmax.f32 %v4539, %v4540
    %v4542 = vrot.slane %v4541, 1
    %v4543 = vmax.f32 %v4541, %v4542
    %v4544 = vsel %vm4487, %v4404, -inf
    %v4545 = vrot.slane %v4544, 4
    %v4546 = vmax.f32 %v4544, %v4545
    %v4547 = vrot.slane %v4546, 2
    %v4548 = vmax.f32 %v4546, %v4547
    %v4549 = vrot.slane %v4548, 1
    %v4550 = vmax.f32 %v4548, %v4549
    %v4551 = vsel %vm4487, %v4459, -inf
    %v4552 = vrot.slane %v4551, 4
    %v4553 = vmax.f32 %v4551, %v4552
    %v4554 = vrot.slane %v4553, 2
    %v4555 = vmax.f32 %v4553, %v4554
    %v4556 = vrot.slane %v4555, 1
    %v4557 = vmax.f32 %v4555, %v4556
    %v4558 = vsel %vm4487, %v4407, -inf
    %v4559 = vrot.slane %v4558, 4
    %v4560 = vmax.f32 %v4558, %v4559
    %v4561 = vrot.slane %v4560, 2
    %v4562 = vmax.f32 %v4560, %v4561
    %v4563 = vrot.slane %v4562, 1
    %v4564 = vmax.f32 %v4562, %v4563
    %v4565 = vsel %vm4487, %v4460, -inf
    %v4566 = vrot.slane %v4565, 4
    %v4567 = vmax.f32 %v4565, %v4566
    %v4568 = vrot.slane %v4567, 2
    %v4569 = vmax.f32 %v4567, %v4568
    %v4570 = vrot.slane %v4569, 1
    %v4571 = vmax.f32 %v4569, %v4570
    %v4572 = vsel %vm4487, %v4410, -inf
    %v4573 = vrot.slane %v4572, 4
    %v4574 = vmax.f32 %v4572, %v4573
    %v4575 = vrot.slane %v4574, 2
    %v4576 = vmax.f32 %v4574, %v4575
    %v4577 = vrot.slane %v4576, 1
    %v4578 = vmax.f32 %v4576, %v4577
    %v4579 = vsel %vm4487, %v4461, -inf
    %v4580 = vrot.slane %v4579, 4
    %v4581 = vmax.f32 %v4579, %v4580
    %v4582 = vrot.slane %v4581, 2
    %v4583 = vmax.f32 %v4581, %v4582
    %v4584 = vrot.slane %v4583, 1
    %v4585 = vmax.f32 %v4583, %v4584
    %v4586 = vsel %vm4487, %v4413, -inf
    %v4587 = vrot.slane %v4586, 4
    %v4588 = vmax.f32 %v4586, %v4587
    %v4589 = vrot.slane %v4588, 2
    %v4590 = vmax.f32 %v4588, %v4589
    %v4591 = vrot.slane %v4590, 1
    %v4592 = vmax.f32 %v4590, %v4591
    %v4593 = vsel %vm4487, %v4462, -inf
    %v4594 = vrot.slane %v4593, 4
    %v4595 = vmax.f32 %v4593, %v4594
    %v4596 = vrot.slane %v4595, 2
    %v4597 = vmax.f32 %v4595, %v4596
    %v4598 = vrot.slane %v4597, 1
    %v4599 = vmax.f32 %v4597, %v4598
    %v4600 = vsel %vm4487, %v4416, -inf
    %v4601 = vrot.slane %v4600, 4
    %v4602 = vmax.f32 %v4600, %v4601
    %v4603 = vrot.slane %v4602, 2
    %v4604 = vmax.f32 %v4602, %v4603
    %v4605 = vrot.slane %v4604, 1
    %v4606 = vmax.f32 %v4604, %v4605
    %v4607 = vsel %vm4487, %v4463, -inf
    %v4608 = vrot.slane %v4607, 4
    %v4609 = vmax.f32 %v4607, %v4608
    %v4610 = vrot.slane %v4609, 2
    %v4611 = vmax.f32 %v4609, %v4610
    %v4612 = vrot.slane %v4611, 1
    %v4613 = vmax.f32 %v4611, %v4612
    %v4614 = vsel %vm4487, %v4419, -inf
    %v4615 = vrot.slane %v4614, 4
    %v4616 = vmax.f32 %v4614, %v4615
    %v4617 = vrot.slane %v4616, 2
    %v4618 = vmax.f32 %v4616, %v4617
    %v4619 = vrot.slane %v4618, 1
    %v4620 = vmax.f32 %v4618, %v4619
    %v4621 = vsel %vm4487, %v4464, -inf
    %v4622 = vrot.slane %v4621, 4
    %v4623 = vmax.f32 %v4621, %v4622
    %v4624 = vrot.slane %v4623, 2
    %v4625 = vmax.f32 %v4623, %v4624
    %v4626 = vrot.slane %v4625, 1
    %v4627 = vmax.f32 %v4625, %v4626
    %v4628 = vsel %vm4487, %v4422, -inf
    %v4629 = vrot.slane %v4628, 4
    %v4630 = vmax.f32 %v4628, %v4629
    %v4631 = vrot.slane %v4630, 2
    %v4632 = vmax.f32 %v4630, %v4631
    %v4633 = vrot.slane %v4632, 1
    %v4634 = vmax.f32 %v4632, %v4633
    %v4635 = vsel %vm4487, %v4465, -inf
    %v4636 = vrot.slane %v4635, 4
    %v4637 = vmax.f32 %v4635, %v4636
    %v4638 = vrot.slane %v4637, 2
    %v4639 = vmax.f32 %v4637, %v4638
    %v4640 = vrot.slane %v4639, 1
    %v4641 = vmax.f32 %v4639, %v4640
    %v4642 = vsel %vm4487, %v4425, -inf
    %v4643 = vrot.slane %v4642, 4
    %v4644 = vmax.f32 %v4642, %v4643
    %v4645 = vrot.slane %v4644, 2
    %v4646 = vmax.f32 %v4644, %v4645
    %v4647 = vrot.slane %v4646, 1
    %v4648 = vmax.f32 %v4646, %v4647
    %v4649 = vsel %vm4487, %v4466, -inf
    %v4650 = vrot.slane %v4649, 4
    %v4651 = vmax.f32 %v4649, %v4650
    %v4652 = vrot.slane %v4651, 2
    %v4653 = vmax.f32 %v4651, %v4652
    %v4654 = vrot.slane %v4653, 1
    %v4655 = vmax.f32 %v4653, %v4654
    %v4656 = vsel %vm4487, %v4428, -inf
    %v4657 = vrot.slane %v4656, 4
    %v4658 = vmax.f32 %v4656, %v4657
    %v4659 = vrot.slane %v4658, 2
    %v4660 = vmax.f32 %v4658, %v4659
    %v4661 = vrot.slane %v4660, 1
    %v4662 = vmax.f32 %v4660, %v4661
    %v4663 = vsel %vm4487, %v4467, -inf
    %v4664 = vrot.slane %v4663, 4
    %v4665 = vmax.f32 %v4663, %v4664
    %v4666 = vrot.slane %v4665, 2
    %v4667 = vmax.f32 %v4665, %v4666
    %v4668 = vrot.slane %v4667, 1
    %v4669 = vmax.f32 %v4667, %v4668
    %v4670 = vsel %vm4487, %v4431, -inf
    %v4671 = vrot.slane %v4670, 4
    %v4672 = vmax.f32 %v4670, %v4671
    %v4673 = vrot.slane %v4672, 2
    %v4674 = vmax.f32 %v4672, %v4673
    %v4675 = vrot.slane %v4674, 1
    %v4676 = vmax.f32 %v4674, %v4675
    %v4677 = vsel %vm4487, %v4468, -inf
    %v4678 = vrot.slane %v4677, 4
    %v4679 = vmax.f32 %v4677, %v4678
    %v4680 = vrot.slane %v4679, 2
    %v4681 = vmax.f32 %v4679, %v4680
    %v4682 = vrot.slane %v4681, 1
    %v4683 = vmax.f32 %v4681, %v4682
    %v4684 = vsel %vm4487, %v4434, -inf
    %v4685 = vrot.slane %v4684, 4
    %v4686 = vmax.f32 %v4684, %v4685
    %v4687 = vrot.slane %v4686, 2
    %v4688 = vmax.f32 %v4686, %v4687
    %v4689 = vrot.slane %v4688, 1
    %v4690 = vmax.f32 %v4688, %v4689
    %v4691 = vsel %vm4487, %v4469, -inf
    %v4692 = vrot.slane %v4691, 4
    %v4693 = vmax.f32 %v4691, %v4692
    %v4694 = vrot.slane %v4693, 2
    %v4695 = vmax.f32 %v4693, %v4694
    %v4696 = vrot.slane %v4695, 1
    %v4697 = vmax.f32 %v4695, %v4696
    %v4698 = vsel %vm4487, %v4437, -inf
    %v4699 = vrot.slane %v4698, 4
    %v4700 = vmax.f32 %v4698, %v4699
    %v4701 = vrot.slane %v4700, 2
    %v4702 = vmax.f32 %v4700, %v4701
    %v4703 = vrot.slane %v4702, 1
    %v4704 = vmax.f32 %v4702, %v4703
    %v4705 = vsel %vm4487, %v4470, -inf
    %v4706 = vrot.slane %v4705, 4
    %v4707 = vmax.f32 %v4705, %v4706
    %v4708 = vrot.slane %v4707, 2
    %v4709 = vmax.f32 %v4707, %v4708
    %v4710 = vrot.slane %v4709, 1
    %v4711 = vmax.f32 %v4709, %v4710
    %v4712 = vsub.f32 %v4392, %v4494
    %v4713 = vsub.f32 %v4455, %v4501
    %v4714 = vsub.f32 %v4395, %v4508
    %v4715 = vsub.f32 %v4456, %v4515
    %v4716 = vsub.f32 %v4398, %v4522
    %v4717 = vsub.f32 %v4457, %v4529
    %v4718 = vsub.f32 %v4401, %v4536
    %v4719 = vsub.f32 %v4458, %v4543
    %v4720 = vsub.f32 %v4404, %v4550
    %v4721 = vsub.f32 %v4459, %v4557
    %v4722 = vsub.f32 %v4407, %v4564
    %v4723 = vsub.f32 %v4460, %v4571
    %v4724 = vsub.f32 %v4410, %v4578
    %v4725 = vsub.f32 %v4461, %v4585
    %v4726 = vsub.f32 %v4413, %v4592
    %v4727 = vsub.f32 %v4462, %v4599
    %v4728 = vsub.f32 %v4416, %v4606
    %v4729 = vsub.f32 %v4463, %v4613
    %v4730 = vsub.f32 %v4419, %v4620
    %v4731 = vsub.f32 %v4464, %v4627
    %v4732 = vsub.f32 %v4422, %v4634
    %v4733 = vsub.f32 %v4465, %v4641
    %v4734 = vsub.f32 %v4425, %v4648
    %v4735 = vsub.f32 %v4466, %v4655
    %v4736 = vsub.f32 %v4428, %v4662
    %v4737 = vsub.f32 %v4467, %v4669
    %v4738 = vsub.f32 %v4431, %v4676
    %v4739 = vsub.f32 %v4468, %v4683
    %v4740 = vsub.f32 %v4434, %v4690
    %v4741 = vsub.f32 %v4469, %v4697
    %v4742 = vsub.f32 %v4437, %v4704
    %v4743 = vsub.f32 %v4470, %v4711
    %v4744 = vmul.f32 %v4712, 1.442695
    %v4745 = vpow.pop %v4744
    %v4746 = vmul.f32 %v4713, 1.442695
    %v4747 = vpow.pop %v4746
    %v4748 = vmul.f32 %v4714, 1.442695
    %v4749 = vpow.pop %v4748
    %v4750 = vmul.f32 %v4715, 1.442695
    %v4751 = vpow.pop %v4750
    %v4752 = vmul.f32 %v4716, 1.442695
    %v4753 = vpow.pop %v4752
    %v4754 = vmul.f32 %v4717, 1.442695
    %v4755 = vpow.pop %v4754
    %v4756 = vmul.f32 %v4718, 1.442695
    %v4757 = vpow.pop %v4756
    %v4758 = vmul.f32 %v4719, 1.442695
    %v4759 = vpow.pop %v4758
    %v4760 = vmul.f32 %v4720, 1.442695
    %v4761 = vpow.pop %v4760
    %v4762 = vmul.f32 %v4721, 1.442695
    %v4763 = vpow.pop %v4762
    %v4764 = vmul.f32 %v4722, 1.442695
    %v4765 = vpow.pop %v4764
    %v4766 = vmul.f32 %v4723, 1.442695
    %v4767 = vpow.pop %v4766
    %v4768 = vmul.f32 %v4724, 1.442695
    %v4769 = vpow.pop %v4768
    %v4770 = vmul.f32 %v4725, 1.442695
    %v4771 = vpow.pop %v4770
    %v4772 = vmul.f32 %v4726, 1.442695
    %v4773 = vpow.pop %v4772
    %v4774 = vmul.f32 %v4727, 1.442695
    %v4775 = vpow.pop %v4774
    %v4776 = vmul.f32 %v4728, 1.442695
    %v4777 = vpow.pop %v4776
    %v4778 = vmul.f32 %v4729, 1.442695
    %v4779 = vpow.pop %v4778
    %v4780 = vmul.f32 %v4730, 1.442695
    %v4781 = vpow.pop %v4780
    %v4782 = vmul.f32 %v4731, 1.442695
    %v4783 = vpow.pop %v4782
    %v4784 = vmul.f32 %v4732, 1.442695
    %v4785 = vpow.pop %v4784
    %v4786 = vmul.f32 %v4733, 1.442695
    %v4787 = vpow.pop %v4786
    %v4788 = vmul.f32 %v4734, 1.442695
    %v4789 = vpow.pop %v4788
    %v4790 = vmul.f32 %v4735, 1.442695
    %v4791 = vpow.pop %v4790
    %v4792 = vmul.f32 %v4736, 1.442695
    %v4793 = vpow.pop %v4792
    %v4794 = vmul.f32 %v4737, 1.442695
    %v4795 = vpow.pop %v4794
    %v4796 = vmul.f32 %v4738, 1.442695
    %v4797 = vpow.pop %v4796
    %v4798 = vmul.f32 %v4739, 1.442695
    %v4799 = vpow.pop %v4798
    %v4800 = vmul.f32 %v4740, 1.442695
    %v4801 = vpow.pop %v4800
    %v4802 = vmul.f32 %v4741, 1.442695
    %v4803 = vpow.pop %v4802
    %v4804 = vmul.f32 %v4742, 1.442695
    %v4805 = vpow.pop %v4804
    %v4806 = vmul.f32 %v4743, 1.442695
    %v4807 = vpow.pop %v4806
    %v4808 = vsel %vm4487, %v4745, 0.0
    %v4809 = vrot.slane %v4808, 4
    %v4810 = vadd.f32 %v4808, %v4809
    %v4811 = vrot.slane %v4810, 2
    %v4812 = vadd.f32 %v4810, %v4811
    %v4813 = vrot.slane %v4812, 1
    %v4814 = vadd.f32 %v4812, %v4813
    %v4815 = vsel %vm4487, %v4747, 0.0
    %v4816 = vrot.slane %v4815, 4
    %v4817 = vadd.f32 %v4815, %v4816
    %v4818 = vrot.slane %v4817, 2
    %v4819 = vadd.f32 %v4817, %v4818
    %v4820 = vrot.slane %v4819, 1
    %v4821 = vadd.f32 %v4819, %v4820
    %v4822 = vsel %vm4487, %v4749, 0.0
    %v4823 = vrot.slane %v4822, 4
    %v4824 = vadd.f32 %v4822, %v4823
    %v4825 = vrot.slane %v4824, 2
    %v4826 = vadd.f32 %v4824, %v4825
    %v4827 = vrot.slane %v4826, 1
    %v4828 = vadd.f32 %v4826, %v4827
    %v4829 = vsel %vm4487, %v4751, 0.0
    %v4830 = vrot.slane %v4829, 4
    %v4831 = vadd.f32 %v4829, %v4830
    %v4832 = vrot.slane %v4831, 2
    %v4833 = vadd.f32 %v4831, %v4832
    %v4834 = vrot.slane %v4833, 1
    %v4835 = vadd.f32 %v4833, %v4834
    %v4836 = vsel %vm4487, %v4753, 0.0
    %v4837 = vrot.slane %v4836, 4
    %v4838 = vadd.f32 %v4836, %v4837
    %v4839 = vrot.slane %v4838, 2
    %v4840 = vadd.f32 %v4838, %v4839
    %v4841 = vrot.slane %v4840, 1
    %v4842 = vadd.f32 %v4840, %v4841
    %v4843 = vsel %vm4487, %v4755, 0.0
    %v4844 = vrot.slane %v4843, 4
    %v4845 = vadd.f32 %v4843, %v4844
    %v4846 = vrot.slane %v4845, 2
    %v4847 = vadd.f32 %v4845, %v4846
    %v4848 = vrot.slane %v4847, 1
    %v4849 = vadd.f32 %v4847, %v4848
    %v4850 = vsel %vm4487, %v4757, 0.0
    %v4851 = vrot.slane %v4850, 4
    %v4852 = vadd.f32 %v4850, %v4851
    %v4853 = vrot.slane %v4852, 2
    %v4854 = vadd.f32 %v4852, %v4853
    %v4855 = vrot.slane %v4854, 1
    %v4856 = vadd.f32 %v4854, %v4855
    %v4857 = vsel %vm4487, %v4759, 0.0
    %v4858 = vrot.slane %v4857, 4
    %v4859 = vadd.f32 %v4857, %v4858
    %v4860 = vrot.slane %v4859, 2
    %v4861 = vadd.f32 %v4859, %v4860
    %v4862 = vrot.slane %v4861, 1
    %v4863 = vadd.f32 %v4861, %v4862
    %v4864 = vsel %vm4487, %v4761, 0.0
    %v4865 = vrot.slane %v4864, 4
    %v4866 = vadd.f32 %v4864, %v4865
    %v4867 = vrot.slane %v4866, 2
    %v4868 = vadd.f32 %v4866, %v4867
    %v4869 = vrot.slane %v4868, 1
    %v4870 = vadd.f32 %v4868, %v4869
    %v4871 = vsel %vm4487, %v4763, 0.0
    %v4872 = vrot.slane %v4871, 4
    %v4873 = vadd.f32 %v4871, %v4872
    %v4874 = vrot.slane %v4873, 2
    %v4875 = vadd.f32 %v4873, %v4874
    %v4876 = vrot.slane %v4875, 1
    %v4877 = vadd.f32 %v4875, %v4876
    %v4878 = vsel %vm4487, %v4765, 0.0
    %v4879 = vrot.slane %v4878, 4
    %v4880 = vadd.f32 %v4878, %v4879
    %v4881 = vrot.slane %v4880, 2
    %v4882 = vadd.f32 %v4880, %v4881
    %v4883 = vrot.slane %v4882, 1
    %v4884 = vadd.f32 %v4882, %v4883
    %v4885 = vsel %vm4487, %v4767, 0.0
    %v4886 = vrot.slane %v4885, 4
    %v4887 = vadd.f32 %v4885, %v4886
    %v4888 = vrot.slane %v4887, 2
    %v4889 = vadd.f32 %v4887, %v4888
    %v4890 = vrot.slane %v4889, 1
    %v4891 = vadd.f32 %v4889, %v4890
    %v4892 = vsel %vm4487, %v4769, 0.0
    %v4893 = vrot.slane %v4892, 4
    %v4894 = vadd.f32 %v4892, %v4893
    %v4895 = vrot.slane %v4894, 2
    %v4896 = vadd.f32 %v4894, %v4895
    %v4897 = vrot.slane %v4896, 1
    %v4898 = vadd.f32 %v4896, %v4897
    %v4899 = vsel %vm4487, %v4771, 0.0
    %v4900 = vrot.slane %v4899, 4
    %v4901 = vadd.f32 %v4899, %v4900
    %v4902 = vrot.slane %v4901, 2
    %v4903 = vadd.f32 %v4901, %v4902
    %v4904 = vrot.slane %v4903, 1
    %v4905 = vadd.f32 %v4903, %v4904
    %v4906 = vsel %vm4487, %v4773, 0.0
    %v4907 = vrot.slane %v4906, 4
    %v4908 = vadd.f32 %v4906, %v4907
    %v4909 = vrot.slane %v4908, 2
    %v4910 = vadd.f32 %v4908, %v4909
    %v4911 = vrot.slane %v4910, 1
    %v4912 = vadd.f32 %v4910, %v4911
    %v4913 = vsel %vm4487, %v4775, 0.0
    %v4914 = vrot.slane %v4913, 4
    %v4915 = vadd.f32 %v4913, %v4914
    %v4916 = vrot.slane %v4915, 2
    %v4917 = vadd.f32 %v4915, %v4916
    %v4918 = vrot.slane %v4917, 1
    %v4919 = vadd.f32 %v4917, %v4918
    %v4920 = vsel %vm4487, %v4777, 0.0
    %v4921 = vrot.slane %v4920, 4
    %v4922 = vadd.f32 %v4920, %v4921
    %v4923 = vrot.slane %v4922, 2
    %v4924 = vadd.f32 %v4922, %v4923
    %v4925 = vrot.slane %v4924, 1
    %v4926 = vadd.f32 %v4924, %v4925
    %v4927 = vsel %vm4487, %v4779, 0.0
    %v4928 = vrot.slane %v4927, 4
    %v4929 = vadd.f32 %v4927, %v4928
    %v4930 = vrot.slane %v4929, 2
    %v4931 = vadd.f32 %v4929, %v4930
    %v4932 = vrot.slane %v4931, 1
    %v4933 = vadd.f32 %v4931, %v4932
    %v4934 = vsel %vm4487, %v4781, 0.0
    %v4935 = vrot.slane %v4934, 4
    %v4936 = vadd.f32 %v4934, %v4935
    %v4937 = vrot.slane %v4936, 2
    %v4938 = vadd.f32 %v4936, %v4937
    %v4939 = vrot.slane %v4938, 1
    %v4940 = vadd.f32 %v4938, %v4939
    %v4941 = vsel %vm4487, %v4783, 0.0
    %v4942 = vrot.slane %v4941, 4
    %v4943 = vadd.f32 %v4941, %v4942
    %v4944 = vrot.slane %v4943, 2
    %v4945 = vadd.f32 %v4943, %v4944
    %v4946 = vrot.slane %v4945, 1
    %v4947 = vadd.f32 %v4945, %v4946
    %v4948 = vsel %vm4487, %v4785, 0.0
    %v4949 = vrot.slane %v4948, 4
    %v4950 = vadd.f32 %v4948, %v4949
    %v4951 = vrot.slane %v4950, 2
    %v4952 = vadd.f32 %v4950, %v4951
    %v4953 = vrot.slane %v4952, 1
    %v4954 = vadd.f32 %v4952, %v4953
    %v4955 = vsel %vm4487, %v4787, 0.0
    %v4956 = vrot.slane %v4955, 4
    %v4957 = vadd.f32 %v4955, %v4956
    %v4958 = vrot.slane %v4957, 2
    %v4959 = vadd.f32 %v4957, %v4958
    %v4960 = vrot.slane %v4959, 1
    %v4961 = vadd.f32 %v4959, %v4960
    %v4962 = vsel %vm4487, %v4789, 0.0
    %v4963 = vrot.slane %v4962, 4
    %v4964 = vadd.f32 %v4962, %v4963
    %v4965 = vrot.slane %v4964, 2
    %v4966 = vadd.f32 %v4964, %v4965
    %v4967 = vrot.slane %v4966, 1
    %v4968 = vadd.f32 %v4966, %v4967
    %v4969 = vsel %vm4487, %v4791, 0.0
    %v4970 = vrot.slane %v4969, 4
    %v4971 = vadd.f32 %v4969, %v4970
    %v4972 = vrot.slane %v4971, 2
    %v4973 = vadd.f32 %v4971, %v4972
    %v4974 = vrot.slane %v4973, 1
    %v4975 = vadd.f32 %v4973, %v4974
    %v4976 = vsel %vm4487, %v4793, 0.0
    %v4977 = vrot.slane %v4976, 4
    %v4978 = vadd.f32 %v4976, %v4977
    %v4979 = vrot.slane %v4978, 2
    %v4980 = vadd.f32 %v4978, %v4979
    %v4981 = vrot.slane %v4980, 1
    %v4982 = vadd.f32 %v4980, %v4981
    %v4983 = vsel %vm4487, %v4795, 0.0
    %v4984 = vrot.slane %v4983, 4
    %v4985 = vadd.f32 %v4983, %v4984
    %v4986 = vrot.slane %v4985, 2
    %v4987 = vadd.f32 %v4985, %v4986
    %v4988 = vrot.slane %v4987, 1
    %v4989 = vadd.f32 %v4987, %v4988
    %v4990 = vsel %vm4487, %v4797, 0.0
    %v4991 = vrot.slane %v4990, 4
    %v4992 = vadd.f32 %v4990, %v4991
    %v4993 = vrot.slane %v4992, 2
    %v4994 = vadd.f32 %v4992, %v4993
    %v4995 = vrot.slane %v4994, 1
    %v4996 = vadd.f32 %v4994, %v4995
    %v4997 = vsel %vm4487, %v4799, 0.0
    %v4998 = vrot.slane %v4997, 4
    %v4999 = vadd.f32 %v4997, %v4998
    %v5000 = vrot.slane %v4999, 2
    %v5001 = vadd.f32 %v4999, %v5000
    %v5002 = vrot.slane %v5001, 1
    %v5003 = vadd.f32 %v5001, %v5002
    %v5004 = vsel %vm4487, %v4801, 0.0
    %v5005 = vrot.slane %v5004, 4
    %v5006 = vadd.f32 %v5004, %v5005
    %v5007 = vrot.slane %v5006, 2
    %v5008 = vadd.f32 %v5006, %v5007
    %v5009 = vrot.slane %v5008, 1
    %v5010 = vadd.f32 %v5008, %v5009
    %v5011 = vsel %vm4487, %v4803, 0.0
    %v5012 = vrot.slane %v5011, 4
    %v5013 = vadd.f32 %v5011, %v5012
    %v5014 = vrot.slane %v5013, 2
    %v5015 = vadd.f32 %v5013, %v5014
    %v5016 = vrot.slane %v5015, 1
    %v5017 = vadd.f32 %v5015, %v5016
    %v5018 = vsel %vm4487, %v4805, 0.0
    %v5019 = vrot.slane %v5018, 4
    %v5020 = vadd.f32 %v5018, %v5019
    %v5021 = vrot.slane %v5020, 2
    %v5022 = vadd.f32 %v5020, %v5021
    %v5023 = vrot.slane %v5022, 1
    %v5024 = vadd.f32 %v5022, %v5023
    %v5025 = vsel %vm4487, %v4807, 0.0
    %v5026 = vrot.slane %v5025, 4
    %v5027 = vadd.f32 %v5025, %v5026
    %v5028 = vrot.slane %v5027, 2
    %v5029 = vadd.f32 %v5027, %v5028
    %v5030 = vrot.slane %v5029, 1
    %v5031 = vadd.f32 %v5029, %v5030
    %v5032 = vrcp.pop %v4814
    %v5033 = vrcp.pop %v4821
    %v5034 = vrcp.pop %v4828
    %v5035 = vrcp.pop %v4835
    %v5036 = vrcp.pop %v4842
    %v5037 = vrcp.pop %v4849
    %v5038 = vrcp.pop %v4856
    %v5039 = vrcp.pop %v4863
    %v5040 = vrcp.pop %v4870
    %v5041 = vrcp.pop %v4877
    %v5042 = vrcp.pop %v4884
    %v5043 = vrcp.pop %v4891
    %v5044 = vrcp.pop %v4898
    %v5045 = vrcp.pop %v4905
    %v5046 = vrcp.pop %v4912
    %v5047 = vrcp.pop %v4919
    %v5048 = vrcp.pop %v4926
    %v5049 = vrcp.pop %v4933
    %v5050 = vrcp.pop %v4940
    %v5051 = vrcp.pop %v4947
    %v5052 = vrcp.pop %v4954
    %v5053 = vrcp.pop %v4961
    %v5054 = vrcp.pop %v4968
    %v5055 = vrcp.pop %v4975
    %v5056 = vrcp.pop %v4982
    %v5057 = vrcp.pop %v4989
    %v5058 = vrcp.pop %v4996
    %v5059 = vrcp.pop %v5003
    %v5060 = vrcp.pop %v5010
    %v5061 = vrcp.pop %v5017
    %v5062 = vrcp.pop %v5024
    %v5063 = vrcp.pop %v5031
    %v5064 = vmul.f32 %v4745, %v5032
    %v5065 = vmul.f32 %v4747, %v5033
    %v5066 = vmul.f32 %v4749, %v5034
    %v5067 = vmul.f32 %v4751, %v5035
    %v5068 = vmul.f32 %v4753, %v5036
    %v5069 = vmul.f32 %v4755, %v5037
    %v5070 = vmul.f32 %v4757, %v5038
    %v5071 = vmul.f32 %v4759, %v5039
    %v5072 = vmul.f32 %v4761, %v5040
    %v5073 = vmul.f32 %v4763, %v5041
    %v5074 = vmul.f32 %v4765, %v5042
    %v5075 = vmul.f32 %v4767, %v5043
    %v5076 = vmul.f32 %v4769, %v5044
    %v5077 = vmul.f32 %v4771, %v5045
    %v5078 = vmul.f32 %v4773, %v5046
    %v5079 = vmul.f32 %v4775, %v5047
    %v5080 = vmul.f32 %v4777, %v5048
    %v5081 = vmul.f32 %v4779, %v5049
    %v5082 = vmul.f32 %v4781, %v5050
    %v5083 = vmul.f32 %v4783, %v5051
    %v5084 = vmul.f32 %v4785, %v5052
    %v5085 = vmul.f32 %v4787, %v5053
    %v5086 = vmul.f32 %v4789, %v5054
    %v5087 = vmul.f32 %v4791, %v5055
    %v5088 = vmul.f32 %v4793, %v5056
    %v5089 = vmul.f32 %v4795, %v5057
    %v5090 = vmul.f32 %v4797, %v5058
    %v5091 = vmul.f32 %v4799, %v5059
    %v5092 = vmul.f32 %v4801, %v5060
    %v5093 = vmul.f32 %v4803, %v5061
    %v5094 = vmul.f32 %v4805, %v5062
    %v5095 = vmul.f32 %v4807, %v5063
    %5128 = vst [vmem:[#allocation1] ss:$2 sm:$0xff] %v5064
    %s5129 = scalar_lea.vmem [#allocation1], 1
    %5130 = vst [vmem:[%s5129] ss:$2 sm:$0xff] %v5065
    %s5131 = scalar_lea.vmem [#allocation1], 16
    %5132 = vst [vmem:[%s5131] ss:$2 sm:$0xff] %v5066
    %s5133 = scalar_lea.vmem [#allocation1], 17
    %5134 = vst [vmem:[%s5133] ss:$2 sm:$0xff] %v5067
    %s5135 = scalar_lea.vmem [#allocation1], 32
    %5136 = vst [vmem:[%s5135] ss:$2 sm:$0xff] %v5068
    %s5137 = scalar_lea.vmem [#allocation1], 33
    %5138 = vst [vmem:[%s5137] ss:$2 sm:$0xff] %v5069
    %s5139 = scalar_lea.vmem [#allocation1], 48
    %5140 = vst [vmem:[%s5139] ss:$2 sm:$0xff] %v5070
    %s5141 = scalar_lea.vmem [#allocation1], 49
    %5142 = vst [vmem:[%s5141] ss:$2 sm:$0xff] %v5071
    %v5143 = vld.sshfl [vmem:[#allocation1] sm:$0xff pattern:$0x75316420]
    %v5144 = vld.sshfl [vmem:[#allocation1 + $0x10] sm:$0xff pattern:$0x75316420]
    %v5145 = vld.sshfl [vmem:[#allocation1 + $0x20] sm:$0xff pattern:$0x75316420]
    %v5146 = vld.sshfl [vmem:[#allocation1 + $0x30] sm:$0xff pattern:$0x75316420]
    %5147 = vst [vmem:[#allocation1] ss:$2 sm:$0xff] %v5072
    %5148 = vst [vmem:[%s5129] ss:$2 sm:$0xff] %v5073
    %5149 = vst [vmem:[%s5131] ss:$2 sm:$0xff] %v5074
    %5150 = vst [vmem:[%s5133] ss:$2 sm:$0xff] %v5075
    %5151 = vst [vmem:[%s5135] ss:$2 sm:$0xff] %v5076
    %5152 = vst [vmem:[%s5137] ss:$2 sm:$0xff] %v5077
    %5153 = vst [vmem:[%s5139] ss:$2 sm:$0xff] %v5078
    %5154 = vst [vmem:[%s5141] ss:$2 sm:$0xff] %v5079
    %v5155 = vld.sshfl [vmem:[#allocation1] sm:$0xff pattern:$0x75316420]
    %v5156 = vld.sshfl [vmem:[#allocation1 + $0x10] sm:$0xff pattern:$0x75316420]
    %v5157 = vld.sshfl [vmem:[#allocation1 + $0x20] sm:$0xff pattern:$0x75316420]
    %v5158 = vld.sshfl [vmem:[#allocation1 + $0x30] sm:$0xff pattern:$0x75316420]
    %5159 = vst [vmem:[#allocation1] ss:$2 sm:$0xff] %v5080
    %5160 = vst [vmem:[%s5129] ss:$2 sm:$0xff] %v5081
    %5161 = vst [vmem:[%s5131] ss:$2 sm:$0xff] %v5082
    %5162 = vst [vmem:[%s5133] ss:$2 sm:$0xff] %v5083
    %5163 = vst [vmem:[%s5135] ss:$2 sm:$0xff] %v5084
    %5164 = vst [vmem:[%s5137] ss:$2 sm:$0xff] %v5085
    %5165 = vst [vmem:[%s5139] ss:$2 sm:$0xff] %v5086
    %5166 = vst [vmem:[%s5141] ss:$2 sm:$0xff] %v5087
    %v5167 = vld.sshfl [vmem:[#allocation1] sm:$0xff pattern:$0x75316420]
    %v5168 = vld.sshfl [vmem:[#allocation1 + $0x10] sm:$0xff pattern:$0x75316420]
    %v5169 = vld.sshfl [vmem:[#allocation1 + $0x20] sm:$0xff pattern:$0x75316420]
    %v5170 = vld.sshfl [vmem:[#allocation1 + $0x30] sm:$0xff pattern:$0x75316420]
    %5171 = vst [vmem:[#allocation1] ss:$2 sm:$0xff] %v5088
    %5172 = vst [vmem:[%s5129] ss:$2 sm:$0xff] %v5089
    %5173 = vst [vmem:[%s5131] ss:$2 sm:$0xff] %v5090
    %5174 = vst [vmem:[%s5133] ss:$2 sm:$0xff] %v5091
    %5175 = vst [vmem:[%s5135] ss:$2 sm:$0xff] %v5092
    %5176 = vst [vmem:[%s5137] ss:$2 sm:$0xff] %v5093
    %5177 = vst [vmem:[%s5139] ss:$2 sm:$0xff] %v5094
    %5178 = vst [vmem:[%s5141] ss:$2 sm:$0xff] %v5095
    %v5179 = vld.sshfl [vmem:[#allocation1] sm:$0xff pattern:$0x75316420]
    %v5180 = vld.sshfl [vmem:[#allocation1 + $0x10] sm:$0xff pattern:$0x75316420]
    %v5181 = vld.sshfl [vmem:[#allocation1 + $0x20] sm:$0xff pattern:$0x75316420]
    %v5182 = vld.sshfl [vmem:[#allocation1 + $0x30] sm:$0xff pattern:$0x75316420]
    %v5183 = vsel %vm987, %v5143, 0
    %v5185 = vsel %vm987, %v5144, 0
    %v5187 = vsel %vm987, %v5145, 0
    %v5189 = vsel %vm987, %v5146, 0
    %v5191 = vsel %vm987, %v5155, 0
    %v5193 = vsel %vm987, %v5156, 0
    %v5195 = vsel %vm987, %v5157, 0
    %v5197 = vsel %vm987, %v5158, 0
    %v5199 = vsel %vm987, %v5167, 0
    %v5201 = vsel %vm987, %v5168, 0
    %v5203 = vsel %vm987, %v5169, 0
    %v5205 = vsel %vm987, %v5170, 0
    %v5207 = vsel %vm987, %v5179, 0
    %v5209 = vsel %vm987, %v5180, 0
    %v5211 = vsel %vm987, %v5181, 0
    %v5213 = vsel %vm987, %v5182, 0
    %5215 = vmatpush.msra.mxu0 0.0
    %5216 = vmatpush.msra.mxu0 0.0
    %5217 = vmatpush.msra.mxu0 0.0
    %5218 = vmatpush.msra.mxu0 0.0
    %5219 = vmatpush.msra.mxu0 0.0
    %5220 = vmatpush.msra.mxu0 0.0
    %5221 = vmatpush.msra.mxu0 0.0
    %5222 = vmatpush.msra.mxu0 0.0
    %5223 = vmatpush.msra.mxu0 0.0
    %5224 = vmatpush.msra.mxu0 0.0
    %5225 = vmatpush.msra.mxu0 0.0
    %5226 = vmatpush.msra.mxu0 0.0
    %5227 = vmatpush.msra.mxu0 0.0
    %5228 = vmatpush.msra.mxu0 0.0
    %5229 = vmatpush.msra.mxu0 0.0
    %5230 = vmatpush.msra.mxu0 %v455
    %5231 = vmatmul.f32.gmra.mxu0 %v5183
    %v5232 = vpop.f32.mrf.mxu0
    %v5233 = vadd.f32 0.0, %v5232
    %5234 = vmatmul.f32.gmra.mxu0 %v5185
    %v5235 = vpop.f32.mrf.mxu0
    %v5236 = vadd.f32 0.0, %v5235
    %5237 = vmatmul.f32.gmra.mxu0 %v5187
    %v5238 = vpop.f32.mrf.mxu0
    %v5239 = vadd.f32 0.0, %v5238
    %5240 = vmatmul.f32.gmra.mxu0 %v5189
    %v5241 = vpop.f32.mrf.mxu0
    %v5242 = vadd.f32 0.0, %v5241
    %5243 = vmatmul.f32.gmra.mxu0 %v5191
    %v5244 = vpop.f32.mrf.mxu0
    %v5245 = vadd.f32 0.0, %v5244
    %5246 = vmatmul.f32.gmra.mxu0 %v5193
    %v5247 = vpop.f32.mrf.mxu0
    %v5248 = vadd.f32 0.0, %v5247
    %5249 = vmatmul.f32.gmra.mxu0 %v5195
    %v5250 = vpop.f32.mrf.mxu0
    %v5251 = vadd.f32 0.0, %v5250
    %5252 = vmatmul.f32.gmra.mxu0 %v5197
    %v5253 = vpop.f32.mrf.mxu0
    %v5254 = vadd.f32 0.0, %v5253
    %5255 = vmatmul.f32.gmra.mxu0 %v5199
    %v5256 = vpop.f32.mrf.mxu0
    %v5257 = vadd.f32 0.0, %v5256
    %5258 = vmatmul.f32.gmra.mxu0 %v5201
    %v5259 = vpop.f32.mrf.mxu0
    %v5260 = vadd.f32 0.0, %v5259
    %5261 = vmatmul.f32.gmra.mxu0 %v5203
    %v5262 = vpop.f32.mrf.mxu0
    %v5263 = vadd.f32 0.0, %v5262
    %5264 = vmatmul.f32.gmra.mxu0 %v5205
    %v5265 = vpop.f32.mrf.mxu0
    %v5266 = vadd.f32 0.0, %v5265
    %5267 = vmatmul.f32.gmra.mxu0 %v5207
    %v5268 = vpop.f32.mrf.mxu0
    %v5269 = vadd.f32 0.0, %v5268
    %5270 = vmatmul.f32.gmra.mxu0 %v5209
    %v5271 = vpop.f32.mrf.mxu0
    %v5272 = vadd.f32 0.0, %v5271
    %5273 = vmatmul.f32.gmra.mxu0 %v5211
    %v5274 = vpop.f32.mrf.mxu0
    %v5275 = vadd.f32 0.0, %v5274
    %5276 = vmatmul.f32.gmra.mxu0 %v5213
    %v5277 = vpop.f32.mrf.mxu0
    %v5278 = vadd.f32 0.0, %v5277
    %5279 = vdwg.mxu0
    %v5296 = vrot.slane %v5233, 4
    %v5297 = vrot.slane %v5236, 4
    %v5298 = vrot.slane %v5239, 4
    %v5299 = vrot.slane %v5242, 4
    %v5300 = vrot.slane %v5245, 4
    %v5301 = vrot.slane %v5248, 4
    %v5302 = vrot.slane %v5251, 4
    %v5303 = vrot.slane %v5254, 4
    %v5304 = vrot.slane %v5257, 4
    %v5305 = vrot.slane %v5260, 4
    %v5306 = vrot.slane %v5263, 4
    %v5307 = vrot.slane %v5266, 4
    %v5308 = vrot.slane %v5269, 4
    %v5309 = vrot.slane %v5272, 4
    %v5310 = vrot.slane %v5275, 4
    %v5311 = vrot.slane %v5278, 4
    %5328 = vrot.lane.b32.xlu0 %v3955, 64
    %v5329 = vpop.permute.xlu0 %5328
    %5330 = vrot.lane.b32.xlu0 %v3971, 64
    %v5331 = vpop.permute.xlu0 %5330
    %5332 = vrot.lane.b32.xlu0 %v3957, 64
    %v5333 = vpop.permute.xlu0 %5332
    %5334 = vrot.lane.b32.xlu0 %v3978, 64
    %v5335 = vpop.permute.xlu0 %5334
    %5336 = vrot.lane.b32.xlu0 %v3960, 64
    %v5337 = vpop.permute.xlu0 %5336
    %5338 = vrot.lane.b32.xlu0 %v3985, 64
    %v5339 = vpop.permute.xlu0 %5338
    %5340 = vrot.lane.b32.xlu0 %v3962, 64
    %v5341 = vpop.permute.xlu0 %5340
    %5342 = vrot.lane.b32.xlu0 %v3992, 64
    %v5343 = vpop.permute.xlu0 %5342
    %v5352 = vmul.f32 %v5233, %v5329
    %v5353 = vmul.f32 %v5296, %v5329
    %v5354 = vmul.f32 %v5236, %v5329
    %v5355 = vmul.f32 %v5297, %v5329
    %v5356 = vmul.f32 %v5239, %v5331
    %v5357 = vmul.f32 %v5298, %v5331
    %v5358 = vmul.f32 %v5242, %v5331
    %v5359 = vmul.f32 %v5299, %v5331
    %v5360 = vmul.f32 %v5245, %v5333
    %v5361 = vmul.f32 %v5300, %v5333
    %v5362 = vmul.f32 %v5248, %v5333
    %v5363 = vmul.f32 %v5301, %v5333
    %v5364 = vmul.f32 %v5251, %v5335
    %v5365 = vmul.f32 %v5302, %v5335
    %v5366 = vmul.f32 %v5254, %v5335
    %v5367 = vmul.f32 %v5303, %v5335
    %v5368 = vmul.f32 %v5257, %v5337
    %v5369 = vmul.f32 %v5304, %v5337
    %v5370 = vmul.f32 %v5260, %v5337
    %v5371 = vmul.f32 %v5305, %v5337
    %v5372 = vmul.f32 %v5263, %v5339
    %v5373 = vmul.f32 %v5306, %v5339
    %v5374 = vmul.f32 %v5266, %v5339
    %v5375 = vmul.f32 %v5307, %v5339
    %v5376 = vmul.f32 %v5269, %v5341
    %v5377 = vmul.f32 %v5308, %v5341
    %v5378 = vmul.f32 %v5272, %v5341
    %v5379 = vmul.f32 %v5309, %v5341
    %v5380 = vmul.f32 %v5275, %v5343
    %v5381 = vmul.f32 %v5310, %v5343
    %v5382 = vmul.f32 %v5278, %v5343
    %v5383 = vmul.f32 %v5311, %v5343
    %v5384 = vsel %vm2936, %v5352, 0.0
    %v5385 = vrot.slane %v5384, 4
    %v5386 = vadd.f32 %v5384, %v5385
    %v5387 = vrot.slane %v5386, 2
    %v5388 = vadd.f32 %v5386, %v5387
    %v5389 = vrot.slane %v5388, 1
    %v5390 = vadd.f32 %v5388, %v5389
    %v5391 = vsel %vm2936, %v5353, 0.0
    %v5392 = vrot.slane %v5391, 4
    %v5393 = vadd.f32 %v5391, %v5392
    %v5394 = vrot.slane %v5393, 2
    %v5395 = vadd.f32 %v5393, %v5394
    %v5396 = vrot.slane %v5395, 1
    %v5397 = vadd.f32 %v5395, %v5396
    %v5398 = vsel %vm2936, %v5354, 0.0
    %v5399 = vrot.slane %v5398, 4
    %v5400 = vadd.f32 %v5398, %v5399
    %v5401 = vrot.slane %v5400, 2
    %v5402 = vadd.f32 %v5400, %v5401
    %v5403 = vrot.slane %v5402, 1
    %v5404 = vadd.f32 %v5402, %v5403
    %v5405 = vsel %vm2936, %v5355, 0.0
    %v5406 = vrot.slane %v5405, 4
    %v5407 = vadd.f32 %v5405, %v5406
    %v5408 = vrot.slane %v5407, 2
    %v5409 = vadd.f32 %v5407, %v5408
    %v5410 = vrot.slane %v5409, 1
    %v5411 = vadd.f32 %v5409, %v5410
    %v5412 = vsel %vm2936, %v5356, 0.0
    %v5413 = vrot.slane %v5412, 4
    %v5414 = vadd.f32 %v5412, %v5413
    %v5415 = vrot.slane %v5414, 2
    %v5416 = vadd.f32 %v5414, %v5415
    %v5417 = vrot.slane %v5416, 1
    %v5418 = vadd.f32 %v5416, %v5417
    %v5419 = vsel %vm2936, %v5357, 0.0
    %v5420 = vrot.slane %v5419, 4
    %v5421 = vadd.f32 %v5419, %v5420
    %v5422 = vrot.slane %v5421, 2
    %v5423 = vadd.f32 %v5421, %v5422
    %v5424 = vrot.slane %v5423, 1
    %v5425 = vadd.f32 %v5423, %v5424
    %v5426 = vsel %vm2936, %v5358, 0.0
    %v5427 = vrot.slane %v5426, 4
    %v5428 = vadd.f32 %v5426, %v5427
    %v5429 = vrot.slane %v5428, 2
    %v5430 = vadd.f32 %v5428, %v5429
    %v5431 = vrot.slane %v5430, 1
    %v5432 = vadd.f32 %v5430, %v5431
    %v5433 = vsel %vm2936, %v5359, 0.0
    %v5434 = vrot.slane %v5433, 4
    %v5435 = vadd.f32 %v5433, %v5434
    %v5436 = vrot.slane %v5435, 2
    %v5437 = vadd.f32 %v5435, %v5436
    %v5438 = vrot.slane %v5437, 1
    %v5439 = vadd.f32 %v5437, %v5438
    %v5440 = vsel %vm2936, %v5360, 0.0
    %v5441 = vrot.slane %v5440, 4
    %v5442 = vadd.f32 %v5440, %v5441
    %v5443 = vrot.slane %v5442, 2
    %v5444 = vadd.f32 %v5442, %v5443
    %v5445 = vrot.slane %v5444, 1
    %v5446 = vadd.f32 %v5444, %v5445
    %v5447 = vsel %vm2936, %v5361, 0.0
    %v5448 = vrot.slane %v5447, 4
    %v5449 = vadd.f32 %v5447, %v5448
    %v5450 = vrot.slane %v5449, 2
    %v5451 = vadd.f32 %v5449, %v5450
    %v5452 = vrot.slane %v5451, 1
    %v5453 = vadd.f32 %v5451, %v5452
    %v5454 = vsel %vm2936, %v5362, 0.0
    %v5455 = vrot.slane %v5454, 4
    %v5456 = vadd.f32 %v5454, %v5455
    %v5457 = vrot.slane %v5456, 2
    %v5458 = vadd.f32 %v5456, %v5457
    %v5459 = vrot.slane %v5458, 1
    %v5460 = vadd.f32 %v5458, %v5459
    %v5461 = vsel %vm2936, %v5363, 0.0
    %v5462 = vrot.slane %v5461, 4
    %v5463 = vadd.f32 %v5461, %v5462
    %v5464 = vrot.slane %v5463, 2
    %v5465 = vadd.f32 %v5463, %v5464
    %v5466 = vrot.slane %v5465, 1
    %v5467 = vadd.f32 %v5465, %v5466
    %v5468 = vsel %vm2936, %v5364, 0.0
    %v5469 = vrot.slane %v5468, 4
    %v5470 = vadd.f32 %v5468, %v5469
    %v5471 = vrot.slane %v5470, 2
    %v5472 = vadd.f32 %v5470, %v5471
    %v5473 = vrot.slane %v5472, 1
    %v5474 = vadd.f32 %v5472, %v5473
    %v5475 = vsel %vm2936, %v5365, 0.0
    %v5476 = vrot.slane %v5475, 4
    %v5477 = vadd.f32 %v5475, %v5476
    %v5478 = vrot.slane %v5477, 2
    %v5479 = vadd.f32 %v5477, %v5478
    %v5480 = vrot.slane %v5479, 1
    %v5481 = vadd.f32 %v5479, %v5480
    %v5482 = vsel %vm2936, %v5366, 0.0
    %v5483 = vrot.slane %v5482, 4
    %v5484 = vadd.f32 %v5482, %v5483
    %v5485 = vrot.slane %v5484, 2
    %v5486 = vadd.f32 %v5484, %v5485
    %v5487 = vrot.slane %v5486, 1
    %v5488 = vadd.f32 %v5486, %v5487
    %v5489 = vsel %vm2936, %v5367, 0.0
    %v5490 = vrot.slane %v5489, 4
    %v5491 = vadd.f32 %v5489, %v5490
    %v5492 = vrot.slane %v5491, 2
    %v5493 = vadd.f32 %v5491, %v5492
    %v5494 = vrot.slane %v5493, 1
    %v5495 = vadd.f32 %v5493, %v5494
    %v5496 = vsel %vm2936, %v5368, 0.0
    %v5497 = vrot.slane %v5496, 4
    %v5498 = vadd.f32 %v5496, %v5497
    %v5499 = vrot.slane %v5498, 2
    %v5500 = vadd.f32 %v5498, %v5499
    %v5501 = vrot.slane %v5500, 1
    %v5502 = vadd.f32 %v5500, %v5501
    %v5503 = vsel %vm2936, %v5369, 0.0
    %v5504 = vrot.slane %v5503, 4
    %v5505 = vadd.f32 %v5503, %v5504
    %v5506 = vrot.slane %v5505, 2
    %v5507 = vadd.f32 %v5505, %v5506
    %v5508 = vrot.slane %v5507, 1
    %v5509 = vadd.f32 %v5507, %v5508
    %v5510 = vsel %vm2936, %v5370, 0.0
    %v5511 = vrot.slane %v5510, 4
    %v5512 = vadd.f32 %v5510, %v5511
    %v5513 = vrot.slane %v5512, 2
    %v5514 = vadd.f32 %v5512, %v5513
    %v5515 = vrot.slane %v5514, 1
    %v5516 = vadd.f32 %v5514, %v5515
    %v5517 = vsel %vm2936, %v5371, 0.0
    %v5518 = vrot.slane %v5517, 4
    %v5519 = vadd.f32 %v5517, %v5518
    %v5520 = vrot.slane %v5519, 2
    %v5521 = vadd.f32 %v5519, %v5520
    %v5522 = vrot.slane %v5521, 1
    %v5523 = vadd.f32 %v5521, %v5522
    %v5524 = vsel %vm2936, %v5372, 0.0
    %v5525 = vrot.slane %v5524, 4
    %v5526 = vadd.f32 %v5524, %v5525
    %v5527 = vrot.slane %v5526, 2
    %v5528 = vadd.f32 %v5526, %v5527
    %v5529 = vrot.slane %v5528, 1
    %v5530 = vadd.f32 %v5528, %v5529
    %v5531 = vsel %vm2936, %v5373, 0.0
    %v5532 = vrot.slane %v5531, 4
    %v5533 = vadd.f32 %v5531, %v5532
    %v5534 = vrot.slane %v5533, 2
    %v5535 = vadd.f32 %v5533, %v5534
    %v5536 = vrot.slane %v5535, 1
    %v5537 = vadd.f32 %v5535, %v5536
    %v5538 = vsel %vm2936, %v5374, 0.0
    %v5539 = vrot.slane %v5538, 4
    %v5540 = vadd.f32 %v5538, %v5539
    %v5541 = vrot.slane %v5540, 2
    %v5542 = vadd.f32 %v5540, %v5541
    %v5543 = vrot.slane %v5542, 1
    %v5544 = vadd.f32 %v5542, %v5543
    %v5545 = vsel %vm2936, %v5375, 0.0
    %v5546 = vrot.slane %v5545, 4
    %v5547 = vadd.f32 %v5545, %v5546
    %v5548 = vrot.slane %v5547, 2
    %v5549 = vadd.f32 %v5547, %v5548
    %v5550 = vrot.slane %v5549, 1
    %v5551 = vadd.f32 %v5549, %v5550
    %v5552 = vsel %vm2936, %v5376, 0.0
    %v5553 = vrot.slane %v5552, 4
    %v5554 = vadd.f32 %v5552, %v5553
    %v5555 = vrot.slane %v5554, 2
    %v5556 = vadd.f32 %v5554, %v5555
    %v5557 = vrot.slane %v5556, 1
    %v5558 = vadd.f32 %v5556, %v5557
    %v5559 = vsel %vm2936, %v5377, 0.0
    %v5560 = vrot.slane %v5559, 4
    %v5561 = vadd.f32 %v5559, %v5560
    %v5562 = vrot.slane %v5561, 2
    %v5563 = vadd.f32 %v5561, %v5562
    %v5564 = vrot.slane %v5563, 1
    %v5565 = vadd.f32 %v5563, %v5564
    %v5566 = vsel %vm2936, %v5378, 0.0
    %v5567 = vrot.slane %v5566, 4
    %v5568 = vadd.f32 %v5566, %v5567
    %v5569 = vrot.slane %v5568, 2
    %v5570 = vadd.f32 %v5568, %v5569
    %v5571 = vrot.slane %v5570, 1
    %v5572 = vadd.f32 %v5570, %v5571
    %v5573 = vsel %vm2936, %v5379, 0.0
    %v5574 = vrot.slane %v5573, 4
    %v5575 = vadd.f32 %v5573, %v5574
    %v5576 = vrot.slane %v5575, 2
    %v5577 = vadd.f32 %v5575, %v5576
    %v5578 = vrot.slane %v5577, 1
    %v5579 = vadd.f32 %v5577, %v5578
    %v5580 = vsel %vm2936, %v5380, 0.0
    %v5581 = vrot.slane %v5580, 4
    %v5582 = vadd.f32 %v5580, %v5581
    %v5583 = vrot.slane %v5582, 2
    %v5584 = vadd.f32 %v5582, %v5583
    %v5585 = vrot.slane %v5584, 1
    %v5586 = vadd.f32 %v5584, %v5585
    %v5587 = vsel %vm2936, %v5381, 0.0
    %v5588 = vrot.slane %v5587, 4
    %v5589 = vadd.f32 %v5587, %v5588
    %v5590 = vrot.slane %v5589, 2
    %v5591 = vadd.f32 %v5589, %v5590
    %v5592 = vrot.slane %v5591, 1
    %v5593 = vadd.f32 %v5591, %v5592
    %v5594 = vsel %vm2936, %v5382, 0.0
    %v5595 = vrot.slane %v5594, 4
    %v5596 = vadd.f32 %v5594, %v5595
    %v5597 = vrot.slane %v5596, 2
    %v5598 = vadd.f32 %v5596, %v5597
    %v5599 = vrot.slane %v5598, 1
    %v5600 = vadd.f32 %v5598, %v5599
    %v5601 = vsel %vm2936, %v5383, 0.0
    %v5602 = vrot.slane %v5601, 4
    %v5603 = vadd.f32 %v5601, %v5602
    %v5604 = vrot.slane %v5603, 2
    %v5605 = vadd.f32 %v5603, %v5604
    %v5606 = vrot.slane %v5605, 1
    %v5607 = vadd.f32 %v5605, %v5606
    %v5608 = vpack.c.bf16 %v5390, %v5390
    %v5609 = vpack.c.bf16 %v5397, %v5397
    %v5610 = vpack.c.bf16 %v5404, %v5404
    %v5611 = vpack.c.bf16 %v5411, %v5411
    %v5612 = vpack.c.bf16 %v5418, %v5418
    %v5613 = vpack.c.bf16 %v5425, %v5425
    %v5614 = vpack.c.bf16 %v5432, %v5432
    %v5615 = vpack.c.bf16 %v5439, %v5439
    %v5616 = vpack.c.bf16 %v5446, %v5446
    %v5617 = vpack.c.bf16 %v5453, %v5453
    %v5618 = vpack.c.bf16 %v5460, %v5460
    %v5619 = vpack.c.bf16 %v5467, %v5467
    %v5620 = vpack.c.bf16 %v5474, %v5474
    %v5621 = vpack.c.bf16 %v5481, %v5481
    %v5622 = vpack.c.bf16 %v5488, %v5488
    %v5623 = vpack.c.bf16 %v5495, %v5495
    %v5624 = vpack.c.bf16 %v5502, %v5502
    %v5625 = vpack.c.bf16 %v5509, %v5509
    %v5626 = vpack.c.bf16 %v5516, %v5516
    %v5627 = vpack.c.bf16 %v5523, %v5523
    %v5628 = vpack.c.bf16 %v5530, %v5530
    %v5629 = vpack.c.bf16 %v5537, %v5537
    %v5630 = vpack.c.bf16 %v5544, %v5544
    %v5631 = vpack.c.bf16 %v5551, %v5551
    %v5632 = vpack.c.bf16 %v5558, %v5558
    %v5633 = vpack.c.bf16 %v5565, %v5565
    %v5634 = vpack.c.bf16 %v5572, %v5572
    %v5635 = vpack.c.bf16 %v5579, %v5579
    %v5636 = vpack.c.bf16 %v5586, %v5586
    %v5637 = vpack.c.bf16 %v5593, %v5593
    %v5638 = vpack.c.bf16 %v5600, %v5600
    %v5639 = vpack.c.bf16 %v5607, %v5607
    %v5641 = vperm.slane %v517, 0
    %v5675 = vunpack.c.l.b16 %v5608
    %v5676 = vunpack.c.l.b16 %v5609
    %v5677 = vunpack.c.l.b16 %v5610
    %v5678 = vunpack.c.l.b16 %v5611
    %v5679 = vunpack.c.l.b16 %v5612
    %v5680 = vunpack.c.l.b16 %v5613
    %v5681 = vunpack.c.l.b16 %v5614
    %v5682 = vunpack.c.l.b16 %v5615
    %v5683 = vunpack.c.l.b16 %v5616
    %v5684 = vunpack.c.l.b16 %v5617
    %v5685 = vunpack.c.l.b16 %v5618
    %v5686 = vunpack.c.l.b16 %v5619
    %v5687 = vunpack.c.l.b16 %v5620
    %v5688 = vunpack.c.l.b16 %v5621
    %v5689 = vunpack.c.l.b16 %v5622
    %v5690 = vunpack.c.l.b16 %v5623
    %v5691 = vunpack.c.l.b16 %v5624
    %v5692 = vunpack.c.l.b16 %v5625
    %v5693 = vunpack.c.l.b16 %v5626
    %v5694 = vunpack.c.l.b16 %v5627
    %v5695 = vunpack.c.l.b16 %v5628
    %v5696 = vunpack.c.l.b16 %v5629
    %v5697 = vunpack.c.l.b16 %v5630
    %v5698 = vunpack.c.l.b16 %v5631
    %v5699 = vunpack.c.l.b16 %v5632
    %v5700 = vunpack.c.l.b16 %v5633
    %v5701 = vunpack.c.l.b16 %v5634
    %v5702 = vunpack.c.l.b16 %v5635
    %v5703 = vunpack.c.l.b16 %v5636
    %v5704 = vunpack.c.l.b16 %v5637
    %v5705 = vunpack.c.l.b16 %v5638
    %v5706 = vunpack.c.l.b16 %v5639
    %v5707 = vsel %vm2172, %v5676, %v5675
    %v5708 = vsel %vm2174, %v5677, %v5707
    %v5709 = vsel %vm2176, %v5678, %v5708
    %v5710 = vsel %vm2178, %v5679, %v5709
    %v5711 = vsel %vm2180, %v5680, %v5710
    %v5712 = vsel %vm2182, %v5681, %v5711
    %v5713 = vsel %vm2184, %v5682, %v5712
    %v5714 = vsel %vm2172, %v5684, %v5683
    %v5715 = vsel %vm2174, %v5685, %v5714
    %v5716 = vsel %vm2176, %v5686, %v5715
    %v5717 = vsel %vm2178, %v5687, %v5716
    %v5718 = vsel %vm2180, %v5688, %v5717
    %v5719 = vsel %vm2182, %v5689, %v5718
    %v5720 = vsel %vm2184, %v5690, %v5719
    %v5721 = vsel %vm2172, %v5692, %v5691
    %v5722 = vsel %vm2174, %v5693, %v5721
    %v5723 = vsel %vm2176, %v5694, %v5722
    %v5724 = vsel %vm2178, %v5695, %v5723
    %v5725 = vsel %vm2180, %v5696, %v5724
    %v5726 = vsel %vm2182, %v5697, %v5725
    %v5727 = vsel %vm2184, %v5698, %v5726
    %v5728 = vsel %vm2172, %v5700, %v5699
    %v5729 = vsel %vm2174, %v5701, %v5728
    %v5730 = vsel %vm2176, %v5702, %v5729
    %v5731 = vsel %vm2178, %v5703, %v5730
    %v5732 = vsel %vm2180, %v5704, %v5731
    %v5733 = vsel %vm2182, %v5705, %v5732
    %v5734 = vsel %vm2184, %v5706, %v5733
    %v5735 = vpack.c.b16 %v5720, %v5713
    %v5736 = vpack.c.b16 %v5734, %v5727
    %v5741 = vunpack.c.l.b16 %v513
    %v5742 = vunpack.c.l.b16 %v514
    %v5743 = vunpack.c.l.b16 %v515
    %v5744 = vunpack.c.l.b16 %v516
    %v5745 = vpack.c.b16 %v5742, %v5741
    %v5746 = vpack.c.b16 %v5744, %v5743
    %v5750 = vsel %vm552, %v5735, 0
    %v5753 = vsel %vm552, %v5736, 0
    %5755 = vmatpush.bf16.msra.mxu0 0
    %5756 = vmatpush.bf16.msra.mxu0 0
    %5757 = vmatpush.bf16.msra.mxu0 0
    %5758 = vmatpush.bf16.msra.mxu0 0
    %5759 = vmatpush.bf16.msra.mxu0 0
    %5760 = vmatpush.bf16.msra.mxu0 0
    %5761 = vmatpush.bf16.msra.mxu0 %v5746
    %5762 = vmatpush.bf16.msra.mxu0 %v5745
    %5763 = vmatmul.bf16.gmra.mxu0 %v5750
    %v5764 = vpop.f32.mrf.mxu0
    %v5765 = vadd.f32 %v5641, %v5764
    %v5766 = vpop.f32.mrf.mxu0
    %v5767 = vadd.f32 %v5641, %v5766
    %5768 = vmatmul.bf16.gmra.mxu0 %v5753
    %v5769 = vpop.f32.mrf.mxu0
    %v5770 = vadd.f32 %v5641, %v5769
    %v5771 = vpop.f32.mrf.mxu0
    %v5772 = vadd.f32 %v5641, %v5771
    %5773 = vdwg.mxu0
    %v5775 = vrot.slane %v5772, 4
    %v5777 = vpack.c.bf16 %v5767, %v5765
    %v5778 = vpack.c.bf16 %v5772, %v5770
    %v5780 = vperm.slane %v522, 0
    %v5786 = vunpack.c.l.b16 %v518
    %v5787 = vunpack.c.l.b16 %v519
    %v5788 = vunpack.c.l.b16 %v520
    %v5789 = vunpack.c.l.b16 %v521
    %v5790 = vpack.c.b16 %v5787, %v5786
    %v5791 = vpack.c.b16 %v5789, %v5788
    %v5795 = vsel %vm552, %v5777, 0
    %v5798 = vsel %vm552, %v5778, 0
    %5800 = vmatpush.bf16.msra.mxu0 0
    %5801 = vmatpush.bf16.msra.mxu0 0
    %5802 = vmatpush.bf16.msra.mxu0 0
    %5803 = vmatpush.bf16.msra.mxu0 0
    %5804 = vmatpush.bf16.msra.mxu0 0
    %5805 = vmatpush.bf16.msra.mxu0 0
    %5806 = vmatpush.bf16.msra.mxu0 %v5791
    %5807 = vmatpush.bf16.msra.mxu0 %v5790
    %5808 = vmatmul.bf16.gmra.mxu0 %v5795
    %v5809 = vpop.f32.mrf.mxu0
    %v5810 = vadd.f32 %v5780, %v5809
    %v5811 = vpop.f32.mrf.mxu0
    %v5812 = vadd.f32 %v5780, %v5811
    %5813 = vmatmul.bf16.gmra.mxu0 %v5798
    %v5814 = vpop.f32.mrf.mxu0
    %v5815 = vadd.f32 %v5780, %v5814
    %v5816 = vpop.f32.mrf.mxu0
    %v5817 = vadd.f32 %v5780, %v5816
    %5818 = vdwg.mxu0
    %5827 = vst [vmem:[#allocation1] ss:$2 sm:$0xff] %v2663
    %s5828 = scalar_lea.vmem [#allocation1], 1
    %5829 = vst [vmem:[%s5828] ss:$2 sm:$0xff] %v2681
    %s5830 = scalar_lea.vmem [#allocation1], 16
    %5831 = vst [vmem:[%s5830] ss:$2 sm:$0xff] %v2667
    %s5832 = scalar_lea.vmem [#allocation1], 17
    %5833 = vst [vmem:[%s5832] ss:$2 sm:$0xff] %v2683
    %s5834 = scalar_lea.vmem [#allocation1], 32
    %5835 = vst [vmem:[%s5834] ss:$2 sm:$0xff] %v2675
    %s5836 = scalar_lea.vmem [#allocation1], 33
    %5837 = vst [vmem:[%s5836] ss:$2 sm:$0xff] %v2685
    %s5838 = scalar_lea.vmem [#allocation1], 48
    %5839 = vst [vmem:[%s5838] ss:$2 sm:$0xff] %v2679
    %s5840 = scalar_lea.vmem [#allocation1], 49
    %5841 = vst [vmem:[%s5840] ss:$2 sm:$0xff] %v2687
    %v5842 = vld.sshfl [vmem:[#allocation1] sm:$0xff pattern:$0x75316420]
    %v5843 = vld.sshfl [vmem:[#allocation1 + $0x10] sm:$0xff pattern:$0x75316420]
    %v5844 = vld.sshfl [vmem:[#allocation1 + $0x20] sm:$0xff pattern:$0x75316420]
    %v5845 = vld.sshfl [vmem:[#allocation1 + $0x30] sm:$0xff pattern:$0x75316420]
    %v5850 = vpack.c.bf16 %v5843, %v5842
    %v5851 = vpack.c.bf16 %v5845, %v5844
    %v5853 = vperm.slane %v527, 0
    %v5859 = vunpack.c.l.b16 %v523
    %v5860 = vunpack.c.l.b16 %v524
    %v5861 = vunpack.c.l.b16 %v525
    %v5862 = vunpack.c.l.b16 %v526
    %v5863 = vpack.c.b16 %v5860, %v5859
    %v5864 = vpack.c.b16 %v5862, %v5861
    %v5868 = vsel %vm552, %v5850, 0
    %v5871 = vsel %vm552, %v5851, 0
    %5873 = vmatpush.bf16.msra.mxu0 0
    %5874 = vmatpush.bf16.msra.mxu0 0
    %5875 = vmatpush.bf16.msra.mxu0 0
    %5876 = vmatpush.bf16.msra.mxu0 0
    %5877 = vmatpush.bf16.msra.mxu0 0
    %5878 = vmatpush.bf16.msra.mxu0 0
    %5879 = vmatpush.bf16.msra.mxu0 %v5864
    %5880 = vmatpush.bf16.msra.mxu0 %v5863
    %5881 = vmatmul.bf16.gmra.mxu0 %v5868
    %v5882 = vpop.f32.mrf.mxu0
    %v5883 = vadd.f32 %v5853, %v5882
    %v5884 = vpop.f32.mrf.mxu0
    %v5885 = vadd.f32 %v5853, %v5884
    %5886 = vmatmul.bf16.gmra.mxu0 %v5871
    %v5887 = vpop.f32.mrf.mxu0
    %v5888 = vadd.f32 %v5853, %v5887
    %v5889 = vpop.f32.mrf.mxu0
    %v5890 = vadd.f32 %v5853, %v5889
    %5891 = vdwg.mxu0
    %v5896 = vrot.slane %v5810, 1
    %v5897 = vrot.slane %v5810, 2
    %v5898 = vrot.slane %v5810, 3
    %v5899 = vrot.slane %v5810, 4
    %v5900 = vrot.slane %v5810, 5
    %v5901 = vrot.slane %v5810, 6
    %v5902 = vrot.slane %v5810, 7
    %v5903 = vrot.slane %v5812, 1
    %v5904 = vrot.slane %v5812, 2
    %v5905 = vrot.slane %v5812, 3
    %v5906 = vrot.slane %v5812, 4
    %v5907 = vrot.slane %v5812, 5
    %v5908 = vrot.slane %v5812, 6
    %v5909 = vrot.slane %v5812, 7
    %v5910 = vrot.slane %v5815, 1
    %v5911 = vrot.slane %v5815, 2
    %v5912 = vrot.slane %v5815, 3
    %v5913 = vrot.slane %v5815, 4
    %v5914 = vrot.slane %v5815, 5
    %v5915 = vrot.slane %v5815, 6
    %v5916 = vrot.slane %v5815, 7
    %v5917 = vrot.slane %v5817, 1
    %v5918 = vrot.slane %v5817, 2
    %v5919 = vrot.slane %v5817, 3
    %v5920 = vrot.slane %v5817, 4
    %v5921 = vrot.slane %v5817, 5
    %v5922 = vrot.slane %v5817, 6
    %v5923 = vrot.slane %v5817, 7
    %v5928 = vrot.slane %v5883, 4
    %v5929 = vrot.slane %v5885, 4
    %v5930 = vrot.slane %v5888, 4
    %v5931 = vrot.slane %v5890, 4
    %v5936 = vperm.slane %v5810, 0
    %v5937 = vperm.slane %v5896, 0
    %v5938 = vperm.slane %v5897, 0
    %v5939 = vperm.slane %v5898, 0
    %v5940 = vperm.slane %v5899, 0
    %v5941 = vperm.slane %v5900, 0
    %v5942 = vperm.slane %v5901, 0
    %v5943 = vperm.slane %v5902, 0
    %v5944 = vperm.slane %v5812, 0
    %v5945 = vperm.slane %v5903, 0
    %v5946 = vperm.slane %v5904, 0
    %v5947 = vperm.slane %v5905, 0
    %v5948 = vperm.slane %v5906, 0
    %v5949 = vperm.slane %v5907, 0
    %v5950 = vperm.slane %v5908, 0
    %v5951 = vperm.slane %v5909, 0
    %v5952 = vperm.slane %v5815, 0
    %v5953 = vperm.slane %v5910, 0
    %v5954 = vperm.slane %v5911, 0
    %v5955 = vperm.slane %v5912, 0
    %v5956 = vperm.slane %v5913, 0
    %v5957 = vperm.slane %v5914, 0
    %v5958 = vperm.slane %v5915, 0
    %v5959 = vperm.slane %v5916, 0
    %v5960 = vperm.slane %v5817, 0
    %v5961 = vperm.slane %v5917, 0
    %v5962 = vperm.slane %v5918, 0
    %v5963 = vperm.slane %v5919, 0
    %v5964 = vperm.slane %v5920, 0
    %v5965 = vperm.slane %v5921, 0
    %v5966 = vperm.slane %v5922, 0
    %v5967 = vperm.slane %v5923, 0
    %v6000 = vmul.f32 %v5936, %v5883
    %v6001 = vmul.f32 %v5937, %v5883
    %v6002 = vmul.f32 %v5938, %v5883
    %v6003 = vmul.f32 %v5939, %v5883
    %v6004 = vmul.f32 %v5940, %v5928
    %v6005 = vmul.f32 %v5941, %v5928
    %v6006 = vmul.f32 %v5942, %v5928
    %v6007 = vmul.f32 %v5943, %v5928
    %v6008 = vmul.f32 %v5944, %v5885
    %v6009 = vmul.f32 %v5945, %v5885
    %v6010 = vmul.f32 %v5946, %v5885
    %v6011 = vmul.f32 %v5947, %v5885
    %v6012 = vmul.f32 %v5948, %v5929
    %v6013 = vmul.f32 %v5949, %v5929
    %v6014 = vmul.f32 %v5950, %v5929
    %v6015 = vmul.f32 %v5951, %v5929
    %v6016 = vmul.f32 %v5952, %v5888
    %v6017 = vmul.f32 %v5953, %v5888
    %v6018 = vmul.f32 %v5954, %v5888
    %v6019 = vmul.f32 %v5955, %v5888
    %v6020 = vmul.f32 %v5956, %v5930
    %v6021 = vmul.f32 %v5957, %v5930
    %v6022 = vmul.f32 %v5958, %v5930
    %v6023 = vmul.f32 %v5959, %v5930
    %v6024 = vmul.f32 %v5960, %v5890
    %v6025 = vmul.f32 %v5961, %v5890
    %v6026 = vmul.f32 %v5962, %v5890
    %v6027 = vmul.f32 %v5963, %v5890
    %v6028 = vmul.f32 %v5964, %v5931
    %v6029 = vmul.f32 %v5965, %v5931
    %v6030 = vmul.f32 %v5966, %v5931
    %v6031 = vmul.f32 %v5967, %v5931
    %6064 = vst [vmem:[#allocation1] ss:$2 sm:$0xff] %v6000
    %s6065 = scalar_lea.vmem [#allocation1], 1
    %6066 = vst [vmem:[%s6065] ss:$2 sm:$0xff] %v6001
    %s6067 = scalar_lea.vmem [#allocation1], 16
    %6068 = vst [vmem:[%s6067] ss:$2 sm:$0xff] %v6002
    %s6069 = scalar_lea.vmem [#allocation1], 17
    %6070 = vst [vmem:[%s6069] ss:$2 sm:$0xff] %v6003
    %s6071 = scalar_lea.vmem [#allocation1], 32
    %6072 = vst [vmem:[%s6071] ss:$2 sm:$0xff] %v6004
    %s6073 = scalar_lea.vmem [#allocation1], 33
    %6074 = vst [vmem:[%s6073] ss:$2 sm:$0xff] %v6005
    %s6075 = scalar_lea.vmem [#allocation1], 48
    %6076 = vst [vmem:[%s6075] ss:$2 sm:$0xff] %v6006
    %s6077 = scalar_lea.vmem [#allocation1], 49
    %6078 = vst [vmem:[%s6077] ss:$2 sm:$0xff] %v6007
    %v6079 = vld.sshfl [vmem:[#allocation1] sm:$0xff pattern:$0x75316420]
    %v6080 = vld.sshfl [vmem:[#allocation1 + $0x10] sm:$0xff pattern:$0x75316420]
    %v6081 = vld.sshfl [vmem:[#allocation1 + $0x20] sm:$0xff pattern:$0x75316420]
    %v6082 = vld.sshfl [vmem:[#allocation1 + $0x30] sm:$0xff pattern:$0x75316420]
    %6083 = vst [vmem:[#allocation1] ss:$2 sm:$0xff] %v6008
    %6084 = vst [vmem:[%s6065] ss:$2 sm:$0xff] %v6009
    %6085 = vst [vmem:[%s6067] ss:$2 sm:$0xff] %v6010
    %6086 = vst [vmem:[%s6069] ss:$2 sm:$0xff] %v6011
    %6087 = vst [vmem:[%s6071] ss:$2 sm:$0xff] %v6012
    %6088 = vst [vmem:[%s6073] ss:$2 sm:$0xff] %v6013
    %6089 = vst [vmem:[%s6075] ss:$2 sm:$0xff] %v6014
    %6090 = vst [vmem:[%s6077] ss:$2 sm:$0xff] %v6015
    %v6091 = vld.sshfl [vmem:[#allocation1] sm:$0xff pattern:$0x75316420]
    %v6092 = vld.sshfl [vmem:[#allocation1 + $0x10] sm:$0xff pattern:$0x75316420]
    %v6093 = vld.sshfl [vmem:[#allocation1 + $0x20] sm:$0xff pattern:$0x75316420]
    %v6094 = vld.sshfl [vmem:[#allocation1 + $0x30] sm:$0xff pattern:$0x75316420]
    %6095 = vst [vmem:[#allocation1] ss:$2 sm:$0xff] %v6016
    %6096 = vst [vmem:[%s6065] ss:$2 sm:$0xff] %v6017
    %6097 = vst [vmem:[%s6067] ss:$2 sm:$0xff] %v6018
    %6098 = vst [vmem:[%s6069] ss:$2 sm:$0xff] %v6019
    %6099 = vst [vmem:[%s6071] ss:$2 sm:$0xff] %v6020
    %6100 = vst [vmem:[%s6073] ss:$2 sm:$0xff] %v6021
    %6101 = vst [vmem:[%s6075] ss:$2 sm:$0xff] %v6022
    %6102 = vst [vmem:[%s6077] ss:$2 sm:$0xff] %v6023
    %v6103 = vld.sshfl [vmem:[#allocation1] sm:$0xff pattern:$0x75316420]
    %v6104 = vld.sshfl [vmem:[#allocation1 + $0x10] sm:$0xff pattern:$0x75316420]
    %v6105 = vld.sshfl [vmem:[#allocation1 + $0x20] sm:$0xff pattern:$0x75316420]
    %v6106 = vld.sshfl [vmem:[#allocation1 + $0x30] sm:$0xff pattern:$0x75316420]
    %6107 = vst [vmem:[#allocation1] ss:$2 sm:$0xff] %v6024
    %6108 = vst [vmem:[%s6065] ss:$2 sm:$0xff] %v6025
    %6109 = vst [vmem:[%s6067] ss:$2 sm:$0xff] %v6026
    %6110 = vst [vmem:[%s6069] ss:$2 sm:$0xff] %v6027
    %6111 = vst [vmem:[%s6071] ss:$2 sm:$0xff] %v6028
    %6112 = vst [vmem:[%s6073] ss:$2 sm:$0xff] %v6029
    %6113 = vst [vmem:[%s6075] ss:$2 sm:$0xff] %v6030
    %6114 = vst [vmem:[%s6077] ss:$2 sm:$0xff] %v6031
    %v6115 = vld.sshfl [vmem:[#allocation1] sm:$0xff pattern:$0x75316420]
    %v6116 = vld.sshfl [vmem:[#allocation1 + $0x10] sm:$0xff pattern:$0x75316420]
    %v6117 = vld.sshfl [vmem:[#allocation1 + $0x20] sm:$0xff pattern:$0x75316420]
    %v6118 = vld.sshfl [vmem:[#allocation1 + $0x30] sm:$0xff pattern:$0x75316420]
    %v6119 = vsel %vm552, %v6079, 0
    %v6121 = vsel %vm552, %v6080, 0
    %v6123 = vsel %vm552, %v6081, 0
    %v6125 = vsel %vm552, %v6082, 0
    %v6127 = vsel %vm552, %v6091, 0
    %v6129 = vsel %vm552, %v6092, 0
    %v6131 = vsel %vm552, %v6093, 0
    %v6133 = vsel %vm552, %v6094, 0
    %v6135 = vsel %vm552, %v6103, 0
    %v6137 = vsel %vm552, %v6104, 0
    %v6139 = vsel %vm552, %v6105, 0
    %v6141 = vsel %vm552, %v6106, 0
    %v6143 = vsel %vm552, %v6115, 0
    %v6145 = vsel %vm552, %v6116, 0
    %v6147 = vsel %vm552, %v6117, 0
    %v6149 = vsel %vm552, %v6118, 0
    %6151 = vmatpush.msra.mxu0 0.0
    %6152 = vmatpush.msra.mxu0 0.0
    %6153 = vmatpush.msra.mxu0 0.0
    %6154 = vmatpush.msra.mxu0 0.0
    %6155 = vmatpush.msra.mxu0 0.0
    %6156 = vmatpush.msra.mxu0 0.0
    %6157 = vmatpush.msra.mxu0 0.0
    %6158 = vmatpush.msra.mxu0 0.0
    %6159 = vmatpush.msra.mxu0 0.0
    %6160 = vmatpush.msra.mxu0 0.0
    %6161 = vmatpush.msra.mxu0 0.0
    %6162 = vmatpush.msra.mxu0 0.0
    %6163 = vmatpush.msra.mxu0 %v454
    %6164 = vmatpush.msra.mxu0 %v453
    %6165 = vmatpush.msra.mxu0 %v452
    %6166 = vmatpush.msra.mxu0 %v451
    %6167 = vmatmul.f32.gmra.mxu0 %v6119
    %v6168 = vpop.f32.mrf.mxu0
    %v6169 = vadd.f32 0.0, %v6168
    %6170 = vmatmul.f32.gmra.mxu0 %v6121
    %v6171 = vpop.f32.mrf.mxu0
    %v6172 = vadd.f32 0.0, %v6171
    %6173 = vmatmul.f32.gmra.mxu0 %v6123
    %v6174 = vpop.f32.mrf.mxu0
    %v6175 = vadd.f32 0.0, %v6174
    %6176 = vmatmul.f32.gmra.mxu0 %v6125
    %v6177 = vpop.f32.mrf.mxu0
    %v6178 = vadd.f32 0.0, %v6177
    %6179 = vmatmul.f32.gmra.mxu0 %v6127
    %v6180 = vpop.f32.mrf.mxu0
    %v6181 = vadd.f32 0.0, %v6180
    %6182 = vmatmul.f32.gmra.mxu0 %v6129
    %v6183 = vpop.f32.mrf.mxu0
    %v6184 = vadd.f32 0.0, %v6183
    %6185 = vmatmul.f32.gmra.mxu0 %v6131
    %v6186 = vpop.f32.mrf.mxu0
    %v6187 = vadd.f32 0.0, %v6186
    %6188 = vmatmul.f32.gmra.mxu0 %v6133
    %v6189 = vpop.f32.mrf.mxu0
    %v6190 = vadd.f32 0.0, %v6189
    %6191 = vmatmul.f32.gmra.mxu0 %v6135
    %v6192 = vpop.f32.mrf.mxu0
    %v6193 = vadd.f32 0.0, %v6192
    %6194 = vmatmul.f32.gmra.mxu0 %v6137
    %v6195 = vpop.f32.mrf.mxu0
    %v6196 = vadd.f32 0.0, %v6195
    %6197 = vmatmul.f32.gmra.mxu0 %v6139
    %v6198 = vpop.f32.mrf.mxu0
    %v6199 = vadd.f32 0.0, %v6198
    %6200 = vmatmul.f32.gmra.mxu0 %v6141
    %v6201 = vpop.f32.mrf.mxu0
    %v6202 = vadd.f32 0.0, %v6201
    %6203 = vmatmul.f32.gmra.mxu0 %v6143
    %v6204 = vpop.f32.mrf.mxu0
    %v6205 = vadd.f32 0.0, %v6204
    %6206 = vmatmul.f32.gmra.mxu0 %v6145
    %v6207 = vpop.f32.mrf.mxu0
    %v6208 = vadd.f32 0.0, %v6207
    %6209 = vmatmul.f32.gmra.mxu0 %v6147
    %v6210 = vpop.f32.mrf.mxu0
    %v6211 = vadd.f32 0.0, %v6210
    %6212 = vmatmul.f32.gmra.mxu0 %v6149
    %v6213 = vpop.f32.mrf.mxu0
    %v6214 = vadd.f32 0.0, %v6213
    %6215 = vdwg.mxu0
    %v6232 = vrot.slane %v6169, 4
    %v6233 = vrot.slane %v6172, 4
    %v6234 = vrot.slane %v6175, 4
    %v6235 = vrot.slane %v6178, 4
    %v6236 = vrot.slane %v6181, 4
    %v6237 = vrot.slane %v6184, 4
    %v6238 = vrot.slane %v6187, 4
    %v6239 = vrot.slane %v6190, 4
    %v6240 = vrot.slane %v6193, 4
    %v6241 = vrot.slane %v6196, 4
    %v6242 = vrot.slane %v6199, 4
    %v6243 = vrot.slane %v6202, 4
    %v6244 = vrot.slane %v6205, 4
    %v6245 = vrot.slane %v6208, 4
    %v6246 = vrot.slane %v6211, 4
    %v6247 = vrot.slane %v6214, 4
    %v6264 = vsel %vm4487, %v6169, -inf
    %v6265 = vrot.slane %v6264, 4
    %v6266 = vmax.f32 %v6264, %v6265
    %v6267 = vrot.slane %v6266, 2
    %v6268 = vmax.f32 %v6266, %v6267
    %v6269 = vrot.slane %v6268, 1
    %v6270 = vmax.f32 %v6268, %v6269
    %v6271 = vsel %vm4487, %v6232, -inf
    %v6272 = vrot.slane %v6271, 4
    %v6273 = vmax.f32 %v6271, %v6272
    %v6274 = vrot.slane %v6273, 2
    %v6275 = vmax.f32 %v6273, %v6274
    %v6276 = vrot.slane %v6275, 1
    %v6277 = vmax.f32 %v6275, %v6276
    %v6278 = vsel %vm4487, %v6172, -inf
    %v6279 = vrot.slane %v6278, 4
    %v6280 = vmax.f32 %v6278, %v6279
    %v6281 = vrot.slane %v6280, 2
    %v6282 = vmax.f32 %v6280, %v6281
    %v6283 = vrot.slane %v6282, 1
    %v6284 = vmax.f32 %v6282, %v6283
    %v6285 = vsel %vm4487, %v6233, -inf
    %v6286 = vrot.slane %v6285, 4
    %v6287 = vmax.f32 %v6285, %v6286
    %v6288 = vrot.slane %v6287, 2
    %v6289 = vmax.f32 %v6287, %v6288
    %v6290 = vrot.slane %v6289, 1
    %v6291 = vmax.f32 %v6289, %v6290
    %v6292 = vsel %vm4487, %v6175, -inf
    %v6293 = vrot.slane %v6292, 4
    %v6294 = vmax.f32 %v6292, %v6293
    %v6295 = vrot.slane %v6294, 2
    %v6296 = vmax.f32 %v6294, %v6295
    %v6297 = vrot.slane %v6296, 1
    %v6298 = vmax.f32 %v6296, %v6297
    %v6299 = vsel %vm4487, %v6234, -inf
    %v6300 = vrot.slane %v6299, 4
    %v6301 = vmax.f32 %v6299, %v6300
    %v6302 = vrot.slane %v6301, 2
    %v6303 = vmax.f32 %v6301, %v6302
    %v6304 = vrot.slane %v6303, 1
    %v6305 = vmax.f32 %v6303, %v6304
    %v6306 = vsel %vm4487, %v6178, -inf
    %v6307 = vrot.slane %v6306, 4
    %v6308 = vmax.f32 %v6306, %v6307
    %v6309 = vrot.slane %v6308, 2
    %v6310 = vmax.f32 %v6308, %v6309
    %v6311 = vrot.slane %v6310, 1
    %v6312 = vmax.f32 %v6310, %v6311
    %v6313 = vsel %vm4487, %v6235, -inf
    %v6314 = vrot.slane %v6313, 4
    %v6315 = vmax.f32 %v6313, %v6314
    %v6316 = vrot.slane %v6315, 2
    %v6317 = vmax.f32 %v6315, %v6316
    %v6318 = vrot.slane %v6317, 1
    %v6319 = vmax.f32 %v6317, %v6318
    %v6320 = vsel %vm4487, %v6181, -inf
    %v6321 = vrot.slane %v6320, 4
    %v6322 = vmax.f32 %v6320, %v6321
    %v6323 = vrot.slane %v6322, 2
    %v6324 = vmax.f32 %v6322, %v6323
    %v6325 = vrot.slane %v6324, 1
    %v6326 = vmax.f32 %v6324, %v6325
    %v6327 = vsel %vm4487, %v6236, -inf
    %v6328 = vrot.slane %v6327, 4
    %v6329 = vmax.f32 %v6327, %v6328
    %v6330 = vrot.slane %v6329, 2
    %v6331 = vmax.f32 %v6329, %v6330
    %v6332 = vrot.slane %v6331, 1
    %v6333 = vmax.f32 %v6331, %v6332
    %v6334 = vsel %vm4487, %v6184, -inf
    %v6335 = vrot.slane %v6334, 4
    %v6336 = vmax.f32 %v6334, %v6335
    %v6337 = vrot.slane %v6336, 2
    %v6338 = vmax.f32 %v6336, %v6337
    %v6339 = vrot.slane %v6338, 1
    %v6340 = vmax.f32 %v6338, %v6339
    %v6341 = vsel %vm4487, %v6237, -inf
    %v6342 = vrot.slane %v6341, 4
    %v6343 = vmax.f32 %v6341, %v6342
    %v6344 = vrot.slane %v6343, 2
    %v6345 = vmax.f32 %v6343, %v6344
    %v6346 = vrot.slane %v6345, 1
    %v6347 = vmax.f32 %v6345, %v6346
    %v6348 = vsel %vm4487, %v6187, -inf
    %v6349 = vrot.slane %v6348, 4
    %v6350 = vmax.f32 %v6348, %v6349
    %v6351 = vrot.slane %v6350, 2
    %v6352 = vmax.f32 %v6350, %v6351
    %v6353 = vrot.slane %v6352, 1
    %v6354 = vmax.f32 %v6352, %v6353
    %v6355 = vsel %vm4487, %v6238, -inf
    %v6356 = vrot.slane %v6355, 4
    %v6357 = vmax.f32 %v6355, %v6356
    %v6358 = vrot.slane %v6357, 2
    %v6359 = vmax.f32 %v6357, %v6358
    %v6360 = vrot.slane %v6359, 1
    %v6361 = vmax.f32 %v6359, %v6360
    %v6362 = vsel %vm4487, %v6190, -inf
    %v6363 = vrot.slane %v6362, 4
    %v6364 = vmax.f32 %v6362, %v6363
    %v6365 = vrot.slane %v6364, 2
    %v6366 = vmax.f32 %v6364, %v6365
    %v6367 = vrot.slane %v6366, 1
    %v6368 = vmax.f32 %v6366, %v6367
    %v6369 = vsel %vm4487, %v6239, -inf
    %v6370 = vrot.slane %v6369, 4
    %v6371 = vmax.f32 %v6369, %v6370
    %v6372 = vrot.slane %v6371, 2
    %v6373 = vmax.f32 %v6371, %v6372
    %v6374 = vrot.slane %v6373, 1
    %v6375 = vmax.f32 %v6373, %v6374
    %v6376 = vsel %vm4487, %v6193, -inf
    %v6377 = vrot.slane %v6376, 4
    %v6378 = vmax.f32 %v6376, %v6377
    %v6379 = vrot.slane %v6378, 2
    %v6380 = vmax.f32 %v6378, %v6379
    %v6381 = vrot.slane %v6380, 1
    %v6382 = vmax.f32 %v6380, %v6381
    %v6383 = vsel %vm4487, %v6240, -inf
    %v6384 = vrot.slane %v6383, 4
    %v6385 = vmax.f32 %v6383, %v6384
    %v6386 = vrot.slane %v6385, 2
    %v6387 = vmax.f32 %v6385, %v6386
    %v6388 = vrot.slane %v6387, 1
    %v6389 = vmax.f32 %v6387, %v6388
    %v6390 = vsel %vm4487, %v6196, -inf
    %v6391 = vrot.slane %v6390, 4
    %v6392 = vmax.f32 %v6390, %v6391
    %v6393 = vrot.slane %v6392, 2
    %v6394 = vmax.f32 %v6392, %v6393
    %v6395 = vrot.slane %v6394, 1
    %v6396 = vmax.f32 %v6394, %v6395
    %v6397 = vsel %vm4487, %v6241, -inf
    %v6398 = vrot.slane %v6397, 4
    %v6399 = vmax.f32 %v6397, %v6398
    %v6400 = vrot.slane %v6399, 2
    %v6401 = vmax.f32 %v6399, %v6400
    %v6402 = vrot.slane %v6401, 1
    %v6403 = vmax.f32 %v6401, %v6402
    %v6404 = vsel %vm4487, %v6199, -inf
    %v6405 = vrot.slane %v6404, 4
    %v6406 = vmax.f32 %v6404, %v6405
    %v6407 = vrot.slane %v6406, 2
    %v6408 = vmax.f32 %v6406, %v6407
    %v6409 = vrot.slane %v6408, 1
    %v6410 = vmax.f32 %v6408, %v6409
    %v6411 = vsel %vm4487, %v6242, -inf
    %v6412 = vrot.slane %v6411, 4
    %v6413 = vmax.f32 %v6411, %v6412
    %v6414 = vrot.slane %v6413, 2
    %v6415 = vmax.f32 %v6413, %v6414
    %v6416 = vrot.slane %v6415, 1
    %v6417 = vmax.f32 %v6415, %v6416
    %v6418 = vsel %vm4487, %v6202, -inf
    %v6419 = vrot.slane %v6418, 4
    %v6420 = vmax.f32 %v6418, %v6419
    %v6421 = vrot.slane %v6420, 2
    %v6422 = vmax.f32 %v6420, %v6421
    %v6423 = vrot.slane %v6422, 1
    %v6424 = vmax.f32 %v6422, %v6423
    %v6425 = vsel %vm4487, %v6243, -inf
    %v6426 = vrot.slane %v6425, 4
    %v6427 = vmax.f32 %v6425, %v6426
    %v6428 = vrot.slane %v6427, 2
    %v6429 = vmax.f32 %v6427, %v6428
    %v6430 = vrot.slane %v6429, 1
    %v6431 = vmax.f32 %v6429, %v6430
    %v6432 = vsel %vm4487, %v6205, -inf
    %v6433 = vrot.slane %v6432, 4
    %v6434 = vmax.f32 %v6432, %v6433
    %v6435 = vrot.slane %v6434, 2
    %v6436 = vmax.f32 %v6434, %v6435
    %v6437 = vrot.slane %v6436, 1
    %v6438 = vmax.f32 %v6436, %v6437
    %v6439 = vsel %vm4487, %v6244, -inf
    %v6440 = vrot.slane %v6439, 4
    %v6441 = vmax.f32 %v6439, %v6440
    %v6442 = vrot.slane %v6441, 2
    %v6443 = vmax.f32 %v6441, %v6442
    %v6444 = vrot.slane %v6443, 1
    %v6445 = vmax.f32 %v6443, %v6444
    %v6446 = vsel %vm4487, %v6208, -inf
    %v6447 = vrot.slane %v6446, 4
    %v6448 = vmax.f32 %v6446, %v6447
    %v6449 = vrot.slane %v6448, 2
    %v6450 = vmax.f32 %v6448, %v6449
    %v6451 = vrot.slane %v6450, 1
    %v6452 = vmax.f32 %v6450, %v6451
    %v6453 = vsel %vm4487, %v6245, -inf
    %v6454 = vrot.slane %v6453, 4
    %v6455 = vmax.f32 %v6453, %v6454
    %v6456 = vrot.slane %v6455, 2
    %v6457 = vmax.f32 %v6455, %v6456
    %v6458 = vrot.slane %v6457, 1
    %v6459 = vmax.f32 %v6457, %v6458
    %v6460 = vsel %vm4487, %v6211, -inf
    %v6461 = vrot.slane %v6460, 4
    %v6462 = vmax.f32 %v6460, %v6461
    %v6463 = vrot.slane %v6462, 2
    %v6464 = vmax.f32 %v6462, %v6463
    %v6465 = vrot.slane %v6464, 1
    %v6466 = vmax.f32 %v6464, %v6465
    %v6467 = vsel %vm4487, %v6246, -inf
    %v6468 = vrot.slane %v6467, 4
    %v6469 = vmax.f32 %v6467, %v6468
    %v6470 = vrot.slane %v6469, 2
    %v6471 = vmax.f32 %v6469, %v6470
    %v6472 = vrot.slane %v6471, 1
    %v6473 = vmax.f32 %v6471, %v6472
    %v6474 = vsel %vm4487, %v6214, -inf
    %v6475 = vrot.slane %v6474, 4
    %v6476 = vmax.f32 %v6474, %v6475
    %v6477 = vrot.slane %v6476, 2
    %v6478 = vmax.f32 %v6476, %v6477
    %v6479 = vrot.slane %v6478, 1
    %v6480 = vmax.f32 %v6478, %v6479
    %v6481 = vsel %vm4487, %v6247, -inf
    %v6482 = vrot.slane %v6481, 4
    %v6483 = vmax.f32 %v6481, %v6482
    %v6484 = vrot.slane %v6483, 2
    %v6485 = vmax.f32 %v6483, %v6484
    %v6486 = vrot.slane %v6485, 1
    %v6487 = vmax.f32 %v6485, %v6486
    %v6488 = vsub.f32 %v6169, %v6270
    %v6489 = vsub.f32 %v6232, %v6277
    %v6490 = vsub.f32 %v6172, %v6284
    %v6491 = vsub.f32 %v6233, %v6291
    %v6492 = vsub.f32 %v6175, %v6298
    %v6493 = vsub.f32 %v6234, %v6305
    %v6494 = vsub.f32 %v6178, %v6312
    %v6495 = vsub.f32 %v6235, %v6319
    %v6496 = vsub.f32 %v6181, %v6326
    %v6497 = vsub.f32 %v6236, %v6333
    %v6498 = vsub.f32 %v6184, %v6340
    %v6499 = vsub.f32 %v6237, %v6347
    %v6500 = vsub.f32 %v6187, %v6354
    %v6501 = vsub.f32 %v6238, %v6361
    %v6502 = vsub.f32 %v6190, %v6368
    %v6503 = vsub.f32 %v6239, %v6375
    %v6504 = vsub.f32 %v6193, %v6382
    %v6505 = vsub.f32 %v6240, %v6389
    %v6506 = vsub.f32 %v6196, %v6396
    %v6507 = vsub.f32 %v6241, %v6403
    %v6508 = vsub.f32 %v6199, %v6410
    %v6509 = vsub.f32 %v6242, %v6417
    %v6510 = vsub.f32 %v6202, %v6424
    %v6511 = vsub.f32 %v6243, %v6431
    %v6512 = vsub.f32 %v6205, %v6438
    %v6513 = vsub.f32 %v6244, %v6445
    %v6514 = vsub.f32 %v6208, %v6452
    %v6515 = vsub.f32 %v6245, %v6459
    %v6516 = vsub.f32 %v6211, %v6466
    %v6517 = vsub.f32 %v6246, %v6473
    %v6518 = vsub.f32 %v6214, %v6480
    %v6519 = vsub.f32 %v6247, %v6487
    %v6520 = vmul.f32 %v6488, 1.442695
    %v6521 = vpow.pop %v6520
    %v6522 = vmul.f32 %v6489, 1.442695
    %v6523 = vpow.pop %v6522
    %v6524 = vmul.f32 %v6490, 1.442695
    %v6525 = vpow.pop %v6524
    %v6526 = vmul.f32 %v6491, 1.442695
    %v6527 = vpow.pop %v6526
    %v6528 = vmul.f32 %v6492, 1.442695
    %v6529 = vpow.pop %v6528
    %v6530 = vmul.f32 %v6493, 1.442695
    %v6531 = vpow.pop %v6530
    %v6532 = vmul.f32 %v6494, 1.442695
    %v6533 = vpow.pop %v6532
    %v6534 = vmul.f32 %v6495, 1.442695
    %v6535 = vpow.pop %v6534
    %v6536 = vmul.f32 %v6496, 1.442695
    %v6537 = vpow.pop %v6536
    %v6538 = vmul.f32 %v6497, 1.442695
    %v6539 = vpow.pop %v6538
    %v6540 = vmul.f32 %v6498, 1.442695
    %v6541 = vpow.pop %v6540
    %v6542 = vmul.f32 %v6499, 1.442695
    %v6543 = vpow.pop %v6542
    %v6544 = vmul.f32 %v6500, 1.442695
    %v6545 = vpow.pop %v6544
    %v6546 = vmul.f32 %v6501, 1.442695
    %v6547 = vpow.pop %v6546
    %v6548 = vmul.f32 %v6502, 1.442695
    %v6549 = vpow.pop %v6548
    %v6550 = vmul.f32 %v6503, 1.442695
    %v6551 = vpow.pop %v6550
    %v6552 = vmul.f32 %v6504, 1.442695
    %v6553 = vpow.pop %v6552
    %v6554 = vmul.f32 %v6505, 1.442695
    %v6555 = vpow.pop %v6554
    %v6556 = vmul.f32 %v6506, 1.442695
    %v6557 = vpow.pop %v6556
    %v6558 = vmul.f32 %v6507, 1.442695
    %v6559 = vpow.pop %v6558
    %v6560 = vmul.f32 %v6508, 1.442695
    %v6561 = vpow.pop %v6560
    %v6562 = vmul.f32 %v6509, 1.442695
    %v6563 = vpow.pop %v6562
    %v6564 = vmul.f32 %v6510, 1.442695
    %v6565 = vpow.pop %v6564
    %v6566 = vmul.f32 %v6511, 1.442695
    %v6567 = vpow.pop %v6566
    %v6568 = vmul.f32 %v6512, 1.442695
    %v6569 = vpow.pop %v6568
    %v6570 = vmul.f32 %v6513, 1.442695
    %v6571 = vpow.pop %v6570
    %v6572 = vmul.f32 %v6514, 1.442695
    %v6573 = vpow.pop %v6572
    %v6574 = vmul.f32 %v6515, 1.442695
    %v6575 = vpow.pop %v6574
    %v6576 = vmul.f32 %v6516, 1.442695
    %v6577 = vpow.pop %v6576
    %v6578 = vmul.f32 %v6517, 1.442695
    %v6579 = vpow.pop %v6578
    %v6580 = vmul.f32 %v6518, 1.442695
    %v6581 = vpow.pop %v6580
    %v6582 = vmul.f32 %v6519, 1.442695
    %v6583 = vpow.pop %v6582
    %v6584 = vsel %vm4487, %v6521, 0.0
    %v6585 = vrot.slane %v6584, 4
    %v6586 = vadd.f32 %v6584, %v6585
    %v6587 = vrot.slane %v6586, 2
    %v6588 = vadd.f32 %v6586, %v6587
    %v6589 = vrot.slane %v6588, 1
    %v6590 = vadd.f32 %v6588, %v6589
    %v6591 = vsel %vm4487, %v6523, 0.0
    %v6592 = vrot.slane %v6591, 4
    %v6593 = vadd.f32 %v6591, %v6592
    %v6594 = vrot.slane %v6593, 2
    %v6595 = vadd.f32 %v6593, %v6594
    %v6596 = vrot.slane %v6595, 1
    %v6597 = vadd.f32 %v6595, %v6596
    %v6598 = vsel %vm4487, %v6525, 0.0
    %v6599 = vrot.slane %v6598, 4
    %v6600 = vadd.f32 %v6598, %v6599
    %v6601 = vrot.slane %v6600, 2
    %v6602 = vadd.f32 %v6600, %v6601
    %v6603 = vrot.slane %v6602, 1
    %v6604 = vadd.f32 %v6602, %v6603
    %v6605 = vsel %vm4487, %v6527, 0.0
    %v6606 = vrot.slane %v6605, 4
    %v6607 = vadd.f32 %v6605, %v6606
    %v6608 = vrot.slane %v6607, 2
    %v6609 = vadd.f32 %v6607, %v6608
    %v6610 = vrot.slane %v6609, 1
    %v6611 = vadd.f32 %v6609, %v6610
    %v6612 = vsel %vm4487, %v6529, 0.0
    %v6613 = vrot.slane %v6612, 4
    %v6614 = vadd.f32 %v6612, %v6613
    %v6615 = vrot.slane %v6614, 2
    %v6616 = vadd.f32 %v6614, %v6615
    %v6617 = vrot.slane %v6616, 1
    %v6618 = vadd.f32 %v6616, %v6617
    %v6619 = vsel %vm4487, %v6531, 0.0
    %v6620 = vrot.slane %v6619, 4
    %v6621 = vadd.f32 %v6619, %v6620
    %v6622 = vrot.slane %v6621, 2
    %v6623 = vadd.f32 %v6621, %v6622
    %v6624 = vrot.slane %v6623, 1
    %v6625 = vadd.f32 %v6623, %v6624
    %v6626 = vsel %vm4487, %v6533, 0.0
    %v6627 = vrot.slane %v6626, 4
    %v6628 = vadd.f32 %v6626, %v6627
    %v6629 = vrot.slane %v6628, 2
    %v6630 = vadd.f32 %v6628, %v6629
    %v6631 = vrot.slane %v6630, 1
    %v6632 = vadd.f32 %v6630, %v6631
    %v6633 = vsel %vm4487, %v6535, 0.0
    %v6634 = vrot.slane %v6633, 4
    %v6635 = vadd.f32 %v6633, %v6634
    %v6636 = vrot.slane %v6635, 2
    %v6637 = vadd.f32 %v6635, %v6636
    %v6638 = vrot.slane %v6637, 1
    %v6639 = vadd.f32 %v6637, %v6638
    %v6640 = vsel %vm4487, %v6537, 0.0
    %v6641 = vrot.slane %v6640, 4
    %v6642 = vadd.f32 %v6640, %v6641
    %v6643 = vrot.slane %v6642, 2
    %v6644 = vadd.f32 %v6642, %v6643
    %v6645 = vrot.slane %v6644, 1
    %v6646 = vadd.f32 %v6644, %v6645
    %v6647 = vsel %vm4487, %v6539, 0.0
    %v6648 = vrot.slane %v6647, 4
    %v6649 = vadd.f32 %v6647, %v6648
    %v6650 = vrot.slane %v6649, 2
    %v6651 = vadd.f32 %v6649, %v6650
    %v6652 = vrot.slane %v6651, 1
    %v6653 = vadd.f32 %v6651, %v6652
    %v6654 = vsel %vm4487, %v6541, 0.0
    %v6655 = vrot.slane %v6654, 4
    %v6656 = vadd.f32 %v6654, %v6655
    %v6657 = vrot.slane %v6656, 2
    %v6658 = vadd.f32 %v6656, %v6657
    %v6659 = vrot.slane %v6658, 1
    %v6660 = vadd.f32 %v6658, %v6659
    %v6661 = vsel %vm4487, %v6543, 0.0
    %v6662 = vrot.slane %v6661, 4
    %v6663 = vadd.f32 %v6661, %v6662
    %v6664 = vrot.slane %v6663, 2
    %v6665 = vadd.f32 %v6663, %v6664
    %v6666 = vrot.slane %v6665, 1
    %v6667 = vadd.f32 %v6665, %v6666
    %v6668 = vsel %vm4487, %v6545, 0.0
    %v6669 = vrot.slane %v6668, 4
    %v6670 = vadd.f32 %v6668, %v6669
    %v6671 = vrot.slane %v6670, 2
    %v6672 = vadd.f32 %v6670, %v6671
    %v6673 = vrot.slane %v6672, 1
    %v6674 = vadd.f32 %v6672, %v6673
    %v6675 = vsel %vm4487, %v6547, 0.0
    %v6676 = vrot.slane %v6675, 4
    %v6677 = vadd.f32 %v6675, %v6676
    %v6678 = vrot.slane %v6677, 2
    %v6679 = vadd.f32 %v6677, %v6678
    %v6680 = vrot.slane %v6679, 1
    %v6681 = vadd.f32 %v6679, %v6680
    %v6682 = vsel %vm4487, %v6549, 0.0
    %v6683 = vrot.slane %v6682, 4
    %v6684 = vadd.f32 %v6682, %v6683
    %v6685 = vrot.slane %v6684, 2
    %v6686 = vadd.f32 %v6684, %v6685
    %v6687 = vrot.slane %v6686, 1
    %v6688 = vadd.f32 %v6686, %v6687
    %v6689 = vsel %vm4487, %v6551, 0.0
    %v6690 = vrot.slane %v6689, 4
    %v6691 = vadd.f32 %v6689, %v6690
    %v6692 = vrot.slane %v6691, 2
    %v6693 = vadd.f32 %v6691, %v6692
    %v6694 = vrot.slane %v6693, 1
    %v6695 = vadd.f32 %v6693, %v6694
    %v6696 = vsel %vm4487, %v6553, 0.0
    %v6697 = vrot.slane %v6696, 4
    %v6698 = vadd.f32 %v6696, %v6697
    %v6699 = vrot.slane %v6698, 2
    %v6700 = vadd.f32 %v6698, %v6699
    %v6701 = vrot.slane %v6700, 1
    %v6702 = vadd.f32 %v6700, %v6701
    %v6703 = vsel %vm4487, %v6555, 0.0
    %v6704 = vrot.slane %v6703, 4
    %v6705 = vadd.f32 %v6703, %v6704
    %v6706 = vrot.slane %v6705, 2
    %v6707 = vadd.f32 %v6705, %v6706
    %v6708 = vrot.slane %v6707, 1
    %v6709 = vadd.f32 %v6707, %v6708
    %v6710 = vsel %vm4487, %v6557, 0.0
    %v6711 = vrot.slane %v6710, 4
    %v6712 = vadd.f32 %v6710, %v6711
    %v6713 = vrot.slane %v6712, 2
    %v6714 = vadd.f32 %v6712, %v6713
    %v6715 = vrot.slane %v6714, 1
    %v6716 = vadd.f32 %v6714, %v6715
    %v6717 = vsel %vm4487, %v6559, 0.0
    %v6718 = vrot.slane %v6717, 4
    %v6719 = vadd.f32 %v6717, %v6718
    %v6720 = vrot.slane %v6719, 2
    %v6721 = vadd.f32 %v6719, %v6720
    %v6722 = vrot.slane %v6721, 1
    %v6723 = vadd.f32 %v6721, %v6722
    %v6724 = vsel %vm4487, %v6561, 0.0
    %v6725 = vrot.slane %v6724, 4
    %v6726 = vadd.f32 %v6724, %v6725
    %v6727 = vrot.slane %v6726, 2
    %v6728 = vadd.f32 %v6726, %v6727
    %v6729 = vrot.slane %v6728, 1
    %v6730 = vadd.f32 %v6728, %v6729
    %v6731 = vsel %vm4487, %v6563, 0.0
    %v6732 = vrot.slane %v6731, 4
    %v6733 = vadd.f32 %v6731, %v6732
    %v6734 = vrot.slane %v6733, 2
    %v6735 = vadd.f32 %v6733, %v6734
    %v6736 = vrot.slane %v6735, 1
    %v6737 = vadd.f32 %v6735, %v6736
    %v6738 = vsel %vm4487, %v6565, 0.0
    %v6739 = vrot.slane %v6738, 4
    %v6740 = vadd.f32 %v6738, %v6739
    %v6741 = vrot.slane %v6740, 2
    %v6742 = vadd.f32 %v6740, %v6741
    %v6743 = vrot.slane %v6742, 1
    %v6744 = vadd.f32 %v6742, %v6743
    %v6745 = vsel %vm4487, %v6567, 0.0
    %v6746 = vrot.slane %v6745, 4
    %v6747 = vadd.f32 %v6745, %v6746
    %v6748 = vrot.slane %v6747, 2
    %v6749 = vadd.f32 %v6747, %v6748
    %v6750 = vrot.slane %v6749, 1
    %v6751 = vadd.f32 %v6749, %v6750
    %v6752 = vsel %vm4487, %v6569, 0.0
    %v6753 = vrot.slane %v6752, 4
    %v6754 = vadd.f32 %v6752, %v6753
    %v6755 = vrot.slane %v6754, 2
    %v6756 = vadd.f32 %v6754, %v6755
    %v6757 = vrot.slane %v6756, 1
    %v6758 = vadd.f32 %v6756, %v6757
    %v6759 = vsel %vm4487, %v6571, 0.0
    %v6760 = vrot.slane %v6759, 4
    %v6761 = vadd.f32 %v6759, %v6760
    %v6762 = vrot.slane %v6761, 2
    %v6763 = vadd.f32 %v6761, %v6762
    %v6764 = vrot.slane %v6763, 1
    %v6765 = vadd.f32 %v6763, %v6764
    %v6766 = vsel %vm4487, %v6573, 0.0
    %v6767 = vrot.slane %v6766, 4
    %v6768 = vadd.f32 %v6766, %v6767
    %v6769 = vrot.slane %v6768, 2
    %v6770 = vadd.f32 %v6768, %v6769
    %v6771 = vrot.slane %v6770, 1
    %v6772 = vadd.f32 %v6770, %v6771
    %v6773 = vsel %vm4487, %v6575, 0.0
    %v6774 = vrot.slane %v6773, 4
    %v6775 = vadd.f32 %v6773, %v6774
    %v6776 = vrot.slane %v6775, 2
    %v6777 = vadd.f32 %v6775, %v6776
    %v6778 = vrot.slane %v6777, 1
    %v6779 = vadd.f32 %v6777, %v6778
    %v6780 = vsel %vm4487, %v6577, 0.0
    %v6781 = vrot.slane %v6780, 4
    %v6782 = vadd.f32 %v6780, %v6781
    %v6783 = vrot.slane %v6782, 2
    %v6784 = vadd.f32 %v6782, %v6783
    %v6785 = vrot.slane %v6784, 1
    %v6786 = vadd.f32 %v6784, %v6785
    %v6787 = vsel %vm4487, %v6579, 0.0
    %v6788 = vrot.slane %v6787, 4
    %v6789 = vadd.f32 %v6787, %v6788
    %v6790 = vrot.slane %v6789, 2
    %v6791 = vadd.f32 %v6789, %v6790
    %v6792 = vrot.slane %v6791, 1
    %v6793 = vadd.f32 %v6791, %v6792
    %v6794 = vsel %vm4487, %v6581, 0.0
    %v6795 = vrot.slane %v6794, 4
    %v6796 = vadd.f32 %v6794, %v6795
    %v6797 = vrot.slane %v6796, 2
    %v6798 = vadd.f32 %v6796, %v6797
    %v6799 = vrot.slane %v6798, 1
    %v6800 = vadd.f32 %v6798, %v6799
    %v6801 = vsel %vm4487, %v6583, 0.0
    %v6802 = vrot.slane %v6801, 4
    %v6803 = vadd.f32 %v6801, %v6802
    %v6804 = vrot.slane %v6803, 2
    %v6805 = vadd.f32 %v6803, %v6804
    %v6806 = vrot.slane %v6805, 1
    %v6807 = vadd.f32 %v6805, %v6806
    %v6808 = vrcp.pop %v6590
    %v6809 = vrcp.pop %v6597
    %v6810 = vrcp.pop %v6604
    %v6811 = vrcp.pop %v6611
    %v6812 = vrcp.pop %v6618
    %v6813 = vrcp.pop %v6625
    %v6814 = vrcp.pop %v6632
    %v6815 = vrcp.pop %v6639
    %v6816 = vrcp.pop %v6646
    %v6817 = vrcp.pop %v6653
    %v6818 = vrcp.pop %v6660
    %v6819 = vrcp.pop %v6667
    %v6820 = vrcp.pop %v6674
    %v6821 = vrcp.pop %v6681
    %v6822 = vrcp.pop %v6688
    %v6823 = vrcp.pop %v6695
    %v6824 = vrcp.pop %v6702
    %v6825 = vrcp.pop %v6709
    %v6826 = vrcp.pop %v6716
    %v6827 = vrcp.pop %v6723
    %v6828 = vrcp.pop %v6730
    %v6829 = vrcp.pop %v6737
    %v6830 = vrcp.pop %v6744
    %v6831 = vrcp.pop %v6751
    %v6832 = vrcp.pop %v6758
    %v6833 = vrcp.pop %v6765
    %v6834 = vrcp.pop %v6772
    %v6835 = vrcp.pop %v6779
    %v6836 = vrcp.pop %v6786
    %v6837 = vrcp.pop %v6793
    %v6838 = vrcp.pop %v6800
    %v6839 = vrcp.pop %v6807
    %v6840 = vmul.f32 %v6521, %v6808
    %v6841 = vmul.f32 %v6523, %v6809
    %v6842 = vmul.f32 %v6525, %v6810
    %v6843 = vmul.f32 %v6527, %v6811
    %v6844 = vmul.f32 %v6529, %v6812
    %v6845 = vmul.f32 %v6531, %v6813
    %v6846 = vmul.f32 %v6533, %v6814
    %v6847 = vmul.f32 %v6535, %v6815
    %v6848 = vmul.f32 %v6537, %v6816
    %v6849 = vmul.f32 %v6539, %v6817
    %v6850 = vmul.f32 %v6541, %v6818
    %v6851 = vmul.f32 %v6543, %v6819
    %v6852 = vmul.f32 %v6545, %v6820
    %v6853 = vmul.f32 %v6547, %v6821
    %v6854 = vmul.f32 %v6549, %v6822
    %v6855 = vmul.f32 %v6551, %v6823
    %v6856 = vmul.f32 %v6553, %v6824
    %v6857 = vmul.f32 %v6555, %v6825
    %v6858 = vmul.f32 %v6557, %v6826
    %v6859 = vmul.f32 %v6559, %v6827
    %v6860 = vmul.f32 %v6561, %v6828
    %v6861 = vmul.f32 %v6563, %v6829
    %v6862 = vmul.f32 %v6565, %v6830
    %v6863 = vmul.f32 %v6567, %v6831
    %v6864 = vmul.f32 %v6569, %v6832
    %v6865 = vmul.f32 %v6571, %v6833
    %v6866 = vmul.f32 %v6573, %v6834
    %v6867 = vmul.f32 %v6575, %v6835
    %v6868 = vmul.f32 %v6577, %v6836
    %v6869 = vmul.f32 %v6579, %v6837
    %v6870 = vmul.f32 %v6581, %v6838
    %v6871 = vmul.f32 %v6583, %v6839
    %6904 = vst [vmem:[#allocation1] ss:$2 sm:$0xff] %v6840
    %s6905 = scalar_lea.vmem [#allocation1], 1
    %6906 = vst [vmem:[%s6905] ss:$2 sm:$0xff] %v6841
    %s6907 = scalar_lea.vmem [#allocation1], 16
    %6908 = vst [vmem:[%s6907] ss:$2 sm:$0xff] %v6842
    %s6909 = scalar_lea.vmem [#allocation1], 17
    %6910 = vst [vmem:[%s6909] ss:$2 sm:$0xff] %v6843
    %s6911 = scalar_lea.vmem [#allocation1], 32
    %6912 = vst [vmem:[%s6911] ss:$2 sm:$0xff] %v6844
    %s6913 = scalar_lea.vmem [#allocation1], 33
    %6914 = vst [vmem:[%s6913] ss:$2 sm:$0xff] %v6845
    %s6915 = scalar_lea.vmem [#allocation1], 48
    %6916 = vst [vmem:[%s6915] ss:$2 sm:$0xff] %v6846
    %s6917 = scalar_lea.vmem [#allocation1], 49
    %6918 = vst [vmem:[%s6917] ss:$2 sm:$0xff] %v6847
    %v6919 = vld.sshfl [vmem:[#allocation1] sm:$0xff pattern:$0x75316420]
    %v6920 = vld.sshfl [vmem:[#allocation1 + $0x10] sm:$0xff pattern:$0x75316420]
    %v6921 = vld.sshfl [vmem:[#allocation1 + $0x20] sm:$0xff pattern:$0x75316420]
    %v6922 = vld.sshfl [vmem:[#allocation1 + $0x30] sm:$0xff pattern:$0x75316420]
    %6923 = vst [vmem:[#allocation1] ss:$2 sm:$0xff] %v6848
    %6924 = vst [vmem:[%s6905] ss:$2 sm:$0xff] %v6849
    %6925 = vst [vmem:[%s6907] ss:$2 sm:$0xff] %v6850
    %6926 = vst [vmem:[%s6909] ss:$2 sm:$0xff] %v6851
    %6927 = vst [vmem:[%s6911] ss:$2 sm:$0xff] %v6852
    %6928 = vst [vmem:[%s6913] ss:$2 sm:$0xff] %v6853
    %6929 = vst [vmem:[%s6915] ss:$2 sm:$0xff] %v6854
    %6930 = vst [vmem:[%s6917] ss:$2 sm:$0xff] %v6855
    %v6931 = vld.sshfl [vmem:[#allocation1] sm:$0xff pattern:$0x75316420]
    %v6932 = vld.sshfl [vmem:[#allocation1 + $0x10] sm:$0xff pattern:$0x75316420]
    %v6933 = vld.sshfl [vmem:[#allocation1 + $0x20] sm:$0xff pattern:$0x75316420]
    %v6934 = vld.sshfl [vmem:[#allocation1 + $0x30] sm:$0xff pattern:$0x75316420]
    %6935 = vst [vmem:[#allocation1] ss:$2 sm:$0xff] %v6856
    %6936 = vst [vmem:[%s6905] ss:$2 sm:$0xff] %v6857
    %6937 = vst [vmem:[%s6907] ss:$2 sm:$0xff] %v6858
    %6938 = vst [vmem:[%s6909] ss:$2 sm:$0xff] %v6859
    %6939 = vst [vmem:[%s6911] ss:$2 sm:$0xff] %v6860
    %6940 = vst [vmem:[%s6913] ss:$2 sm:$0xff] %v6861
    %6941 = vst [vmem:[%s6915] ss:$2 sm:$0xff] %v6862
    %6942 = vst [vmem:[%s6917] ss:$2 sm:$0xff] %v6863
    %v6943 = vld.sshfl [vmem:[#allocation1] sm:$0xff pattern:$0x75316420]
    %v6944 = vld.sshfl [vmem:[#allocation1 + $0x10] sm:$0xff pattern:$0x75316420]
    %v6945 = vld.sshfl [vmem:[#allocation1 + $0x20] sm:$0xff pattern:$0x75316420]
    %v6946 = vld.sshfl [vmem:[#allocation1 + $0x30] sm:$0xff pattern:$0x75316420]
    %6947 = vst [vmem:[#allocation1] ss:$2 sm:$0xff] %v6864
    %6948 = vst [vmem:[%s6905] ss:$2 sm:$0xff] %v6865
    %6949 = vst [vmem:[%s6907] ss:$2 sm:$0xff] %v6866
    %6950 = vst [vmem:[%s6909] ss:$2 sm:$0xff] %v6867
    %6951 = vst [vmem:[%s6911] ss:$2 sm:$0xff] %v6868
    %6952 = vst [vmem:[%s6913] ss:$2 sm:$0xff] %v6869
    %6953 = vst [vmem:[%s6915] ss:$2 sm:$0xff] %v6870
    %6954 = vst [vmem:[%s6917] ss:$2 sm:$0xff] %v6871
    %v6955 = vld.sshfl [vmem:[#allocation1] sm:$0xff pattern:$0x75316420]
    %v6956 = vld.sshfl [vmem:[#allocation1 + $0x10] sm:$0xff pattern:$0x75316420]
    %v6957 = vld.sshfl [vmem:[#allocation1 + $0x20] sm:$0xff pattern:$0x75316420]
    %v6958 = vld.sshfl [vmem:[#allocation1 + $0x30] sm:$0xff pattern:$0x75316420]
    %v6959 = vsel %vm987, %v6919, 0
    %v6961 = vsel %vm987, %v6920, 0
    %v6963 = vsel %vm987, %v6921, 0
    %v6965 = vsel %vm987, %v6922, 0
    %v6967 = vsel %vm987, %v6931, 0
    %v6969 = vsel %vm987, %v6932, 0
    %v6971 = vsel %vm987, %v6933, 0
    %v6973 = vsel %vm987, %v6934, 0
    %v6975 = vsel %vm987, %v6943, 0
    %v6977 = vsel %vm987, %v6944, 0
    %v6979 = vsel %vm987, %v6945, 0
    %v6981 = vsel %vm987, %v6946, 0
    %v6983 = vsel %vm987, %v6955, 0
    %v6985 = vsel %vm987, %v6956, 0
    %v6987 = vsel %vm987, %v6957, 0
    %v6989 = vsel %vm987, %v6958, 0
    %6991 = vmatpush.msra.mxu0 0.0
    %6992 = vmatpush.msra.mxu0 0.0
    %6993 = vmatpush.msra.mxu0 0.0
    %6994 = vmatpush.msra.mxu0 0.0
    %6995 = vmatpush.msra.mxu0 0.0
    %6996 = vmatpush.msra.mxu0 0.0
    %6997 = vmatpush.msra.mxu0 0.0
    %6998 = vmatpush.msra.mxu0 0.0
    %6999 = vmatpush.msra.mxu0 0.0
    %7000 = vmatpush.msra.mxu0 0.0
    %7001 = vmatpush.msra.mxu0 0.0
    %7002 = vmatpush.msra.mxu0 0.0
    %7003 = vmatpush.msra.mxu0 0.0
    %7004 = vmatpush.msra.mxu0 0.0
    %7005 = vmatpush.msra.mxu0 0.0
    %7006 = vmatpush.msra.mxu0 %v455
    %7007 = vmatmul.f32.gmra.mxu0 %v6959
    %v7008 = vpop.f32.mrf.mxu0
    %v7009 = vadd.f32 0.0, %v7008
    %7010 = vmatmul.f32.gmra.mxu0 %v6961
    %v7011 = vpop.f32.mrf.mxu0
    %v7012 = vadd.f32 0.0, %v7011
    %7013 = vmatmul.f32.gmra.mxu0 %v6963
    %v7014 = vpop.f32.mrf.mxu0
    %v7015 = vadd.f32 0.0, %v7014
    %7016 = vmatmul.f32.gmra.mxu0 %v6965
    %v7017 = vpop.f32.mrf.mxu0
    %v7018 = vadd.f32 0.0, %v7017
    %7019 = vmatmul.f32.gmra.mxu0 %v6967
    %v7020 = vpop.f32.mrf.mxu0
    %v7021 = vadd.f32 0.0, %v7020
    %7022 = vmatmul.f32.gmra.mxu0 %v6969
    %v7023 = vpop.f32.mrf.mxu0
    %v7024 = vadd.f32 0.0, %v7023
    %7025 = vmatmul.f32.gmra.mxu0 %v6971
    %v7026 = vpop.f32.mrf.mxu0
    %v7027 = vadd.f32 0.0, %v7026
    %7028 = vmatmul.f32.gmra.mxu0 %v6973
    %v7029 = vpop.f32.mrf.mxu0
    %v7030 = vadd.f32 0.0, %v7029
    %7031 = vmatmul.f32.gmra.mxu0 %v6975
    %v7032 = vpop.f32.mrf.mxu0
    %v7033 = vadd.f32 0.0, %v7032
    %7034 = vmatmul.f32.gmra.mxu0 %v6977
    %v7035 = vpop.f32.mrf.mxu0
    %v7036 = vadd.f32 0.0, %v7035
    %7037 = vmatmul.f32.gmra.mxu0 %v6979
    %v7038 = vpop.f32.mrf.mxu0
    %v7039 = vadd.f32 0.0, %v7038
    %7040 = vmatmul.f32.gmra.mxu0 %v6981
    %v7041 = vpop.f32.mrf.mxu0
    %v7042 = vadd.f32 0.0, %v7041
    %7043 = vmatmul.f32.gmra.mxu0 %v6983
    %v7044 = vpop.f32.mrf.mxu0
    %v7045 = vadd.f32 0.0, %v7044
    %7046 = vmatmul.f32.gmra.mxu0 %v6985
    %v7047 = vpop.f32.mrf.mxu0
    %v7048 = vadd.f32 0.0, %v7047
    %7049 = vmatmul.f32.gmra.mxu0 %v6987
    %v7050 = vpop.f32.mrf.mxu0
    %v7051 = vadd.f32 0.0, %v7050
    %7052 = vmatmul.f32.gmra.mxu0 %v6989
    %v7053 = vpop.f32.mrf.mxu0
    %v7054 = vadd.f32 0.0, %v7053
    %7055 = vdwg.mxu0
    %v7072 = vrot.slane %v7009, 4
    %v7073 = vrot.slane %v7012, 4
    %v7074 = vrot.slane %v7015, 4
    %v7075 = vrot.slane %v7018, 4
    %v7076 = vrot.slane %v7021, 4
    %v7077 = vrot.slane %v7024, 4
    %v7078 = vrot.slane %v7027, 4
    %v7079 = vrot.slane %v7030, 4
    %v7080 = vrot.slane %v7033, 4
    %v7081 = vrot.slane %v7036, 4
    %v7082 = vrot.slane %v7039, 4
    %v7083 = vrot.slane %v7042, 4
    %v7084 = vrot.slane %v7045, 4
    %v7085 = vrot.slane %v7048, 4
    %v7086 = vrot.slane %v7051, 4
    %v7087 = vrot.slane %v7054, 4
    %7104 = vrot.lane.b32.xlu0 %v5883, 96
    %v7105 = vpop.permute.xlu0 %7104
    %7106 = vrot.lane.b32.xlu0 %v5928, 96
    %v7107 = vpop.permute.xlu0 %7106
    %7108 = vrot.lane.b32.xlu0 %v5885, 96
    %v7109 = vpop.permute.xlu0 %7108
    %7110 = vrot.lane.b32.xlu0 %v5929, 96
    %v7111 = vpop.permute.xlu0 %7110
    %7112 = vrot.lane.b32.xlu0 %v5888, 96
    %v7113 = vpop.permute.xlu0 %7112
    %7114 = vrot.lane.b32.xlu0 %v5930, 96
    %v7115 = vpop.permute.xlu0 %7114
    %7116 = vrot.lane.b32.xlu0 %v5890, 96
    %v7117 = vpop.permute.xlu0 %7116
    %7118 = vrot.lane.b32.xlu0 %v5931, 96
    %v7119 = vpop.permute.xlu0 %7118
    %v7128 = vmul.f32 %v7009, %v7105
    %v7129 = vmul.f32 %v7072, %v7105
    %v7130 = vmul.f32 %v7012, %v7105
    %v7131 = vmul.f32 %v7073, %v7105
    %v7132 = vmul.f32 %v7015, %v7107
    %v7133 = vmul.f32 %v7074, %v7107
    %v7134 = vmul.f32 %v7018, %v7107
    %v7135 = vmul.f32 %v7075, %v7107
    %v7136 = vmul.f32 %v7021, %v7109
    %v7137 = vmul.f32 %v7076, %v7109
    %v7138 = vmul.f32 %v7024, %v7109
    %v7139 = vmul.f32 %v7077, %v7109
    %v7140 = vmul.f32 %v7027, %v7111
    %v7141 = vmul.f32 %v7078, %v7111
    %v7142 = vmul.f32 %v7030, %v7111
    %v7143 = vmul.f32 %v7079, %v7111
    %v7144 = vmul.f32 %v7033, %v7113
    %v7145 = vmul.f32 %v7080, %v7113
    %v7146 = vmul.f32 %v7036, %v7113
    %v7147 = vmul.f32 %v7081, %v7113
    %v7148 = vmul.f32 %v7039, %v7115
    %v7149 = vmul.f32 %v7082, %v7115
    %v7150 = vmul.f32 %v7042, %v7115
    %v7151 = vmul.f32 %v7083, %v7115
    %v7152 = vmul.f32 %v7045, %v7117
    %v7153 = vmul.f32 %v7084, %v7117
    %v7154 = vmul.f32 %v7048, %v7117
    %v7155 = vmul.f32 %v7085, %v7117
    %v7156 = vmul.f32 %v7051, %v7119
    %v7157 = vmul.f32 %v7086, %v7119
    %v7158 = vmul.f32 %v7054, %v7119
    %v7159 = vmul.f32 %v7087, %v7119
    %v7160 = vsel %vm2936, %v7128, 0.0
    %v7161 = vrot.slane %v7160, 4
    %v7162 = vadd.f32 %v7160, %v7161
    %v7163 = vrot.slane %v7162, 2
    %v7164 = vadd.f32 %v7162, %v7163
    %v7165 = vrot.slane %v7164, 1
    %v7166 = vadd.f32 %v7164, %v7165
    %v7167 = vsel %vm2936, %v7129, 0.0
    %v7168 = vrot.slane %v7167, 4
    %v7169 = vadd.f32 %v7167, %v7168
    %v7170 = vrot.slane %v7169, 2
    %v7171 = vadd.f32 %v7169, %v7170
    %v7172 = vrot.slane %v7171, 1
    %v7173 = vadd.f32 %v7171, %v7172
    %v7174 = vsel %vm2936, %v7130, 0.0
    %v7175 = vrot.slane %v7174, 4
    %v7176 = vadd.f32 %v7174, %v7175
    %v7177 = vrot.slane %v7176, 2
    %v7178 = vadd.f32 %v7176, %v7177
    %v7179 = vrot.slane %v7178, 1
    %v7180 = vadd.f32 %v7178, %v7179
    %v7181 = vsel %vm2936, %v7131, 0.0
    %v7182 = vrot.slane %v7181, 4
    %v7183 = vadd.f32 %v7181, %v7182
    %v7184 = vrot.slane %v7183, 2
    %v7185 = vadd.f32 %v7183, %v7184
    %v7186 = vrot.slane %v7185, 1
    %v7187 = vadd.f32 %v7185, %v7186
    %v7188 = vsel %vm2936, %v7132, 0.0
    %v7189 = vrot.slane %v7188, 4
    %v7190 = vadd.f32 %v7188, %v7189
    %v7191 = vrot.slane %v7190, 2
    %v7192 = vadd.f32 %v7190, %v7191
    %v7193 = vrot.slane %v7192, 1
    %v7194 = vadd.f32 %v7192, %v7193
    %v7195 = vsel %vm2936, %v7133, 0.0
    %v7196 = vrot.slane %v7195, 4
    %v7197 = vadd.f32 %v7195, %v7196
    %v7198 = vrot.slane %v7197, 2
    %v7199 = vadd.f32 %v7197, %v7198
    %v7200 = vrot.slane %v7199, 1
    %v7201 = vadd.f32 %v7199, %v7200
    %v7202 = vsel %vm2936, %v7134, 0.0
    %v7203 = vrot.slane %v7202, 4
    %v7204 = vadd.f32 %v7202, %v7203
    %v7205 = vrot.slane %v7204, 2
    %v7206 = vadd.f32 %v7204, %v7205
    %v7207 = vrot.slane %v7206, 1
    %v7208 = vadd.f32 %v7206, %v7207
    %v7209 = vsel %vm2936, %v7135, 0.0
    %v7210 = vrot.slane %v7209, 4
    %v7211 = vadd.f32 %v7209, %v7210
    %v7212 = vrot.slane %v7211, 2
    %v7213 = vadd.f32 %v7211, %v7212
    %v7214 = vrot.slane %v7213, 1
    %v7215 = vadd.f32 %v7213, %v7214
    %v7216 = vsel %vm2936, %v7136, 0.0
    %v7217 = vrot.slane %v7216, 4
    %v7218 = vadd.f32 %v7216, %v7217
    %v7219 = vrot.slane %v7218, 2
    %v7220 = vadd.f32 %v7218, %v7219
    %v7221 = vrot.slane %v7220, 1
    %v7222 = vadd.f32 %v7220, %v7221
    %v7223 = vsel %vm2936, %v7137, 0.0
    %v7224 = vrot.slane %v7223, 4
    %v7225 = vadd.f32 %v7223, %v7224
    %v7226 = vrot.slane %v7225, 2
    %v7227 = vadd.f32 %v7225, %v7226
    %v7228 = vrot.slane %v7227, 1
    %v7229 = vadd.f32 %v7227, %v7228
    %v7230 = vsel %vm2936, %v7138, 0.0
    %v7231 = vrot.slane %v7230, 4
    %v7232 = vadd.f32 %v7230, %v7231
    %v7233 = vrot.slane %v7232, 2
    %v7234 = vadd.f32 %v7232, %v7233
    %v7235 = vrot.slane %v7234, 1
    %v7236 = vadd.f32 %v7234, %v7235
    %v7237 = vsel %vm2936, %v7139, 0.0
    %v7238 = vrot.slane %v7237, 4
    %v7239 = vadd.f32 %v7237, %v7238
    %v7240 = vrot.slane %v7239, 2
    %v7241 = vadd.f32 %v7239, %v7240
    %v7242 = vrot.slane %v7241, 1
    %v7243 = vadd.f32 %v7241, %v7242
    %v7244 = vsel %vm2936, %v7140, 0.0
    %v7245 = vrot.slane %v7244, 4
    %v7246 = vadd.f32 %v7244, %v7245
    %v7247 = vrot.slane %v7246, 2
    %v7248 = vadd.f32 %v7246, %v7247
    %v7249 = vrot.slane %v7248, 1
    %v7250 = vadd.f32 %v7248, %v7249
    %v7251 = vsel %vm2936, %v7141, 0.0
    %v7252 = vrot.slane %v7251, 4
    %v7253 = vadd.f32 %v7251, %v7252
    %v7254 = vrot.slane %v7253, 2
    %v7255 = vadd.f32 %v7253, %v7254
    %v7256 = vrot.slane %v7255, 1
    %v7257 = vadd.f32 %v7255, %v7256
    %v7258 = vsel %vm2936, %v7142, 0.0
    %v7259 = vrot.slane %v7258, 4
    %v7260 = vadd.f32 %v7258, %v7259
    %v7261 = vrot.slane %v7260, 2
    %v7262 = vadd.f32 %v7260, %v7261
    %v7263 = vrot.slane %v7262, 1
    %v7264 = vadd.f32 %v7262, %v7263
    %v7265 = vsel %vm2936, %v7143, 0.0
    %v7266 = vrot.slane %v7265, 4
    %v7267 = vadd.f32 %v7265, %v7266
    %v7268 = vrot.slane %v7267, 2
    %v7269 = vadd.f32 %v7267, %v7268
    %v7270 = vrot.slane %v7269, 1
    %v7271 = vadd.f32 %v7269, %v7270
    %v7272 = vsel %vm2936, %v7144, 0.0
    %v7273 = vrot.slane %v7272, 4
    %v7274 = vadd.f32 %v7272, %v7273
    %v7275 = vrot.slane %v7274, 2
    %v7276 = vadd.f32 %v7274, %v7275
    %v7277 = vrot.slane %v7276, 1
    %v7278 = vadd.f32 %v7276, %v7277
    %v7279 = vsel %vm2936, %v7145, 0.0
    %v7280 = vrot.slane %v7279, 4
    %v7281 = vadd.f32 %v7279, %v7280
    %v7282 = vrot.slane %v7281, 2
    %v7283 = vadd.f32 %v7281, %v7282
    %v7284 = vrot.slane %v7283, 1
    %v7285 = vadd.f32 %v7283, %v7284
    %v7286 = vsel %vm2936, %v7146, 0.0
    %v7287 = vrot.slane %v7286, 4
    %v7288 = vadd.f32 %v7286, %v7287
    %v7289 = vrot.slane %v7288, 2
    %v7290 = vadd.f32 %v7288, %v7289
    %v7291 = vrot.slane %v7290, 1
    %v7292 = vadd.f32 %v7290, %v7291
    %v7293 = vsel %vm2936, %v7147, 0.0
    %v7294 = vrot.slane %v7293, 4
    %v7295 = vadd.f32 %v7293, %v7294
    %v7296 = vrot.slane %v7295, 2
    %v7297 = vadd.f32 %v7295, %v7296
    %v7298 = vrot.slane %v7297, 1
    %v7299 = vadd.f32 %v7297, %v7298
    %v7300 = vsel %vm2936, %v7148, 0.0
    %v7301 = vrot.slane %v7300, 4
    %v7302 = vadd.f32 %v7300, %v7301
    %v7303 = vrot.slane %v7302, 2
    %v7304 = vadd.f32 %v7302, %v7303
    %v7305 = vrot.slane %v7304, 1
    %v7306 = vadd.f32 %v7304, %v7305
    %v7307 = vsel %vm2936, %v7149, 0.0
    %v7308 = vrot.slane %v7307, 4
    %v7309 = vadd.f32 %v7307, %v7308
    %v7310 = vrot.slane %v7309, 2
    %v7311 = vadd.f32 %v7309, %v7310
    %v7312 = vrot.slane %v7311, 1
    %v7313 = vadd.f32 %v7311, %v7312
    %v7314 = vsel %vm2936, %v7150, 0.0
    %v7315 = vrot.slane %v7314, 4
    %v7316 = vadd.f32 %v7314, %v7315
    %v7317 = vrot.slane %v7316, 2
    %v7318 = vadd.f32 %v7316, %v7317
    %v7319 = vrot.slane %v7318, 1
    %v7320 = vadd.f32 %v7318, %v7319
    %v7321 = vsel %vm2936, %v7151, 0.0
    %v7322 = vrot.slane %v7321, 4
    %v7323 = vadd.f32 %v7321, %v7322
    %v7324 = vrot.slane %v7323, 2
    %v7325 = vadd.f32 %v7323, %v7324
    %v7326 = vrot.slane %v7325, 1
    %v7327 = vadd.f32 %v7325, %v7326
    %v7328 = vsel %vm2936, %v7152, 0.0
    %v7329 = vrot.slane %v7328, 4
    %v7330 = vadd.f32 %v7328, %v7329
    %v7331 = vrot.slane %v7330, 2
    %v7332 = vadd.f32 %v7330, %v7331
    %v7333 = vrot.slane %v7332, 1
    %v7334 = vadd.f32 %v7332, %v7333
    %v7335 = vsel %vm2936, %v7153, 0.0
    %v7336 = vrot.slane %v7335, 4
    %v7337 = vadd.f32 %v7335, %v7336
    %v7338 = vrot.slane %v7337, 2
    %v7339 = vadd.f32 %v7337, %v7338
    %v7340 = vrot.slane %v7339, 1
    %v7341 = vadd.f32 %v7339, %v7340
    %v7342 = vsel %vm2936, %v7154, 0.0
    %v7343 = vrot.slane %v7342, 4
    %v7344 = vadd.f32 %v7342, %v7343
    %v7345 = vrot.slane %v7344, 2
    %v7346 = vadd.f32 %v7344, %v7345
    %v7347 = vrot.slane %v7346, 1
    %v7348 = vadd.f32 %v7346, %v7347
    %v7349 = vsel %vm2936, %v7155, 0.0
    %v7350 = vrot.slane %v7349, 4
    %v7351 = vadd.f32 %v7349, %v7350
    %v7352 = vrot.slane %v7351, 2
    %v7353 = vadd.f32 %v7351, %v7352
    %v7354 = vrot.slane %v7353, 1
    %v7355 = vadd.f32 %v7353, %v7354
    %v7356 = vsel %vm2936, %v7156, 0.0
    %v7357 = vrot.slane %v7356, 4
    %v7358 = vadd.f32 %v7356, %v7357
    %v7359 = vrot.slane %v7358, 2
    %v7360 = vadd.f32 %v7358, %v7359
    %v7361 = vrot.slane %v7360, 1
    %v7362 = vadd.f32 %v7360, %v7361
    %v7363 = vsel %vm2936, %v7157, 0.0
    %v7364 = vrot.slane %v7363, 4
    %v7365 = vadd.f32 %v7363, %v7364
    %v7366 = vrot.slane %v7365, 2
    %v7367 = vadd.f32 %v7365, %v7366
    %v7368 = vrot.slane %v7367, 1
    %v7369 = vadd.f32 %v7367, %v7368
    %v7370 = vsel %vm2936, %v7158, 0.0
    %v7371 = vrot.slane %v7370, 4
    %v7372 = vadd.f32 %v7370, %v7371
    %v7373 = vrot.slane %v7372, 2
    %v7374 = vadd.f32 %v7372, %v7373
    %v7375 = vrot.slane %v7374, 1
    %v7376 = vadd.f32 %v7374, %v7375
    %v7377 = vsel %vm2936, %v7159, 0.0
    %v7378 = vrot.slane %v7377, 4
    %v7379 = vadd.f32 %v7377, %v7378
    %v7380 = vrot.slane %v7379, 2
    %v7381 = vadd.f32 %v7379, %v7380
    %v7382 = vrot.slane %v7381, 1
    %v7383 = vadd.f32 %v7381, %v7382
    %v7384 = vpack.c.bf16 %v7166, %v7166
    %v7385 = vpack.c.bf16 %v7173, %v7173
    %v7386 = vpack.c.bf16 %v7180, %v7180
    %v7387 = vpack.c.bf16 %v7187, %v7187
    %v7388 = vpack.c.bf16 %v7194, %v7194
    %v7389 = vpack.c.bf16 %v7201, %v7201
    %v7390 = vpack.c.bf16 %v7208, %v7208
    %v7391 = vpack.c.bf16 %v7215, %v7215
    %v7392 = vpack.c.bf16 %v7222, %v7222
    %v7393 = vpack.c.bf16 %v7229, %v7229
    %v7394 = vpack.c.bf16 %v7236, %v7236
    %v7395 = vpack.c.bf16 %v7243, %v7243
    %v7396 = vpack.c.bf16 %v7250, %v7250
    %v7397 = vpack.c.bf16 %v7257, %v7257
    %v7398 = vpack.c.bf16 %v7264, %v7264
    %v7399 = vpack.c.bf16 %v7271, %v7271
    %v7400 = vpack.c.bf16 %v7278, %v7278
    %v7401 = vpack.c.bf16 %v7285, %v7285
    %v7402 = vpack.c.bf16 %v7292, %v7292
    %v7403 = vpack.c.bf16 %v7299, %v7299
    %v7404 = vpack.c.bf16 %v7306, %v7306
    %v7405 = vpack.c.bf16 %v7313, %v7313
    %v7406 = vpack.c.bf16 %v7320, %v7320
    %v7407 = vpack.c.bf16 %v7327, %v7327
    %v7408 = vpack.c.bf16 %v7334, %v7334
    %v7409 = vpack.c.bf16 %v7341, %v7341
    %v7410 = vpack.c.bf16 %v7348, %v7348
    %v7411 = vpack.c.bf16 %v7355, %v7355
    %v7412 = vpack.c.bf16 %v7362, %v7362
    %v7413 = vpack.c.bf16 %v7369, %v7369
    %v7414 = vpack.c.bf16 %v7376, %v7376
    %v7415 = vpack.c.bf16 %v7383, %v7383
    %v7417 = vperm.slane %v532, 0
    %v7451 = vunpack.c.l.b16 %v7384
    %v7452 = vunpack.c.l.b16 %v7385
    %v7453 = vunpack.c.l.b16 %v7386
    %v7454 = vunpack.c.l.b16 %v7387
    %v7455 = vunpack.c.l.b16 %v7388
    %v7456 = vunpack.c.l.b16 %v7389
    %v7457 = vunpack.c.l.b16 %v7390
    %v7458 = vunpack.c.l.b16 %v7391
    %v7459 = vunpack.c.l.b16 %v7392
    %v7460 = vunpack.c.l.b16 %v7393
    %v7461 = vunpack.c.l.b16 %v7394
    %v7462 = vunpack.c.l.b16 %v7395
    %v7463 = vunpack.c.l.b16 %v7396
    %v7464 = vunpack.c.l.b16 %v7397
    %v7465 = vunpack.c.l.b16 %v7398
    %v7466 = vunpack.c.l.b16 %v7399
    %v7467 = vunpack.c.l.b16 %v7400
    %v7468 = vunpack.c.l.b16 %v7401
    %v7469 = vunpack.c.l.b16 %v7402
    %v7470 = vunpack.c.l.b16 %v7403
    %v7471 = vunpack.c.l.b16 %v7404
    %v7472 = vunpack.c.l.b16 %v7405
    %v7473 = vunpack.c.l.b16 %v7406
    %v7474 = vunpack.c.l.b16 %v7407
    %v7475 = vunpack.c.l.b16 %v7408
    %v7476 = vunpack.c.l.b16 %v7409
    %v7477 = vunpack.c.l.b16 %v7410
    %v7478 = vunpack.c.l.b16 %v7411
    %v7479 = vunpack.c.l.b16 %v7412
    %v7480 = vunpack.c.l.b16 %v7413
    %v7481 = vunpack.c.l.b16 %v7414
    %v7482 = vunpack.c.l.b16 %v7415
    %v7483 = vsel %vm2172, %v7452, %v7451
    %v7484 = vsel %vm2174, %v7453, %v7483
    %v7485 = vsel %vm2176, %v7454, %v7484
    %v7486 = vsel %vm2178, %v7455, %v7485
    %v7487 = vsel %vm2180, %v7456, %v7486
    %v7488 = vsel %vm2182, %v7457, %v7487
    %v7489 = vsel %vm2184, %v7458, %v7488
    %v7490 = vsel %vm2172, %v7460, %v7459
    %v7491 = vsel %vm2174, %v7461, %v7490
    %v7492 = vsel %vm2176, %v7462, %v7491
    %v7493 = vsel %vm2178, %v7463, %v7492
    %v7494 = vsel %vm2180, %v7464, %v7493
    %v7495 = vsel %vm2182, %v7465, %v7494
    %v7496 = vsel %vm2184, %v7466, %v7495
    %v7497 = vsel %vm2172, %v7468, %v7467
    %v7498 = vsel %vm2174, %v7469, %v7497
    %v7499 = vsel %vm2176, %v7470, %v7498
    %v7500 = vsel %vm2178, %v7471, %v7499
    %v7501 = vsel %vm2180, %v7472, %v7500
    %v7502 = vsel %vm2182, %v7473, %v7501
    %v7503 = vsel %vm2184, %v7474, %v7502
    %v7504 = vsel %vm2172, %v7476, %v7475
    %v7505 = vsel %vm2174, %v7477, %v7504
    %v7506 = vsel %vm2176, %v7478, %v7505
    %v7507 = vsel %vm2178, %v7479, %v7506
    %v7508 = vsel %vm2180, %v7480, %v7507
    %v7509 = vsel %vm2182, %v7481, %v7508
    %v7510 = vsel %vm2184, %v7482, %v7509
    %v7511 = vpack.c.b16 %v7496, %v7489
    %v7512 = vpack.c.b16 %v7510, %v7503
    %v7517 = vunpack.c.l.b16 %v528
    %v7518 = vunpack.c.l.b16 %v529
    %v7519 = vunpack.c.l.b16 %v530
    %v7520 = vunpack.c.l.b16 %v531
    %v7521 = vpack.c.b16 %v7518, %v7517
    %v7522 = vpack.c.b16 %v7520, %v7519
    %v7526 = vsel %vm552, %v7511, 0
    %v7529 = vsel %vm552, %v7512, 0
    %7531 = vmatpush.bf16.msra.mxu0 0
    %7532 = vmatpush.bf16.msra.mxu0 0
    %7533 = vmatpush.bf16.msra.mxu0 0
    %7534 = vmatpush.bf16.msra.mxu0 0
    %7535 = vmatpush.bf16.msra.mxu0 0
    %7536 = vmatpush.bf16.msra.mxu0 0
    %7537 = vmatpush.bf16.msra.mxu0 %v7522
    %7538 = vmatpush.bf16.msra.mxu0 %v7521
    %7539 = vmatmul.bf16.gmra.mxu0 %v7526
    %v7540 = vpop.f32.mrf.mxu0
    %v7541 = vpop.f32.mrf.mxu0
    %7542 = vmatmul.bf16.gmra.mxu0 %v7529
    %v7543 = vpop.f32.mrf.mxu0
    %v7544 = vpop.f32.mrf.mxu0
    %v7545 = vadd.f32 %v7417, %v7544
    %7546 = vdwg.mxu0
    %v7548 = vrot.slane %v7545, 4
    %v7551 = vperm.slane %v533, 0
    %v7553 = vmul.f32 %v5775, %v7551
    %v7554 = vsel %vm2936, %v7553, 0.0
    %7555 = vadd.xlane.f32.xlu0 %v7554
    %v7556 = vpop.xlane.xlu0 %7555
    %7557 = vrot.lane.b32.xlu0 %v7551, 96
    %v7558 = vpop.permute.xlu0 %7557
    %v7560 = vmul.f32 %v7548, %v7558
    %v7561 = vsel %vm2936, %v7560, 0.0
    %7562 = vadd.xlane.f32.xlu0 %v7561
    %v7563 = vpop.xlane.xlu0 %7562
    %v7564 = vadd.f32 %v7556, %v7563
    %v7566 = vperm.slane %v534, 0
    %v7568 = vadd.f32 %v7564, %v7566
    %vm7569 = vcmask 3072
    %7570 = vst.msk [vmem:[%s71] sm:$0xf] %vm7569, %v7568
    // Predicated region
    $region222: #{tpu_custom_call.1} parent=1 // pred_check
      _
    $region223: #{tpu_custom_call.1} parent=1 // pred_check_branch
      %7572 = sbr.rel (0) target = $region225
    $region224: #{tpu_custom_call.1} parent=1 // pred_region
      _
    $region225: #{tpu_custom_call.1} parent=1 // pred_fallthru
      _
    // Predicated region
    $region226: #{tpu_custom_call.1} parent=1 // pred_check
      _
    $region227: #{tpu_custom_call.1} parent=1 // pred_check_branch
      %7574 = sbr.rel (0) target = $region229
    $region228: #{tpu_custom_call.1} parent=1 // pred_region
      _
    $region229: #{tpu_custom_call.1} parent=1 // pred_fallthru
      _
    %7575 = vsyncpa [#allocation5], 1
    %7576 = vsyncpa [#allocation7], 1
    %7577 = vsyncpa [#allocation10], 1
    %7578 = vsyncpa [#allocation13], 1
    %7579 = vsyncpa [#allocation16], 1
    %7580 = vsyncpa [#allocation19], 1
    %7581 = vsyncpa [#allocation22], 1
    %7582 = vsyncpa [#allocation25], 1
    %7583 = vsyncpa [#allocation28], 1
    %7584 = vsyncpa [#allocation31], 1
    %7585 = vsyncpa [#allocation34], 1

</llo_original>
